<compile_context>
chip_gen: v6e
topology: v6e:2x2x1
jax: 0.10.0
libtpu: 0.0.40
codegen_flags: <defaults>
</compile_context>

<pallas_src>
import functools

import jax
import jax.numpy as jnp
from jax.experimental import pallas as pl
from jax.experimental.pallas import tpu as pltpu


ASPP_RATES = (6, 12, 18, 24)
CPAD = 128                      # lane-dense width of the packed classifier slab
VMEM_LIMIT = 32 * 1024 * 1024   # ample at this size; raise when scaling on v5e/v6e


def _round_up(x, m):
    return ((x + m - 1) // m) * m


def _im2col_3x3(x_nhwc, dil):
    """(N,H,W,C) with zero pad=dil -> (N, H*W, 9*C) patch (tap-major columns)."""
    N, H, W, C = x_nhwc.shape
    xp = jnp.pad(x_nhwc, ((0, 0), (dil, dil), (dil, dil), (0, 0)))
    cols = []
    for ky in range(3):
        for kx in range(3):
            cols.append(
                xp[:, ky * dil:ky * dil + H, kx * dil:kx * dil + W, :]
                .reshape(N, H * W, C))
    return jnp.concatenate(cols, axis=-1)


# -----------------------------------------------------------------------------
# Fused kernel: backbone conv + zero-pad (in VMEM) + multi-task ASPP head.
# One program per image.
# -----------------------------------------------------------------------------
def _mtl_fused_kernel(x_ref, wb_ref, bb_ref, w1_ref, b1_ref, w2_ref, b2_ref,
                      w3_ref, b3s_ref, o_ref, f_ref, *, H, W, rates, base_f):
    HW = H * W
    Cf = wb_ref.shape[-1]
    taps = [(ky, kx) for ky in (-1, 0, 1) for kx in (-1, 0, 1)]

    # Column index of every output pixel (sublane axis); used to mask horizontal
    # taps that would wrap across image rows in the flat-row layout.
    col = jax.lax.broadcasted_iota(jnp.int32, (HW, 1), 0) % W

    def shifted(dy, dx):
        win = f_ref[pl.ds(base_f + dy * W + dx, HW), :]
        if dx > 0:
            win = jnp.where(col < W - dx, win, jnp.zeros_like(win))
        elif dx < 0:
            win = jnp.where(col >= -dx, win, jnp.zeros_like(win))
        return win

    # --- backbone stand-in: 3x3 "same" conv + ReLU as ONE (HW, 9*Cin) matmul --
    # TODO(synk): the real backbone is supplied externally (backbone_init).
    feat = jnp.dot(x_ref[...], wb_ref[...], preferred_element_type=jnp.float32)
    feat = jnp.maximum(feat + bb_ref[...], 0.0).astype(f_ref.dtype)

    # --- zero-pad the features ONCE, entirely in VMEM (never touches HBM) -----
    f_ref[...] = jnp.zeros(f_ref.shape, f_ref.dtype)
    f_ref[pl.ds(base_f, HW), :] = feat

    # --- 4 dilated branches, both tasks stacked on the 128-lane Cout axis -----
    h2s = []
    for ri, rate in enumerate(rates):
        live, cols = [], []
        for t, (ky, kx) in enumerate(taps):
            dy, dx = ky * rate, kx * rate
            if abs(dy) >= H or abs(dx) >= W:
                continue                     # window entirely in zero padding
            live.append(t)
            cols.append(shifted(dy, dx))
        p = cols[0] if len(cols) == 1 else jnp.concatenate(cols, axis=-1)

        w1_full = w1_ref[ri]                 # (9*Cf, cstack)
        if len(live) == len(taps):
            w1r = w1_full
        else:                                # keep only the live taps' K rows
            w1r = jnp.concatenate(
                [w1_full[t * Cf:(t + 1) * Cf, :] for t in live], axis=0)

        # dilated 3x3 conv (tasks stacked along Cout) + ReLU
        h = jnp.dot(p, w1r, preferred_element_type=jnp.float32)
        h = jnp.maximum(h + b1_ref[ri], 0.0).astype(jnp.bfloat16)
        # 1x1 conv (block-diagonal over tasks) + ReLU
        h = jnp.dot(h, w2_ref[ri], preferred_element_type=jnp.float32)
        h = jnp.maximum(h + b2_ref[ri], 0.0).astype(jnp.bfloat16)
        h2s.append(h)

    # --- all 4 per-rate classifiers as ONE K-stacked matmul -------------------
    hcat = jnp.concatenate(h2s, axis=-1)                        # (HW, R*cstack)
    out = jnp.dot(hcat, w3_ref[...], preferred_element_type=jnp.float32)
    o_ref[...] = (out + b3s_ref[...]).astype(o_ref.dtype)


def mtl_fused(xcol, backbone_params, head_params, *, H, W, rates=ASPP_RATES):
    """xcol: (N, H*W, 9*Cin) bf16 im2col'd input.  Returns (N, H*W, CPAD) f32."""
    N, HW, Kin = xcol.shape
    assert HW == H * W
    wb, bb = backbone_params
    w1, b1, w2, b2, w3k, b3s = head_params
    Cf = wb.shape[-1]
    R, K9, cstack = w1.shape
    cpad = w3k.shape[-1]
    maxr = max(rates)
    assert K9 == 9 * Cf and R == len(rates)

    # Flat-row padded-feature scratch: zero slack of (maxr rows + maxr cols)
    # worth of pixels on each side of the H*W data rows.
    base_f = _round_up(maxr * W + maxr, 16)
    S_f = _round_up(base_f + HW + maxr * W + maxr, 16)

    kernel = functools.partial(_mtl_fused_kernel, H=H, W=W, rates=tuple(rates),
                               base_f=base_f)
    return pl.pallas_call(
        kernel,
        out_shape=jax.ShapeDtypeStruct((N, HW, cpad), jnp.float32),
        grid=(N,),
        in_specs=[
            pl.BlockSpec((None, HW, Kin), lambda n: (n, 0, 0)),
            pl.BlockSpec((Kin, Cf), lambda n: (0, 0)),
            pl.BlockSpec((1, Cf), lambda n: (0, 0)),
            pl.BlockSpec((R, K9, cstack), lambda n: (0, 0, 0)),
            pl.BlockSpec((R, 1, cstack), lambda n: (0, 0, 0)),
            pl.BlockSpec((R, cstack, cstack), lambda n: (0, 0, 0)),
            pl.BlockSpec((R, 1, cstack), lambda n: (0, 0, 0)),
            pl.BlockSpec((R * cstack, cpad), lambda n: (0, 0)),
            pl.BlockSpec((1, cpad), lambda n: (0, 0)),
        ],
        out_specs=pl.BlockSpec((None, HW, cpad), lambda n: (n, 0, 0)),
        scratch_shapes=[pltpu.VMEM((S_f, Cf), jnp.bfloat16)],
        compiler_params=pltpu.CompilerParams(
            dimension_semantics=("parallel",), vmem_limit_bytes=VMEM_LIMIT),
    )(xcol, wb, bb, w1, b1, w2, b2, w3k, b3s)


# -----------------------------------------------------------------------------
# Parameter construction (deterministic, synthetic) with task packing:
#   conv1: tasks stacked along Cout                    -> (R, 9*Cf, T*hidden)
#   conv2: block-diagonal over tasks                   -> (R, T*hidden, T*hidden)
#   conv3: per-rate blocks K-stacked into one matrix   -> (R*T*hidden, 128),
#          task output lanes packed at offsets 0:5 / 5:6, bias pre-summed
#          over rates.  Weights bf16, biases f32.
# -----------------------------------------------------------------------------
def init_params(key, in_ch, feature_dim, hidden, clsNum, dtype=jnp.bfloat16):
    tasks = list(clsNum.keys())
    ncls = [clsNum[t] for t in tasks]
    offs, c0 = [], 0
    for n in ncls:
        offs.append(c0)
        c0 += n
    assert c0 <= CPAD, "packed classifier width exceeds the 128-lane slab"

    R = len(ASPP_RATES)
    T = len(tasks)
    cstack = T * hidden

    def nrm(k, shape, scale):
        return scale * jax.random.normal(k, shape, jnp.float32)

    key, kbw, kbb = jax.random.split(key, 3)
    wb = nrm(kbw, (9 * in_ch, feature_dim), 0.05)
    bb = nrm(kbb, (1, feature_dim), 0.01)

    w1 = jnp.zeros((R, 9 * feature_dim, cstack), jnp.float32)
    b1 = jnp.zeros((R, 1, cstack), jnp.float32)
    w2 = jnp.zeros((R, cstack, cstack), jnp.float32)
    b2 = jnp.zeros((R, 1, cstack), jnp.float32)
    w3 = jnp.zeros((R, cstack, CPAD), jnp.float32)
    b3 = jnp.zeros((R, 1, CPAD), jnp.float32)

    for r in range(R):
        for ti in range(T):
            key, k1, k1b, k2, k2b, k3, k3b = jax.random.split(key, 7)
            w1_t = nrm(k1, (9 * feature_dim, hidden), 0.05)
            b1_t = nrm(k1b, (1, hidden), 0.01)
            w2_t = nrm(k2, (hidden, hidden), 0.05)
            b2_t = nrm(k2b, (1, hidden), 0.01)
            w3_t = nrm(k3, (hidden, ncls[ti]), 0.05)
            b3_t = nrm(k3b, (1, ncls[ti]), 0.01)
            h0, cc = ti * hidden, offs[ti]
            w1 = w1.at[r, :, h0:h0 + hidden].set(w1_t)
            b1 = b1.at[r, :, h0:h0 + hidden].set(b1_t)
            w2 = w2.at[r, h0:h0 + hidden, h0:h0 + hidden].set(w2_t)
            b2 = b2.at[r, :, h0:h0 + hidden].set(b2_t)
            w3 = w3.at[r, h0:h0 + hidden, cc:cc + ncls[ti]].set(w3_t)
            b3 = b3.at[r, :, cc:cc + ncls[ti]].set(b3_t)

    return {
        "backbone": (wb.astype(dtype), bb),
        "heads": (
            w1.astype(dtype), b1,
            w2.astype(dtype), b2,
            w3.reshape(R * cstack, CPAD).astype(dtype),   # K-stacked classifier
            jnp.sum(b3, axis=0),                          # pre-summed bias
        ),
        "tasks": tasks,
        "ncls": ncls,
        "offs": offs,
    }


# -----------------------------------------------------------------------------
# Forward pass (MTLModel.forward equivalent): a single fused pallas_call.
# -----------------------------------------------------------------------------
def mtl_forward(params, x_nchw):
    N, C, H, W = x_nchw.shape
    x = jnp.transpose(x_nchw, (0, 2, 3, 1)).astype(jnp.bfloat16)   # NHWC bf16
    xcol = _im2col_3x3(x, 1)                        # wrapper-side layout plumbing
    slab = mtl_fused(xcol, params["backbone"], params["heads"], H=H, W=W)
    slab = slab.reshape(N, H, W, CPAD)

    output = {}
    for ti, task in enumerate(params["tasks"]):
        c0, nc = params["offs"][ti], params["ncls"][ti]
        out = slab[..., c0:c0 + nc]
        output[task] = jnp.transpose(out, (0, 3, 1, 2)).astype(x_nchw.dtype)
    return output


# Plain-JAX reference (jnp.pad + window slicing) with matching bf16 casts,
# used to numerically validate the fused kernel.
def mtl_reference_slab(params, x_nchw, rates=ASPP_RATES):
    wb, bb = params["backbone"]
    w1, b1, w2, b2, w3k, b3s = params["heads"]
    x = jnp.transpose(x_nchw, (0, 2, 3, 1)).astype(jnp.bfloat16)
    N, H, W, _ = x.shape
    Cf = wb.shape[-1]

    def mm(a, w):
        return jnp.einsum("npk,kc->npc", a, w, preferred_element_type=jnp.float32)

    feat = jnp.maximum(mm(_im2col_3x3(x, 1), wb) + bb, 0.0).astype(jnp.bfloat16)
    feat = feat.reshape(N, H, W, Cf)

    h2s = []
    for ri, rate in enumerate(rates):
        p = _im2col_3x3(feat, rate)
        h = jnp.maximum(mm(p, w1[ri]) + b1[ri], 0.0).astype(jnp.bfloat16)
        h = jnp.maximum(mm(h, w2[ri]) + b2[ri], 0.0).astype(jnp.bfloat16)
        h2s.append(h)
    hcat = jnp.concatenate(h2s, axis=-1)
    return mm(hcat, w3k) + b3s                       # (N, H*W, CPAD) float32


if __name__ == "__main__":
    # Small synthetic config: batch=2, 4 input channels, 16x16 spatial,
    # feature_dim=32, ASPP hidden=64, two tasks (5-class seg + 1-channel depth).
    clsNum = {"segmentsemantic": 5, "depth_zbuffer": 1}
    N, C, H, W = 2, 4, 16, 16
    feature_dim, hidden = 32, 64

    x = jax.random.normal(jax.random.PRNGKey(0), (N, C, H, W), jnp.float32)
    params = init_params(jax.random.PRNGKey(42), C, feature_dim, hidden, clsNum)

    out = mtl_forward(params, x)
    out = jax.block_until_ready(out)

    # shape / dtype / finiteness checks
    for task, nc in clsNum.items():
        assert out[task].shape == (N, nc, H, W), (task, out[task].shape)
        assert out[task].dtype == jnp.float32
        assert bool(jnp.all(jnp.isfinite(out[task])))

    # numerical check against the plain-JAX reference
    ref_slab = mtl_reference_slab(params, x).reshape(N, H, W, CPAD)
    for ti, task in enumerate(params["tasks"]):
        c0, nc = params["offs"][ti], params["ncls"][ti]
        ref_t = jnp.transpose(ref_slab[..., c0:c0 + nc], (0, 3, 1, 2))
        err = float(jnp.max(jnp.abs(out[task] - ref_t.astype(jnp.float32))))
        assert err < 1e-3, (task, err)

    print("KERNEL_OK")
</pallas_src>

<mosaic_0001>
module attributes {stable_mosaic.version = 11 : i64} {
  func.func @_mtl_fused_kernel(%arg0: i32, %arg1: memref<1x256x36xbf16, #tpu.memory_space<vmem>>, %arg2: memref<36x32xbf16, #tpu.memory_space<vmem>>, %arg3: memref<1x32xf32, #tpu.memory_space<vmem>>, %arg4: memref<4x288x128xbf16, #tpu.memory_space<vmem>>, %arg5: memref<4x1x128xf32, #tpu.memory_space<vmem>>, %arg6: memref<4x128x128xbf16, #tpu.memory_space<vmem>>, %arg7: memref<4x1x128xf32, #tpu.memory_space<vmem>>, %arg8: memref<512x128xbf16, #tpu.memory_space<vmem>>, %arg9: memref<1x128xf32, #tpu.memory_space<vmem>>, %arg10: memref<1x256x128xf32, #tpu.memory_space<vmem>>, %arg11: memref<1088x32xbf16, #tpu.memory_space<vmem>>) attributes {dimension_semantics = [#tpu.dimension_semantics<parallel>], iteration_bounds = array<i64: 2>, scalar_prefetch = 0 : i64, scratch_operands = 1 : i64, tpu.core_type = #tpu.core_type<tc>, window_params = [{transform_indices = @transform_0, window_bounds = array<i64: 1, 256, 36>}, {pipeline_mode = #tpu.pipeline_mode<synchronous>, transform_indices = @transform_1, window_bounds = array<i64: 36, 32>}, {pipeline_mode = #tpu.pipeline_mode<synchronous>, transform_indices = @transform_2, window_bounds = array<i64: 1, 32>}, {pipeline_mode = #tpu.pipeline_mode<synchronous>, transform_indices = @transform_3, window_bounds = array<i64: 4, 288, 128>}, {pipeline_mode = #tpu.pipeline_mode<synchronous>, transform_indices = @transform_4, window_bounds = array<i64: 4, 1, 128>}, {pipeline_mode = #tpu.pipeline_mode<synchronous>, transform_indices = @transform_5, window_bounds = array<i64: 4, 128, 128>}, {pipeline_mode = #tpu.pipeline_mode<synchronous>, transform_indices = @transform_6, window_bounds = array<i64: 4, 1, 128>}, {pipeline_mode = #tpu.pipeline_mode<synchronous>, transform_indices = @transform_7, window_bounds = array<i64: 512, 128>}, {pipeline_mode = #tpu.pipeline_mode<synchronous>, transform_indices = @transform_8, window_bounds = array<i64: 1, 128>}, {transform_indices = @transform_9, window_bounds = array<i64: 1, 256, 128>}]} {
    %0 = tpu.iota {dimensions = array<i32: 0>} : vector<256x1xi32>
    %c16_i32 = arith.constant 16 : i32
    %c0_i32 = arith.constant 0 : i32
    %1 = arith.cmpi eq, %c16_i32, %c0_i32 : i32
    %c1_i32 = arith.constant 1 : i32
    %2 = arith.select %1, %c1_i32, %c16_i32 : i32
    %3 = vector.broadcast %2 : i32 to vector<256x1xi32>
    %4 = arith.remsi %0, %3 : vector<256x1xi32>
    %c0_i32_0 = arith.constant 0 : i32
    %5 = vector.broadcast %c0_i32_0 : i32 to vector<256x1xi32>
    %6 = arith.cmpi ne, %4, %5 : vector<256x1xi32>
    %c0_i32_1 = arith.constant 0 : i32
    %7 = vector.broadcast %c0_i32_1 : i32 to vector<256x1xi32>
    %8 = arith.cmpi slt, %4, %7 : vector<256x1xi32>
    %c0_i32_2 = arith.constant 0 : i32
    %9 = arith.cmpi slt, %2, %c0_i32_2 : i32
    %10 = vector.broadcast %9 : i1 to vector<256x1xi1>
    %11 = vector.broadcast %10 : vector<256x1xi1> to vector<256x1xi1>
    %12 = arith.xori %8, %11 : vector<256x1xi1>
    %13 = arith.andi %12, %6 : vector<256x1xi1>
    %14 = vector.broadcast %2 : i32 to vector<256x1xi32>
    %15 = arith.addi %4, %14 : vector<256x1xi32>
    %16 = arith.select %13, %15, %4 : vector<256x1xi1>, vector<256x1xi32>
    %c0 = arith.constant 0 : index
    %c0_3 = arith.constant 0 : index
    %c0_4 = arith.constant 0 : index
    %17 = vector.load %arg1[%c0, %c0_3, %c0_4] : memref<1x256x36xbf16, #tpu.memory_space<vmem>>, vector<1x256x36xbf16>
    %18 = vector.shape_cast %17 : vector<1x256x36xbf16> to vector<256x36xbf16>
    %c0_5 = arith.constant 0 : index
    %c0_6 = arith.constant 0 : index
    %19 = vector.load %arg2[%c0_5, %c0_6] : memref<36x32xbf16, #tpu.memory_space<vmem>>, vector<36x32xbf16>
    %cst = arith.constant dense<0.000000e+00> : vector<256x32xf32>
    %20 = tpu.matmul %18, %19, %cst {dimension_numbers = #tpu.dot_dimension_numbers<[1], [0], [0], [1], [0, 0, 1, 1], [], []>} : vector<256x36xbf16>, vector<36x32xbf16>, vector<256x32xf32> -> vector<256x32xf32>
    %c0_7 = arith.constant 0 : index
    %c0_8 = arith.constant 0 : index
    %21 = vector.load %arg3[%c0_7, %c0_8] : memref<1x32xf32, #tpu.memory_space<vmem>>, vector<1x32xf32>
    %22 = vector.broadcast %21 : vector<1x32xf32> to vector<256x32xf32>
    %23 = arith.addf %20, %22 : vector<256x32xf32>
    %cst_9 = arith.constant 0.000000e+00 : f32
    %24 = vector.broadcast %cst_9 : f32 to vector<256x32xf32>
    %25 = arith.maximumf %23, %24 : vector<256x32xf32>
    %26 = arith.truncf %25 : vector<256x32xf32> to vector<256x32xbf16>
    %cst_10 = arith.constant 0.000000e+00 : bf16
    %27 = vector.broadcast %cst_10 : bf16 to vector<1088x32xbf16>
    %c0_11 = arith.constant 0 : index
    %c0_12 = arith.constant 0 : index
    %28 = vector.load %arg11[%c0_11, %c0_12] : memref<1088x32xbf16, #tpu.memory_space<vmem>>, vector<1088x32xbf16>
    tpu.vector_store %arg11[%c0_11, %c0_12], %27 {strides = array<i32>} : memref<1088x32xbf16, #tpu.memory_space<vmem>>, vector<1088x32xbf16>,
    %c416 = arith.constant 416 : index
    %c0_13 = arith.constant 0 : index
    %29 = vector.load %arg11[%c416, %c0_13] : memref<1088x32xbf16, #tpu.memory_space<vmem>>, vector<256x32xbf16>
    tpu.vector_store %arg11[%c416, %c0_13], %26 {strides = array<i32>} : memref<1088x32xbf16, #tpu.memory_space<vmem>>, vector<256x32xbf16>,
    %c314 = arith.constant 314 : index
    %c0_14 = arith.constant 0 : index
    %30 = vector.load %arg11[%c314, %c0_14] : memref<1088x32xbf16, #tpu.memory_space<vmem>>, vector<256x32xbf16>
    %c6_i32 = arith.constant 6 : i32
    %31 = vector.broadcast %c6_i32 : i32 to vector<256x1xi32>
    %32 = arith.cmpi sge, %16, %31 : vector<256x1xi32>
    %cst_15 = arith.constant 0.000000e+00 : bf16
    %33 = vector.broadcast %cst_15 : bf16 to vector<256x32xbf16>
    %34 = vector.shape_cast %32 : vector<256x1xi1> to vector<256x1xi1>
    %35 = vector.broadcast %34 : vector<256x1xi1> to vector<256x32xi1>
    %36 = arith.select %35, %30, %33 : vector<256x32xi1>, vector<256x32xbf16>
    %c320 = arith.constant 320 : index
    %c0_16 = arith.constant 0 : index
    %37 = vector.load %arg11[%c320, %c0_16] : memref<1088x32xbf16, #tpu.memory_space<vmem>>, vector<256x32xbf16>
    %c326 = arith.constant 326 : index
    %c0_17 = arith.constant 0 : index
    %38 = vector.load %arg11[%c326, %c0_17] : memref<1088x32xbf16, #tpu.memory_space<vmem>>, vector<256x32xbf16>
    %c10_i32 = arith.constant 10 : i32
    %39 = vector.broadcast %c10_i32 : i32 to vector<256x1xi32>
    %40 = arith.cmpi slt, %16, %39 : vector<256x1xi32>
    %cst_18 = arith.constant 0.000000e+00 : bf16
    %41 = vector.broadcast %cst_18 : bf16 to vector<256x32xbf16>
    %42 = vector.shape_cast %40 : vector<256x1xi1> to vector<256x1xi1>
    %43 = vector.broadcast %42 : vector<256x1xi1> to vector<256x32xi1>
    %44 = arith.select %43, %38, %41 : vector<256x32xi1>, vector<256x32xbf16>
    %c410 = arith.constant 410 : index
    %c0_19 = arith.constant 0 : index
    %45 = vector.load %arg11[%c410, %c0_19] : memref<1088x32xbf16, #tpu.memory_space<vmem>>, vector<256x32xbf16>
    %c6_i32_20 = arith.constant 6 : i32
    %46 = vector.broadcast %c6_i32_20 : i32 to vector<256x1xi32>
    %47 = arith.cmpi sge, %16, %46 : vector<256x1xi32>
    %cst_21 = arith.constant 0.000000e+00 : bf16
    %48 = vector.broadcast %cst_21 : bf16 to vector<256x32xbf16>
    %49 = vector.shape_cast %47 : vector<256x1xi1> to vector<256x1xi1>
    %50 = vector.broadcast %49 : vector<256x1xi1> to vector<256x32xi1>
    %51 = arith.select %50, %45, %48 : vector<256x32xi1>, vector<256x32xbf16>
    %c416_22 = arith.constant 416 : index
    %c0_23 = arith.constant 0 : index
    %52 = vector.load %arg11[%c416_22, %c0_23] : memref<1088x32xbf16, #tpu.memory_space<vmem>>, vector<256x32xbf16>
    %c422 = arith.constant 422 : index
    %c0_24 = arith.constant 0 : index
    %53 = vector.load %arg11[%c422, %c0_24] : memref<1088x32xbf16, #tpu.memory_space<vmem>>, vector<256x32xbf16>
    %c10_i32_25 = arith.constant 10 : i32
    %54 = vector.broadcast %c10_i32_25 : i32 to vector<256x1xi32>
    %55 = arith.cmpi slt, %16, %54 : vector<256x1xi32>
    %cst_26 = arith.constant 0.000000e+00 : bf16
    %56 = vector.broadcast %cst_26 : bf16 to vector<256x32xbf16>
    %57 = vector.shape_cast %55 : vector<256x1xi1> to vector<256x1xi1>
    %58 = vector.broadcast %57 : vector<256x1xi1> to vector<256x32xi1>
    %59 = arith.select %58, %53, %56 : vector<256x32xi1>, vector<256x32xbf16>
    %c506 = arith.constant 506 : index
    %c0_27 = arith.constant 0 : index
    %60 = vector.load %arg11[%c506, %c0_27] : memref<1088x32xbf16, #tpu.memory_space<vmem>>, vector<256x32xbf16>
    %c6_i32_28 = arith.constant 6 : i32
    %61 = vector.broadcast %c6_i32_28 : i32 to vector<256x1xi32>
    %62 = arith.cmpi sge, %16, %61 : vector<256x1xi32>
    %cst_29 = arith.constant 0.000000e+00 : bf16
    %63 = vector.broadcast %cst_29 : bf16 to vector<256x32xbf16>
    %64 = vector.shape_cast %62 : vector<256x1xi1> to vector<256x1xi1>
    %65 = vector.broadcast %64 : vector<256x1xi1> to vector<256x32xi1>
    %66 = arith.select %65, %60, %63 : vector<256x32xi1>, vector<256x32xbf16>
    %c512 = arith.constant 512 : index
    %c0_30 = arith.constant 0 : index
    %67 = vector.load %arg11[%c512, %c0_30] : memref<1088x32xbf16, #tpu.memory_space<vmem>>, vector<256x32xbf16>
    %c518 = arith.constant 518 : index
    %c0_31 = arith.constant 0 : index
    %68 = vector.load %arg11[%c518, %c0_31] : memref<1088x32xbf16, #tpu.memory_space<vmem>>, vector<256x32xbf16>
    %c10_i32_32 = arith.constant 10 : i32
    %69 = vector.broadcast %c10_i32_32 : i32 to vector<256x1xi32>
    %70 = arith.cmpi slt, %16, %69 : vector<256x1xi32>
    %cst_33 = arith.constant 0.000000e+00 : bf16
    %71 = vector.broadcast %cst_33 : bf16 to vector<256x32xbf16>
    %72 = vector.shape_cast %70 : vector<256x1xi1> to vector<256x1xi1>
    %73 = vector.broadcast %72 : vector<256x1xi1> to vector<256x32xi1>
    %74 = arith.select %73, %68, %71 : vector<256x32xi1>, vector<256x32xbf16>
    %75 = tpu.concatenate %36, %37, %44, %51, %52, %59, %66, %67, %74 in 1 : vector<256x32xbf16>, vector<256x32xbf16>, vector<256x32xbf16>, vector<256x32xbf16>, vector<256x32xbf16>, vector<256x32xbf16>, vector<256x32xbf16>, vector<256x32xbf16>, vector<256x32xbf16> -> vector<256x288xbf16>
    %c0_34 = arith.constant 0 : index
    %c0_35 = arith.constant 0 : index
    %c0_36 = arith.constant 0 : index
    %76 = vector.load %arg4[%c0_34, %c0_35, %c0_36] : memref<4x288x128xbf16, #tpu.memory_space<vmem>>, vector<1x288x128xbf16>
    %77 = vector.shape_cast %76 : vector<1x288x128xbf16> to vector<288x128xbf16>
    %cst_37 = arith.constant dense<0.000000e+00> : vector<256x128xf32>
    %78 = tpu.matmul %75, %77, %cst_37 {dimension_numbers = #tpu.dot_dimension_numbers<[1], [0], [0], [1], [0, 0, 1, 1], [], []>} : vector<256x288xbf16>, vector<288x128xbf16>, vector<256x128xf32> -> vector<256x128xf32>
    %c0_38 = arith.constant 0 : index
    %c0_39 = arith.constant 0 : index
    %c0_40 = arith.constant 0 : index
    %79 = vector.load %arg5[%c0_38, %c0_39, %c0_40] : memref<4x1x128xf32, #tpu.memory_space<vmem>>, vector<1x1x128xf32>
    %80 = vector.shape_cast %79 : vector<1x1x128xf32> to vector<1x128xf32>
    %81 = vector.broadcast %80 : vector<1x128xf32> to vector<256x128xf32>
    %82 = arith.addf %78, %81 : vector<256x128xf32>
    %cst_41 = arith.constant 0.000000e+00 : f32
    %83 = vector.broadcast %cst_41 : f32 to vector<256x128xf32>
    %84 = arith.maximumf %82, %83 : vector<256x128xf32>
    %85 = arith.truncf %84 : vector<256x128xf32> to vector<256x128xbf16>
    %c0_42 = arith.constant 0 : index
    %c0_43 = arith.constant 0 : index
    %c0_44 = arith.constant 0 : index
    %86 = vector.load %arg6[%c0_42, %c0_43, %c0_44] : memref<4x128x128xbf16, #tpu.memory_space<vmem>>, vector<1x128x128xbf16>
    %87 = vector.shape_cast %86 : vector<1x128x128xbf16> to vector<128x128xbf16>
    %cst_45 = arith.constant dense<0.000000e+00> : vector<256x128xf32>
    %88 = tpu.matmul %85, %87, %cst_45 {dimension_numbers = #tpu.dot_dimension_numbers<[1], [0], [0], [1], [0, 0, 1, 1], [], []>} : vector<256x128xbf16>, vector<128x128xbf16>, vector<256x128xf32> -> vector<256x128xf32>
    %c0_46 = arith.constant 0 : index
    %c0_47 = arith.constant 0 : index
    %c0_48 = arith.constant 0 : index
    %89 = vector.load %arg7[%c0_46, %c0_47, %c0_48] : memref<4x1x128xf32, #tpu.memory_space<vmem>>, vector<1x1x128xf32>
    %90 = vector.shape_cast %89 : vector<1x1x128xf32> to vector<1x128xf32>
    %91 = vector.broadcast %90 : vector<1x128xf32> to vector<256x128xf32>
    %92 = arith.addf %88, %91 : vector<256x128xf32>
    %cst_49 = arith.constant 0.000000e+00 : f32
    %93 = vector.broadcast %cst_49 : f32 to vector<256x128xf32>
    %94 = arith.maximumf %92, %93 : vector<256x128xf32>
    %95 = arith.truncf %94 : vector<256x128xf32> to vector<256x128xbf16>
    %c212 = arith.constant 212 : index
    %c0_50 = arith.constant 0 : index
    %96 = vector.load %arg11[%c212, %c0_50] : memref<1088x32xbf16, #tpu.memory_space<vmem>>, vector<256x32xbf16>
    %c12_i32 = arith.constant 12 : i32
    %97 = vector.broadcast %c12_i32 : i32 to vector<256x1xi32>
    %98 = arith.cmpi sge, %16, %97 : vector<256x1xi32>
    %cst_51 = arith.constant 0.000000e+00 : bf16
    %99 = vector.broadcast %cst_51 : bf16 to vector<256x32xbf16>
    %100 = vector.shape_cast %98 : vector<256x1xi1> to vector<256x1xi1>
    %101 = vector.broadcast %100 : vector<256x1xi1> to vector<256x32xi1>
    %102 = arith.select %101, %96, %99 : vector<256x32xi1>, vector<256x32xbf16>
    %c224 = arith.constant 224 : index
    %c0_52 = arith.constant 0 : index
    %103 = vector.load %arg11[%c224, %c0_52] : memref<1088x32xbf16, #tpu.memory_space<vmem>>, vector<256x32xbf16>
    %c236 = arith.constant 236 : index
    %c0_53 = arith.constant 0 : index
    %104 = vector.load %arg11[%c236, %c0_53] : memref<1088x32xbf16, #tpu.memory_space<vmem>>, vector<256x32xbf16>
    %c4_i32 = arith.constant 4 : i32
    %105 = vector.broadcast %c4_i32 : i32 to vector<256x1xi32>
    %106 = arith.cmpi slt, %16, %105 : vector<256x1xi32>
    %cst_54 = arith.constant 0.000000e+00 : bf16
    %107 = vector.broadcast %cst_54 : bf16 to vector<256x32xbf16>
    %108 = vector.shape_cast %106 : vector<256x1xi1> to vector<256x1xi1>
    %109 = vector.broadcast %108 : vector<256x1xi1> to vector<256x32xi1>
    %110 = arith.select %109, %104, %107 : vector<256x32xi1>, vector<256x32xbf16>
    %c404 = arith.constant 404 : index
    %c0_55 = arith.constant 0 : index
    %111 = vector.load %arg11[%c404, %c0_55] : memref<1088x32xbf16, #tpu.memory_space<vmem>>, vector<256x32xbf16>
    %c12_i32_56 = arith.constant 12 : i32
    %112 = vector.broadcast %c12_i32_56 : i32 to vector<256x1xi32>
    %113 = arith.cmpi sge, %16, %112 : vector<256x1xi32>
    %cst_57 = arith.constant 0.000000e+00 : bf16
    %114 = vector.broadcast %cst_57 : bf16 to vector<256x32xbf16>
    %115 = vector.shape_cast %113 : vector<256x1xi1> to vector<256x1xi1>
    %116 = vector.broadcast %115 : vector<256x1xi1> to vector<256x32xi1>
    %117 = arith.select %116, %111, %114 : vector<256x32xi1>, vector<256x32xbf16>
    %c416_58 = arith.constant 416 : index
    %c0_59 = arith.constant 0 : index
    %118 = vector.load %arg11[%c416_58, %c0_59] : memref<1088x32xbf16, #tpu.memory_space<vmem>>, vector<256x32xbf16>
    %c428 = arith.constant 428 : index
    %c0_60 = arith.constant 0 : index
    %119 = vector.load %arg11[%c428, %c0_60] : memref<1088x32xbf16, #tpu.memory_space<vmem>>, vector<256x32xbf16>
    %c4_i32_61 = arith.constant 4 : i32
    %120 = vector.broadcast %c4_i32_61 : i32 to vector<256x1xi32>
    %121 = arith.cmpi slt, %16, %120 : vector<256x1xi32>
    %cst_62 = arith.constant 0.000000e+00 : bf16
    %122 = vector.broadcast %cst_62 : bf16 to vector<256x32xbf16>
    %123 = vector.shape_cast %121 : vector<256x1xi1> to vector<256x1xi1>
    %124 = vector.broadcast %123 : vector<256x1xi1> to vector<256x32xi1>
    %125 = arith.select %124, %119, %122 : vector<256x32xi1>, vector<256x32xbf16>
    %c596 = arith.constant 596 : index
    %c0_63 = arith.constant 0 : index
    %126 = vector.load %arg11[%c596, %c0_63] : memref<1088x32xbf16, #tpu.memory_space<vmem>>, vector<256x32xbf16>
    %c12_i32_64 = arith.constant 12 : i32
    %127 = vector.broadcast %c12_i32_64 : i32 to vector<256x1xi32>
    %128 = arith.cmpi sge, %16, %127 : vector<256x1xi32>
    %cst_65 = arith.constant 0.000000e+00 : bf16
    %129 = vector.broadcast %cst_65 : bf16 to vector<256x32xbf16>
    %130 = vector.shape_cast %128 : vector<256x1xi1> to vector<256x1xi1>
    %131 = vector.broadcast %130 : vector<256x1xi1> to vector<256x32xi1>
    %132 = arith.select %131, %126, %129 : vector<256x32xi1>, vector<256x32xbf16>
    %c608 = arith.constant 608 : index
    %c0_66 = arith.constant 0 : index
    %133 = vector.load %arg11[%c608, %c0_66] : memref<1088x32xbf16, #tpu.memory_space<vmem>>, vector<256x32xbf16>
    %c620 = arith.constant 620 : index
    %c0_67 = arith.constant 0 : index
    %134 = vector.load %arg11[%c620, %c0_67] : memref<1088x32xbf16, #tpu.memory_space<vmem>>, vector<256x32xbf16>
    %c4_i32_68 = arith.constant 4 : i32
    %135 = vector.broadcast %c4_i32_68 : i32 to vector<256x1xi32>
    %136 = arith.cmpi slt, %16, %135 : vector<256x1xi32>
    %cst_69 = arith.constant 0.000000e+00 : bf16
    %137 = vector.broadcast %cst_69 : bf16 to vector<256x32xbf16>
    %138 = vector.shape_cast %136 : vector<256x1xi1> to vector<256x1xi1>
    %139 = vector.broadcast %138 : vector<256x1xi1> to vector<256x32xi1>
    %140 = arith.select %139, %134, %137 : vector<256x32xi1>, vector<256x32xbf16>
    %141 = tpu.concatenate %102, %103, %110, %117, %118, %125, %132, %133, %140 in 1 : vector<256x32xbf16>, vector<256x32xbf16>, vector<256x32xbf16>, vector<256x32xbf16>, vector<256x32xbf16>, vector<256x32xbf16>, vector<256x32xbf16>, vector<256x32xbf16>, vector<256x32xbf16> -> vector<256x288xbf16>
    %c1 = arith.constant 1 : index
    %c0_70 = arith.constant 0 : index
    %c0_71 = arith.constant 0 : index
    %142 = vector.load %arg4[%c1, %c0_70, %c0_71] : memref<4x288x128xbf16, #tpu.memory_space<vmem>>, vector<1x288x128xbf16>
    %143 = vector.shape_cast %142 : vector<1x288x128xbf16> to vector<288x128xbf16>
    %cst_72 = arith.constant dense<0.000000e+00> : vector<256x128xf32>
    %144 = tpu.matmul %141, %143, %cst_72 {dimension_numbers = #tpu.dot_dimension_numbers<[1], [0], [0], [1], [0, 0, 1, 1], [], []>} : vector<256x288xbf16>, vector<288x128xbf16>, vector<256x128xf32> -> vector<256x128xf32>
    %c1_73 = arith.constant 1 : index
    %c0_74 = arith.constant 0 : index
    %c0_75 = arith.constant 0 : index
    %145 = vector.load %arg5[%c1_73, %c0_74, %c0_75] : memref<4x1x128xf32, #tpu.memory_space<vmem>>, vector<1x1x128xf32>
    %146 = vector.shape_cast %145 : vector<1x1x128xf32> to vector<1x128xf32>
    %147 = vector.broadcast %146 : vector<1x128xf32> to vector<256x128xf32>
    %148 = arith.addf %144, %147 : vector<256x128xf32>
    %cst_76 = arith.constant 0.000000e+00 : f32
    %149 = vector.broadcast %cst_76 : f32 to vector<256x128xf32>
    %150 = arith.maximumf %148, %149 : vector<256x128xf32>
    %151 = arith.truncf %150 : vector<256x128xf32> to vector<256x128xbf16>
    %c1_77 = arith.constant 1 : index
    %c0_78 = arith.constant 0 : index
    %c0_79 = arith.constant 0 : index
    %152 = vector.load %arg6[%c1_77, %c0_78, %c0_79] : memref<4x128x128xbf16, #tpu.memory_space<vmem>>, vector<1x128x128xbf16>
    %153 = vector.shape_cast %152 : vector<1x128x128xbf16> to vector<128x128xbf16>
    %cst_80 = arith.constant dense<0.000000e+00> : vector<256x128xf32>
    %154 = tpu.matmul %151, %153, %cst_80 {dimension_numbers = #tpu.dot_dimension_numbers<[1], [0], [0], [1], [0, 0, 1, 1], [], []>} : vector<256x128xbf16>, vector<128x128xbf16>, vector<256x128xf32> -> vector<256x128xf32>
    %c1_81 = arith.constant 1 : index
    %c0_82 = arith.constant 0 : index
    %c0_83 = arith.constant 0 : index
    %155 = vector.load %arg7[%c1_81, %c0_82, %c0_83] : memref<4x1x128xf32, #tpu.memory_space<vmem>>, vector<1x1x128xf32>
    %156 = vector.shape_cast %155 : vector<1x1x128xf32> to vector<1x128xf32>
    %157 = vector.broadcast %156 : vector<1x128xf32> to vector<256x128xf32>
    %158 = arith.addf %154, %157 : vector<256x128xf32>
    %cst_84 = arith.constant 0.000000e+00 : f32
    %159 = vector.broadcast %cst_84 : f32 to vector<256x128xf32>
    %160 = arith.maximumf %158, %159 : vector<256x128xf32>
    %161 = arith.truncf %160 : vector<256x128xf32> to vector<256x128xbf16>
    %c416_85 = arith.constant 416 : index
    %c0_86 = arith.constant 0 : index
    %162 = vector.load %arg11[%c416_85, %c0_86] : memref<1088x32xbf16, #tpu.memory_space<vmem>>, vector<256x32xbf16>
    %c2 = arith.constant 2 : index
    %c0_87 = arith.constant 0 : index
    %c0_88 = arith.constant 0 : index
    %163 = vector.load %arg4[%c2, %c0_87, %c0_88] : memref<4x288x128xbf16, #tpu.memory_space<vmem>>, vector<1x288x128xbf16>
    %164 = vector.shape_cast %163 : vector<1x288x128xbf16> to vector<288x128xbf16>
    %165 = vector.extract_strided_slice %164 {offsets = [128, 0], sizes = [32, 128], strides = [1, 1]} : vector<288x128xbf16> to vector<32x128xbf16>
    %cst_89 = arith.constant dense<0.000000e+00> : vector<256x128xf32>
    %166 = tpu.matmul %162, %165, %cst_89 {dimension_numbers = #tpu.dot_dimension_numbers<[1], [0], [0], [1], [0, 0, 1, 1], [], []>} : vector<256x32xbf16>, vector<32x128xbf16>, vector<256x128xf32> -> vector<256x128xf32>
    %c2_90 = arith.constant 2 : index
    %c0_91 = arith.constant 0 : index
    %c0_92 = arith.constant 0 : index
    %167 = vector.load %arg5[%c2_90, %c0_91, %c0_92] : memref<4x1x128xf32, #tpu.memory_space<vmem>>, vector<1x1x128xf32>
    %168 = vector.shape_cast %167 : vector<1x1x128xf32> to vector<1x128xf32>
    %169 = vector.broadcast %168 : vector<1x128xf32> to vector<256x128xf32>
    %170 = arith.addf %166, %169 : vector<256x128xf32>
    %cst_93 = arith.constant 0.000000e+00 : f32
    %171 = vector.broadcast %cst_93 : f32 to vector<256x128xf32>
    %172 = arith.maximumf %170, %171 : vector<256x128xf32>
    %173 = arith.truncf %172 : vector<256x128xf32> to vector<256x128xbf16>
    %c2_94 = arith.constant 2 : index
    %c0_95 = arith.constant 0 : index
    %c0_96 = arith.constant 0 : index
    %174 = vector.load %arg6[%c2_94, %c0_95, %c0_96] : memref<4x128x128xbf16, #tpu.memory_space<vmem>>, vector<1x128x128xbf16>
    %175 = vector.shape_cast %174 : vector<1x128x128xbf16> to vector<128x128xbf16>
    %cst_97 = arith.constant dense<0.000000e+00> : vector<256x128xf32>
    %176 = tpu.matmul %173, %175, %cst_97 {dimension_numbers = #tpu.dot_dimension_numbers<[1], [0], [0], [1], [0, 0, 1, 1], [], []>} : vector<256x128xbf16>, vector<128x128xbf16>, vector<256x128xf32> -> vector<256x128xf32>
    %c2_98 = arith.constant 2 : index
    %c0_99 = arith.constant 0 : index
    %c0_100 = arith.constant 0 : index
    %177 = vector.load %arg7[%c2_98, %c0_99, %c0_100] : memref<4x1x128xf32, #tpu.memory_space<vmem>>, vector<1x1x128xf32>
    %178 = vector.shape_cast %177 : vector<1x1x128xf32> to vector<1x128xf32>
    %179 = vector.broadcast %178 : vector<1x128xf32> to vector<256x128xf32>
    %180 = arith.addf %176, %179 : vector<256x128xf32>
    %cst_101 = arith.constant 0.000000e+00 : f32
    %181 = vector.broadcast %cst_101 : f32 to vector<256x128xf32>
    %182 = arith.maximumf %180, %181 : vector<256x128xf32>
    %183 = arith.truncf %182 : vector<256x128xf32> to vector<256x128xbf16>
    %c416_102 = arith.constant 416 : index
    %c0_103 = arith.constant 0 : index
    %184 = vector.load %arg11[%c416_102, %c0_103] : memref<1088x32xbf16, #tpu.memory_space<vmem>>, vector<256x32xbf16>
    %c3 = arith.constant 3 : index
    %c0_104 = arith.constant 0 : index
    %c0_105 = arith.constant 0 : index
    %185 = vector.load %arg4[%c3, %c0_104, %c0_105] : memref<4x288x128xbf16, #tpu.memory_space<vmem>>, vector<1x288x128xbf16>
    %186 = vector.shape_cast %185 : vector<1x288x128xbf16> to vector<288x128xbf16>
    %187 = vector.extract_strided_slice %186 {offsets = [128, 0], sizes = [32, 128], strides = [1, 1]} : vector<288x128xbf16> to vector<32x128xbf16>
    %cst_106 = arith.constant dense<0.000000e+00> : vector<256x128xf32>
    %188 = tpu.matmul %184, %187, %cst_106 {dimension_numbers = #tpu.dot_dimension_numbers<[1], [0], [0], [1], [0, 0, 1, 1], [], []>} : vector<256x32xbf16>, vector<32x128xbf16>, vector<256x128xf32> -> vector<256x128xf32>
    %c3_107 = arith.constant 3 : index
    %c0_108 = arith.constant 0 : index
    %c0_109 = arith.constant 0 : index
    %189 = vector.load %arg5[%c3_107, %c0_108, %c0_109] : memref<4x1x128xf32, #tpu.memory_space<vmem>>, vector<1x1x128xf32>
    %190 = vector.shape_cast %189 : vector<1x1x128xf32> to vector<1x128xf32>
    %191 = vector.broadcast %190 : vector<1x128xf32> to vector<256x128xf32>
    %192 = arith.addf %188, %191 : vector<256x128xf32>
    %cst_110 = arith.constant 0.000000e+00 : f32
    %193 = vector.broadcast %cst_110 : f32 to vector<256x128xf32>
    %194 = arith.maximumf %192, %193 : vector<256x128xf32>
    %195 = arith.truncf %194 : vector<256x128xf32> to vector<256x128xbf16>
    %c3_111 = arith.constant 3 : index
    %c0_112 = arith.constant 0 : index
    %c0_113 = arith.constant 0 : index
    %196 = vector.load %arg6[%c3_111, %c0_112, %c0_113] : memref<4x128x128xbf16, #tpu.memory_space<vmem>>, vector<1x128x128xbf16>
    %197 = vector.shape_cast %196 : vector<1x128x128xbf16> to vector<128x128xbf16>
    %cst_114 = arith.constant dense<0.000000e+00> : vector<256x128xf32>
    %198 = tpu.matmul %195, %197, %cst_114 {dimension_numbers = #tpu.dot_dimension_numbers<[1], [0], [0], [1], [0, 0, 1, 1], [], []>} : vector<256x128xbf16>, vector<128x128xbf16>, vector<256x128xf32> -> vector<256x128xf32>
    %c3_115 = arith.constant 3 : index
    %c0_116 = arith.constant 0 : index
    %c0_117 = arith.constant 0 : index
    %199 = vector.load %arg7[%c3_115, %c0_116, %c0_117] : memref<4x1x128xf32, #tpu.memory_space<vmem>>, vector<1x1x128xf32>
    %200 = vector.shape_cast %199 : vector<1x1x128xf32> to vector<1x128xf32>
    %201 = vector.broadcast %200 : vector<1x128xf32> to vector<256x128xf32>
    %202 = arith.addf %198, %201 : vector<256x128xf32>
    %cst_118 = arith.constant 0.000000e+00 : f32
    %203 = vector.broadcast %cst_118 : f32 to vector<256x128xf32>
    %204 = arith.maximumf %202, %203 : vector<256x128xf32>
    %205 = arith.truncf %204 : vector<256x128xf32> to vector<256x128xbf16>
    %206 = tpu.concatenate %95, %161, %183, %205 in 1 : vector<256x128xbf16>, vector<256x128xbf16>, vector<256x128xbf16>, vector<256x128xbf16> -> vector<256x512xbf16>
    %c0_119 = arith.constant 0 : index
    %c0_120 = arith.constant 0 : index
    %207 = vector.load %arg8[%c0_119, %c0_120] : memref<512x128xbf16, #tpu.memory_space<vmem>>, vector<512x128xbf16>
    %cst_121 = arith.constant dense<0.000000e+00> : vector<256x128xf32>
    %208 = tpu.matmul %206, %207, %cst_121 {dimension_numbers = #tpu.dot_dimension_numbers<[1], [0], [0], [1], [0, 0, 1, 1], [], []>} : vector<256x512xbf16>, vector<512x128xbf16>, vector<256x128xf32> -> vector<256x128xf32>
    %c0_122 = arith.constant 0 : index
    %c0_123 = arith.constant 0 : index
    %209 = vector.load %arg9[%c0_122, %c0_123] : memref<1x128xf32, #tpu.memory_space<vmem>>, vector<1x128xf32>
    %210 = vector.broadcast %209 : vector<1x128xf32> to vector<256x128xf32>
    %211 = arith.addf %208, %210 : vector<256x128xf32>
    %c0_124 = arith.constant 0 : index
    %c0_125 = arith.constant 0 : index
    %c0_126 = arith.constant 0 : index
    %212 = vector.load %arg10[%c0_124, %c0_125, %c0_126] : memref<1x256x128xf32, #tpu.memory_space<vmem>>, vector<1x256x128xf32>
    %213 = vector.shape_cast %212 : vector<1x256x128xf32> to vector<256x128xf32>
    %214 = vector.shape_cast %211 : vector<256x128xf32> to vector<1x256x128xf32>
    tpu.vector_store %arg10[%c0_124, %c0_125, %c0_126], %214 {strides = array<i32>} : memref<1x256x128xf32, #tpu.memory_space<vmem>>, vector<1x256x128xf32>,
    return
  }
  func.func @transform_0(%arg0: i32) -> (i32, i32, i32) {
    %c0_i32 = arith.constant 0 : i32
    %c0_i32_0 = arith.constant 0 : i32
    %c0_i32_1 = arith.constant 0 : i32
    return %arg0, %c0_i32, %c0_i32_0 : i32, i32, i32
  }
  func.func @transform_1(%arg0: i32) -> (i32, i32) {
    %c0_i32 = arith.constant 0 : i32
    %c0_i32_0 = arith.constant 0 : i32
    %c0_i32_1 = arith.constant 0 : i32
    return %c0_i32, %c0_i32_0 : i32, i32
  }
  func.func @transform_2(%arg0: i32) -> (i32, i32) {
    %c0_i32 = arith.constant 0 : i32
    %c0_i32_0 = arith.constant 0 : i32
    %c0_i32_1 = arith.constant 0 : i32
    return %c0_i32, %c0_i32_0 : i32, i32
  }
  func.func @transform_3(%arg0: i32) -> (i32, i32, i32) {
    %c0_i32 = arith.constant 0 : i32
    %c0_i32_0 = arith.constant 0 : i32
    %c0_i32_1 = arith.constant 0 : i32
    %c0_i32_2 = arith.constant 0 : i32
    return %c0_i32, %c0_i32_0, %c0_i32_1 : i32, i32, i32
  }
  func.func @transform_4(%arg0: i32) -> (i32, i32, i32) {
    %c0_i32 = arith.constant 0 : i32
    %c0_i32_0 = arith.constant 0 : i32
    %c0_i32_1 = arith.constant 0 : i32
    %c0_i32_2 = arith.constant 0 : i32
    return %c0_i32, %c0_i32_0, %c0_i32_1 : i32, i32, i32
  }
  func.func @transform_5(%arg0: i32) -> (i32, i32, i32) {
    %c0_i32 = arith.constant 0 : i32
    %c0_i32_0 = arith.constant 0 : i32
    %c0_i32_1 = arith.constant 0 : i32
    %c0_i32_2 = arith.constant 0 : i32
    return %c0_i32, %c0_i32_0, %c0_i32_1 : i32, i32, i32
  }
  func.func @transform_6(%arg0: i32) -> (i32, i32, i32) {
    %c0_i32 = arith.constant 0 : i32
    %c0_i32_0 = arith.constant 0 : i32
    %c0_i32_1 = arith.constant 0 : i32
    %c0_i32_2 = arith.constant 0 : i32
    return %c0_i32, %c0_i32_0, %c0_i32_1 : i32, i32, i32
  }
  func.func @transform_7(%arg0: i32) -> (i32, i32) {
    %c0_i32 = arith.constant 0 : i32
    %c0_i32_0 = arith.constant 0 : i32
    %c0_i32_1 = arith.constant 0 : i32
    return %c0_i32, %c0_i32_0 : i32, i32
  }
  func.func @transform_8(%arg0: i32) -> (i32, i32) {
    %c0_i32 = arith.constant 0 : i32
    %c0_i32_0 = arith.constant 0 : i32
    %c0_i32_1 = arith.constant 0 : i32
    return %c0_i32, %c0_i32_0 : i32, i32
  }
  func.func @transform_9(%arg0: i32) -> (i32, i32, i32) {
    %c0_i32 = arith.constant 0 : i32
    %c0_i32_0 = arith.constant 0 : i32
    %c0_i32_1 = arith.constant 0 : i32
    return %arg0, %c0_i32, %c0_i32_0 : i32, i32, i32
  }
}

</mosaic_0001>

<llo_original>
// kernel: tpu_custom_call.1
$region0: #{tpu_custom_call.1}
  #allocation0 [shape = 'u32[]', space=smem, size = 0x4, offset = 0x4, fixed_abs, tag = 'smem constant byte address 0x4 - core index']
  #allocation1 [shape = 'u32[144,128]{1,0:T(1,128)}', space=vmem, size = 0x12000, scoped, tag = 'internal scratch']
  #allocation2 [shape = 'bf16[1088,32]{1,0:T(8,128)(2,1)}', space=vmem, size = 0x44000, scoped, tag = 'scratch operand']
  %s0 = inlined_call_operand.vmem [shape: bf16[2,256,36], index: 0, kind: input, shape index: {}]
  %s1 = inlined_call_operand.vmem [shape: bf16[36,32], index: 1, kind: input, shape index: {}]
  %s2 = inlined_call_operand.vmem [shape: f32[1,32], index: 2, kind: input, shape index: {}]
  %s3 = inlined_call_operand.hbm [shape: bf16[4,288,128], index: 3, kind: input, shape index: {}]
  %s4 = inlined_call_operand.vmem [shape: f32[4,1,128], index: 4, kind: input, shape index: {}]
  %s5 = inlined_call_operand.vmem [shape: bf16[4,128,128], index: 5, kind: input, shape index: {}]
  %s6 = inlined_call_operand.vmem [shape: f32[4,1,128], index: 6, kind: input, shape index: {}]
  %s7 = inlined_call_operand.hbm [shape: bf16[512,128], index: 7, kind: input, shape index: {}]
  %s8 = inlined_call_operand.vmem [shape: f32[1,128], index: 8, kind: input, shape index: {}]
  %s9 = inlined_call_operand.hbm [shape: f32[2,256,128], index: 9, kind: output, shape index: {}]
  %s10 = sld [smem:[#allocation0]]
  $region77: #{tpu_custom_call.1} parent=0
    _
  %s12 = ssub.s32 1, %s10
  %s13 = scalar_select 0, %s12, %s10
  $region1: #{tpu_custom_call.1} parent=0
    #allocation3 [shape = 'u8[294912]{0}', space=vmem, size = 0x48000, scoped, tag = 'input window, operand 3, single buffered']
    #allocation4 [shape = 's32[2]{0}', space=sflag, size = 0x8, scoped, tag = 'scoped memory for tpu_custom_call.1']
    #allocation5 [shape = 's32[2]{0}', space=sflag, size = 0x8, scoped, tag = 'scoped memory for tpu_custom_call.1']
    #allocation6 [shape = 'u8[131072]{0}', space=vmem, size = 0x20000, scoped, tag = 'input window, operand 7, single buffered']
    #allocation7 [shape = 's32[1]{0}', space=sflag, size = 0x4, scoped, tag = 'scoped memory for tpu_custom_call.1']
    #allocation8 [shape = 'u8[262144]{0}', space=vmem, size = 0x40000, scoped, tag = 'output window, operand 0']
    %14 = vsyncpa [#allocation4], 0
    %15 = vsyncpa [#allocation7], 0
    %16 = vsyncpa [#allocation5], 0
    %s17 = scalar_lea.sflag [#allocation5], 1
    %18 = vsyncpa %s17, 0
    loop: start=0, step=1, limit=4
    $region2: #{tpu_custom_call.1} parent=1 // loop_pre_header
      _
    $region3: #{tpu_custom_call.1} parent=1 // loop_header
      %s20 = sphi 0, %s24
      %p21 = scmp.ge.s32.totalorder %s20, 4
      %s30 = sphi 0, %s32
      %s33 = sphi 0, %s30
      %s34 = sphi 0, %s33
      %s50 = sphi 0, %s34
      %s54 = sphi 0, %s54
      %s56 = sphi 0, %s54
      %s57 = sphi 0, %s56
      %s71 = sphi 0, %s57
      %s75 = sphi 0, %s75
      %s77 = sphi 0, %s75
      %s78 = sphi 0, %s77
      %s92 = sphi 0, %s78
      %s96 = sphi 0, %s96
      %s98 = sphi 0, %s96
      %s99 = sphi 0, %s98
      %s113 = sphi 0, %s99
      %s117 = sphi 0, %s117
      %s119 = sphi 0, %s117
      %s120 = sphi 0, %s119
      %s134 = sphi 0, %s120
      %s138 = sphi 0, %s138
      %s140 = sphi 0, %s138
      %s141 = sphi 0, %s140
      %s155 = sphi 0, %s141
      %s159 = sphi 0, %s159
      %s161 = sphi 0, %s159
      %s162 = sphi 0, %s161
      %s176 = sphi 0, %s162
      %s180 = sphi 0, %s180
      %s182 = sphi 0, %s180
      %s183 = sphi 0, %s182
      %s197 = sphi 0, %s183
      %s201 = sphi 0, %s201
      %s203 = sphi 0, %s201
      %s204 = sphi 0, %s203
      %s218 = sphi 0, %s204
      %s224 = sphi 0, %s226
      %s227 = sphi 0, %s224
      %s228 = sphi 0, %s227
      %s244 = sphi 0, %s228
    $region4: #{tpu_custom_call.1} parent=1 // loop_header_branch
      %23 = sbr.rel (%p21) target = $region8
    $region5: #{tpu_custom_call.1} parent=1 // loop_body
      %s25 = ssub.s32 %s20, 1
      %s26 = ssub.s32 %s20, 2
      %s27 = sadd.s32 %s20, 1
      %s28 = ssub.s32 %s20, %s27
      %p29 = scmp.eq.s32.totalorder %s28, 0
      %s31 = sadd.s32 %s30, 1
      %s32 = scalar_select %p29, %s30, %s31
      %p35 = pneg %p29
      %p36 = scmp.eq.s32.totalorder %s20, 1
      %p37 = por %p35, %p36
      %p38 = scmp.ne.s32.totalorder %s30, %s33
      %p39 = scmp.eq.s32.totalorder %s20, 0
      %p40 = por %p38, %p39
      %p41 = scmp.ne.s32.totalorder %s30, %s33
      %p42 = scmp.eq.s32.totalorder %s25, 1
      %p43 = por %p41, %p42
      %p44 = scmp.ne.s32.totalorder %s33, %s34
      %p45 = scmp.eq.s32.totalorder %s25, 0
      %p46 = por %p44, %p45
      %p47 = scmp.ne.s32.totalorder %s33, %s34
      %p48 = scmp.eq.s32.totalorder %s26, 1
      %p49 = por %p47, %p48
      %p51 = scmp.ne.s32.totalorder %s34, %s50
      %p52 = scmp.eq.s32.totalorder %s26, 0
      %p53 = por %p51, %p52
      %s55 = sadd.s32 %s54, 1
      %p58 = scmp.eq.s32.totalorder %s20, 1
      %p59 = scmp.ne.s32.totalorder %s54, %s56
      %p60 = scmp.eq.s32.totalorder %s20, 0
      %p61 = por %p59, %p60
      %p62 = scmp.ne.s32.totalorder %s54, %s56
      %p63 = scmp.eq.s32.totalorder %s25, 1
      %p64 = por %p62, %p63
      %p65 = scmp.ne.s32.totalorder %s56, %s57
      %p66 = scmp.eq.s32.totalorder %s25, 0
      %p67 = por %p65, %p66
      %p68 = scmp.ne.s32.totalorder %s56, %s57
      %p69 = scmp.eq.s32.totalorder %s26, 1
      %p70 = por %p68, %p69
      %p72 = scmp.ne.s32.totalorder %s57, %s71
      %p73 = scmp.eq.s32.totalorder %s26, 0
      %p74 = por %p72, %p73
      %s76 = sadd.s32 %s75, 1
      %p79 = scmp.eq.s32.totalorder %s20, 1
      %p80 = scmp.ne.s32.totalorder %s75, %s77
      %p81 = scmp.eq.s32.totalorder %s20, 0
      %p82 = por %p80, %p81
      %p83 = scmp.ne.s32.totalorder %s75, %s77
      %p84 = scmp.eq.s32.totalorder %s25, 1
      %p85 = por %p83, %p84
      %p86 = scmp.ne.s32.totalorder %s77, %s78
      %p87 = scmp.eq.s32.totalorder %s25, 0
      %p88 = por %p86, %p87
      %p89 = scmp.ne.s32.totalorder %s77, %s78
      %p90 = scmp.eq.s32.totalorder %s26, 1
      %p91 = por %p89, %p90
      %p93 = scmp.ne.s32.totalorder %s78, %s92
      %p94 = scmp.eq.s32.totalorder %s26, 0
      %p95 = por %p93, %p94
      %s97 = sadd.s32 %s96, 1
      %p100 = scmp.eq.s32.totalorder %s20, 1
      %p101 = scmp.ne.s32.totalorder %s96, %s98
      %p102 = scmp.eq.s32.totalorder %s20, 0
      %p103 = por %p101, %p102
      %p104 = scmp.ne.s32.totalorder %s96, %s98
      %p105 = scmp.eq.s32.totalorder %s25, 1
      %p106 = por %p104, %p105
      %p107 = scmp.ne.s32.totalorder %s98, %s99
      %p108 = scmp.eq.s32.totalorder %s25, 0
      %p109 = por %p107, %p108
      %p110 = scmp.ne.s32.totalorder %s98, %s99
      %p111 = scmp.eq.s32.totalorder %s26, 1
      %p112 = por %p110, %p111
      %p114 = scmp.ne.s32.totalorder %s99, %s113
      %p115 = scmp.eq.s32.totalorder %s26, 0
      %p116 = por %p114, %p115
      %s118 = sadd.s32 %s117, 1
      %p121 = scmp.eq.s32.totalorder %s20, 1
      %p122 = scmp.ne.s32.totalorder %s117, %s119
      %p123 = scmp.eq.s32.totalorder %s20, 0
      %p124 = por %p122, %p123
      %p125 = scmp.ne.s32.totalorder %s117, %s119
      %p126 = scmp.eq.s32.totalorder %s25, 1
      %p127 = por %p125, %p126
      %p128 = scmp.ne.s32.totalorder %s119, %s120
      %p129 = scmp.eq.s32.totalorder %s25, 0
      %p130 = por %p128, %p129
      %p131 = scmp.ne.s32.totalorder %s119, %s120
      %p132 = scmp.eq.s32.totalorder %s26, 1
      %p133 = por %p131, %p132
      %p135 = scmp.ne.s32.totalorder %s120, %s134
      %p136 = scmp.eq.s32.totalorder %s26, 0
      %p137 = por %p135, %p136
      %s139 = sadd.s32 %s138, 1
      %p142 = scmp.eq.s32.totalorder %s20, 1
      %p143 = scmp.ne.s32.totalorder %s138, %s140
      %p144 = scmp.eq.s32.totalorder %s20, 0
      %p145 = por %p143, %p144
      %p146 = scmp.ne.s32.totalorder %s138, %s140
      %p147 = scmp.eq.s32.totalorder %s25, 1
      %p148 = por %p146, %p147
      %p149 = scmp.ne.s32.totalorder %s140, %s141
      %p150 = scmp.eq.s32.totalorder %s25, 0
      %p151 = por %p149, %p150
      %p152 = scmp.ne.s32.totalorder %s140, %s141
      %p153 = scmp.eq.s32.totalorder %s26, 1
      %p154 = por %p152, %p153
      %p156 = scmp.ne.s32.totalorder %s141, %s155
      %p157 = scmp.eq.s32.totalorder %s26, 0
      %p158 = por %p156, %p157
      %s160 = sadd.s32 %s159, 1
      %p163 = scmp.eq.s32.totalorder %s20, 1
      %p164 = scmp.ne.s32.totalorder %s159, %s161
      %p165 = scmp.eq.s32.totalorder %s20, 0
      %p166 = por %p164, %p165
      %p167 = scmp.ne.s32.totalorder %s159, %s161
      %p168 = scmp.eq.s32.totalorder %s25, 1
      %p169 = por %p167, %p168
      %p170 = scmp.ne.s32.totalorder %s161, %s162
      %p171 = scmp.eq.s32.totalorder %s25, 0
      %p172 = por %p170, %p171
      %p173 = scmp.ne.s32.totalorder %s161, %s162
      %p174 = scmp.eq.s32.totalorder %s26, 1
      %p175 = por %p173, %p174
      %p177 = scmp.ne.s32.totalorder %s162, %s176
      %p178 = scmp.eq.s32.totalorder %s26, 0
      %p179 = por %p177, %p178
      %s181 = sadd.s32 %s180, 1
      %p184 = scmp.eq.s32.totalorder %s20, 1
      %p185 = scmp.ne.s32.totalorder %s180, %s182
      %p186 = scmp.eq.s32.totalorder %s20, 0
      %p187 = por %p185, %p186
      %p188 = scmp.ne.s32.totalorder %s180, %s182
      %p189 = scmp.eq.s32.totalorder %s25, 1
      %p190 = por %p188, %p189
      %p191 = scmp.ne.s32.totalorder %s182, %s183
      %p192 = scmp.eq.s32.totalorder %s25, 0
      %p193 = por %p191, %p192
      %p194 = scmp.ne.s32.totalorder %s182, %s183
      %p195 = scmp.eq.s32.totalorder %s26, 1
      %p196 = por %p194, %p195
      %p198 = scmp.ne.s32.totalorder %s183, %s197
      %p199 = scmp.eq.s32.totalorder %s26, 0
      %p200 = por %p198, %p199
      %s202 = sadd.s32 %s201, 1
      %p205 = scmp.eq.s32.totalorder %s20, 1
      %p206 = scmp.ne.s32.totalorder %s201, %s203
      %p207 = scmp.eq.s32.totalorder %s20, 0
      %p208 = por %p206, %p207
      %p209 = scmp.ne.s32.totalorder %s201, %s203
      %p210 = scmp.eq.s32.totalorder %s25, 1
      %p211 = por %p209, %p210
      %p212 = scmp.ne.s32.totalorder %s203, %s204
      %p213 = scmp.eq.s32.totalorder %s25, 0
      %p214 = por %p212, %p213
      %p215 = scmp.ne.s32.totalorder %s203, %s204
      %p216 = scmp.eq.s32.totalorder %s26, 1
      %p217 = por %p215, %p216
      %p219 = scmp.ne.s32.totalorder %s204, %s218
      %p220 = scmp.eq.s32.totalorder %s26, 0
      %p221 = por %p219, %p220
      %s222 = ssub.s32 %s20, %s27
      %p223 = scmp.eq.s32.totalorder %s222, 0
      %s225 = sadd.s32 %s224, 1
      %s226 = scalar_select %p223, %s224, %s225
      %p229 = pneg %p223
      %p230 = scmp.eq.s32.totalorder %s20, 1
      %p231 = por %p229, %p230
      %p232 = scmp.ne.s32.totalorder %s224, %s227
      %p233 = scmp.eq.s32.totalorder %s20, 0
      %p234 = por %p232, %p233
      %p235 = scmp.ne.s32.totalorder %s224, %s227
      %p236 = scmp.eq.s32.totalorder %s25, 1
      %p237 = por %p235, %p236
      %p238 = scmp.ne.s32.totalorder %s227, %s228
      %p239 = scmp.eq.s32.totalorder %s25, 0
      %p240 = por %p238, %p239
      %p241 = scmp.ne.s32.totalorder %s227, %s228
      %p242 = scmp.eq.s32.totalorder %s26, 1
      %p243 = por %p241, %p242
      %p245 = scmp.ne.s32.totalorder %s228, %s244
      %p246 = scmp.eq.s32.totalorder %s26, 0
      %p247 = por %p245, %p246
      %p248 = scmp.le.s32.totalorder 1, %s20
      %p249 = scmp.lt.s32.totalorder %s20, 3
      %p250 = pnand %p248, %p249
      %p251 = pneg %p250
      // Predicated region
      $region9: #{tpu_custom_call.1} parent=5 // pred_check
        _
      $region10: #{tpu_custom_call.1} parent=5 // pred_check_branch
        %253 = sbr.rel (%p250) target = $region12
      $region11: #{tpu_custom_call.1} parent=5 // pred_region
        %s254 = ssub.s32 %s20, 1
        // Predicated region
        $region13: #{tpu_custom_call.1} parent=11 // pred_check
          %p255 = pneg %p67
        $region14: #{tpu_custom_call.1} parent=11 // pred_check_branch
          %257 = sbr.rel (%p255) target = $region16
        $region15: #{tpu_custom_call.1} parent=11 // pred_region
          _
        $region16: #{tpu_custom_call.1} parent=11 // pred_fallthru
          _
        // Predicated region
        $region17: #{tpu_custom_call.1} parent=11 // pred_check
          %p258 = pneg %p88
        $region18: #{tpu_custom_call.1} parent=11 // pred_check_branch
          %260 = sbr.rel (%p258) target = $region20
        $region19: #{tpu_custom_call.1} parent=11 // pred_region
          _
        $region20: #{tpu_custom_call.1} parent=11 // pred_fallthru
          _
        // Predicated region
        $region21: #{tpu_custom_call.1} parent=11 // pred_check
          %p261 = pneg %p109
        $region22: #{tpu_custom_call.1} parent=11 // pred_check_branch
          %263 = sbr.rel (%p261) target = $region24
        $region23: #{tpu_custom_call.1} parent=11 // pred_region
          %s265 = ssub.s32 9216, 9216
          %266 = vsyncadd [#allocation4], %s265
          %s267 = sshll.u32 [#allocation3], 4
          %s268 = int_to_ptr.vmem [resolvable:$true] %s267
          %273 = dma.hbm_to_vmem [thread:$0]  %s3, 9216, %s268, [#allocation4], 64, 64, 4
        $region24: #{tpu_custom_call.1} parent=11 // pred_fallthru
          _
        // Predicated region
        $region25: #{tpu_custom_call.1} parent=11 // pred_check
          %p274 = pneg %p130
        $region26: #{tpu_custom_call.1} parent=11 // pred_check_branch
          %276 = sbr.rel (%p274) target = $region28
        $region27: #{tpu_custom_call.1} parent=11 // pred_region
          _
        $region28: #{tpu_custom_call.1} parent=11 // pred_fallthru
          _
        // Predicated region
        $region29: #{tpu_custom_call.1} parent=11 // pred_check
          %p277 = pneg %p151
        $region30: #{tpu_custom_call.1} parent=11 // pred_check_branch
          %279 = sbr.rel (%p277) target = $region32
        $region31: #{tpu_custom_call.1} parent=11 // pred_region
          _
        $region32: #{tpu_custom_call.1} parent=11 // pred_fallthru
          _
        // Predicated region
        $region33: #{tpu_custom_call.1} parent=11 // pred_check
          %p280 = pneg %p172
        $region34: #{tpu_custom_call.1} parent=11 // pred_check_branch
          %282 = sbr.rel (%p280) target = $region36
        $region35: #{tpu_custom_call.1} parent=11 // pred_region
          _
        $region36: #{tpu_custom_call.1} parent=11 // pred_fallthru
          _
        // Predicated region
        $region37: #{tpu_custom_call.1} parent=11 // pred_check
          %p283 = pneg %p193
        $region38: #{tpu_custom_call.1} parent=11 // pred_check_branch
          %285 = sbr.rel (%p283) target = $region40
        $region39: #{tpu_custom_call.1} parent=11 // pred_region
          %s287 = ssub.s32 4096, 4096
          %288 = vsyncadd [#allocation7], %s287
          %s289 = sshll.u32 [#allocation6], 4
          %s290 = int_to_ptr.vmem [resolvable:$true] %s289
          %295 = dma.hbm_to_vmem [thread:$0]  %s7, 4096, %s290, [#allocation7], 64, 64, 4
        $region40: #{tpu_custom_call.1} parent=11 // pred_fallthru
          _
        // Predicated region
        $region41: #{tpu_custom_call.1} parent=11 // pred_check
          %p296 = pneg %p214
        $region42: #{tpu_custom_call.1} parent=11 // pred_check_branch
          %298 = sbr.rel (%p296) target = $region44
        $region43: #{tpu_custom_call.1} parent=11 // pred_region
          _
        $region44: #{tpu_custom_call.1} parent=11 // pred_fallthru
          _
      $region12: #{tpu_custom_call.1} parent=5 // pred_fallthru
        _
      %p299 = scmp.lt.s32.totalorder %s20, 2
      // Predicated region
      $region45: #{tpu_custom_call.1} parent=5 // pred_check
        %p300 = pneg %p299
      $region46: #{tpu_custom_call.1} parent=5 // pred_check_branch
        %302 = sbr.rel (%p300) target = $region48
      $region47: #{tpu_custom_call.1} parent=5 // pred_region
        // Predicated region
        $region49: #{tpu_custom_call.1} parent=47 // pred_check
          %p303 = pneg %p40
        $region50: #{tpu_custom_call.1} parent=47 // pred_check_branch
          %305 = sbr.rel (%p303) target = $region52
        $region51: #{tpu_custom_call.1} parent=47 // pred_region
          %p306 = scmp.lt.s32.totalorder %s20, 1
          %s307 = scalar_select %p306, %s20, 1
          %s308 = smul.addr %s307, 32
          %s309 = smul.addr %s308, 4
          %s310 = scalar_lea.vmem %s0, %s309
        $region52: #{tpu_custom_call.1} parent=47 // pred_fallthru
          _
      $region48: #{tpu_custom_call.1} parent=5 // pred_fallthru
        _
      %p311 = scmp.le.s32.totalorder 1, %s20
      %p312 = scmp.lt.s32.totalorder %s20, 3
      %p313 = pnand %p311, %p312
      %p314 = pneg %p313
      // Predicated region
      $region53: #{tpu_custom_call.1} parent=5 // pred_check
        _
      $region54: #{tpu_custom_call.1} parent=5 // pred_check_branch
        %316 = sbr.rel (%p313) target = $region56
      $region55: #{tpu_custom_call.1} parent=5 // pred_region
        %s317 = ssub.s32 %s20, 1
        // Predicated region
        $region57: #{tpu_custom_call.1} parent=55 // pred_check
          %p318 = pneg %p109
        $region58: #{tpu_custom_call.1} parent=55 // pred_check_branch
          %320 = sbr.rel (%p318) target = $region60
        $region59: #{tpu_custom_call.1} parent=55 // pred_region
          %321 = dma.done [#allocation4], 9216
        $region60: #{tpu_custom_call.1} parent=55 // pred_fallthru
          _
        // Predicated region
        $region61: #{tpu_custom_call.1} parent=55 // pred_check
          %p322 = pneg %p193
        $region62: #{tpu_custom_call.1} parent=55 // pred_check_branch
          %324 = sbr.rel (%p322) target = $region64
        $region63: #{tpu_custom_call.1} parent=55 // pred_region
          %325 = dma.done [#allocation7], 4096
        $region64: #{tpu_custom_call.1} parent=55 // pred_fallthru
          _
        %p326 = scmp.lt.s32.totalorder %s25, 1
        %s327 = scalar_select %p326, %s25, 1
        %s328 = smul.addr %s327, 32
        %s329 = smul.addr %s328, 4
        %s330 = scalar_lea.vmem %s0, %s329
        %p331 = pneg %p46
        %p332 = pneg %p43
        %p333 = pneg %p67
        %p334 = pneg %p64
        %p335 = pneg %p88
        %p336 = pneg %p85
        %p337 = pneg %p109
        %p338 = pneg %p106
        %p339 = pneg %p130
        %p340 = pneg %p127
        %p341 = pneg %p151
        %p342 = pneg %p148
        %p343 = pneg %p172
        %p344 = pneg %p169
        %p345 = pneg %p193
        %p346 = pneg %p190
        %p347 = pneg %p214
        %p348 = pneg %p211
        %p349 = pneg %p240
        %p350 = pneg %p237
        %s351 = sand.u32 %s227, 1
        %s352 = scalar_lea.sflag [#allocation5], %s351
        %s353 = sand.u32 %s227, 1
        %s354 = smul.addr %s353, 256
        %s355 = scalar_lea.vmem [#allocation8], %s354
        %p356 = scmp.lt.s32.totalorder %s25, 1
        %s357 = scalar_select %p356, %s25, 1
        %s358 = smul.addr %s357, 32
        %s359 = smul.addr %s358, 4
        %s360 = scalar_lea.vmem %s0, %s359
        %v364 = vlaneseq
        %v365 = vshrl.u32 %v364, 7
        %v366 = vadd.s32 %v365, 8
        %v367 = vadd.s32 %v365, 16
        %v368 = vadd.s32 %v365, 24
        %v369 = vadd.s32 %v365, 32
        %v370 = vadd.s32 %v365, 40
        %v371 = vadd.s32 %v365, 48
        %v372 = vadd.s32 %v365, 56
        %v373 = vadd.s32 %v365, 64
        %v374 = vadd.s32 %v365, 72
        %v375 = vadd.s32 %v365, 80
        %v376 = vadd.s32 %v365, 88
        %v377 = vadd.s32 %v365, 96
        %v378 = vadd.s32 %v365, 104
        %v379 = vadd.s32 %v365, 112
        %v380 = vadd.s32 %v365, 120
        %v381 = vadd.s32 %v365, 128
        %v382 = vadd.s32 %v365, 136
        %v383 = vadd.s32 %v365, 144
        %v384 = vadd.s32 %v365, 152
        %v385 = vadd.s32 %v365, 160
        %v386 = vadd.s32 %v365, 168
        %v387 = vadd.s32 %v365, 176
        %v388 = vadd.s32 %v365, 184
        %v389 = vadd.s32 %v365, 192
        %v390 = vadd.s32 %v365, 200
        %v391 = vadd.s32 %v365, 208
        %v392 = vadd.s32 %v365, 216
        %v393 = vadd.s32 %v365, 224
        %v394 = vadd.s32 %v365, 232
        %v395 = vadd.s32 %v365, 240
        %v396 = vadd.s32 %v365, 248
        %vm397 = vcmp.lt.s32.totalorder %v365, 0
        %v398 = vsub.s32 0, %v365
        %v399 = vsel %vm397, %v398, %v365
        %v400 = vshrl.u32 %v399, 4
        %v401 = vand.u32 %v399, 15
        %v402 = vsub.s32 0, %v401
        %v403 = vsel %vm397, %v402, %v401
        %vm404 = vcmp.lt.s32.totalorder %v366, 0
        %v405 = vsub.s32 0, %v366
        %v406 = vsel %vm404, %v405, %v366
        %v407 = vshrl.u32 %v406, 4
        %v408 = vand.u32 %v406, 15
        %v409 = vsub.s32 0, %v408
        %v410 = vsel %vm404, %v409, %v408
        %vm411 = vcmp.lt.s32.totalorder %v367, 0
        %v412 = vsub.s32 0, %v367
        %v413 = vsel %vm411, %v412, %v367
        %v414 = vshrl.u32 %v413, 4
        %v415 = vand.u32 %v413, 15
        %v416 = vsub.s32 0, %v415
        %v417 = vsel %vm411, %v416, %v415
        %vm418 = vcmp.lt.s32.totalorder %v368, 0
        %v419 = vsub.s32 0, %v368
        %v420 = vsel %vm418, %v419, %v368
        %v421 = vshrl.u32 %v420, 4
        %v422 = vand.u32 %v420, 15
        %v423 = vsub.s32 0, %v422
        %v424 = vsel %vm418, %v423, %v422
        %vm425 = vcmp.lt.s32.totalorder %v369, 0
        %v426 = vsub.s32 0, %v369
        %v427 = vsel %vm425, %v426, %v369
        %v428 = vshrl.u32 %v427, 4
        %v429 = vand.u32 %v427, 15
        %v430 = vsub.s32 0, %v429
        %v431 = vsel %vm425, %v430, %v429
        %vm432 = vcmp.lt.s32.totalorder %v370, 0
        %v433 = vsub.s32 0, %v370
        %v434 = vsel %vm432, %v433, %v370
        %v435 = vshrl.u32 %v434, 4
        %v436 = vand.u32 %v434, 15
        %v437 = vsub.s32 0, %v436
        %v438 = vsel %vm432, %v437, %v436
        %vm439 = vcmp.lt.s32.totalorder %v371, 0
        %v440 = vsub.s32 0, %v371
        %v441 = vsel %vm439, %v440, %v371
        %v442 = vshrl.u32 %v441, 4
        %v443 = vand.u32 %v441, 15
        %v444 = vsub.s32 0, %v443
        %v445 = vsel %vm439, %v444, %v443
        %vm446 = vcmp.lt.s32.totalorder %v372, 0
        %v447 = vsub.s32 0, %v372
        %v448 = vsel %vm446, %v447, %v372
        %v449 = vshrl.u32 %v448, 4
        %v450 = vand.u32 %v448, 15
        %v451 = vsub.s32 0, %v450
        %v452 = vsel %vm446, %v451, %v450
        %vm453 = vcmp.lt.s32.totalorder %v373, 0
        %v454 = vsub.s32 0, %v373
        %v455 = vsel %vm453, %v454, %v373
        %v456 = vshrl.u32 %v455, 4
        %v457 = vand.u32 %v455, 15
        %v458 = vsub.s32 0, %v457
        %v459 = vsel %vm453, %v458, %v457
        %vm460 = vcmp.lt.s32.totalorder %v374, 0
        %v461 = vsub.s32 0, %v374
        %v462 = vsel %vm460, %v461, %v374
        %v463 = vshrl.u32 %v462, 4
        %v464 = vand.u32 %v462, 15
        %v465 = vsub.s32 0, %v464
        %v466 = vsel %vm460, %v465, %v464
        %vm467 = vcmp.lt.s32.totalorder %v375, 0
        %v468 = vsub.s32 0, %v375
        %v469 = vsel %vm467, %v468, %v375
        %v470 = vshrl.u32 %v469, 4
        %v471 = vand.u32 %v469, 15
        %v472 = vsub.s32 0, %v471
        %v473 = vsel %vm467, %v472, %v471
        %vm474 = vcmp.lt.s32.totalorder %v376, 0
        %v475 = vsub.s32 0, %v376
        %v476 = vsel %vm474, %v475, %v376
        %v477 = vshrl.u32 %v476, 4
        %v478 = vand.u32 %v476, 15
        %v479 = vsub.s32 0, %v478
        %v480 = vsel %vm474, %v479, %v478
        %vm481 = vcmp.lt.s32.totalorder %v377, 0
        %v482 = vsub.s32 0, %v377
        %v483 = vsel %vm481, %v482, %v377
        %v484 = vshrl.u32 %v483, 4
        %v485 = vand.u32 %v483, 15
        %v486 = vsub.s32 0, %v485
        %v487 = vsel %vm481, %v486, %v485
        %vm488 = vcmp.lt.s32.totalorder %v378, 0
        %v489 = vsub.s32 0, %v378
        %v490 = vsel %vm488, %v489, %v378
        %v491 = vshrl.u32 %v490, 4
        %v492 = vand.u32 %v490, 15
        %v493 = vsub.s32 0, %v492
        %v494 = vsel %vm488, %v493, %v492
        %vm495 = vcmp.lt.s32.totalorder %v379, 0
        %v496 = vsub.s32 0, %v379
        %v497 = vsel %vm495, %v496, %v379
        %v498 = vshrl.u32 %v497, 4
        %v499 = vand.u32 %v497, 15
        %v500 = vsub.s32 0, %v499
        %v501 = vsel %vm495, %v500, %v499
        %vm502 = vcmp.lt.s32.totalorder %v380, 0
        %v503 = vsub.s32 0, %v380
        %v504 = vsel %vm502, %v503, %v380
        %v505 = vshrl.u32 %v504, 4
        %v506 = vand.u32 %v504, 15
        %v507 = vsub.s32 0, %v506
        %v508 = vsel %vm502, %v507, %v506
        %vm509 = vcmp.lt.s32.totalorder %v381, 0
        %v510 = vsub.s32 0, %v381
        %v511 = vsel %vm509, %v510, %v381
        %v512 = vshrl.u32 %v511, 4
        %v513 = vand.u32 %v511, 15
        %v514 = vsub.s32 0, %v513
        %v515 = vsel %vm509, %v514, %v513
        %vm516 = vcmp.lt.s32.totalorder %v382, 0
        %v517 = vsub.s32 0, %v382
        %v518 = vsel %vm516, %v517, %v382
        %v519 = vshrl.u32 %v518, 4
        %v520 = vand.u32 %v518, 15
        %v521 = vsub.s32 0, %v520
        %v522 = vsel %vm516, %v521, %v520
        %vm523 = vcmp.lt.s32.totalorder %v383, 0
        %v524 = vsub.s32 0, %v383
        %v525 = vsel %vm523, %v524, %v383
        %v526 = vshrl.u32 %v525, 4
        %v527 = vand.u32 %v525, 15
        %v528 = vsub.s32 0, %v527
        %v529 = vsel %vm523, %v528, %v527
        %vm530 = vcmp.lt.s32.totalorder %v384, 0
        %v531 = vsub.s32 0, %v384
        %v532 = vsel %vm530, %v531, %v384
        %v533 = vshrl.u32 %v532, 4
        %v534 = vand.u32 %v532, 15
        %v535 = vsub.s32 0, %v534
        %v536 = vsel %vm530, %v535, %v534
        %vm537 = vcmp.lt.s32.totalorder %v385, 0
        %v538 = vsub.s32 0, %v385
        %v539 = vsel %vm537, %v538, %v385
        %v540 = vshrl.u32 %v539, 4
        %v541 = vand.u32 %v539, 15
        %v542 = vsub.s32 0, %v541
        %v543 = vsel %vm537, %v542, %v541
        %vm544 = vcmp.lt.s32.totalorder %v386, 0
        %v545 = vsub.s32 0, %v386
        %v546 = vsel %vm544, %v545, %v386
        %v547 = vshrl.u32 %v546, 4
        %v548 = vand.u32 %v546, 15
        %v549 = vsub.s32 0, %v548
        %v550 = vsel %vm544, %v549, %v548
        %vm551 = vcmp.lt.s32.totalorder %v387, 0
        %v552 = vsub.s32 0, %v387
        %v553 = vsel %vm551, %v552, %v387
        %v554 = vshrl.u32 %v553, 4
        %v555 = vand.u32 %v553, 15
        %v556 = vsub.s32 0, %v555
        %v557 = vsel %vm551, %v556, %v555
        %vm558 = vcmp.lt.s32.totalorder %v388, 0
        %v559 = vsub.s32 0, %v388
        %v560 = vsel %vm558, %v559, %v388
        %v561 = vshrl.u32 %v560, 4
        %v562 = vand.u32 %v560, 15
        %v563 = vsub.s32 0, %v562
        %v564 = vsel %vm558, %v563, %v562
        %vm565 = vcmp.lt.s32.totalorder %v389, 0
        %v566 = vsub.s32 0, %v389
        %v567 = vsel %vm565, %v566, %v389
        %v568 = vshrl.u32 %v567, 4
        %v569 = vand.u32 %v567, 15
        %v570 = vsub.s32 0, %v569
        %v571 = vsel %vm565, %v570, %v569
        %vm572 = vcmp.lt.s32.totalorder %v390, 0
        %v573 = vsub.s32 0, %v390
        %v574 = vsel %vm572, %v573, %v390
        %v575 = vshrl.u32 %v574, 4
        %v576 = vand.u32 %v574, 15
        %v577 = vsub.s32 0, %v576
        %v578 = vsel %vm572, %v577, %v576
        %vm579 = vcmp.lt.s32.totalorder %v391, 0
        %v580 = vsub.s32 0, %v391
        %v581 = vsel %vm579, %v580, %v391
        %v582 = vshrl.u32 %v581, 4
        %v583 = vand.u32 %v581, 15
        %v584 = vsub.s32 0, %v583
        %v585 = vsel %vm579, %v584, %v583
        %vm586 = vcmp.lt.s32.totalorder %v392, 0
        %v587 = vsub.s32 0, %v392
        %v588 = vsel %vm586, %v587, %v392
        %v589 = vshrl.u32 %v588, 4
        %v590 = vand.u32 %v588, 15
        %v591 = vsub.s32 0, %v590
        %v592 = vsel %vm586, %v591, %v590
        %vm593 = vcmp.lt.s32.totalorder %v393, 0
        %v594 = vsub.s32 0, %v393
        %v595 = vsel %vm593, %v594, %v393
        %v596 = vshrl.u32 %v595, 4
        %v597 = vand.u32 %v595, 15
        %v598 = vsub.s32 0, %v597
        %v599 = vsel %vm593, %v598, %v597
        %vm600 = vcmp.lt.s32.totalorder %v394, 0
        %v601 = vsub.s32 0, %v394
        %v602 = vsel %vm600, %v601, %v394
        %v603 = vshrl.u32 %v602, 4
        %v604 = vand.u32 %v602, 15
        %v605 = vsub.s32 0, %v604
        %v606 = vsel %vm600, %v605, %v604
        %vm607 = vcmp.lt.s32.totalorder %v395, 0
        %v608 = vsub.s32 0, %v395
        %v609 = vsel %vm607, %v608, %v395
        %v610 = vshrl.u32 %v609, 4
        %v611 = vand.u32 %v609, 15
        %v612 = vsub.s32 0, %v611
        %v613 = vsel %vm607, %v612, %v611
        %vm614 = vcmp.lt.s32.totalorder %v396, 0
        %v615 = vsub.s32 0, %v396
        %v616 = vsel %vm614, %v615, %v396
        %v617 = vshrl.u32 %v616, 4
        %v618 = vand.u32 %v616, 15
        %v619 = vsub.s32 0, %v618
        %v620 = vsel %vm614, %v619, %v618
        %vm621 = vcmp.ne.s32.totalorder %v403, 0
        %vm622 = vcmp.ne.s32.totalorder %v410, 0
        %vm623 = vcmp.ne.s32.totalorder %v417, 0
        %vm624 = vcmp.ne.s32.totalorder %v424, 0
        %vm625 = vcmp.ne.s32.totalorder %v431, 0
        %vm626 = vcmp.ne.s32.totalorder %v438, 0
        %vm627 = vcmp.ne.s32.totalorder %v445, 0
        %vm628 = vcmp.ne.s32.totalorder %v452, 0
        %vm629 = vcmp.ne.s32.totalorder %v459, 0
        %vm630 = vcmp.ne.s32.totalorder %v466, 0
        %vm631 = vcmp.ne.s32.totalorder %v473, 0
        %vm632 = vcmp.ne.s32.totalorder %v480, 0
        %vm633 = vcmp.ne.s32.totalorder %v487, 0
        %vm634 = vcmp.ne.s32.totalorder %v494, 0
        %vm635 = vcmp.ne.s32.totalorder %v501, 0
        %vm636 = vcmp.ne.s32.totalorder %v508, 0
        %vm637 = vcmp.ne.s32.totalorder %v515, 0
        %vm638 = vcmp.ne.s32.totalorder %v522, 0
        %vm639 = vcmp.ne.s32.totalorder %v529, 0
        %vm640 = vcmp.ne.s32.totalorder %v536, 0
        %vm641 = vcmp.ne.s32.totalorder %v543, 0
        %vm642 = vcmp.ne.s32.totalorder %v550, 0
        %vm643 = vcmp.ne.s32.totalorder %v557, 0
        %vm644 = vcmp.ne.s32.totalorder %v564, 0
        %vm645 = vcmp.ne.s32.totalorder %v571, 0
        %vm646 = vcmp.ne.s32.totalorder %v578, 0
        %vm647 = vcmp.ne.s32.totalorder %v585, 0
        %vm648 = vcmp.ne.s32.totalorder %v592, 0
        %vm649 = vcmp.ne.s32.totalorder %v599, 0
        %vm650 = vcmp.ne.s32.totalorder %v606, 0
        %vm651 = vcmp.ne.s32.totalorder %v613, 0
        %vm652 = vcmp.ne.s32.totalorder %v620, 0
        %vm653 = vcmp.lt.s32.totalorder %v403, 0
        %vm654 = vcmp.lt.s32.totalorder %v410, 0
        %vm655 = vcmp.lt.s32.totalorder %v417, 0
        %vm656 = vcmp.lt.s32.totalorder %v424, 0
        %vm657 = vcmp.lt.s32.totalorder %v431, 0
        %vm658 = vcmp.lt.s32.totalorder %v438, 0
        %vm659 = vcmp.lt.s32.totalorder %v445, 0
        %vm660 = vcmp.lt.s32.totalorder %v452, 0
        %vm661 = vcmp.lt.s32.totalorder %v459, 0
        %vm662 = vcmp.lt.s32.totalorder %v466, 0
        %vm663 = vcmp.lt.s32.totalorder %v473, 0
        %vm664 = vcmp.lt.s32.totalorder %v480, 0
        %vm665 = vcmp.lt.s32.totalorder %v487, 0
        %vm666 = vcmp.lt.s32.totalorder %v494, 0
        %vm667 = vcmp.lt.s32.totalorder %v501, 0
        %vm668 = vcmp.lt.s32.totalorder %v508, 0
        %vm669 = vcmp.lt.s32.totalorder %v515, 0
        %vm670 = vcmp.lt.s32.totalorder %v522, 0
        %vm671 = vcmp.lt.s32.totalorder %v529, 0
        %vm672 = vcmp.lt.s32.totalorder %v536, 0
        %vm673 = vcmp.lt.s32.totalorder %v543, 0
        %vm674 = vcmp.lt.s32.totalorder %v550, 0
        %vm675 = vcmp.lt.s32.totalorder %v557, 0
        %vm676 = vcmp.lt.s32.totalorder %v564, 0
        %vm677 = vcmp.lt.s32.totalorder %v571, 0
        %vm678 = vcmp.lt.s32.totalorder %v578, 0
        %vm679 = vcmp.lt.s32.totalorder %v585, 0
        %vm680 = vcmp.lt.s32.totalorder %v592, 0
        %vm681 = vcmp.lt.s32.totalorder %v599, 0
        %vm682 = vcmp.lt.s32.totalorder %v606, 0
        %vm683 = vcmp.lt.s32.totalorder %v613, 0
        %vm684 = vcmp.lt.s32.totalorder %v620, 0
        %vm685 = vmand %vm653, %vm621
        %vm686 = vmand %vm654, %vm622
        %vm687 = vmand %vm655, %vm623
        %vm688 = vmand %vm656, %vm624
        %vm689 = vmand %vm657, %vm625
        %vm690 = vmand %vm658, %vm626
        %vm691 = vmand %vm659, %vm627
        %vm692 = vmand %vm660, %vm628
        %vm693 = vmand %vm661, %vm629
        %vm694 = vmand %vm662, %vm630
        %vm695 = vmand %vm663, %vm631
        %vm696 = vmand %vm664, %vm632
        %vm697 = vmand %vm665, %vm633
        %vm698 = vmand %vm666, %vm634
        %vm699 = vmand %vm667, %vm635
        %vm700 = vmand %vm668, %vm636
        %vm701 = vmand %vm669, %vm637
        %vm702 = vmand %vm670, %vm638
        %vm703 = vmand %vm671, %vm639
        %vm704 = vmand %vm672, %vm640
        %vm705 = vmand %vm673, %vm641
        %vm706 = vmand %vm674, %vm642
        %vm707 = vmand %vm675, %vm643
        %vm708 = vmand %vm676, %vm644
        %vm709 = vmand %vm677, %vm645
        %vm710 = vmand %vm678, %vm646
        %vm711 = vmand %vm679, %vm647
        %vm712 = vmand %vm680, %vm648
        %vm713 = vmand %vm681, %vm649
        %vm714 = vmand %vm682, %vm650
        %vm715 = vmand %vm683, %vm651
        %vm716 = vmand %vm684, %vm652
        %v717 = vadd.s32 %v403, 16
        %v718 = vadd.s32 %v410, 16
        %v719 = vadd.s32 %v417, 16
        %v720 = vadd.s32 %v424, 16
        %v721 = vadd.s32 %v431, 16
        %v722 = vadd.s32 %v438, 16
        %v723 = vadd.s32 %v445, 16
        %v724 = vadd.s32 %v452, 16
        %v725 = vadd.s32 %v459, 16
        %v726 = vadd.s32 %v466, 16
        %v727 = vadd.s32 %v473, 16
        %v728 = vadd.s32 %v480, 16
        %v729 = vadd.s32 %v487, 16
        %v730 = vadd.s32 %v494, 16
        %v731 = vadd.s32 %v501, 16
        %v732 = vadd.s32 %v508, 16
        %v733 = vadd.s32 %v515, 16
        %v734 = vadd.s32 %v522, 16
        %v735 = vadd.s32 %v529, 16
        %v736 = vadd.s32 %v536, 16
        %v737 = vadd.s32 %v543, 16
        %v738 = vadd.s32 %v550, 16
        %v739 = vadd.s32 %v557, 16
        %v740 = vadd.s32 %v564, 16
        %v741 = vadd.s32 %v571, 16
        %v742 = vadd.s32 %v578, 16
        %v743 = vadd.s32 %v585, 16
        %v744 = vadd.s32 %v592, 16
        %v745 = vadd.s32 %v599, 16
        %v746 = vadd.s32 %v606, 16
        %v747 = vadd.s32 %v613, 16
        %v748 = vadd.s32 %v620, 16
        %v749 = vsel %vm685, %v717, %v403
        %v750 = vsel %vm686, %v718, %v410
        %v751 = vsel %vm687, %v719, %v417
        %v752 = vsel %vm688, %v720, %v424
        %v753 = vsel %vm689, %v721, %v431
        %v754 = vsel %vm690, %v722, %v438
        %v755 = vsel %vm691, %v723, %v445
        %v756 = vsel %vm692, %v724, %v452
        %v757 = vsel %vm693, %v725, %v459
        %v758 = vsel %vm694, %v726, %v466
        %v759 = vsel %vm695, %v727, %v473
        %v760 = vsel %vm696, %v728, %v480
        %v761 = vsel %vm697, %v729, %v487
        %v762 = vsel %vm698, %v730, %v494
        %v763 = vsel %vm699, %v731, %v501
        %v764 = vsel %vm700, %v732, %v508
        %v765 = vsel %vm701, %v733, %v515
        %v766 = vsel %vm702, %v734, %v522
        %v767 = vsel %vm703, %v735, %v529
        %v768 = vsel %vm704, %v736, %v536
        %v769 = vsel %vm705, %v737, %v543
        %v770 = vsel %vm706, %v738, %v550
        %v771 = vsel %vm707, %v739, %v557
        %v772 = vsel %vm708, %v740, %v564
        %v773 = vsel %vm709, %v741, %v571
        %v774 = vsel %vm710, %v742, %v578
        %v775 = vsel %vm711, %v743, %v585
        %v776 = vsel %vm712, %v744, %v592
        %v777 = vsel %vm713, %v745, %v599
        %v778 = vsel %vm714, %v746, %v606
        %v779 = vsel %vm715, %v747, %v613
        %v780 = vsel %vm716, %v748, %v620
        %v781 = vld [vmem:[%s360] sm:$0xf]
        %v782 = vld [vmem:[%s360 + $0x4] sm:$0xf]
        %v783 = vld [vmem:[%s360 + $0x8] sm:$0xf]
        %v784 = vld [vmem:[%s360 + $0xc] sm:$0xf]
        %v785 = vld [vmem:[%s360 + $0x10] sm:$0xf]
        %v786 = vld [vmem:[%s360 + $0x14] sm:$0xf]
        %v787 = vld [vmem:[%s360 + $0x18] sm:$0xf]
        %v788 = vld [vmem:[%s360 + $0x1c] sm:$0xf]
        %v789 = vld [vmem:[%s360 + $0x20] sm:$0xf]
        %v790 = vld [vmem:[%s360 + $0x24] sm:$0xf]
        %v791 = vld [vmem:[%s360 + $0x28] sm:$0xf]
        %v792 = vld [vmem:[%s360 + $0x2c] sm:$0xf]
        %v793 = vld [vmem:[%s360 + $0x30] sm:$0xf]
        %v794 = vld [vmem:[%s360 + $0x34] sm:$0xf]
        %v795 = vld [vmem:[%s360 + $0x38] sm:$0xf]
        %v796 = vld [vmem:[%s360 + $0x3c] sm:$0xf]
        %v797 = vld [vmem:[%s360 + $0x40] sm:$0xf]
        %v798 = vld [vmem:[%s360 + $0x44] sm:$0xf]
        %v799 = vld [vmem:[%s360 + $0x48] sm:$0xf]
        %v800 = vld [vmem:[%s360 + $0x4c] sm:$0xf]
        %v801 = vld [vmem:[%s360 + $0x50] sm:$0xf]
        %v802 = vld [vmem:[%s360 + $0x54] sm:$0xf]
        %v803 = vld [vmem:[%s360 + $0x58] sm:$0xf]
        %v804 = vld [vmem:[%s360 + $0x5c] sm:$0xf]
        %v805 = vld [vmem:[%s360 + $0x60] sm:$0xf]
        %v806 = vld [vmem:[%s360 + $0x64] sm:$0xf]
        %v807 = vld [vmem:[%s360 + $0x68] sm:$0xf]
        %v808 = vld [vmem:[%s360 + $0x6c] sm:$0xf]
        %v809 = vld [vmem:[%s360 + $0x70] sm:$0xf]
        %v810 = vld [vmem:[%s360 + $0x74] sm:$0xf]
        %v811 = vld [vmem:[%s360 + $0x78] sm:$0xf]
        %v812 = vld [vmem:[%s360 + $0x7c] sm:$0xf]
        %v813 = vld [vmem:[%s1] sm:$0xf]
        %v814 = vld [vmem:[%s1 + $0x4] sm:$0xf]
        %v815 = vld [vmem:[%s1 + $0x8] sm:$0xf]
        %v816 = vld [vmem:[%s1 + $0xc] sm:$0xf]
        %v817 = vld [vmem:[%s1 + $0x10] sm:$0x3]
        %v818 = vld [vmem:[%s2] sm:$0x1]
        %v820 = vlaneseq
        %v821 = vshrl.u32 %v820, 7
        %v822 = vsub.s32 0, %v821
        %v823 = vrot.slane %v818, %v822
        %v857 = vunpack.c.l.b16 %v781
        %v858 = vunpack.c.l.b16 %v782
        %v859 = vunpack.c.l.b16 %v783
        %v860 = vunpack.c.l.b16 %v784
        %v861 = vunpack.c.l.b16 %v785
        %v862 = vunpack.c.l.b16 %v786
        %v863 = vunpack.c.l.b16 %v787
        %v864 = vunpack.c.l.b16 %v788
        %v865 = vunpack.c.l.b16 %v789
        %v866 = vunpack.c.l.b16 %v790
        %v867 = vunpack.c.l.b16 %v791
        %v868 = vunpack.c.l.b16 %v792
        %v869 = vunpack.c.l.b16 %v793
        %v870 = vunpack.c.l.b16 %v794
        %v871 = vunpack.c.l.b16 %v795
        %v872 = vunpack.c.l.b16 %v796
        %v873 = vunpack.c.l.b16 %v797
        %v874 = vunpack.c.l.b16 %v798
        %v875 = vunpack.c.l.b16 %v799
        %v876 = vunpack.c.l.b16 %v800
        %v877 = vunpack.c.l.b16 %v801
        %v878 = vunpack.c.l.b16 %v802
        %v879 = vunpack.c.l.b16 %v803
        %v880 = vunpack.c.l.b16 %v804
        %v881 = vunpack.c.l.b16 %v805
        %v882 = vunpack.c.l.b16 %v806
        %v883 = vunpack.c.l.b16 %v807
        %v884 = vunpack.c.l.b16 %v808
        %v885 = vunpack.c.l.b16 %v809
        %v886 = vunpack.c.l.b16 %v810
        %v887 = vunpack.c.l.b16 %v811
        %v888 = vunpack.c.l.b16 %v812
        %v889 = vpack.c.b16 %v858, %v857
        %v890 = vpack.c.b16 %v860, %v859
        %v891 = vpack.c.b16 %v862, %v861
        %v892 = vpack.c.b16 %v864, %v863
        %v893 = vpack.c.b16 %v866, %v865
        %v894 = vpack.c.b16 %v868, %v867
        %v895 = vpack.c.b16 %v870, %v869
        %v896 = vpack.c.b16 %v872, %v871
        %v897 = vpack.c.b16 %v874, %v873
        %v898 = vpack.c.b16 %v876, %v875
        %v899 = vpack.c.b16 %v878, %v877
        %v900 = vpack.c.b16 %v880, %v879
        %v901 = vpack.c.b16 %v882, %v881
        %v902 = vpack.c.b16 %v884, %v883
        %v903 = vpack.c.b16 %v886, %v885
        %v904 = vpack.c.b16 %v888, %v887
        %v910 = vunpack.c.l.b16 %v813
        %v911 = vunpack.c.l.b16 %v814
        %v912 = vunpack.c.l.b16 %v815
        %v913 = vunpack.c.l.b16 %v816
        %v914 = vunpack.c.l.b16 %v817
        %v915 = vpack.c.b16 %v911, %v910
        %v916 = vpack.c.b16 %v913, %v912
        %v917 = vpack.c.b16 %v914, %v914
        %vm920 = vcmask 293888
        %v922 = vsel %vm920, %v889, 0
        %v925 = vsel %vm920, %v890, 0
        %v928 = vsel %vm920, %v891, 0
        %v931 = vsel %vm920, %v892, 0
        %v934 = vsel %vm920, %v893, 0
        %v937 = vsel %vm920, %v894, 0
        %v940 = vsel %vm920, %v895, 0
        %v943 = vsel %vm920, %v896, 0
        %v946 = vsel %vm920, %v897, 0
        %v949 = vsel %vm920, %v898, 0
        %v952 = vsel %vm920, %v899, 0
        %v955 = vsel %vm920, %v900, 0
        %v958 = vsel %vm920, %v901, 0
        %v961 = vsel %vm920, %v902, 0
        %v964 = vsel %vm920, %v903, 0
        %v967 = vsel %vm920, %v904, 0
        %vm969 = vcmask 1041408
        %v971 = vsel %vm969, %v917, 0
        %973 = vmatprep.subr.bf16.mxu0 0
        %974 = vmatpush1.bf16.msra.mxu0 0
        %975 = vmatprep.subr.bf16.mxu0 0
        %976 = vmatpush1.bf16.msra.mxu0 0
        %977 = vmatprep.subr.bf16.mxu0 0
        %978 = vmatpush1.bf16.msra.mxu0 0
        %979 = vmatprep.subr.bf16.mxu0 0
        %980 = vmatpush1.bf16.msra.mxu0 0
        %981 = vmatprep.subr.bf16.mxu0 0
        %982 = vmatpush1.bf16.msra.mxu0 0
        %983 = vmatprep.subr.bf16.mxu0 0
        %984 = vmatpush1.bf16.msra.mxu0 %v971
        %985 = vmatprep.subr.bf16.mxu0 0
        %986 = vmatpush1.bf16.msra.mxu0 %v916
        %987 = vmatprep.subr.bf16.mxu0 0
        %988 = vmatpush1.bf16.msra.mxu0 %v915
        %989 = vmatprep.subr.bf16.mxu0 0
        %990 = vmatpush2.bf16.msra.mxu0 0
        %991 = vmatprep.subr.bf16.mxu0 0
        %992 = vmatpush2.bf16.msra.mxu0 0
        %993 = vmatprep.subr.bf16.mxu0 0
        %994 = vmatpush2.bf16.msra.mxu0 0
        %995 = vmatprep.subr.bf16.mxu0 0
        %996 = vmatpush2.bf16.msra.mxu0 0
        %997 = vmatprep.subr.bf16.mxu0 0
        %998 = vmatpush2.bf16.msra.mxu0 0
        %999 = vmatprep.subr.bf16.mxu0 0
        %1000 = vmatpush2.bf16.msra.mxu0 0
        %1001 = vmatprep.subr.bf16.mxu0 0
        %1002 = vmatpush2.bf16.msra.mxu0 0
        %1003 = vmatprep.subr.bf16.mxu0 0
        %1004 = vmatpush2.bf16.msra.mxu0 0
        %1005 = vmatprep.mubr.bf16.mxu0 0
        %1006 = vmatmul.mubr.bf16.gmra.mxu0 %v922
        %v1007 = vpop.f32.mrf.mxu0
        %v1008 = vadd.f32 %v823, %v1007
        %v1009 = vpop.f32.mrf.mxu0
        %v1010 = vpop.f32.mrf.mxu0
        %v1011 = vadd.f32 %v823, %v1010
        %v1012 = vpop.f32.mrf.mxu0
        %1013 = vmatprep.mubr.bf16.mxu0 0
        %1014 = vmatmul.mubr.bf16.gmra.mxu0 %v925
        %v1015 = vpop.f32.mrf.mxu0
        %v1016 = vadd.f32 %v823, %v1015
        %v1017 = vpop.f32.mrf.mxu0
        %v1018 = vpop.f32.mrf.mxu0
        %v1019 = vadd.f32 %v823, %v1018
        %v1020 = vpop.f32.mrf.mxu0
        %1021 = vmatprep.mubr.bf16.mxu0 0
        %1022 = vmatmul.mubr.bf16.gmra.mxu0 %v928
        %v1023 = vpop.f32.mrf.mxu0
        %v1024 = vadd.f32 %v823, %v1023
        %v1025 = vpop.f32.mrf.mxu0
        %v1026 = vpop.f32.mrf.mxu0
        %v1027 = vadd.f32 %v823, %v1026
        %v1028 = vpop.f32.mrf.mxu0
        %1029 = vmatprep.mubr.bf16.mxu0 0
        %1030 = vmatmul.mubr.bf16.gmra.mxu0 %v931
        %v1031 = vpop.f32.mrf.mxu0
        %v1032 = vadd.f32 %v823, %v1031
        %v1033 = vpop.f32.mrf.mxu0
        %v1034 = vpop.f32.mrf.mxu0
        %v1035 = vadd.f32 %v823, %v1034
        %v1036 = vpop.f32.mrf.mxu0
        %1037 = vmatprep.mubr.bf16.mxu0 0
        %1038 = vmatmul.mubr.bf16.gmra.mxu0 %v934
        %v1039 = vpop.f32.mrf.mxu0
        %v1040 = vadd.f32 %v823, %v1039
        %v1041 = vpop.f32.mrf.mxu0
        %v1042 = vpop.f32.mrf.mxu0
        %v1043 = vadd.f32 %v823, %v1042
        %v1044 = vpop.f32.mrf.mxu0
        %1045 = vmatprep.mubr.bf16.mxu0 0
        %1046 = vmatmul.mubr.bf16.gmra.mxu0 %v937
        %v1047 = vpop.f32.mrf.mxu0
        %v1048 = vadd.f32 %v823, %v1047
        %v1049 = vpop.f32.mrf.mxu0
        %v1050 = vpop.f32.mrf.mxu0
        %v1051 = vadd.f32 %v823, %v1050
        %v1052 = vpop.f32.mrf.mxu0
        %1053 = vmatprep.mubr.bf16.mxu0 0
        %1054 = vmatmul.mubr.bf16.gmra.mxu0 %v940
        %v1055 = vpop.f32.mrf.mxu0
        %v1056 = vadd.f32 %v823, %v1055
        %v1057 = vpop.f32.mrf.mxu0
        %v1058 = vpop.f32.mrf.mxu0
        %v1059 = vadd.f32 %v823, %v1058
        %v1060 = vpop.f32.mrf.mxu0
        %1061 = vmatprep.mubr.bf16.mxu0 0
        %1062 = vmatmul.mubr.bf16.gmra.mxu0 %v943
        %v1063 = vpop.f32.mrf.mxu0
        %v1064 = vadd.f32 %v823, %v1063
        %v1065 = vpop.f32.mrf.mxu0
        %v1066 = vpop.f32.mrf.mxu0
        %v1067 = vadd.f32 %v823, %v1066
        %v1068 = vpop.f32.mrf.mxu0
        %1069 = vmatprep.mubr.bf16.mxu0 0
        %1070 = vmatmul.mubr.bf16.gmra.mxu0 %v946
        %v1071 = vpop.f32.mrf.mxu0
        %v1072 = vadd.f32 %v823, %v1071
        %v1073 = vpop.f32.mrf.mxu0
        %v1074 = vpop.f32.mrf.mxu0
        %v1075 = vadd.f32 %v823, %v1074
        %v1076 = vpop.f32.mrf.mxu0
        %1077 = vmatprep.mubr.bf16.mxu0 0
        %1078 = vmatmul.mubr.bf16.gmra.mxu0 %v949
        %v1079 = vpop.f32.mrf.mxu0
        %v1080 = vadd.f32 %v823, %v1079
        %v1081 = vpop.f32.mrf.mxu0
        %v1082 = vpop.f32.mrf.mxu0
        %v1083 = vadd.f32 %v823, %v1082
        %v1084 = vpop.f32.mrf.mxu0
        %1085 = vmatprep.mubr.bf16.mxu0 0
        %1086 = vmatmul.mubr.bf16.gmra.mxu0 %v952
        %v1087 = vpop.f32.mrf.mxu0
        %v1088 = vadd.f32 %v823, %v1087
        %v1089 = vpop.f32.mrf.mxu0
        %v1090 = vpop.f32.mrf.mxu0
        %v1091 = vadd.f32 %v823, %v1090
        %v1092 = vpop.f32.mrf.mxu0
        %1093 = vmatprep.mubr.bf16.mxu0 0
        %1094 = vmatmul.mubr.bf16.gmra.mxu0 %v955
        %v1095 = vpop.f32.mrf.mxu0
        %v1096 = vadd.f32 %v823, %v1095
        %v1097 = vpop.f32.mrf.mxu0
        %v1098 = vpop.f32.mrf.mxu0
        %v1099 = vadd.f32 %v823, %v1098
        %v1100 = vpop.f32.mrf.mxu0
        %1101 = vmatprep.mubr.bf16.mxu0 0
        %1102 = vmatmul.mubr.bf16.gmra.mxu0 %v958
        %v1103 = vpop.f32.mrf.mxu0
        %v1104 = vadd.f32 %v823, %v1103
        %v1105 = vpop.f32.mrf.mxu0
        %v1106 = vpop.f32.mrf.mxu0
        %v1107 = vadd.f32 %v823, %v1106
        %v1108 = vpop.f32.mrf.mxu0
        %1109 = vmatprep.mubr.bf16.mxu0 0
        %1110 = vmatmul.mubr.bf16.gmra.mxu0 %v961
        %v1111 = vpop.f32.mrf.mxu0
        %v1112 = vadd.f32 %v823, %v1111
        %v1113 = vpop.f32.mrf.mxu0
        %v1114 = vpop.f32.mrf.mxu0
        %v1115 = vadd.f32 %v823, %v1114
        %v1116 = vpop.f32.mrf.mxu0
        %1117 = vmatprep.mubr.bf16.mxu0 0
        %1118 = vmatmul.mubr.bf16.gmra.mxu0 %v964
        %v1119 = vpop.f32.mrf.mxu0
        %v1120 = vadd.f32 %v823, %v1119
        %v1121 = vpop.f32.mrf.mxu0
        %v1122 = vpop.f32.mrf.mxu0
        %v1123 = vadd.f32 %v823, %v1122
        %v1124 = vpop.f32.mrf.mxu0
        %1125 = vmatprep.mubr.bf16.mxu0 0
        %1126 = vmatmul.mubr.bf16.gmra.mxu0 %v967
        %v1127 = vpop.f32.mrf.mxu0
        %v1128 = vadd.f32 %v823, %v1127
        %v1129 = vpop.f32.mrf.mxu0
        %v1130 = vpop.f32.mrf.mxu0
        %v1131 = vadd.f32 %v823, %v1130
        %v1132 = vpop.f32.mrf.mxu0
        %1133 = vdwg.mxu0
        %v1134 = vmax.f32 %v1008, 0.0
        %v1135 = vmax.f32 %v1011, 0.0
        %v1136 = vmax.f32 %v1016, 0.0
        %v1137 = vmax.f32 %v1019, 0.0
        %v1138 = vmax.f32 %v1024, 0.0
        %v1139 = vmax.f32 %v1027, 0.0
        %v1140 = vmax.f32 %v1032, 0.0
        %v1141 = vmax.f32 %v1035, 0.0
        %v1142 = vmax.f32 %v1040, 0.0
        %v1143 = vmax.f32 %v1043, 0.0
        %v1144 = vmax.f32 %v1048, 0.0
        %v1145 = vmax.f32 %v1051, 0.0
        %v1146 = vmax.f32 %v1056, 0.0
        %v1147 = vmax.f32 %v1059, 0.0
        %v1148 = vmax.f32 %v1064, 0.0
        %v1149 = vmax.f32 %v1067, 0.0
        %v1150 = vmax.f32 %v1072, 0.0
        %v1151 = vmax.f32 %v1075, 0.0
        %v1152 = vmax.f32 %v1080, 0.0
        %v1153 = vmax.f32 %v1083, 0.0
        %v1154 = vmax.f32 %v1088, 0.0
        %v1155 = vmax.f32 %v1091, 0.0
        %v1156 = vmax.f32 %v1096, 0.0
        %v1157 = vmax.f32 %v1099, 0.0
        %v1158 = vmax.f32 %v1104, 0.0
        %v1159 = vmax.f32 %v1107, 0.0
        %v1160 = vmax.f32 %v1112, 0.0
        %v1161 = vmax.f32 %v1115, 0.0
        %v1162 = vmax.f32 %v1120, 0.0
        %v1163 = vmax.f32 %v1123, 0.0
        %v1164 = vmax.f32 %v1128, 0.0
        %v1165 = vmax.f32 %v1131, 0.0
        %v1166 = vpack.c.bf16 %v1135, %v1134
        %v1167 = vpack.c.bf16 %v1137, %v1136
        %v1168 = vpack.c.bf16 %v1139, %v1138
        %v1169 = vpack.c.bf16 %v1141, %v1140
        %v1170 = vpack.c.bf16 %v1143, %v1142
        %v1171 = vpack.c.bf16 %v1145, %v1144
        %v1172 = vpack.c.bf16 %v1147, %v1146
        %v1173 = vpack.c.bf16 %v1149, %v1148
        %v1174 = vpack.c.bf16 %v1151, %v1150
        %v1175 = vpack.c.bf16 %v1153, %v1152
        %v1176 = vpack.c.bf16 %v1155, %v1154
        %v1177 = vpack.c.bf16 %v1157, %v1156
        %v1178 = vpack.c.bf16 %v1159, %v1158
        %v1179 = vpack.c.bf16 %v1161, %v1160
        %v1180 = vpack.c.bf16 %v1163, %v1162
        %v1181 = vpack.c.bf16 %v1165, %v1164
        %vm1182 = vcmask 257024
        %1183 = vst.msk [vmem:[#allocation2] sm:$0xf] %vm1182, 0
        %1184 = vst.msk [vmem:[#allocation2 + $0x4] sm:$0xf] %vm1182, 0
        %1185 = vst.msk [vmem:[#allocation2 + $0x8] sm:$0xf] %vm1182, 0
        %1186 = vst.msk [vmem:[#allocation2 + $0xc] sm:$0xf] %vm1182, 0
        %1187 = vst.msk [vmem:[#allocation2 + $0x10] sm:$0xf] %vm1182, 0
        %1188 = vst.msk [vmem:[#allocation2 + $0x14] sm:$0xf] %vm1182, 0
        %1189 = vst.msk [vmem:[#allocation2 + $0x18] sm:$0xf] %vm1182, 0
        %1190 = vst.msk [vmem:[#allocation2 + $0x1c] sm:$0xf] %vm1182, 0
        %1191 = vst.msk [vmem:[#allocation2 + $0x20] sm:$0xf] %vm1182, 0
        %1192 = vst.msk [vmem:[#allocation2 + $0x24] sm:$0xf] %vm1182, 0
        %1193 = vst.msk [vmem:[#allocation2 + $0x28] sm:$0xf] %vm1182, 0
        %1194 = vst.msk [vmem:[#allocation2 + $0x2c] sm:$0xf] %vm1182, 0
        %1195 = vst.msk [vmem:[#allocation2 + $0x30] sm:$0xf] %vm1182, 0
        %1196 = vst.msk [vmem:[#allocation2 + $0x34] sm:$0xf] %vm1182, 0
        %1197 = vst.msk [vmem:[#allocation2 + $0x38] sm:$0xf] %vm1182, 0
        %1198 = vst.msk [vmem:[#allocation2 + $0x3c] sm:$0xf] %vm1182, 0
        %1199 = vst.msk [vmem:[#allocation2 + $0x40] sm:$0xf] %vm1182, 0
        %1200 = vst.msk [vmem:[#allocation2 + $0x44] sm:$0xf] %vm1182, 0
        %1201 = vst.msk [vmem:[#allocation2 + $0x48] sm:$0xf] %vm1182, 0
        %1202 = vst.msk [vmem:[#allocation2 + $0x4c] sm:$0xf] %vm1182, 0
        %1203 = vst.msk [vmem:[#allocation2 + $0x50] sm:$0xf] %vm1182, 0
        %1204 = vst.msk [vmem:[#allocation2 + $0x54] sm:$0xf] %vm1182, 0
        %1205 = vst.msk [vmem:[#allocation2 + $0x58] sm:$0xf] %vm1182, 0
        %1206 = vst.msk [vmem:[#allocation2 + $0x5c] sm:$0xf] %vm1182, 0
        %1207 = vst.msk [vmem:[#allocation2 + $0x60] sm:$0xf] %vm1182, 0
        %1208 = vst.msk [vmem:[#allocation2 + $0x64] sm:$0xf] %vm1182, 0
        %1209 = vst.msk [vmem:[#allocation2 + $0x68] sm:$0xf] %vm1182, 0
        %1210 = vst.msk [vmem:[#allocation2 + $0x6c] sm:$0xf] %vm1182, 0
        %1211 = vst.msk [vmem:[#allocation2 + $0x70] sm:$0xf] %vm1182, 0
        %1212 = vst.msk [vmem:[#allocation2 + $0x74] sm:$0xf] %vm1182, 0
        %1213 = vst.msk [vmem:[#allocation2 + $0x78] sm:$0xf] %vm1182, 0
        %1214 = vst.msk [vmem:[#allocation2 + $0x7c] sm:$0xf] %vm1182, 0
        %1215 = vst.msk [vmem:[#allocation2 + $0x80] sm:$0xf] %vm1182, 0
        %1216 = vst.msk [vmem:[#allocation2 + $0x84] sm:$0xf] %vm1182, 0
        %1217 = vst.msk [vmem:[#allocation2 + $0x88] sm:$0xf] %vm1182, 0
        %1218 = vst.msk [vmem:[#allocation2 + $0x8c] sm:$0xf] %vm1182, 0
        %1219 = vst.msk [vmem:[#allocation2 + $0x90] sm:$0xf] %vm1182, 0
        %1220 = vst.msk [vmem:[#allocation2 + $0x94] sm:$0xf] %vm1182, 0
        %1221 = vst.msk [vmem:[#allocation2 + $0x98] sm:$0xf] %vm1182, 0
        %1222 = vst.msk [vmem:[#allocation2 + $0x9c] sm:$0xf] %vm1182, 0
        %1223 = vst.msk [vmem:[#allocation2 + $0xa0] sm:$0xf] %vm1182, 0
        %1224 = vst.msk [vmem:[#allocation2 + $0xa4] sm:$0xf] %vm1182, 0
        %1225 = vst.msk [vmem:[#allocation2 + $0xa8] sm:$0xf] %vm1182, 0
        %1226 = vst.msk [vmem:[#allocation2 + $0xac] sm:$0xf] %vm1182, 0
        %1227 = vst.msk [vmem:[#allocation2 + $0xb0] sm:$0xf] %vm1182, 0
        %1228 = vst.msk [vmem:[#allocation2 + $0xb4] sm:$0xf] %vm1182, 0
        %1229 = vst.msk [vmem:[#allocation2 + $0xb8] sm:$0xf] %vm1182, 0
        %1230 = vst.msk [vmem:[#allocation2 + $0xbc] sm:$0xf] %vm1182, 0
        %1231 = vst.msk [vmem:[#allocation2 + $0xc0] sm:$0xf] %vm1182, 0
        %1232 = vst.msk [vmem:[#allocation2 + $0xc4] sm:$0xf] %vm1182, 0
        %1233 = vst.msk [vmem:[#allocation2 + $0xc8] sm:$0xf] %vm1182, 0
        %1234 = vst.msk [vmem:[#allocation2 + $0xcc] sm:$0xf] %vm1182, 0
        %1235 = vst.msk [vmem:[#allocation2 + $0xd0] sm:$0xf] %vm1182, 0
        %1236 = vst.msk [vmem:[#allocation2 + $0xd4] sm:$0xf] %vm1182, 0
        %1237 = vst.msk [vmem:[#allocation2 + $0xd8] sm:$0xf] %vm1182, 0
        %1238 = vst.msk [vmem:[#allocation2 + $0xdc] sm:$0xf] %vm1182, 0
        %1239 = vst.msk [vmem:[#allocation2 + $0xe0] sm:$0xf] %vm1182, 0
        %1240 = vst.msk [vmem:[#allocation2 + $0xe4] sm:$0xf] %vm1182, 0
        %1241 = vst.msk [vmem:[#allocation2 + $0xe8] sm:$0xf] %vm1182, 0
        %1242 = vst.msk [vmem:[#allocation2 + $0xec] sm:$0xf] %vm1182, 0
        %1243 = vst.msk [vmem:[#allocation2 + $0xf0] sm:$0xf] %vm1182, 0
        %1244 = vst.msk [vmem:[#allocation2 + $0xf4] sm:$0xf] %vm1182, 0
        %1245 = vst.msk [vmem:[#allocation2 + $0xf8] sm:$0xf] %vm1182, 0
        %1246 = vst.msk [vmem:[#allocation2 + $0xfc] sm:$0xf] %vm1182, 0
        %1247 = vst.msk [vmem:[#allocation2 + $0x100] sm:$0xf] %vm1182, 0
        %1248 = vst.msk [vmem:[#allocation2 + $0x104] sm:$0xf] %vm1182, 0
        %1249 = vst.msk [vmem:[#allocation2 + $0x108] sm:$0xf] %vm1182, 0
        %1250 = vst.msk [vmem:[#allocation2 + $0x10c] sm:$0xf] %vm1182, 0
        %1251 = vst.msk [vmem:[#allocation2 + $0x110] sm:$0xf] %vm1182, 0
        %1252 = vst.msk [vmem:[#allocation2 + $0x114] sm:$0xf] %vm1182, 0
        %1253 = vst.msk [vmem:[#allocation2 + $0x118] sm:$0xf] %vm1182, 0
        %1254 = vst.msk [vmem:[#allocation2 + $0x11c] sm:$0xf] %vm1182, 0
        %1255 = vst.msk [vmem:[#allocation2 + $0x120] sm:$0xf] %vm1182, 0
        %1256 = vst.msk [vmem:[#allocation2 + $0x124] sm:$0xf] %vm1182, 0
        %1257 = vst.msk [vmem:[#allocation2 + $0x128] sm:$0xf] %vm1182, 0
        %1258 = vst.msk [vmem:[#allocation2 + $0x12c] sm:$0xf] %vm1182, 0
        %1259 = vst.msk [vmem:[#allocation2 + $0x130] sm:$0xf] %vm1182, 0
        %1260 = vst.msk [vmem:[#allocation2 + $0x134] sm:$0xf] %vm1182, 0
        %1261 = vst.msk [vmem:[#allocation2 + $0x138] sm:$0xf] %vm1182, 0
        %1262 = vst.msk [vmem:[#allocation2 + $0x13c] sm:$0xf] %vm1182, 0
        %1263 = vst.msk [vmem:[#allocation2 + $0x140] sm:$0xf] %vm1182, 0
        %1264 = vst.msk [vmem:[#allocation2 + $0x144] sm:$0xf] %vm1182, 0
        %1265 = vst.msk [vmem:[#allocation2 + $0x148] sm:$0xf] %vm1182, 0
        %1266 = vst.msk [vmem:[#allocation2 + $0x14c] sm:$0xf] %vm1182, 0
        %1267 = vst.msk [vmem:[#allocation2 + $0x150] sm:$0xf] %vm1182, 0
        %1268 = vst.msk [vmem:[#allocation2 + $0x154] sm:$0xf] %vm1182, 0
        %1269 = vst.msk [vmem:[#allocation2 + $0x158] sm:$0xf] %vm1182, 0
        %1270 = vst.msk [vmem:[#allocation2 + $0x15c] sm:$0xf] %vm1182, 0
        %1271 = vst.msk [vmem:[#allocation2 + $0x160] sm:$0xf] %vm1182, 0
        %1272 = vst.msk [vmem:[#allocation2 + $0x164] sm:$0xf] %vm1182, 0
        %1273 = vst.msk [vmem:[#allocation2 + $0x168] sm:$0xf] %vm1182, 0
        %1274 = vst.msk [vmem:[#allocation2 + $0x16c] sm:$0xf] %vm1182, 0
        %1275 = vst.msk [vmem:[#allocation2 + $0x170] sm:$0xf] %vm1182, 0
        %1276 = vst.msk [vmem:[#allocation2 + $0x174] sm:$0xf] %vm1182, 0
        %1277 = vst.msk [vmem:[#allocation2 + $0x178] sm:$0xf] %vm1182, 0
        %1278 = vst.msk [vmem:[#allocation2 + $0x17c] sm:$0xf] %vm1182, 0
        %1279 = vst.msk [vmem:[#allocation2 + $0x180] sm:$0xf] %vm1182, 0
        %1280 = vst.msk [vmem:[#allocation2 + $0x184] sm:$0xf] %vm1182, 0
        %1281 = vst.msk [vmem:[#allocation2 + $0x188] sm:$0xf] %vm1182, 0
        %1282 = vst.msk [vmem:[#allocation2 + $0x18c] sm:$0xf] %vm1182, 0
        %1283 = vst.msk [vmem:[#allocation2 + $0x190] sm:$0xf] %vm1182, 0
        %1284 = vst.msk [vmem:[#allocation2 + $0x194] sm:$0xf] %vm1182, 0
        %1285 = vst.msk [vmem:[#allocation2 + $0x198] sm:$0xf] %vm1182, 0
        %1286 = vst.msk [vmem:[#allocation2 + $0x19c] sm:$0xf] %vm1182, 0
        %1287 = vst.msk [vmem:[#allocation2 + $0x1a0] sm:$0xf] %vm1182, 0
        %1288 = vst.msk [vmem:[#allocation2 + $0x1a4] sm:$0xf] %vm1182, 0
        %1289 = vst.msk [vmem:[#allocation2 + $0x1a8] sm:$0xf] %vm1182, 0
        %1290 = vst.msk [vmem:[#allocation2 + $0x1ac] sm:$0xf] %vm1182, 0
        %1291 = vst.msk [vmem:[#allocation2 + $0x1b0] sm:$0xf] %vm1182, 0
        %1292 = vst.msk [vmem:[#allocation2 + $0x1b4] sm:$0xf] %vm1182, 0
        %1293 = vst.msk [vmem:[#allocation2 + $0x1b8] sm:$0xf] %vm1182, 0
        %1294 = vst.msk [vmem:[#allocation2 + $0x1bc] sm:$0xf] %vm1182, 0
        %1295 = vst.msk [vmem:[#allocation2 + $0x1c0] sm:$0xf] %vm1182, 0
        %1296 = vst.msk [vmem:[#allocation2 + $0x1c4] sm:$0xf] %vm1182, 0
        %1297 = vst.msk [vmem:[#allocation2 + $0x1c8] sm:$0xf] %vm1182, 0
        %1298 = vst.msk [vmem:[#allocation2 + $0x1cc] sm:$0xf] %vm1182, 0
        %1299 = vst.msk [vmem:[#allocation2 + $0x1d0] sm:$0xf] %vm1182, 0
        %1300 = vst.msk [vmem:[#allocation2 + $0x1d4] sm:$0xf] %vm1182, 0
        %1301 = vst.msk [vmem:[#allocation2 + $0x1d8] sm:$0xf] %vm1182, 0
        %1302 = vst.msk [vmem:[#allocation2 + $0x1dc] sm:$0xf] %vm1182, 0
        %1303 = vst.msk [vmem:[#allocation2 + $0x1e0] sm:$0xf] %vm1182, 0
        %1304 = vst.msk [vmem:[#allocation2 + $0x1e4] sm:$0xf] %vm1182, 0
        %1305 = vst.msk [vmem:[#allocation2 + $0x1e8] sm:$0xf] %vm1182, 0
        %1306 = vst.msk [vmem:[#allocation2 + $0x1ec] sm:$0xf] %vm1182, 0
        %1307 = vst.msk [vmem:[#allocation2 + $0x1f0] sm:$0xf] %vm1182, 0
        %1308 = vst.msk [vmem:[#allocation2 + $0x1f4] sm:$0xf] %vm1182, 0
        %1309 = vst.msk [vmem:[#allocation2 + $0x1f8] sm:$0xf] %vm1182, 0
        %1310 = vst.msk [vmem:[#allocation2 + $0x1fc] sm:$0xf] %vm1182, 0
        %1311 = vst.msk [vmem:[#allocation2 + $0x200] sm:$0xf] %vm1182, 0
        %1312 = vst.msk [vmem:[#allocation2 + $0x204] sm:$0xf] %vm1182, 0
        %1313 = vst.msk [vmem:[#allocation2 + $0x208] sm:$0xf] %vm1182, 0
        %1314 = vst.msk [vmem:[#allocation2 + $0x20c] sm:$0xf] %vm1182, 0
        %1315 = vst.msk [vmem:[#allocation2 + $0x210] sm:$0xf] %vm1182, 0
        %1316 = vst.msk [vmem:[#allocation2 + $0x214] sm:$0xf] %vm1182, 0
        %1317 = vst.msk [vmem:[#allocation2 + $0x218] sm:$0xf] %vm1182, 0
        %1318 = vst.msk [vmem:[#allocation2 + $0x21c] sm:$0xf] %vm1182, 0
        %v1335 = vunpack.c.l.b16 %v1166
        %v1336 = vunpack.c.h.b16 %v1166
        %v1337 = vunpack.c.l.b16 %v1167
        %v1338 = vunpack.c.h.b16 %v1167
        %v1339 = vunpack.c.l.b16 %v1168
        %v1340 = vunpack.c.h.b16 %v1168
        %v1341 = vunpack.c.l.b16 %v1169
        %v1342 = vunpack.c.h.b16 %v1169
        %v1343 = vunpack.c.l.b16 %v1170
        %v1344 = vunpack.c.h.b16 %v1170
        %v1345 = vunpack.c.l.b16 %v1171
        %v1346 = vunpack.c.h.b16 %v1171
        %v1347 = vunpack.c.l.b16 %v1172
        %v1348 = vunpack.c.h.b16 %v1172
        %v1349 = vunpack.c.l.b16 %v1173
        %v1350 = vunpack.c.h.b16 %v1173
        %v1351 = vunpack.c.l.b16 %v1174
        %v1352 = vunpack.c.h.b16 %v1174
        %v1353 = vunpack.c.l.b16 %v1175
        %v1354 = vunpack.c.h.b16 %v1175
        %v1355 = vunpack.c.l.b16 %v1176
        %v1356 = vunpack.c.h.b16 %v1176
        %v1357 = vunpack.c.l.b16 %v1177
        %v1358 = vunpack.c.h.b16 %v1177
        %v1359 = vunpack.c.l.b16 %v1178
        %v1360 = vunpack.c.h.b16 %v1178
        %v1361 = vunpack.c.l.b16 %v1179
        %v1362 = vunpack.c.h.b16 %v1179
        %v1363 = vunpack.c.l.b16 %v1180
        %v1364 = vunpack.c.h.b16 %v1180
        %v1365 = vunpack.c.l.b16 %v1181
        %v1366 = vunpack.c.h.b16 %v1181
        %v1367 = vpack.c.b16 %v1335, %v1335
        %v1368 = vpack.c.b16 %v1336, %v1336
        %v1369 = vpack.c.b16 %v1337, %v1337
        %v1370 = vpack.c.b16 %v1338, %v1338
        %v1371 = vpack.c.b16 %v1339, %v1339
        %v1372 = vpack.c.b16 %v1340, %v1340
        %v1373 = vpack.c.b16 %v1341, %v1341
        %v1374 = vpack.c.b16 %v1342, %v1342
        %v1375 = vpack.c.b16 %v1343, %v1343
        %v1376 = vpack.c.b16 %v1344, %v1344
        %v1377 = vpack.c.b16 %v1345, %v1345
        %v1378 = vpack.c.b16 %v1346, %v1346
        %v1379 = vpack.c.b16 %v1347, %v1347
        %v1380 = vpack.c.b16 %v1348, %v1348
        %v1381 = vpack.c.b16 %v1349, %v1349
        %v1382 = vpack.c.b16 %v1350, %v1350
        %v1383 = vpack.c.b16 %v1351, %v1351
        %v1384 = vpack.c.b16 %v1352, %v1352
        %v1385 = vpack.c.b16 %v1353, %v1353
        %v1386 = vpack.c.b16 %v1354, %v1354
        %v1387 = vpack.c.b16 %v1355, %v1355
        %v1388 = vpack.c.b16 %v1356, %v1356
        %v1389 = vpack.c.b16 %v1357, %v1357
        %v1390 = vpack.c.b16 %v1358, %v1358
        %v1391 = vpack.c.b16 %v1359, %v1359
        %v1392 = vpack.c.b16 %v1360, %v1360
        %v1393 = vpack.c.b16 %v1361, %v1361
        %v1394 = vpack.c.b16 %v1362, %v1362
        %v1395 = vpack.c.b16 %v1363, %v1363
        %v1396 = vpack.c.b16 %v1364, %v1364
        %v1397 = vpack.c.b16 %v1365, %v1365
        %v1398 = vpack.c.b16 %v1366, %v1366
        %1431 = vst.msk [vmem:[#allocation2 + $0xd0] sm:$0xf] %vm1182, %v1367
        %1432 = vst.msk [vmem:[#allocation2 + $0xd4] sm:$0xf] %vm1182, %v1368
        %1433 = vst.msk [vmem:[#allocation2 + $0xd8] sm:$0xf] %vm1182, %v1369
        %1434 = vst.msk [vmem:[#allocation2 + $0xdc] sm:$0xf] %vm1182, %v1370
        %1435 = vst.msk [vmem:[#allocation2 + $0xe0] sm:$0xf] %vm1182, %v1371
        %1436 = vst.msk [vmem:[#allocation2 + $0xe4] sm:$0xf] %vm1182, %v1372
        %1437 = vst.msk [vmem:[#allocation2 + $0xe8] sm:$0xf] %vm1182, %v1373
        %1438 = vst.msk [vmem:[#allocation2 + $0xec] sm:$0xf] %vm1182, %v1374
        %1439 = vst.msk [vmem:[#allocation2 + $0xf0] sm:$0xf] %vm1182, %v1375
        %1440 = vst.msk [vmem:[#allocation2 + $0xf4] sm:$0xf] %vm1182, %v1376
        %1441 = vst.msk [vmem:[#allocation2 + $0xf8] sm:$0xf] %vm1182, %v1377
        %1442 = vst.msk [vmem:[#allocation2 + $0xfc] sm:$0xf] %vm1182, %v1378
        %1443 = vst.msk [vmem:[#allocation2 + $0x100] sm:$0xf] %vm1182, %v1379
        %1444 = vst.msk [vmem:[#allocation2 + $0x104] sm:$0xf] %vm1182, %v1380
        %1445 = vst.msk [vmem:[#allocation2 + $0x108] sm:$0xf] %vm1182, %v1381
        %1446 = vst.msk [vmem:[#allocation2 + $0x10c] sm:$0xf] %vm1182, %v1382
        %1447 = vst.msk [vmem:[#allocation2 + $0x110] sm:$0xf] %vm1182, %v1383
        %1448 = vst.msk [vmem:[#allocation2 + $0x114] sm:$0xf] %vm1182, %v1384
        %1449 = vst.msk [vmem:[#allocation2 + $0x118] sm:$0xf] %vm1182, %v1385
        %1450 = vst.msk [vmem:[#allocation2 + $0x11c] sm:$0xf] %vm1182, %v1386
        %1451 = vst.msk [vmem:[#allocation2 + $0x120] sm:$0xf] %vm1182, %v1387
        %1452 = vst.msk [vmem:[#allocation2 + $0x124] sm:$0xf] %vm1182, %v1388
        %1453 = vst.msk [vmem:[#allocation2 + $0x128] sm:$0xf] %vm1182, %v1389
        %1454 = vst.msk [vmem:[#allocation2 + $0x12c] sm:$0xf] %vm1182, %v1390
        %1455 = vst.msk [vmem:[#allocation2 + $0x130] sm:$0xf] %vm1182, %v1391
        %1456 = vst.msk [vmem:[#allocation2 + $0x134] sm:$0xf] %vm1182, %v1392
        %1457 = vst.msk [vmem:[#allocation2 + $0x138] sm:$0xf] %vm1182, %v1393
        %1458 = vst.msk [vmem:[#allocation2 + $0x13c] sm:$0xf] %vm1182, %v1394
        %1459 = vst.msk [vmem:[#allocation2 + $0x140] sm:$0xf] %vm1182, %v1395
        %1460 = vst.msk [vmem:[#allocation2 + $0x144] sm:$0xf] %vm1182, %v1396
        %1461 = vst.msk [vmem:[#allocation2 + $0x148] sm:$0xf] %vm1182, %v1397
        %1462 = vst.msk [vmem:[#allocation2 + $0x14c] sm:$0xf] %vm1182, %v1398
        %v1463 = vld [vmem:[#allocation2 + $0x9c] sm:$0xe]
        %v1464 = vld [vmem:[#allocation2 + $0xa0] sm:$0xf]
        %v1465 = vld [vmem:[#allocation2 + $0xa4] sm:$0xf]
        %v1466 = vld [vmem:[#allocation2 + $0xa8] sm:$0xf]
        %v1467 = vld [vmem:[#allocation2 + $0xac] sm:$0xf]
        %v1468 = vld [vmem:[#allocation2 + $0xb0] sm:$0xf]
        %v1469 = vld [vmem:[#allocation2 + $0xb4] sm:$0xf]
        %v1470 = vld [vmem:[#allocation2 + $0xb8] sm:$0xf]
        %v1471 = vld [vmem:[#allocation2 + $0xbc] sm:$0xf]
        %v1472 = vld [vmem:[#allocation2 + $0xc0] sm:$0xf]
        %v1473 = vld [vmem:[#allocation2 + $0xc4] sm:$0xf]
        %v1474 = vld [vmem:[#allocation2 + $0xc8] sm:$0xf]
        %v1475 = vld [vmem:[#allocation2 + $0xcc] sm:$0xf]
        %v1476 = vld [vmem:[#allocation2 + $0xd0] sm:$0xf]
        %v1477 = vld [vmem:[#allocation2 + $0xd4] sm:$0xf]
        %v1478 = vld [vmem:[#allocation2 + $0xd8] sm:$0xf]
        %v1479 = vld [vmem:[#allocation2 + $0xdc] sm:$0xf]
        %v1480 = vld [vmem:[#allocation2 + $0xe0] sm:$0xf]
        %v1481 = vld [vmem:[#allocation2 + $0xe4] sm:$0xf]
        %v1482 = vld [vmem:[#allocation2 + $0xe8] sm:$0xf]
        %v1483 = vld [vmem:[#allocation2 + $0xec] sm:$0xf]
        %v1484 = vld [vmem:[#allocation2 + $0xf0] sm:$0xf]
        %v1485 = vld [vmem:[#allocation2 + $0xf4] sm:$0xf]
        %v1486 = vld [vmem:[#allocation2 + $0xf8] sm:$0xf]
        %v1487 = vld [vmem:[#allocation2 + $0xfc] sm:$0xf]
        %v1488 = vld [vmem:[#allocation2 + $0x100] sm:$0xf]
        %v1489 = vld [vmem:[#allocation2 + $0x104] sm:$0xf]
        %v1490 = vld [vmem:[#allocation2 + $0x108] sm:$0xf]
        %v1491 = vld [vmem:[#allocation2 + $0x10c] sm:$0xf]
        %v1492 = vld [vmem:[#allocation2 + $0x110] sm:$0xf]
        %v1493 = vld [vmem:[#allocation2 + $0x114] sm:$0xf]
        %v1494 = vld [vmem:[#allocation2 + $0x118] sm:$0xf]
        %v1495 = vld [vmem:[#allocation2 + $0x11c] sm:$0x1]
        %vm1496 = vcmp.ge.s32.totalorder %v749, 6
        %vm1497 = vcmp.ge.s32.totalorder %v750, 6
        %vm1498 = vcmp.ge.s32.totalorder %v751, 6
        %vm1499 = vcmp.ge.s32.totalorder %v752, 6
        %vm1500 = vcmp.ge.s32.totalorder %v753, 6
        %vm1501 = vcmp.ge.s32.totalorder %v754, 6
        %vm1502 = vcmp.ge.s32.totalorder %v755, 6
        %vm1503 = vcmp.ge.s32.totalorder %v756, 6
        %vm1504 = vcmp.ge.s32.totalorder %v757, 6
        %vm1505 = vcmp.ge.s32.totalorder %v758, 6
        %vm1506 = vcmp.ge.s32.totalorder %v759, 6
        %vm1507 = vcmp.ge.s32.totalorder %v760, 6
        %vm1508 = vcmp.ge.s32.totalorder %v761, 6
        %vm1509 = vcmp.ge.s32.totalorder %v762, 6
        %vm1510 = vcmp.ge.s32.totalorder %v763, 6
        %vm1511 = vcmp.ge.s32.totalorder %v764, 6
        %vm1512 = vcmp.ge.s32.totalorder %v765, 6
        %vm1513 = vcmp.ge.s32.totalorder %v766, 6
        %vm1514 = vcmp.ge.s32.totalorder %v767, 6
        %vm1515 = vcmp.ge.s32.totalorder %v768, 6
        %vm1516 = vcmp.ge.s32.totalorder %v769, 6
        %vm1517 = vcmp.ge.s32.totalorder %v770, 6
        %vm1518 = vcmp.ge.s32.totalorder %v771, 6
        %vm1519 = vcmp.ge.s32.totalorder %v772, 6
        %vm1520 = vcmp.ge.s32.totalorder %v773, 6
        %vm1521 = vcmp.ge.s32.totalorder %v774, 6
        %vm1522 = vcmp.ge.s32.totalorder %v775, 6
        %vm1523 = vcmp.ge.s32.totalorder %v776, 6
        %vm1524 = vcmp.ge.s32.totalorder %v777, 6
        %vm1525 = vcmp.ge.s32.totalorder %v778, 6
        %vm1526 = vcmp.ge.s32.totalorder %v779, 6
        %vm1527 = vcmp.ge.s32.totalorder %v780, 6
        %v1528 = vsel %vm1496, 1, 0
        %v1529 = vsel %vm1497, 1, 0
        %v1530 = vsel %vm1498, 1, 0
        %v1531 = vsel %vm1499, 1, 0
        %v1532 = vsel %vm1500, 1, 0
        %v1533 = vsel %vm1501, 1, 0
        %v1534 = vsel %vm1502, 1, 0
        %v1535 = vsel %vm1503, 1, 0
        %v1536 = vsel %vm1504, 1, 0
        %v1537 = vsel %vm1505, 1, 0
        %v1538 = vsel %vm1506, 1, 0
        %v1539 = vsel %vm1507, 1, 0
        %v1540 = vsel %vm1508, 1, 0
        %v1541 = vsel %vm1509, 1, 0
        %v1542 = vsel %vm1510, 1, 0
        %v1543 = vsel %vm1511, 1, 0
        %v1544 = vsel %vm1512, 1, 0
        %v1545 = vsel %vm1513, 1, 0
        %v1546 = vsel %vm1514, 1, 0
        %v1547 = vsel %vm1515, 1, 0
        %v1548 = vsel %vm1516, 1, 0
        %v1549 = vsel %vm1517, 1, 0
        %v1550 = vsel %vm1518, 1, 0
        %v1551 = vsel %vm1519, 1, 0
        %v1552 = vsel %vm1520, 1, 0
        %v1553 = vsel %vm1521, 1, 0
        %v1554 = vsel %vm1522, 1, 0
        %v1555 = vsel %vm1523, 1, 0
        %v1556 = vsel %vm1524, 1, 0
        %v1557 = vsel %vm1525, 1, 0
        %v1558 = vsel %vm1526, 1, 0
        %v1559 = vsel %vm1527, 1, 0
        %vm1560 = vcmp.eq.s32.totalorder %v1528, 1
        %vm1561 = vcmp.eq.s32.totalorder %v1529, 1
        %vm1562 = vcmp.eq.s32.totalorder %v1530, 1
        %vm1563 = vcmp.eq.s32.totalorder %v1531, 1
        %vm1564 = vcmp.eq.s32.totalorder %v1532, 1
        %vm1565 = vcmp.eq.s32.totalorder %v1533, 1
        %vm1566 = vcmp.eq.s32.totalorder %v1534, 1
        %vm1567 = vcmp.eq.s32.totalorder %v1535, 1
        %vm1568 = vcmp.eq.s32.totalorder %v1536, 1
        %vm1569 = vcmp.eq.s32.totalorder %v1537, 1
        %vm1570 = vcmp.eq.s32.totalorder %v1538, 1
        %vm1571 = vcmp.eq.s32.totalorder %v1539, 1
        %vm1572 = vcmp.eq.s32.totalorder %v1540, 1
        %vm1573 = vcmp.eq.s32.totalorder %v1541, 1
        %vm1574 = vcmp.eq.s32.totalorder %v1542, 1
        %vm1575 = vcmp.eq.s32.totalorder %v1543, 1
        %vm1576 = vcmp.eq.s32.totalorder %v1544, 1
        %vm1577 = vcmp.eq.s32.totalorder %v1545, 1
        %vm1578 = vcmp.eq.s32.totalorder %v1546, 1
        %vm1579 = vcmp.eq.s32.totalorder %v1547, 1
        %vm1580 = vcmp.eq.s32.totalorder %v1548, 1
        %vm1581 = vcmp.eq.s32.totalorder %v1549, 1
        %vm1582 = vcmp.eq.s32.totalorder %v1550, 1
        %vm1583 = vcmp.eq.s32.totalorder %v1551, 1
        %vm1584 = vcmp.eq.s32.totalorder %v1552, 1
        %vm1585 = vcmp.eq.s32.totalorder %v1553, 1
        %vm1586 = vcmp.eq.s32.totalorder %v1554, 1
        %vm1587 = vcmp.eq.s32.totalorder %v1555, 1
        %vm1588 = vcmp.eq.s32.totalorder %v1556, 1
        %vm1589 = vcmp.eq.s32.totalorder %v1557, 1
        %vm1590 = vcmp.eq.s32.totalorder %v1558, 1
        %vm1591 = vcmp.eq.s32.totalorder %v1559, 1
        %vm1592 = vmpackc.low %vm1560, %vm1560
        %vm1593 = vmpackc.low %vm1561, %vm1561
        %vm1594 = vmpackc.low %vm1562, %vm1562
        %vm1595 = vmpackc.low %vm1563, %vm1563
        %vm1596 = vmpackc.low %vm1564, %vm1564
        %vm1597 = vmpackc.low %vm1565, %vm1565
        %vm1598 = vmpackc.low %vm1566, %vm1566
        %vm1599 = vmpackc.low %vm1567, %vm1567
        %vm1600 = vmpackc.low %vm1568, %vm1568
        %vm1601 = vmpackc.low %vm1569, %vm1569
        %vm1602 = vmpackc.low %vm1570, %vm1570
        %vm1603 = vmpackc.low %vm1571, %vm1571
        %vm1604 = vmpackc.low %vm1572, %vm1572
        %vm1605 = vmpackc.low %vm1573, %vm1573
        %vm1606 = vmpackc.low %vm1574, %vm1574
        %vm1607 = vmpackc.low %vm1575, %vm1575
        %vm1608 = vmpackc.low %vm1576, %vm1576
        %vm1609 = vmpackc.low %vm1577, %vm1577
        %vm1610 = vmpackc.low %vm1578, %vm1578
        %vm1611 = vmpackc.low %vm1579, %vm1579
        %vm1612 = vmpackc.low %vm1580, %vm1580
        %vm1613 = vmpackc.low %vm1581, %vm1581
        %vm1614 = vmpackc.low %vm1582, %vm1582
        %vm1615 = vmpackc.low %vm1583, %vm1583
        %vm1616 = vmpackc.low %vm1584, %vm1584
        %vm1617 = vmpackc.low %vm1585, %vm1585
        %vm1618 = vmpackc.low %vm1586, %vm1586
        %vm1619 = vmpackc.low %vm1587, %vm1587
        %vm1620 = vmpackc.low %vm1588, %vm1588
        %vm1621 = vmpackc.low %vm1589, %vm1589
        %vm1622 = vmpackc.low %vm1590, %vm1590
        %vm1623 = vmpackc.low %vm1591, %vm1591
        %v1624 = vsel %vm1592, 65537, 0
        %v1625 = vsel %vm1593, 65537, 0
        %v1626 = vsel %vm1594, 65537, 0
        %v1627 = vsel %vm1595, 65537, 0
        %v1628 = vsel %vm1596, 65537, 0
        %v1629 = vsel %vm1597, 65537, 0
        %v1630 = vsel %vm1598, 65537, 0
        %v1631 = vsel %vm1599, 65537, 0
        %v1632 = vsel %vm1600, 65537, 0
        %v1633 = vsel %vm1601, 65537, 0
        %v1634 = vsel %vm1602, 65537, 0
        %v1635 = vsel %vm1603, 65537, 0
        %v1636 = vsel %vm1604, 65537, 0
        %v1637 = vsel %vm1605, 65537, 0
        %v1638 = vsel %vm1606, 65537, 0
        %v1639 = vsel %vm1607, 65537, 0
        %v1640 = vsel %vm1608, 65537, 0
        %v1641 = vsel %vm1609, 65537, 0
        %v1642 = vsel %vm1610, 65537, 0
        %v1643 = vsel %vm1611, 65537, 0
        %v1644 = vsel %vm1612, 65537, 0
        %v1645 = vsel %vm1613, 65537, 0
        %v1646 = vsel %vm1614, 65537, 0
        %v1647 = vsel %vm1615, 65537, 0
        %v1648 = vsel %vm1616, 65537, 0
        %v1649 = vsel %vm1617, 65537, 0
        %v1650 = vsel %vm1618, 65537, 0
        %v1651 = vsel %vm1619, 65537, 0
        %v1652 = vsel %vm1620, 65537, 0
        %v1653 = vsel %vm1621, 65537, 0
        %v1654 = vsel %vm1622, 65537, 0
        %v1655 = vsel %vm1623, 65537, 0
        %vm1656 = vcmask 1040384
        %vm1657 = vcmask 1044484
        %vm1658 = vmor %vm1656, %vm1657
        %v1659 = vrot.slane %v1624, 7
        %v1660 = vrot.slane %v1659, 4
        %v1661 = vrot.slane %v1625, 7
        %v1662 = vsel %vm1658, %v1660, %v1661
        %v1663 = vrot.slane %v1661, 4
        %v1664 = vrot.slane %v1626, 7
        %v1665 = vsel %vm1658, %v1663, %v1664
        %v1666 = vrot.slane %v1664, 4
        %v1667 = vrot.slane %v1627, 7
        %v1668 = vsel %vm1658, %v1666, %v1667
        %v1669 = vrot.slane %v1667, 4
        %v1670 = vrot.slane %v1628, 7
        %v1671 = vsel %vm1658, %v1669, %v1670
        %v1672 = vrot.slane %v1670, 4
        %v1673 = vrot.slane %v1629, 7
        %v1674 = vsel %vm1658, %v1672, %v1673
        %v1675 = vrot.slane %v1673, 4
        %v1676 = vrot.slane %v1630, 7
        %v1677 = vsel %vm1658, %v1675, %v1676
        %v1678 = vrot.slane %v1676, 4
        %v1679 = vrot.slane %v1631, 7
        %v1680 = vsel %vm1658, %v1678, %v1679
        %v1681 = vrot.slane %v1679, 4
        %v1682 = vrot.slane %v1632, 7
        %v1683 = vsel %vm1658, %v1681, %v1682
        %v1684 = vrot.slane %v1682, 4
        %v1685 = vrot.slane %v1633, 7
        %v1686 = vsel %vm1658, %v1684, %v1685
        %v1687 = vrot.slane %v1685, 4
        %v1688 = vrot.slane %v1634, 7
        %v1689 = vsel %vm1658, %v1687, %v1688
        %v1690 = vrot.slane %v1688, 4
        %v1691 = vrot.slane %v1635, 7
        %v1692 = vsel %vm1658, %v1690, %v1691
        %v1693 = vrot.slane %v1691, 4
        %v1694 = vrot.slane %v1636, 7
        %v1695 = vsel %vm1658, %v1693, %v1694
        %v1696 = vrot.slane %v1694, 4
        %v1697 = vrot.slane %v1637, 7
        %v1698 = vsel %vm1658, %v1696, %v1697
        %v1699 = vrot.slane %v1697, 4
        %v1700 = vrot.slane %v1638, 7
        %v1701 = vsel %vm1658, %v1699, %v1700
        %v1702 = vrot.slane %v1700, 4
        %v1703 = vrot.slane %v1639, 7
        %v1704 = vsel %vm1658, %v1702, %v1703
        %v1705 = vrot.slane %v1703, 4
        %v1706 = vrot.slane %v1640, 7
        %v1707 = vsel %vm1658, %v1705, %v1706
        %v1708 = vrot.slane %v1706, 4
        %v1709 = vrot.slane %v1641, 7
        %v1710 = vsel %vm1658, %v1708, %v1709
        %v1711 = vrot.slane %v1709, 4
        %v1712 = vrot.slane %v1642, 7
        %v1713 = vsel %vm1658, %v1711, %v1712
        %v1714 = vrot.slane %v1712, 4
        %v1715 = vrot.slane %v1643, 7
        %v1716 = vsel %vm1658, %v1714, %v1715
        %v1717 = vrot.slane %v1715, 4
        %v1718 = vrot.slane %v1644, 7
        %v1719 = vsel %vm1658, %v1717, %v1718
        %v1720 = vrot.slane %v1718, 4
        %v1721 = vrot.slane %v1645, 7
        %v1722 = vsel %vm1658, %v1720, %v1721
        %v1723 = vrot.slane %v1721, 4
        %v1724 = vrot.slane %v1646, 7
        %v1725 = vsel %vm1658, %v1723, %v1724
        %v1726 = vrot.slane %v1724, 4
        %v1727 = vrot.slane %v1647, 7
        %v1728 = vsel %vm1658, %v1726, %v1727
        %v1729 = vrot.slane %v1727, 4
        %v1730 = vrot.slane %v1648, 7
        %v1731 = vsel %vm1658, %v1729, %v1730
        %v1732 = vrot.slane %v1730, 4
        %v1733 = vrot.slane %v1649, 7
        %v1734 = vsel %vm1658, %v1732, %v1733
        %v1735 = vrot.slane %v1733, 4
        %v1736 = vrot.slane %v1650, 7
        %v1737 = vsel %vm1658, %v1735, %v1736
        %v1738 = vrot.slane %v1736, 4
        %v1739 = vrot.slane %v1651, 7
        %v1740 = vsel %vm1658, %v1738, %v1739
        %v1741 = vrot.slane %v1739, 4
        %v1742 = vrot.slane %v1652, 7
        %v1743 = vsel %vm1658, %v1741, %v1742
        %v1744 = vrot.slane %v1742, 4
        %v1745 = vrot.slane %v1653, 7
        %v1746 = vsel %vm1658, %v1744, %v1745
        %v1747 = vrot.slane %v1745, 4
        %v1748 = vrot.slane %v1654, 7
        %v1749 = vsel %vm1658, %v1747, %v1748
        %v1750 = vrot.slane %v1748, 4
        %v1751 = vrot.slane %v1655, 7
        %v1752 = vsel %vm1658, %v1750, %v1751
        %v1753 = vrot.slane %v1751, 4
        %vm1754 = vcmp.ne.s16.totalorder %v1659, 0
        %vm1755 = vcmp.ne.s16.totalorder %v1662, 0
        %vm1756 = vcmp.ne.s16.totalorder %v1665, 0
        %vm1757 = vcmp.ne.s16.totalorder %v1668, 0
        %vm1758 = vcmp.ne.s16.totalorder %v1671, 0
        %vm1759 = vcmp.ne.s16.totalorder %v1674, 0
        %vm1760 = vcmp.ne.s16.totalorder %v1677, 0
        %vm1761 = vcmp.ne.s16.totalorder %v1680, 0
        %vm1762 = vcmp.ne.s16.totalorder %v1683, 0
        %vm1763 = vcmp.ne.s16.totalorder %v1686, 0
        %vm1764 = vcmp.ne.s16.totalorder %v1689, 0
        %vm1765 = vcmp.ne.s16.totalorder %v1692, 0
        %vm1766 = vcmp.ne.s16.totalorder %v1695, 0
        %vm1767 = vcmp.ne.s16.totalorder %v1698, 0
        %vm1768 = vcmp.ne.s16.totalorder %v1701, 0
        %vm1769 = vcmp.ne.s16.totalorder %v1704, 0
        %vm1770 = vcmp.ne.s16.totalorder %v1707, 0
        %vm1771 = vcmp.ne.s16.totalorder %v1710, 0
        %vm1772 = vcmp.ne.s16.totalorder %v1713, 0
        %vm1773 = vcmp.ne.s16.totalorder %v1716, 0
        %vm1774 = vcmp.ne.s16.totalorder %v1719, 0
        %vm1775 = vcmp.ne.s16.totalorder %v1722, 0
        %vm1776 = vcmp.ne.s16.totalorder %v1725, 0
        %vm1777 = vcmp.ne.s16.totalorder %v1728, 0
        %vm1778 = vcmp.ne.s16.totalorder %v1731, 0
        %vm1779 = vcmp.ne.s16.totalorder %v1734, 0
        %vm1780 = vcmp.ne.s16.totalorder %v1737, 0
        %vm1781 = vcmp.ne.s16.totalorder %v1740, 0
        %vm1782 = vcmp.ne.s16.totalorder %v1743, 0
        %vm1783 = vcmp.ne.s16.totalorder %v1746, 0
        %vm1784 = vcmp.ne.s16.totalorder %v1749, 0
        %vm1785 = vcmp.ne.s16.totalorder %v1752, 0
        %vm1786 = vcmp.ne.s16.totalorder %v1753, 0
        %v1787 = vsel %vm1754, %v1463, 0
        %v1788 = vsel %vm1755, %v1464, 0
        %v1789 = vsel %vm1756, %v1465, 0
        %v1790 = vsel %vm1757, %v1466, 0
        %v1791 = vsel %vm1758, %v1467, 0
        %v1792 = vsel %vm1759, %v1468, 0
        %v1793 = vsel %vm1760, %v1469, 0
        %v1794 = vsel %vm1761, %v1470, 0
        %v1795 = vsel %vm1762, %v1471, 0
        %v1796 = vsel %vm1763, %v1472, 0
        %v1797 = vsel %vm1764, %v1473, 0
        %v1798 = vsel %vm1765, %v1474, 0
        %v1799 = vsel %vm1766, %v1475, 0
        %v1800 = vsel %vm1767, %v1476, 0
        %v1801 = vsel %vm1768, %v1477, 0
        %v1802 = vsel %vm1769, %v1478, 0
        %v1803 = vsel %vm1770, %v1479, 0
        %v1804 = vsel %vm1771, %v1480, 0
        %v1805 = vsel %vm1772, %v1481, 0
        %v1806 = vsel %vm1773, %v1482, 0
        %v1807 = vsel %vm1774, %v1483, 0
        %v1808 = vsel %vm1775, %v1484, 0
        %v1809 = vsel %vm1776, %v1485, 0
        %v1810 = vsel %vm1777, %v1486, 0
        %v1811 = vsel %vm1778, %v1487, 0
        %v1812 = vsel %vm1779, %v1488, 0
        %v1813 = vsel %vm1780, %v1489, 0
        %v1814 = vsel %vm1781, %v1490, 0
        %v1815 = vsel %vm1782, %v1491, 0
        %v1816 = vsel %vm1783, %v1492, 0
        %v1817 = vsel %vm1784, %v1493, 0
        %v1818 = vsel %vm1785, %v1494, 0
        %v1819 = vsel %vm1786, %v1495, 0
        %v1820 = vld [vmem:[#allocation2 + $0x11c] sm:$0xf]
        %v1821 = vld [vmem:[#allocation2 + $0xa0] sm:$0x8]
        %v1822 = vld [vmem:[#allocation2 + $0x120] sm:$0x7]
        %vm1823 = vcmp.lt.s32.totalorder %v749, 10
        %vm1824 = vcmp.lt.s32.totalorder %v750, 10
        %vm1825 = vcmp.lt.s32.totalorder %v751, 10
        %vm1826 = vcmp.lt.s32.totalorder %v752, 10
        %vm1827 = vcmp.lt.s32.totalorder %v753, 10
        %vm1828 = vcmp.lt.s32.totalorder %v754, 10
        %vm1829 = vcmp.lt.s32.totalorder %v755, 10
        %vm1830 = vcmp.lt.s32.totalorder %v756, 10
        %vm1831 = vcmp.lt.s32.totalorder %v757, 10
        %vm1832 = vcmp.lt.s32.totalorder %v758, 10
        %vm1833 = vcmp.lt.s32.totalorder %v759, 10
        %vm1834 = vcmp.lt.s32.totalorder %v760, 10
        %vm1835 = vcmp.lt.s32.totalorder %v761, 10
        %vm1836 = vcmp.lt.s32.totalorder %v762, 10
        %vm1837 = vcmp.lt.s32.totalorder %v763, 10
        %vm1838 = vcmp.lt.s32.totalorder %v764, 10
        %vm1839 = vcmp.lt.s32.totalorder %v765, 10
        %vm1840 = vcmp.lt.s32.totalorder %v766, 10
        %vm1841 = vcmp.lt.s32.totalorder %v767, 10
        %vm1842 = vcmp.lt.s32.totalorder %v768, 10
        %vm1843 = vcmp.lt.s32.totalorder %v769, 10
        %vm1844 = vcmp.lt.s32.totalorder %v770, 10
        %vm1845 = vcmp.lt.s32.totalorder %v771, 10
        %vm1846 = vcmp.lt.s32.totalorder %v772, 10
        %vm1847 = vcmp.lt.s32.totalorder %v773, 10
        %vm1848 = vcmp.lt.s32.totalorder %v774, 10
        %vm1849 = vcmp.lt.s32.totalorder %v775, 10
        %vm1850 = vcmp.lt.s32.totalorder %v776, 10
        %vm1851 = vcmp.lt.s32.totalorder %v777, 10
        %vm1852 = vcmp.lt.s32.totalorder %v778, 10
        %vm1853 = vcmp.lt.s32.totalorder %v779, 10
        %vm1854 = vcmp.lt.s32.totalorder %v780, 10
        %v1855 = vsel %vm1823, 1, 0
        %v1856 = vsel %vm1824, 1, 0
        %v1857 = vsel %vm1825, 1, 0
        %v1858 = vsel %vm1826, 1, 0
        %v1859 = vsel %vm1827, 1, 0
        %v1860 = vsel %vm1828, 1, 0
        %v1861 = vsel %vm1829, 1, 0
        %v1862 = vsel %vm1830, 1, 0
        %v1863 = vsel %vm1831, 1, 0
        %v1864 = vsel %vm1832, 1, 0
        %v1865 = vsel %vm1833, 1, 0
        %v1866 = vsel %vm1834, 1, 0
        %v1867 = vsel %vm1835, 1, 0
        %v1868 = vsel %vm1836, 1, 0
        %v1869 = vsel %vm1837, 1, 0
        %v1870 = vsel %vm1838, 1, 0
        %v1871 = vsel %vm1839, 1, 0
        %v1872 = vsel %vm1840, 1, 0
        %v1873 = vsel %vm1841, 1, 0
        %v1874 = vsel %vm1842, 1, 0
        %v1875 = vsel %vm1843, 1, 0
        %v1876 = vsel %vm1844, 1, 0
        %v1877 = vsel %vm1845, 1, 0
        %v1878 = vsel %vm1846, 1, 0
        %v1879 = vsel %vm1847, 1, 0
        %v1880 = vsel %vm1848, 1, 0
        %v1881 = vsel %vm1849, 1, 0
        %v1882 = vsel %vm1850, 1, 0
        %v1883 = vsel %vm1851, 1, 0
        %v1884 = vsel %vm1852, 1, 0
        %v1885 = vsel %vm1853, 1, 0
        %v1886 = vsel %vm1854, 1, 0
        %vm1887 = vcmp.eq.s32.totalorder %v1855, 1
        %vm1888 = vcmp.eq.s32.totalorder %v1856, 1
        %vm1889 = vcmp.eq.s32.totalorder %v1857, 1
        %vm1890 = vcmp.eq.s32.totalorder %v1858, 1
        %vm1891 = vcmp.eq.s32.totalorder %v1859, 1
        %vm1892 = vcmp.eq.s32.totalorder %v1860, 1
        %vm1893 = vcmp.eq.s32.totalorder %v1861, 1
        %vm1894 = vcmp.eq.s32.totalorder %v1862, 1
        %vm1895 = vcmp.eq.s32.totalorder %v1863, 1
        %vm1896 = vcmp.eq.s32.totalorder %v1864, 1
        %vm1897 = vcmp.eq.s32.totalorder %v1865, 1
        %vm1898 = vcmp.eq.s32.totalorder %v1866, 1
        %vm1899 = vcmp.eq.s32.totalorder %v1867, 1
        %vm1900 = vcmp.eq.s32.totalorder %v1868, 1
        %vm1901 = vcmp.eq.s32.totalorder %v1869, 1
        %vm1902 = vcmp.eq.s32.totalorder %v1870, 1
        %vm1903 = vcmp.eq.s32.totalorder %v1871, 1
        %vm1904 = vcmp.eq.s32.totalorder %v1872, 1
        %vm1905 = vcmp.eq.s32.totalorder %v1873, 1
        %vm1906 = vcmp.eq.s32.totalorder %v1874, 1
        %vm1907 = vcmp.eq.s32.totalorder %v1875, 1
        %vm1908 = vcmp.eq.s32.totalorder %v1876, 1
        %vm1909 = vcmp.eq.s32.totalorder %v1877, 1
        %vm1910 = vcmp.eq.s32.totalorder %v1878, 1
        %vm1911 = vcmp.eq.s32.totalorder %v1879, 1
        %vm1912 = vcmp.eq.s32.totalorder %v1880, 1
        %vm1913 = vcmp.eq.s32.totalorder %v1881, 1
        %vm1914 = vcmp.eq.s32.totalorder %v1882, 1
        %vm1915 = vcmp.eq.s32.totalorder %v1883, 1
        %vm1916 = vcmp.eq.s32.totalorder %v1884, 1
        %vm1917 = vcmp.eq.s32.totalorder %v1885, 1
        %vm1918 = vcmp.eq.s32.totalorder %v1886, 1
        %vm1919 = vmpackc.low %vm1887, %vm1887
        %vm1920 = vmpackc.low %vm1888, %vm1888
        %vm1921 = vmpackc.low %vm1889, %vm1889
        %vm1922 = vmpackc.low %vm1890, %vm1890
        %vm1923 = vmpackc.low %vm1891, %vm1891
        %vm1924 = vmpackc.low %vm1892, %vm1892
        %vm1925 = vmpackc.low %vm1893, %vm1893
        %vm1926 = vmpackc.low %vm1894, %vm1894
        %vm1927 = vmpackc.low %vm1895, %vm1895
        %vm1928 = vmpackc.low %vm1896, %vm1896
        %vm1929 = vmpackc.low %vm1897, %vm1897
        %vm1930 = vmpackc.low %vm1898, %vm1898
        %vm1931 = vmpackc.low %vm1899, %vm1899
        %vm1932 = vmpackc.low %vm1900, %vm1900
        %vm1933 = vmpackc.low %vm1901, %vm1901
        %vm1934 = vmpackc.low %vm1902, %vm1902
        %vm1935 = vmpackc.low %vm1903, %vm1903
        %vm1936 = vmpackc.low %vm1904, %vm1904
        %vm1937 = vmpackc.low %vm1905, %vm1905
        %vm1938 = vmpackc.low %vm1906, %vm1906
        %vm1939 = vmpackc.low %vm1907, %vm1907
        %vm1940 = vmpackc.low %vm1908, %vm1908
        %vm1941 = vmpackc.low %vm1909, %vm1909
        %vm1942 = vmpackc.low %vm1910, %vm1910
        %vm1943 = vmpackc.low %vm1911, %vm1911
        %vm1944 = vmpackc.low %vm1912, %vm1912
        %vm1945 = vmpackc.low %vm1913, %vm1913
        %vm1946 = vmpackc.low %vm1914, %vm1914
        %vm1947 = vmpackc.low %vm1915, %vm1915
        %vm1948 = vmpackc.low %vm1916, %vm1916
        %vm1949 = vmpackc.low %vm1917, %vm1917
        %vm1950 = vmpackc.low %vm1918, %vm1918
        %v1951 = vsel %vm1919, 65537, 0
        %v1952 = vsel %vm1920, 65537, 0
        %v1953 = vsel %vm1921, 65537, 0
        %v1954 = vsel %vm1922, 65537, 0
        %v1955 = vsel %vm1923, 65537, 0
        %v1956 = vsel %vm1924, 65537, 0
        %v1957 = vsel %vm1925, 65537, 0
        %v1958 = vsel %vm1926, 65537, 0
        %v1959 = vsel %vm1927, 65537, 0
        %v1960 = vsel %vm1928, 65537, 0
        %v1961 = vsel %vm1929, 65537, 0
        %v1962 = vsel %vm1930, 65537, 0
        %v1963 = vsel %vm1931, 65537, 0
        %v1964 = vsel %vm1932, 65537, 0
        %v1965 = vsel %vm1933, 65537, 0
        %v1966 = vsel %vm1934, 65537, 0
        %v1967 = vsel %vm1935, 65537, 0
        %v1968 = vsel %vm1936, 65537, 0
        %v1969 = vsel %vm1937, 65537, 0
        %v1970 = vsel %vm1938, 65537, 0
        %v1971 = vsel %vm1939, 65537, 0
        %v1972 = vsel %vm1940, 65537, 0
        %v1973 = vsel %vm1941, 65537, 0
        %v1974 = vsel %vm1942, 65537, 0
        %v1975 = vsel %vm1943, 65537, 0
        %v1976 = vsel %vm1944, 65537, 0
        %v1977 = vsel %vm1945, 65537, 0
        %v1978 = vsel %vm1946, 65537, 0
        %v1979 = vsel %vm1947, 65537, 0
        %v1980 = vsel %vm1948, 65537, 0
        %v1981 = vsel %vm1949, 65537, 0
        %v1982 = vsel %vm1950, 65537, 0
        %vm1983 = vcmask 1042432
        %vm1984 = vcmask 1046532
        %vm1985 = vmor %vm1983, %vm1984
        %v1986 = vrot.slane %v1951, 5
        %v1987 = vrot.slane %v1986, 4
        %v1988 = vrot.slane %v1952, 5
        %v1989 = vsel %vm1985, %v1987, %v1988
        %v1990 = vrot.slane %v1988, 4
        %v1991 = vrot.slane %v1953, 5
        %v1992 = vsel %vm1985, %v1990, %v1991
        %v1993 = vrot.slane %v1991, 4
        %v1994 = vrot.slane %v1954, 5
        %v1995 = vsel %vm1985, %v1993, %v1994
        %v1996 = vrot.slane %v1994, 4
        %v1997 = vrot.slane %v1955, 5
        %v1998 = vsel %vm1985, %v1996, %v1997
        %v1999 = vrot.slane %v1997, 4
        %v2000 = vrot.slane %v1956, 5
        %v2001 = vsel %vm1985, %v1999, %v2000
        %v2002 = vrot.slane %v2000, 4
        %v2003 = vrot.slane %v1957, 5
        %v2004 = vsel %vm1985, %v2002, %v2003
        %v2005 = vrot.slane %v2003, 4
        %v2006 = vrot.slane %v1958, 5
        %v2007 = vsel %vm1985, %v2005, %v2006
        %v2008 = vrot.slane %v2006, 4
        %v2009 = vrot.slane %v1959, 5
        %v2010 = vsel %vm1985, %v2008, %v2009
        %v2011 = vrot.slane %v2009, 4
        %v2012 = vrot.slane %v1960, 5
        %v2013 = vsel %vm1985, %v2011, %v2012
        %v2014 = vrot.slane %v2012, 4
        %v2015 = vrot.slane %v1961, 5
        %v2016 = vsel %vm1985, %v2014, %v2015
        %v2017 = vrot.slane %v2015, 4
        %v2018 = vrot.slane %v1962, 5
        %v2019 = vsel %vm1985, %v2017, %v2018
        %v2020 = vrot.slane %v2018, 4
        %v2021 = vrot.slane %v1963, 5
        %v2022 = vsel %vm1985, %v2020, %v2021
        %v2023 = vrot.slane %v2021, 4
        %v2024 = vrot.slane %v1964, 5
        %v2025 = vsel %vm1985, %v2023, %v2024
        %v2026 = vrot.slane %v2024, 4
        %v2027 = vrot.slane %v1965, 5
        %v2028 = vsel %vm1985, %v2026, %v2027
        %v2029 = vrot.slane %v2027, 4
        %v2030 = vrot.slane %v1966, 5
        %v2031 = vsel %vm1985, %v2029, %v2030
        %v2032 = vrot.slane %v2030, 4
        %v2033 = vrot.slane %v1967, 5
        %v2034 = vsel %vm1985, %v2032, %v2033
        %v2035 = vrot.slane %v2033, 4
        %v2036 = vrot.slane %v1968, 5
        %v2037 = vsel %vm1985, %v2035, %v2036
        %v2038 = vrot.slane %v2036, 4
        %v2039 = vrot.slane %v1969, 5
        %v2040 = vsel %vm1985, %v2038, %v2039
        %v2041 = vrot.slane %v2039, 4
        %v2042 = vrot.slane %v1970, 5
        %v2043 = vsel %vm1985, %v2041, %v2042
        %v2044 = vrot.slane %v2042, 4
        %v2045 = vrot.slane %v1971, 5
        %v2046 = vsel %vm1985, %v2044, %v2045
        %v2047 = vrot.slane %v2045, 4
        %v2048 = vrot.slane %v1972, 5
        %v2049 = vsel %vm1985, %v2047, %v2048
        %v2050 = vrot.slane %v2048, 4
        %v2051 = vrot.slane %v1973, 5
        %v2052 = vsel %vm1985, %v2050, %v2051
        %v2053 = vrot.slane %v2051, 4
        %v2054 = vrot.slane %v1974, 5
        %v2055 = vsel %vm1985, %v2053, %v2054
        %v2056 = vrot.slane %v2054, 4
        %v2057 = vrot.slane %v1975, 5
        %v2058 = vsel %vm1985, %v2056, %v2057
        %v2059 = vrot.slane %v2057, 4
        %v2060 = vrot.slane %v1976, 5
        %v2061 = vsel %vm1985, %v2059, %v2060
        %v2062 = vrot.slane %v2060, 4
        %v2063 = vrot.slane %v1977, 5
        %v2064 = vsel %vm1985, %v2062, %v2063
        %v2065 = vrot.slane %v2063, 4
        %v2066 = vrot.slane %v1978, 5
        %v2067 = vsel %vm1985, %v2065, %v2066
        %v2068 = vrot.slane %v2066, 4
        %v2069 = vrot.slane %v1979, 5
        %v2070 = vsel %vm1985, %v2068, %v2069
        %v2071 = vrot.slane %v2069, 4
        %v2072 = vrot.slane %v1980, 5
        %v2073 = vsel %vm1985, %v2071, %v2072
        %v2074 = vrot.slane %v2072, 4
        %v2075 = vrot.slane %v1981, 5
        %v2076 = vsel %vm1985, %v2074, %v2075
        %v2077 = vrot.slane %v2075, 4
        %v2078 = vrot.slane %v1982, 5
        %v2079 = vsel %vm1985, %v2077, %v2078
        %v2080 = vrot.slane %v2078, 4
        %vm2081 = vcmp.ne.s16.totalorder %v1986, 0
        %vm2082 = vcmp.ne.s16.totalorder %v1989, 0
        %vm2083 = vcmp.ne.s16.totalorder %v1992, 0
        %vm2084 = vcmp.ne.s16.totalorder %v1995, 0
        %vm2085 = vcmp.ne.s16.totalorder %v1998, 0
        %vm2086 = vcmp.ne.s16.totalorder %v2001, 0
        %vm2087 = vcmp.ne.s16.totalorder %v2004, 0
        %vm2088 = vcmp.ne.s16.totalorder %v2007, 0
        %vm2089 = vcmp.ne.s16.totalorder %v2010, 0
        %vm2090 = vcmp.ne.s16.totalorder %v2013, 0
        %vm2091 = vcmp.ne.s16.totalorder %v2016, 0
        %vm2092 = vcmp.ne.s16.totalorder %v2019, 0
        %vm2093 = vcmp.ne.s16.totalorder %v2022, 0
        %vm2094 = vcmp.ne.s16.totalorder %v2025, 0
        %vm2095 = vcmp.ne.s16.totalorder %v2028, 0
        %vm2096 = vcmp.ne.s16.totalorder %v2031, 0
        %vm2097 = vcmp.ne.s16.totalorder %v2034, 0
        %vm2098 = vcmp.ne.s16.totalorder %v2037, 0
        %vm2099 = vcmp.ne.s16.totalorder %v2040, 0
        %vm2100 = vcmp.ne.s16.totalorder %v2043, 0
        %vm2101 = vcmp.ne.s16.totalorder %v2046, 0
        %vm2102 = vcmp.ne.s16.totalorder %v2049, 0
        %vm2103 = vcmp.ne.s16.totalorder %v2052, 0
        %vm2104 = vcmp.ne.s16.totalorder %v2055, 0
        %vm2105 = vcmp.ne.s16.totalorder %v2058, 0
        %vm2106 = vcmp.ne.s16.totalorder %v2061, 0
        %vm2107 = vcmp.ne.s16.totalorder %v2064, 0
        %vm2108 = vcmp.ne.s16.totalorder %v2067, 0
        %vm2109 = vcmp.ne.s16.totalorder %v2070, 0
        %vm2110 = vcmp.ne.s16.totalorder %v2073, 0
        %vm2111 = vcmp.ne.s16.totalorder %v2076, 0
        %vm2112 = vcmp.ne.s16.totalorder %v2079, 0
        %vm2113 = vcmp.ne.s16.totalorder %v2080, 0
        %v2114 = vsel %vm2081, %v1821, 0
        %v2115 = vsel %vm2082, %v1465, 0
        %v2116 = vsel %vm2083, %v1466, 0
        %v2117 = vsel %vm2084, %v1467, 0
        %v2118 = vsel %vm2085, %v1468, 0
        %v2119 = vsel %vm2086, %v1469, 0
        %v2120 = vsel %vm2087, %v1470, 0
        %v2121 = vsel %vm2088, %v1471, 0
        %v2122 = vsel %vm2089, %v1472, 0
        %v2123 = vsel %vm2090, %v1473, 0
        %v2124 = vsel %vm2091, %v1474, 0
        %v2125 = vsel %vm2092, %v1475, 0
        %v2126 = vsel %vm2093, %v1476, 0
        %v2127 = vsel %vm2094, %v1477, 0
        %v2128 = vsel %vm2095, %v1478, 0
        %v2129 = vsel %vm2096, %v1479, 0
        %v2130 = vsel %vm2097, %v1480, 0
        %v2131 = vsel %vm2098, %v1481, 0
        %v2132 = vsel %vm2099, %v1482, 0
        %v2133 = vsel %vm2100, %v1483, 0
        %v2134 = vsel %vm2101, %v1484, 0
        %v2135 = vsel %vm2102, %v1485, 0
        %v2136 = vsel %vm2103, %v1486, 0
        %v2137 = vsel %vm2104, %v1487, 0
        %v2138 = vsel %vm2105, %v1488, 0
        %v2139 = vsel %vm2106, %v1489, 0
        %v2140 = vsel %vm2107, %v1490, 0
        %v2141 = vsel %vm2108, %v1491, 0
        %v2142 = vsel %vm2109, %v1492, 0
        %v2143 = vsel %vm2110, %v1493, 0
        %v2144 = vsel %vm2111, %v1494, 0
        %v2145 = vsel %vm2112, %v1820, 0
        %v2146 = vsel %vm2113, %v1822, 0
        %v2147 = vld [vmem:[#allocation2 + $0xcc] sm:$0xe]
        %v2148 = vld [vmem:[#allocation2 + $0x120] sm:$0xf]
        %v2149 = vld [vmem:[#allocation2 + $0x124] sm:$0xf]
        %v2150 = vld [vmem:[#allocation2 + $0x128] sm:$0xf]
        %v2151 = vld [vmem:[#allocation2 + $0x12c] sm:$0xf]
        %v2152 = vld [vmem:[#allocation2 + $0x130] sm:$0xf]
        %v2153 = vld [vmem:[#allocation2 + $0x134] sm:$0xf]
        %v2154 = vld [vmem:[#allocation2 + $0x138] sm:$0xf]
        %v2155 = vld [vmem:[#allocation2 + $0x13c] sm:$0xf]
        %v2156 = vld [vmem:[#allocation2 + $0x140] sm:$0xf]
        %v2157 = vld [vmem:[#allocation2 + $0x144] sm:$0xf]
        %v2158 = vld [vmem:[#allocation2 + $0x148] sm:$0xf]
        %v2159 = vld [vmem:[#allocation2 + $0x14c] sm:$0x1]
        %v2160 = vsel %vm1754, %v2147, 0
        %v2161 = vsel %vm1755, %v1476, 0
        %v2162 = vsel %vm1756, %v1477, 0
        %v2163 = vsel %vm1757, %v1478, 0
        %v2164 = vsel %vm1758, %v1479, 0
        %v2165 = vsel %vm1759, %v1480, 0
        %v2166 = vsel %vm1760, %v1481, 0
        %v2167 = vsel %vm1761, %v1482, 0
        %v2168 = vsel %vm1762, %v1483, 0
        %v2169 = vsel %vm1763, %v1484, 0
        %v2170 = vsel %vm1764, %v1485, 0
        %v2171 = vsel %vm1765, %v1486, 0
        %v2172 = vsel %vm1766, %v1487, 0
        %v2173 = vsel %vm1767, %v1488, 0
        %v2174 = vsel %vm1768, %v1489, 0
        %v2175 = vsel %vm1769, %v1490, 0
        %v2176 = vsel %vm1770, %v1491, 0
        %v2177 = vsel %vm1771, %v1492, 0
        %v2178 = vsel %vm1772, %v1493, 0
        %v2179 = vsel %vm1773, %v1494, 0
        %v2180 = vsel %vm1774, %v1820, 0
        %v2181 = vsel %vm1775, %v2148, 0
        %v2182 = vsel %vm1776, %v2149, 0
        %v2183 = vsel %vm1777, %v2150, 0
        %v2184 = vsel %vm1778, %v2151, 0
        %v2185 = vsel %vm1779, %v2152, 0
        %v2186 = vsel %vm1780, %v2153, 0
        %v2187 = vsel %vm1781, %v2154, 0
        %v2188 = vsel %vm1782, %v2155, 0
        %v2189 = vsel %vm1783, %v2156, 0
        %v2190 = vsel %vm1784, %v2157, 0
        %v2191 = vsel %vm1785, %v2158, 0
        %v2192 = vsel %vm1786, %v2159, 0
        %v2193 = vld [vmem:[#allocation2 + $0x14c] sm:$0xf]
        %v2194 = vld [vmem:[#allocation2 + $0xd0] sm:$0x8]
        %v2195 = vld [vmem:[#allocation2 + $0x150] sm:$0x7]
        %v2196 = vsel %vm2081, %v2194, 0
        %v2197 = vsel %vm2082, %v1477, 0
        %v2198 = vsel %vm2083, %v1478, 0
        %v2199 = vsel %vm2084, %v1479, 0
        %v2200 = vsel %vm2085, %v1480, 0
        %v2201 = vsel %vm2086, %v1481, 0
        %v2202 = vsel %vm2087, %v1482, 0
        %v2203 = vsel %vm2088, %v1483, 0
        %v2204 = vsel %vm2089, %v1484, 0
        %v2205 = vsel %vm2090, %v1485, 0
        %v2206 = vsel %vm2091, %v1486, 0
        %v2207 = vsel %vm2092, %v1487, 0
        %v2208 = vsel %vm2093, %v1488, 0
        %v2209 = vsel %vm2094, %v1489, 0
        %v2210 = vsel %vm2095, %v1490, 0
        %v2211 = vsel %vm2096, %v1491, 0
        %v2212 = vsel %vm2097, %v1492, 0
        %v2213 = vsel %vm2098, %v1493, 0
        %v2214 = vsel %vm2099, %v1494, 0
        %v2215 = vsel %vm2100, %v1820, 0
        %v2216 = vsel %vm2101, %v2148, 0
        %v2217 = vsel %vm2102, %v2149, 0
        %v2218 = vsel %vm2103, %v2150, 0
        %v2219 = vsel %vm2104, %v2151, 0
        %v2220 = vsel %vm2105, %v2152, 0
        %v2221 = vsel %vm2106, %v2153, 0
        %v2222 = vsel %vm2107, %v2154, 0
        %v2223 = vsel %vm2108, %v2155, 0
        %v2224 = vsel %vm2109, %v2156, 0
        %v2225 = vsel %vm2110, %v2157, 0
        %v2226 = vsel %vm2111, %v2158, 0
        %v2227 = vsel %vm2112, %v2193, 0
        %v2228 = vsel %vm2113, %v2195, 0
        %v2229 = vld [vmem:[#allocation2 + $0xfc] sm:$0xe]
        %v2230 = vld [vmem:[#allocation2 + $0x150] sm:$0xf]
        %v2231 = vld [vmem:[#allocation2 + $0x154] sm:$0xf]
        %v2232 = vld [vmem:[#allocation2 + $0x158] sm:$0xf]
        %v2233 = vld [vmem:[#allocation2 + $0x15c] sm:$0xf]
        %v2234 = vld [vmem:[#allocation2 + $0x160] sm:$0xf]
        %v2235 = vld [vmem:[#allocation2 + $0x164] sm:$0xf]
        %v2236 = vld [vmem:[#allocation2 + $0x168] sm:$0xf]
        %v2237 = vld [vmem:[#allocation2 + $0x16c] sm:$0xf]
        %v2238 = vld [vmem:[#allocation2 + $0x170] sm:$0xf]
        %v2239 = vld [vmem:[#allocation2 + $0x174] sm:$0xf]
        %v2240 = vld [vmem:[#allocation2 + $0x178] sm:$0xf]
        %v2241 = vld [vmem:[#allocation2 + $0x17c] sm:$0x1]
        %v2242 = vsel %vm1754, %v2229, 0
        %v2243 = vsel %vm1755, %v1488, 0
        %v2244 = vsel %vm1756, %v1489, 0
        %v2245 = vsel %vm1757, %v1490, 0
        %v2246 = vsel %vm1758, %v1491, 0
        %v2247 = vsel %vm1759, %v1492, 0
        %v2248 = vsel %vm1760, %v1493, 0
        %v2249 = vsel %vm1761, %v1494, 0
        %v2250 = vsel %vm1762, %v1820, 0
        %v2251 = vsel %vm1763, %v2148, 0
        %v2252 = vsel %vm1764, %v2149, 0
        %v2253 = vsel %vm1765, %v2150, 0
        %v2254 = vsel %vm1766, %v2151, 0
        %v2255 = vsel %vm1767, %v2152, 0
        %v2256 = vsel %vm1768, %v2153, 0
        %v2257 = vsel %vm1769, %v2154, 0
        %v2258 = vsel %vm1770, %v2155, 0
        %v2259 = vsel %vm1771, %v2156, 0
        %v2260 = vsel %vm1772, %v2157, 0
        %v2261 = vsel %vm1773, %v2158, 0
        %v2262 = vsel %vm1774, %v2193, 0
        %v2263 = vsel %vm1775, %v2230, 0
        %v2264 = vsel %vm1776, %v2231, 0
        %v2265 = vsel %vm1777, %v2232, 0
        %v2266 = vsel %vm1778, %v2233, 0
        %v2267 = vsel %vm1779, %v2234, 0
        %v2268 = vsel %vm1780, %v2235, 0
        %v2269 = vsel %vm1781, %v2236, 0
        %v2270 = vsel %vm1782, %v2237, 0
        %v2271 = vsel %vm1783, %v2238, 0
        %v2272 = vsel %vm1784, %v2239, 0
        %v2273 = vsel %vm1785, %v2240, 0
        %v2274 = vsel %vm1786, %v2241, 0
        %v2275 = vld [vmem:[#allocation2 + $0x17c] sm:$0xf]
        %v2276 = vld [vmem:[#allocation2 + $0x100] sm:$0x8]
        %v2277 = vld [vmem:[#allocation2 + $0x180] sm:$0x7]
        %v2278 = vsel %vm2081, %v2276, 0
        %v2279 = vsel %vm2082, %v1489, 0
        %v2280 = vsel %vm2083, %v1490, 0
        %v2281 = vsel %vm2084, %v1491, 0
        %v2282 = vsel %vm2085, %v1492, 0
        %v2283 = vsel %vm2086, %v1493, 0
        %v2284 = vsel %vm2087, %v1494, 0
        %v2285 = vsel %vm2088, %v1820, 0
        %v2286 = vsel %vm2089, %v2148, 0
        %v2287 = vsel %vm2090, %v2149, 0
        %v2288 = vsel %vm2091, %v2150, 0
        %v2289 = vsel %vm2092, %v2151, 0
        %v2290 = vsel %vm2093, %v2152, 0
        %v2291 = vsel %vm2094, %v2153, 0
        %v2292 = vsel %vm2095, %v2154, 0
        %v2293 = vsel %vm2096, %v2155, 0
        %v2294 = vsel %vm2097, %v2156, 0
        %v2295 = vsel %vm2098, %v2157, 0
        %v2296 = vsel %vm2099, %v2158, 0
        %v2297 = vsel %vm2100, %v2193, 0
        %v2298 = vsel %vm2101, %v2230, 0
        %v2299 = vsel %vm2102, %v2231, 0
        %v2300 = vsel %vm2103, %v2232, 0
        %v2301 = vsel %vm2104, %v2233, 0
        %v2302 = vsel %vm2105, %v2234, 0
        %v2303 = vsel %vm2106, %v2235, 0
        %v2304 = vsel %vm2107, %v2236, 0
        %v2305 = vsel %vm2108, %v2237, 0
        %v2306 = vsel %vm2109, %v2238, 0
        %v2307 = vsel %vm2110, %v2239, 0
        %v2308 = vsel %vm2111, %v2240, 0
        %v2309 = vsel %vm2112, %v2275, 0
        %v2310 = vsel %vm2113, %v2277, 0
        %v2344 = vunpack.c.l.b16 %v1787
        %v2345 = vunpack.c.l.b16 %v1788
        %v2346 = vunpack.c.l.b16 %v1789
        %v2347 = vunpack.c.l.b16 %v1790
        %v2348 = vunpack.c.l.b16 %v1791
        %v2349 = vunpack.c.l.b16 %v1792
        %v2350 = vunpack.c.l.b16 %v1793
        %v2351 = vunpack.c.l.b16 %v1794
        %v2352 = vunpack.c.l.b16 %v1795
        %v2353 = vunpack.c.l.b16 %v1796
        %v2354 = vunpack.c.l.b16 %v1797
        %v2355 = vunpack.c.l.b16 %v1798
        %v2356 = vunpack.c.l.b16 %v1799
        %v2357 = vunpack.c.l.b16 %v1800
        %v2358 = vunpack.c.l.b16 %v1801
        %v2359 = vunpack.c.l.b16 %v1802
        %v2360 = vunpack.c.l.b16 %v1803
        %v2361 = vunpack.c.l.b16 %v1804
        %v2362 = vunpack.c.l.b16 %v1805
        %v2363 = vunpack.c.l.b16 %v1806
        %v2364 = vunpack.c.l.b16 %v1807
        %v2365 = vunpack.c.l.b16 %v1808
        %v2366 = vunpack.c.l.b16 %v1809
        %v2367 = vunpack.c.l.b16 %v1810
        %v2368 = vunpack.c.l.b16 %v1811
        %v2369 = vunpack.c.l.b16 %v1812
        %v2370 = vunpack.c.l.b16 %v1813
        %v2371 = vunpack.c.l.b16 %v1814
        %v2372 = vunpack.c.l.b16 %v1815
        %v2373 = vunpack.c.l.b16 %v1816
        %v2374 = vunpack.c.l.b16 %v1817
        %v2375 = vunpack.c.l.b16 %v1818
        %v2376 = vunpack.c.l.b16 %v1819
        %v2377 = vpack.c.b16 %v2345, %v2344
        %v2378 = vpack.c.b16 %v2347, %v2346
        %v2379 = vpack.c.b16 %v2349, %v2348
        %v2380 = vpack.c.b16 %v2351, %v2350
        %v2381 = vpack.c.b16 %v2353, %v2352
        %v2382 = vpack.c.b16 %v2355, %v2354
        %v2383 = vpack.c.b16 %v2357, %v2356
        %v2384 = vpack.c.b16 %v2359, %v2358
        %v2385 = vpack.c.b16 %v2361, %v2360
        %v2386 = vpack.c.b16 %v2363, %v2362
        %v2387 = vpack.c.b16 %v2365, %v2364
        %v2388 = vpack.c.b16 %v2367, %v2366
        %v2389 = vpack.c.b16 %v2369, %v2368
        %v2390 = vpack.c.b16 %v2371, %v2370
        %v2391 = vpack.c.b16 %v2373, %v2372
        %v2392 = vpack.c.b16 %v2375, %v2374
        %v2393 = vpack.c.b16 %v2376, %v2376
        %v2426 = vunpack.c.l.b16 %v1464
        %v2427 = vunpack.c.l.b16 %v1465
        %v2428 = vunpack.c.l.b16 %v1466
        %v2429 = vunpack.c.l.b16 %v1467
        %v2430 = vunpack.c.l.b16 %v1468
        %v2431 = vunpack.c.l.b16 %v1469
        %v2432 = vunpack.c.l.b16 %v1470
        %v2433 = vunpack.c.l.b16 %v1471
        %v2434 = vunpack.c.l.b16 %v1472
        %v2435 = vunpack.c.l.b16 %v1473
        %v2436 = vunpack.c.l.b16 %v1474
        %v2437 = vunpack.c.l.b16 %v1475
        %v2438 = vunpack.c.l.b16 %v1476
        %v2439 = vunpack.c.l.b16 %v1477
        %v2440 = vunpack.c.l.b16 %v1478
        %v2441 = vunpack.c.l.b16 %v1479
        %v2442 = vunpack.c.l.b16 %v1480
        %v2443 = vunpack.c.l.b16 %v1481
        %v2444 = vunpack.c.l.b16 %v1482
        %v2445 = vunpack.c.l.b16 %v1483
        %v2446 = vunpack.c.l.b16 %v1484
        %v2447 = vunpack.c.l.b16 %v1485
        %v2448 = vunpack.c.l.b16 %v1486
        %v2449 = vunpack.c.l.b16 %v1487
        %v2450 = vunpack.c.l.b16 %v1488
        %v2451 = vunpack.c.l.b16 %v1489
        %v2452 = vunpack.c.l.b16 %v1490
        %v2453 = vunpack.c.l.b16 %v1491
        %v2454 = vunpack.c.l.b16 %v1492
        %v2455 = vunpack.c.l.b16 %v1493
        %v2456 = vunpack.c.l.b16 %v1494
        %v2457 = vunpack.c.l.b16 %v1820
        %v2458 = vpack.c.b16 %v2427, %v2426
        %v2459 = vpack.c.b16 %v2429, %v2428
        %v2460 = vpack.c.b16 %v2431, %v2430
        %v2461 = vpack.c.b16 %v2433, %v2432
        %v2462 = vpack.c.b16 %v2435, %v2434
        %v2463 = vpack.c.b16 %v2437, %v2436
        %v2464 = vpack.c.b16 %v2439, %v2438
        %v2465 = vpack.c.b16 %v2441, %v2440
        %v2466 = vpack.c.b16 %v2443, %v2442
        %v2467 = vpack.c.b16 %v2445, %v2444
        %v2468 = vpack.c.b16 %v2447, %v2446
        %v2469 = vpack.c.b16 %v2449, %v2448
        %v2470 = vpack.c.b16 %v2451, %v2450
        %v2471 = vpack.c.b16 %v2453, %v2452
        %v2472 = vpack.c.b16 %v2455, %v2454
        %v2473 = vpack.c.b16 %v2457, %v2456
        %v2474 = vrot.slane %v2458, 7
        %v2475 = vrot.slane %v2459, 7
        %v2476 = vsel %vm1656, %v2474, %v2475
        %v2477 = vrot.slane %v2460, 7
        %v2478 = vsel %vm1656, %v2475, %v2477
        %v2479 = vrot.slane %v2461, 7
        %v2480 = vsel %vm1656, %v2477, %v2479
        %v2481 = vrot.slane %v2462, 7
        %v2482 = vsel %vm1656, %v2479, %v2481
        %v2483 = vrot.slane %v2463, 7
        %v2484 = vsel %vm1656, %v2481, %v2483
        %v2485 = vrot.slane %v2464, 7
        %v2486 = vsel %vm1656, %v2483, %v2485
        %v2487 = vrot.slane %v2465, 7
        %v2488 = vsel %vm1656, %v2485, %v2487
        %v2489 = vrot.slane %v2466, 7
        %v2490 = vsel %vm1656, %v2487, %v2489
        %v2491 = vrot.slane %v2467, 7
        %v2492 = vsel %vm1656, %v2489, %v2491
        %v2493 = vrot.slane %v2468, 7
        %v2494 = vsel %vm1656, %v2491, %v2493
        %v2495 = vrot.slane %v2469, 7
        %v2496 = vsel %vm1656, %v2493, %v2495
        %v2497 = vrot.slane %v2470, 7
        %v2498 = vsel %vm1656, %v2495, %v2497
        %v2499 = vrot.slane %v2471, 7
        %v2500 = vsel %vm1656, %v2497, %v2499
        %v2501 = vrot.slane %v2472, 7
        %v2502 = vsel %vm1656, %v2499, %v2501
        %v2503 = vrot.slane %v2473, 7
        %v2504 = vsel %vm1656, %v2501, %v2503
        %2505 = vrot.lane.b32.xlu0 %v2474, 32
        %v2506 = vpop.permute.xlu0 %2505
        %2507 = vrot.lane.b32.xlu0 %v2476, 32
        %v2508 = vpop.permute.xlu0 %2507
        %2509 = vrot.lane.b32.xlu0 %v2478, 32
        %v2510 = vpop.permute.xlu0 %2509
        %2511 = vrot.lane.b32.xlu0 %v2480, 32
        %v2512 = vpop.permute.xlu0 %2511
        %2513 = vrot.lane.b32.xlu0 %v2482, 32
        %v2514 = vpop.permute.xlu0 %2513
        %2515 = vrot.lane.b32.xlu0 %v2484, 32
        %v2516 = vpop.permute.xlu0 %2515
        %2517 = vrot.lane.b32.xlu0 %v2486, 32
        %v2518 = vpop.permute.xlu0 %2517
        %2519 = vrot.lane.b32.xlu0 %v2488, 32
        %v2520 = vpop.permute.xlu0 %2519
        %2521 = vrot.lane.b32.xlu0 %v2490, 32
        %v2522 = vpop.permute.xlu0 %2521
        %2523 = vrot.lane.b32.xlu0 %v2492, 32
        %v2524 = vpop.permute.xlu0 %2523
        %2525 = vrot.lane.b32.xlu0 %v2494, 32
        %v2526 = vpop.permute.xlu0 %2525
        %2527 = vrot.lane.b32.xlu0 %v2496, 32
        %v2528 = vpop.permute.xlu0 %2527
        %2529 = vrot.lane.b32.xlu0 %v2498, 32
        %v2530 = vpop.permute.xlu0 %2529
        %2531 = vrot.lane.b32.xlu0 %v2500, 32
        %v2532 = vpop.permute.xlu0 %2531
        %2533 = vrot.lane.b32.xlu0 %v2502, 32
        %v2534 = vpop.permute.xlu0 %2533
        %2535 = vrot.lane.b32.xlu0 %v2504, 32
        %v2536 = vpop.permute.xlu0 %2535
        %2537 = vrot.lane.b32.xlu0 %v2503, 32
        %v2538 = vpop.permute.xlu0 %2537
        %v2572 = vunpack.c.l.b16 %v2114
        %v2573 = vunpack.c.l.b16 %v2115
        %v2574 = vunpack.c.l.b16 %v2116
        %v2575 = vunpack.c.l.b16 %v2117
        %v2576 = vunpack.c.l.b16 %v2118
        %v2577 = vunpack.c.l.b16 %v2119
        %v2578 = vunpack.c.l.b16 %v2120
        %v2579 = vunpack.c.l.b16 %v2121
        %v2580 = vunpack.c.l.b16 %v2122
        %v2581 = vunpack.c.l.b16 %v2123
        %v2582 = vunpack.c.l.b16 %v2124
        %v2583 = vunpack.c.l.b16 %v2125
        %v2584 = vunpack.c.l.b16 %v2126
        %v2585 = vunpack.c.l.b16 %v2127
        %v2586 = vunpack.c.l.b16 %v2128
        %v2587 = vunpack.c.l.b16 %v2129
        %v2588 = vunpack.c.l.b16 %v2130
        %v2589 = vunpack.c.l.b16 %v2131
        %v2590 = vunpack.c.l.b16 %v2132
        %v2591 = vunpack.c.l.b16 %v2133
        %v2592 = vunpack.c.l.b16 %v2134
        %v2593 = vunpack.c.l.b16 %v2135
        %v2594 = vunpack.c.l.b16 %v2136
        %v2595 = vunpack.c.l.b16 %v2137
        %v2596 = vunpack.c.l.b16 %v2138
        %v2597 = vunpack.c.l.b16 %v2139
        %v2598 = vunpack.c.l.b16 %v2140
        %v2599 = vunpack.c.l.b16 %v2141
        %v2600 = vunpack.c.l.b16 %v2142
        %v2601 = vunpack.c.l.b16 %v2143
        %v2602 = vunpack.c.l.b16 %v2144
        %v2603 = vunpack.c.l.b16 %v2145
        %v2604 = vunpack.c.l.b16 %v2146
        %v2605 = vpack.c.b16 %v2573, %v2572
        %v2606 = vpack.c.b16 %v2575, %v2574
        %v2607 = vpack.c.b16 %v2577, %v2576
        %v2608 = vpack.c.b16 %v2579, %v2578
        %v2609 = vpack.c.b16 %v2581, %v2580
        %v2610 = vpack.c.b16 %v2583, %v2582
        %v2611 = vpack.c.b16 %v2585, %v2584
        %v2612 = vpack.c.b16 %v2587, %v2586
        %v2613 = vpack.c.b16 %v2589, %v2588
        %v2614 = vpack.c.b16 %v2591, %v2590
        %v2615 = vpack.c.b16 %v2593, %v2592
        %v2616 = vpack.c.b16 %v2595, %v2594
        %v2617 = vpack.c.b16 %v2597, %v2596
        %v2618 = vpack.c.b16 %v2599, %v2598
        %v2619 = vpack.c.b16 %v2601, %v2600
        %v2620 = vpack.c.b16 %v2603, %v2602
        %v2621 = vpack.c.b16 %v2604, %v2604
        %vm2622 = vcmask 1045504
        %v2623 = vrot.slane %v2605, 2
        %v2624 = vrot.slane %v2606, 2
        %v2625 = vsel %vm2622, %v2623, %v2624
        %v2626 = vrot.slane %v2607, 2
        %v2627 = vsel %vm2622, %v2624, %v2626
        %v2628 = vrot.slane %v2608, 2
        %v2629 = vsel %vm2622, %v2626, %v2628
        %v2630 = vrot.slane %v2609, 2
        %v2631 = vsel %vm2622, %v2628, %v2630
        %v2632 = vrot.slane %v2610, 2
        %v2633 = vsel %vm2622, %v2630, %v2632
        %v2634 = vrot.slane %v2611, 2
        %v2635 = vsel %vm2622, %v2632, %v2634
        %v2636 = vrot.slane %v2612, 2
        %v2637 = vsel %vm2622, %v2634, %v2636
        %v2638 = vrot.slane %v2613, 2
        %v2639 = vsel %vm2622, %v2636, %v2638
        %v2640 = vrot.slane %v2614, 2
        %v2641 = vsel %vm2622, %v2638, %v2640
        %v2642 = vrot.slane %v2615, 2
        %v2643 = vsel %vm2622, %v2640, %v2642
        %v2644 = vrot.slane %v2616, 2
        %v2645 = vsel %vm2622, %v2642, %v2644
        %v2646 = vrot.slane %v2617, 2
        %v2647 = vsel %vm2622, %v2644, %v2646
        %v2648 = vrot.slane %v2618, 2
        %v2649 = vsel %vm2622, %v2646, %v2648
        %v2650 = vrot.slane %v2619, 2
        %v2651 = vsel %vm2622, %v2648, %v2650
        %v2652 = vrot.slane %v2620, 2
        %v2653 = vsel %vm2622, %v2650, %v2652
        %v2654 = vrot.slane %v2621, 2
        %v2655 = vsel %vm2622, %v2652, %v2654
        %2656 = vrot.lane.b32.xlu0 %v2625, 64
        %v2657 = vpop.permute.xlu0 %2656
        %2658 = vrot.lane.b32.xlu0 %v2627, 64
        %v2659 = vpop.permute.xlu0 %2658
        %2660 = vrot.lane.b32.xlu0 %v2629, 64
        %v2661 = vpop.permute.xlu0 %2660
        %2662 = vrot.lane.b32.xlu0 %v2631, 64
        %v2663 = vpop.permute.xlu0 %2662
        %2664 = vrot.lane.b32.xlu0 %v2633, 64
        %v2665 = vpop.permute.xlu0 %2664
        %2666 = vrot.lane.b32.xlu0 %v2635, 64
        %v2667 = vpop.permute.xlu0 %2666
        %2668 = vrot.lane.b32.xlu0 %v2637, 64
        %v2669 = vpop.permute.xlu0 %2668
        %2670 = vrot.lane.b32.xlu0 %v2639, 64
        %v2671 = vpop.permute.xlu0 %2670
        %2672 = vrot.lane.b32.xlu0 %v2641, 64
        %v2673 = vpop.permute.xlu0 %2672
        %2674 = vrot.lane.b32.xlu0 %v2643, 64
        %v2675 = vpop.permute.xlu0 %2674
        %2676 = vrot.lane.b32.xlu0 %v2645, 64
        %v2677 = vpop.permute.xlu0 %2676
        %2678 = vrot.lane.b32.xlu0 %v2647, 64
        %v2679 = vpop.permute.xlu0 %2678
        %2680 = vrot.lane.b32.xlu0 %v2649, 64
        %v2681 = vpop.permute.xlu0 %2680
        %2682 = vrot.lane.b32.xlu0 %v2651, 64
        %v2683 = vpop.permute.xlu0 %2682
        %2684 = vrot.lane.b32.xlu0 %v2653, 64
        %v2685 = vpop.permute.xlu0 %2684
        %2686 = vrot.lane.b32.xlu0 %v2655, 64
        %v2687 = vpop.permute.xlu0 %2686
        %2688 = vrot.lane.b32.xlu0 %v2654, 64
        %v2689 = vpop.permute.xlu0 %2688
        %v2723 = vunpack.c.l.b16 %v2160
        %v2724 = vunpack.c.l.b16 %v2161
        %v2725 = vunpack.c.l.b16 %v2162
        %v2726 = vunpack.c.l.b16 %v2163
        %v2727 = vunpack.c.l.b16 %v2164
        %v2728 = vunpack.c.l.b16 %v2165
        %v2729 = vunpack.c.l.b16 %v2166
        %v2730 = vunpack.c.l.b16 %v2167
        %v2731 = vunpack.c.l.b16 %v2168
        %v2732 = vunpack.c.l.b16 %v2169
        %v2733 = vunpack.c.l.b16 %v2170
        %v2734 = vunpack.c.l.b16 %v2171
        %v2735 = vunpack.c.l.b16 %v2172
        %v2736 = vunpack.c.l.b16 %v2173
        %v2737 = vunpack.c.l.b16 %v2174
        %v2738 = vunpack.c.l.b16 %v2175
        %v2739 = vunpack.c.l.b16 %v2176
        %v2740 = vunpack.c.l.b16 %v2177
        %v2741 = vunpack.c.l.b16 %v2178
        %v2742 = vunpack.c.l.b16 %v2179
        %v2743 = vunpack.c.l.b16 %v2180
        %v2744 = vunpack.c.l.b16 %v2181
        %v2745 = vunpack.c.l.b16 %v2182
        %v2746 = vunpack.c.l.b16 %v2183
        %v2747 = vunpack.c.l.b16 %v2184
        %v2748 = vunpack.c.l.b16 %v2185
        %v2749 = vunpack.c.l.b16 %v2186
        %v2750 = vunpack.c.l.b16 %v2187
        %v2751 = vunpack.c.l.b16 %v2188
        %v2752 = vunpack.c.l.b16 %v2189
        %v2753 = vunpack.c.l.b16 %v2190
        %v2754 = vunpack.c.l.b16 %v2191
        %v2755 = vunpack.c.l.b16 %v2192
        %v2756 = vpack.c.b16 %v2724, %v2723
        %v2757 = vpack.c.b16 %v2726, %v2725
        %v2758 = vpack.c.b16 %v2728, %v2727
        %v2759 = vpack.c.b16 %v2730, %v2729
        %v2760 = vpack.c.b16 %v2732, %v2731
        %v2761 = vpack.c.b16 %v2734, %v2733
        %v2762 = vpack.c.b16 %v2736, %v2735
        %v2763 = vpack.c.b16 %v2738, %v2737
        %v2764 = vpack.c.b16 %v2740, %v2739
        %v2765 = vpack.c.b16 %v2742, %v2741
        %v2766 = vpack.c.b16 %v2744, %v2743
        %v2767 = vpack.c.b16 %v2746, %v2745
        %v2768 = vpack.c.b16 %v2748, %v2747
        %v2769 = vpack.c.b16 %v2750, %v2749
        %v2770 = vpack.c.b16 %v2752, %v2751
        %v2771 = vpack.c.b16 %v2754, %v2753
        %v2772 = vpack.c.b16 %v2755, %v2755
        %2773 = vrot.lane.b32.xlu0 %v2756, 96
        %v2774 = vpop.permute.xlu0 %2773
        %2775 = vrot.lane.b32.xlu0 %v2757, 96
        %v2776 = vpop.permute.xlu0 %2775
        %2777 = vrot.lane.b32.xlu0 %v2758, 96
        %v2778 = vpop.permute.xlu0 %2777
        %2779 = vrot.lane.b32.xlu0 %v2759, 96
        %v2780 = vpop.permute.xlu0 %2779
        %2781 = vrot.lane.b32.xlu0 %v2760, 96
        %v2782 = vpop.permute.xlu0 %2781
        %2783 = vrot.lane.b32.xlu0 %v2761, 96
        %v2784 = vpop.permute.xlu0 %2783
        %2785 = vrot.lane.b32.xlu0 %v2762, 96
        %v2786 = vpop.permute.xlu0 %2785
        %2787 = vrot.lane.b32.xlu0 %v2763, 96
        %v2788 = vpop.permute.xlu0 %2787
        %2789 = vrot.lane.b32.xlu0 %v2764, 96
        %v2790 = vpop.permute.xlu0 %2789
        %2791 = vrot.lane.b32.xlu0 %v2765, 96
        %v2792 = vpop.permute.xlu0 %2791
        %2793 = vrot.lane.b32.xlu0 %v2766, 96
        %v2794 = vpop.permute.xlu0 %2793
        %2795 = vrot.lane.b32.xlu0 %v2767, 96
        %v2796 = vpop.permute.xlu0 %2795
        %2797 = vrot.lane.b32.xlu0 %v2768, 96
        %v2798 = vpop.permute.xlu0 %2797
        %2799 = vrot.lane.b32.xlu0 %v2769, 96
        %v2800 = vpop.permute.xlu0 %2799
        %2801 = vrot.lane.b32.xlu0 %v2770, 96
        %v2802 = vpop.permute.xlu0 %2801
        %2803 = vrot.lane.b32.xlu0 %v2771, 96
        %v2804 = vpop.permute.xlu0 %2803
        %2805 = vrot.lane.b32.xlu0 %v2772, 96
        %v2806 = vpop.permute.xlu0 %2805
        %v2819 = vunpack.c.l.b16 %v2148
        %v2820 = vunpack.c.l.b16 %v2149
        %v2821 = vunpack.c.l.b16 %v2150
        %v2822 = vunpack.c.l.b16 %v2151
        %v2823 = vunpack.c.l.b16 %v2152
        %v2824 = vunpack.c.l.b16 %v2153
        %v2825 = vunpack.c.l.b16 %v2154
        %v2826 = vunpack.c.l.b16 %v2155
        %v2827 = vunpack.c.l.b16 %v2156
        %v2828 = vunpack.c.l.b16 %v2157
        %v2829 = vunpack.c.l.b16 %v2158
        %v2830 = vunpack.c.l.b16 %v2193
        %v2831 = vpack.c.b16 %v2820, %v2819
        %v2832 = vpack.c.b16 %v2822, %v2821
        %v2833 = vpack.c.b16 %v2824, %v2823
        %v2834 = vpack.c.b16 %v2826, %v2825
        %v2835 = vpack.c.b16 %v2828, %v2827
        %v2836 = vpack.c.b16 %v2830, %v2829
        %v2837 = vrot.slane %v2831, 7
        %v2838 = vsel %vm1656, %v2503, %v2837
        %v2839 = vrot.slane %v2832, 7
        %v2840 = vsel %vm1656, %v2837, %v2839
        %v2841 = vrot.slane %v2833, 7
        %v2842 = vsel %vm1656, %v2839, %v2841
        %v2843 = vrot.slane %v2834, 7
        %v2844 = vsel %vm1656, %v2841, %v2843
        %v2845 = vrot.slane %v2835, 7
        %v2846 = vsel %vm1656, %v2843, %v2845
        %v2847 = vrot.slane %v2836, 7
        %v2848 = vsel %vm1656, %v2845, %v2847
        %v2882 = vunpack.c.l.b16 %v2196
        %v2883 = vunpack.c.l.b16 %v2197
        %v2884 = vunpack.c.l.b16 %v2198
        %v2885 = vunpack.c.l.b16 %v2199
        %v2886 = vunpack.c.l.b16 %v2200
        %v2887 = vunpack.c.l.b16 %v2201
        %v2888 = vunpack.c.l.b16 %v2202
        %v2889 = vunpack.c.l.b16 %v2203
        %v2890 = vunpack.c.l.b16 %v2204
        %v2891 = vunpack.c.l.b16 %v2205
        %v2892 = vunpack.c.l.b16 %v2206
        %v2893 = vunpack.c.l.b16 %v2207
        %v2894 = vunpack.c.l.b16 %v2208
        %v2895 = vunpack.c.l.b16 %v2209
        %v2896 = vunpack.c.l.b16 %v2210
        %v2897 = vunpack.c.l.b16 %v2211
        %v2898 = vunpack.c.l.b16 %v2212
        %v2899 = vunpack.c.l.b16 %v2213
        %v2900 = vunpack.c.l.b16 %v2214
        %v2901 = vunpack.c.l.b16 %v2215
        %v2902 = vunpack.c.l.b16 %v2216
        %v2903 = vunpack.c.l.b16 %v2217
        %v2904 = vunpack.c.l.b16 %v2218
        %v2905 = vunpack.c.l.b16 %v2219
        %v2906 = vunpack.c.l.b16 %v2220
        %v2907 = vunpack.c.l.b16 %v2221
        %v2908 = vunpack.c.l.b16 %v2222
        %v2909 = vunpack.c.l.b16 %v2223
        %v2910 = vunpack.c.l.b16 %v2224
        %v2911 = vunpack.c.l.b16 %v2225
        %v2912 = vunpack.c.l.b16 %v2226
        %v2913 = vunpack.c.l.b16 %v2227
        %v2914 = vunpack.c.l.b16 %v2228
        %v2915 = vpack.c.b16 %v2883, %v2882
        %v2916 = vpack.c.b16 %v2885, %v2884
        %v2917 = vpack.c.b16 %v2887, %v2886
        %v2918 = vpack.c.b16 %v2889, %v2888
        %v2919 = vpack.c.b16 %v2891, %v2890
        %v2920 = vpack.c.b16 %v2893, %v2892
        %v2921 = vpack.c.b16 %v2895, %v2894
        %v2922 = vpack.c.b16 %v2897, %v2896
        %v2923 = vpack.c.b16 %v2899, %v2898
        %v2924 = vpack.c.b16 %v2901, %v2900
        %v2925 = vpack.c.b16 %v2903, %v2902
        %v2926 = vpack.c.b16 %v2905, %v2904
        %v2927 = vpack.c.b16 %v2907, %v2906
        %v2928 = vpack.c.b16 %v2909, %v2908
        %v2929 = vpack.c.b16 %v2911, %v2910
        %v2930 = vpack.c.b16 %v2913, %v2912
        %v2931 = vpack.c.b16 %v2914, %v2914
        %v2932 = vrot.slane %v2915, 2
        %v2933 = vrot.slane %v2916, 2
        %v2934 = vsel %vm2622, %v2932, %v2933
        %v2935 = vrot.slane %v2917, 2
        %v2936 = vsel %vm2622, %v2933, %v2935
        %v2937 = vrot.slane %v2918, 2
        %v2938 = vsel %vm2622, %v2935, %v2937
        %v2939 = vrot.slane %v2919, 2
        %v2940 = vsel %vm2622, %v2937, %v2939
        %v2941 = vrot.slane %v2920, 2
        %v2942 = vsel %vm2622, %v2939, %v2941
        %v2943 = vrot.slane %v2921, 2
        %v2944 = vsel %vm2622, %v2941, %v2943
        %v2945 = vrot.slane %v2922, 2
        %v2946 = vsel %vm2622, %v2943, %v2945
        %v2947 = vrot.slane %v2923, 2
        %v2948 = vsel %vm2622, %v2945, %v2947
        %v2949 = vrot.slane %v2924, 2
        %v2950 = vsel %vm2622, %v2947, %v2949
        %v2951 = vrot.slane %v2925, 2
        %v2952 = vsel %vm2622, %v2949, %v2951
        %v2953 = vrot.slane %v2926, 2
        %v2954 = vsel %vm2622, %v2951, %v2953
        %v2955 = vrot.slane %v2927, 2
        %v2956 = vsel %vm2622, %v2953, %v2955
        %v2957 = vrot.slane %v2928, 2
        %v2958 = vsel %vm2622, %v2955, %v2957
        %v2959 = vrot.slane %v2929, 2
        %v2960 = vsel %vm2622, %v2957, %v2959
        %v2961 = vrot.slane %v2930, 2
        %v2962 = vsel %vm2622, %v2959, %v2961
        %v2963 = vrot.slane %v2931, 2
        %v2964 = vsel %vm2622, %v2961, %v2963
        %2965 = vrot.lane.b32.xlu0 %v2934, 32
        %v2966 = vpop.permute.xlu0 %2965
        %2967 = vrot.lane.b32.xlu0 %v2936, 32
        %v2968 = vpop.permute.xlu0 %2967
        %2969 = vrot.lane.b32.xlu0 %v2938, 32
        %v2970 = vpop.permute.xlu0 %2969
        %2971 = vrot.lane.b32.xlu0 %v2940, 32
        %v2972 = vpop.permute.xlu0 %2971
        %2973 = vrot.lane.b32.xlu0 %v2942, 32
        %v2974 = vpop.permute.xlu0 %2973
        %2975 = vrot.lane.b32.xlu0 %v2944, 32
        %v2976 = vpop.permute.xlu0 %2975
        %2977 = vrot.lane.b32.xlu0 %v2946, 32
        %v2978 = vpop.permute.xlu0 %2977
        %2979 = vrot.lane.b32.xlu0 %v2948, 32
        %v2980 = vpop.permute.xlu0 %2979
        %2981 = vrot.lane.b32.xlu0 %v2950, 32
        %v2982 = vpop.permute.xlu0 %2981
        %2983 = vrot.lane.b32.xlu0 %v2952, 32
        %v2984 = vpop.permute.xlu0 %2983
        %2985 = vrot.lane.b32.xlu0 %v2954, 32
        %v2986 = vpop.permute.xlu0 %2985
        %2987 = vrot.lane.b32.xlu0 %v2956, 32
        %v2988 = vpop.permute.xlu0 %2987
        %2989 = vrot.lane.b32.xlu0 %v2958, 32
        %v2990 = vpop.permute.xlu0 %2989
        %2991 = vrot.lane.b32.xlu0 %v2960, 32
        %v2992 = vpop.permute.xlu0 %2991
        %2993 = vrot.lane.b32.xlu0 %v2962, 32
        %v2994 = vpop.permute.xlu0 %2993
        %2995 = vrot.lane.b32.xlu0 %v2964, 32
        %v2996 = vpop.permute.xlu0 %2995
        %2997 = vrot.lane.b32.xlu0 %v2963, 32
        %v2998 = vpop.permute.xlu0 %2997
        %v3032 = vunpack.c.l.b16 %v2242
        %v3033 = vunpack.c.l.b16 %v2243
        %v3034 = vunpack.c.l.b16 %v2244
        %v3035 = vunpack.c.l.b16 %v2245
        %v3036 = vunpack.c.l.b16 %v2246
        %v3037 = vunpack.c.l.b16 %v2247
        %v3038 = vunpack.c.l.b16 %v2248
        %v3039 = vunpack.c.l.b16 %v2249
        %v3040 = vunpack.c.l.b16 %v2250
        %v3041 = vunpack.c.l.b16 %v2251
        %v3042 = vunpack.c.l.b16 %v2252
        %v3043 = vunpack.c.l.b16 %v2253
        %v3044 = vunpack.c.l.b16 %v2254
        %v3045 = vunpack.c.l.b16 %v2255
        %v3046 = vunpack.c.l.b16 %v2256
        %v3047 = vunpack.c.l.b16 %v2257
        %v3048 = vunpack.c.l.b16 %v2258
        %v3049 = vunpack.c.l.b16 %v2259
        %v3050 = vunpack.c.l.b16 %v2260
        %v3051 = vunpack.c.l.b16 %v2261
        %v3052 = vunpack.c.l.b16 %v2262
        %v3053 = vunpack.c.l.b16 %v2263
        %v3054 = vunpack.c.l.b16 %v2264
        %v3055 = vunpack.c.l.b16 %v2265
        %v3056 = vunpack.c.l.b16 %v2266
        %v3057 = vunpack.c.l.b16 %v2267
        %v3058 = vunpack.c.l.b16 %v2268
        %v3059 = vunpack.c.l.b16 %v2269
        %v3060 = vunpack.c.l.b16 %v2270
        %v3061 = vunpack.c.l.b16 %v2271
        %v3062 = vunpack.c.l.b16 %v2272
        %v3063 = vunpack.c.l.b16 %v2273
        %v3064 = vunpack.c.l.b16 %v2274
        %v3065 = vpack.c.b16 %v3033, %v3032
        %v3066 = vpack.c.b16 %v3035, %v3034
        %v3067 = vpack.c.b16 %v3037, %v3036
        %v3068 = vpack.c.b16 %v3039, %v3038
        %v3069 = vpack.c.b16 %v3041, %v3040
        %v3070 = vpack.c.b16 %v3043, %v3042
        %v3071 = vpack.c.b16 %v3045, %v3044
        %v3072 = vpack.c.b16 %v3047, %v3046
        %v3073 = vpack.c.b16 %v3049, %v3048
        %v3074 = vpack.c.b16 %v3051, %v3050
        %v3075 = vpack.c.b16 %v3053, %v3052
        %v3076 = vpack.c.b16 %v3055, %v3054
        %v3077 = vpack.c.b16 %v3057, %v3056
        %v3078 = vpack.c.b16 %v3059, %v3058
        %v3079 = vpack.c.b16 %v3061, %v3060
        %v3080 = vpack.c.b16 %v3063, %v3062
        %v3081 = vpack.c.b16 %v3064, %v3064
        %3082 = vrot.lane.b32.xlu0 %v3065, 64
        %v3083 = vpop.permute.xlu0 %3082
        %3084 = vrot.lane.b32.xlu0 %v3066, 64
        %v3085 = vpop.permute.xlu0 %3084
        %3086 = vrot.lane.b32.xlu0 %v3067, 64
        %v3087 = vpop.permute.xlu0 %3086
        %3088 = vrot.lane.b32.xlu0 %v3068, 64
        %v3089 = vpop.permute.xlu0 %3088
        %3090 = vrot.lane.b32.xlu0 %v3069, 64
        %v3091 = vpop.permute.xlu0 %3090
        %3092 = vrot.lane.b32.xlu0 %v3070, 64
        %v3093 = vpop.permute.xlu0 %3092
        %3094 = vrot.lane.b32.xlu0 %v3071, 64
        %v3095 = vpop.permute.xlu0 %3094
        %3096 = vrot.lane.b32.xlu0 %v3072, 64
        %v3097 = vpop.permute.xlu0 %3096
        %3098 = vrot.lane.b32.xlu0 %v3073, 64
        %v3099 = vpop.permute.xlu0 %3098
        %3100 = vrot.lane.b32.xlu0 %v3074, 64
        %v3101 = vpop.permute.xlu0 %3100
        %3102 = vrot.lane.b32.xlu0 %v3075, 64
        %v3103 = vpop.permute.xlu0 %3102
        %3104 = vrot.lane.b32.xlu0 %v3076, 64
        %v3105 = vpop.permute.xlu0 %3104
        %3106 = vrot.lane.b32.xlu0 %v3077, 64
        %v3107 = vpop.permute.xlu0 %3106
        %3108 = vrot.lane.b32.xlu0 %v3078, 64
        %v3109 = vpop.permute.xlu0 %3108
        %3110 = vrot.lane.b32.xlu0 %v3079, 64
        %v3111 = vpop.permute.xlu0 %3110
        %3112 = vrot.lane.b32.xlu0 %v3080, 64
        %v3113 = vpop.permute.xlu0 %3112
        %3114 = vrot.lane.b32.xlu0 %v3081, 64
        %v3115 = vpop.permute.xlu0 %3114
        %v3128 = vunpack.c.l.b16 %v2230
        %v3129 = vunpack.c.l.b16 %v2231
        %v3130 = vunpack.c.l.b16 %v2232
        %v3131 = vunpack.c.l.b16 %v2233
        %v3132 = vunpack.c.l.b16 %v2234
        %v3133 = vunpack.c.l.b16 %v2235
        %v3134 = vunpack.c.l.b16 %v2236
        %v3135 = vunpack.c.l.b16 %v2237
        %v3136 = vunpack.c.l.b16 %v2238
        %v3137 = vunpack.c.l.b16 %v2239
        %v3138 = vunpack.c.l.b16 %v2240
        %v3139 = vunpack.c.l.b16 %v2275
        %v3140 = vpack.c.b16 %v3129, %v3128
        %v3141 = vpack.c.b16 %v3131, %v3130
        %v3142 = vpack.c.b16 %v3133, %v3132
        %v3143 = vpack.c.b16 %v3135, %v3134
        %v3144 = vpack.c.b16 %v3137, %v3136
        %v3145 = vpack.c.b16 %v3139, %v3138
        %v3146 = vrot.slane %v3140, 7
        %v3147 = vsel %vm1656, %v2847, %v3146
        %v3148 = vrot.slane %v3141, 7
        %v3149 = vsel %vm1656, %v3146, %v3148
        %v3150 = vrot.slane %v3142, 7
        %v3151 = vsel %vm1656, %v3148, %v3150
        %v3152 = vrot.slane %v3143, 7
        %v3153 = vsel %vm1656, %v3150, %v3152
        %v3154 = vrot.slane %v3144, 7
        %v3155 = vsel %vm1656, %v3152, %v3154
        %v3156 = vrot.slane %v3145, 7
        %v3157 = vsel %vm1656, %v3154, %v3156
        %3158 = vrot.lane.b32.xlu0 %v2497, 96
        %v3159 = vpop.permute.xlu0 %3158
        %3160 = vrot.lane.b32.xlu0 %v2500, 96
        %v3161 = vpop.permute.xlu0 %3160
        %3162 = vrot.lane.b32.xlu0 %v2502, 96
        %v3163 = vpop.permute.xlu0 %3162
        %3164 = vrot.lane.b32.xlu0 %v2504, 96
        %v3165 = vpop.permute.xlu0 %3164
        %3166 = vrot.lane.b32.xlu0 %v2838, 96
        %v3167 = vpop.permute.xlu0 %3166
        %3168 = vrot.lane.b32.xlu0 %v2840, 96
        %v3169 = vpop.permute.xlu0 %3168
        %3170 = vrot.lane.b32.xlu0 %v2842, 96
        %v3171 = vpop.permute.xlu0 %3170
        %3172 = vrot.lane.b32.xlu0 %v2844, 96
        %v3173 = vpop.permute.xlu0 %3172
        %3174 = vrot.lane.b32.xlu0 %v2846, 96
        %v3175 = vpop.permute.xlu0 %3174
        %3176 = vrot.lane.b32.xlu0 %v2848, 96
        %v3177 = vpop.permute.xlu0 %3176
        %3178 = vrot.lane.b32.xlu0 %v3147, 96
        %v3179 = vpop.permute.xlu0 %3178
        %3180 = vrot.lane.b32.xlu0 %v3149, 96
        %v3181 = vpop.permute.xlu0 %3180
        %3182 = vrot.lane.b32.xlu0 %v3151, 96
        %v3183 = vpop.permute.xlu0 %3182
        %3184 = vrot.lane.b32.xlu0 %v3153, 96
        %v3185 = vpop.permute.xlu0 %3184
        %3186 = vrot.lane.b32.xlu0 %v3155, 96
        %v3187 = vpop.permute.xlu0 %3186
        %3188 = vrot.lane.b32.xlu0 %v3157, 96
        %v3189 = vpop.permute.xlu0 %3188
        %3190 = vrot.lane.b32.xlu0 %v3156, 96
        %v3191 = vpop.permute.xlu0 %3190
        %v3225 = vunpack.c.l.b16 %v2278
        %v3226 = vunpack.c.l.b16 %v2279
        %v3227 = vunpack.c.l.b16 %v2280
        %v3228 = vunpack.c.l.b16 %v2281
        %v3229 = vunpack.c.l.b16 %v2282
        %v3230 = vunpack.c.l.b16 %v2283
        %v3231 = vunpack.c.l.b16 %v2284
        %v3232 = vunpack.c.l.b16 %v2285
        %v3233 = vunpack.c.l.b16 %v2286
        %v3234 = vunpack.c.l.b16 %v2287
        %v3235 = vunpack.c.l.b16 %v2288
        %v3236 = vunpack.c.l.b16 %v2289
        %v3237 = vunpack.c.l.b16 %v2290
        %v3238 = vunpack.c.l.b16 %v2291
        %v3239 = vunpack.c.l.b16 %v2292
        %v3240 = vunpack.c.l.b16 %v2293
        %v3241 = vunpack.c.l.b16 %v2294
        %v3242 = vunpack.c.l.b16 %v2295
        %v3243 = vunpack.c.l.b16 %v2296
        %v3244 = vunpack.c.l.b16 %v2297
        %v3245 = vunpack.c.l.b16 %v2298
        %v3246 = vunpack.c.l.b16 %v2299
        %v3247 = vunpack.c.l.b16 %v2300
        %v3248 = vunpack.c.l.b16 %v2301
        %v3249 = vunpack.c.l.b16 %v2302
        %v3250 = vunpack.c.l.b16 %v2303
        %v3251 = vunpack.c.l.b16 %v2304
        %v3252 = vunpack.c.l.b16 %v2305
        %v3253 = vunpack.c.l.b16 %v2306
        %v3254 = vunpack.c.l.b16 %v2307
        %v3255 = vunpack.c.l.b16 %v2308
        %v3256 = vunpack.c.l.b16 %v2309
        %v3257 = vunpack.c.l.b16 %v2310
        %v3258 = vpack.c.b16 %v3226, %v3225
        %v3259 = vpack.c.b16 %v3228, %v3227
        %v3260 = vpack.c.b16 %v3230, %v3229
        %v3261 = vpack.c.b16 %v3232, %v3231
        %v3262 = vpack.c.b16 %v3234, %v3233
        %v3263 = vpack.c.b16 %v3236, %v3235
        %v3264 = vpack.c.b16 %v3238, %v3237
        %v3265 = vpack.c.b16 %v3240, %v3239
        %v3266 = vpack.c.b16 %v3242, %v3241
        %v3267 = vpack.c.b16 %v3244, %v3243
        %v3268 = vpack.c.b16 %v3246, %v3245
        %v3269 = vpack.c.b16 %v3248, %v3247
        %v3270 = vpack.c.b16 %v3250, %v3249
        %v3271 = vpack.c.b16 %v3252, %v3251
        %v3272 = vpack.c.b16 %v3254, %v3253
        %v3273 = vpack.c.b16 %v3256, %v3255
        %v3274 = vpack.c.b16 %v3257, %v3257
        %v3275 = vrot.slane %v3258, 2
        %v3276 = vrot.slane %v3259, 2
        %v3277 = vsel %vm2622, %v3275, %v3276
        %v3278 = vrot.slane %v3260, 2
        %v3279 = vsel %vm2622, %v3276, %v3278
        %v3280 = vrot.slane %v3261, 2
        %v3281 = vsel %vm2622, %v3278, %v3280
        %v3282 = vrot.slane %v3262, 2
        %v3283 = vsel %vm2622, %v3280, %v3282
        %v3284 = vrot.slane %v3263, 2
        %v3285 = vsel %vm2622, %v3282, %v3284
        %v3286 = vrot.slane %v3264, 2
        %v3287 = vsel %vm2622, %v3284, %v3286
        %v3288 = vrot.slane %v3265, 2
        %v3289 = vsel %vm2622, %v3286, %v3288
        %v3290 = vrot.slane %v3266, 2
        %v3291 = vsel %vm2622, %v3288, %v3290
        %v3292 = vrot.slane %v3267, 2
        %v3293 = vsel %vm2622, %v3290, %v3292
        %v3294 = vrot.slane %v3268, 2
        %v3295 = vsel %vm2622, %v3292, %v3294
        %v3296 = vrot.slane %v3269, 2
        %v3297 = vsel %vm2622, %v3294, %v3296
        %v3298 = vrot.slane %v3270, 2
        %v3299 = vsel %vm2622, %v3296, %v3298
        %v3300 = vrot.slane %v3271, 2
        %v3301 = vsel %vm2622, %v3298, %v3300
        %v3302 = vrot.slane %v3272, 2
        %v3303 = vsel %vm2622, %v3300, %v3302
        %v3304 = vrot.slane %v3273, 2
        %v3305 = vsel %vm2622, %v3302, %v3304
        %v3306 = vrot.slane %v3274, 2
        %v3307 = vsel %vm2622, %v3304, %v3306
        %vm3308 = vcmask 261120
        %v3311 = vsel %vm3308, %v2377, %v2506
        %v3314 = vsel %vm3308, %v2378, %v2508
        %v3317 = vsel %vm3308, %v2379, %v2510
        %v3320 = vsel %vm3308, %v2380, %v2512
        %v3323 = vsel %vm3308, %v2381, %v2514
        %v3326 = vsel %vm3308, %v2382, %v2516
        %v3329 = vsel %vm3308, %v2383, %v2518
        %v3332 = vsel %vm3308, %v2384, %v2520
        %v3335 = vsel %vm3308, %v2385, %v2522
        %v3338 = vsel %vm3308, %v2386, %v2524
        %v3341 = vsel %vm3308, %v2387, %v2526
        %v3344 = vsel %vm3308, %v2388, %v2528
        %v3347 = vsel %vm3308, %v2389, %v2530
        %v3350 = vsel %vm3308, %v2390, %v2532
        %v3353 = vsel %vm3308, %v2391, %v2534
        %v3356 = vsel %vm3308, %v2392, %v2536
        %v3359 = vsel %vm3308, %v2393, %v2538
        %vm3360 = vcmask 523264
        %v3362 = vsel %vm3360, %v3311, %v2657
        %v3364 = vsel %vm3360, %v3314, %v2659
        %v3366 = vsel %vm3360, %v3317, %v2661
        %v3368 = vsel %vm3360, %v3320, %v2663
        %v3370 = vsel %vm3360, %v3323, %v2665
        %v3372 = vsel %vm3360, %v3326, %v2667
        %v3374 = vsel %vm3360, %v3329, %v2669
        %v3376 = vsel %vm3360, %v3332, %v2671
        %v3378 = vsel %vm3360, %v3335, %v2673
        %v3380 = vsel %vm3360, %v3338, %v2675
        %v3382 = vsel %vm3360, %v3341, %v2677
        %v3384 = vsel %vm3360, %v3344, %v2679
        %v3386 = vsel %vm3360, %v3347, %v2681
        %v3388 = vsel %vm3360, %v3350, %v2683
        %v3390 = vsel %vm3360, %v3353, %v2685
        %v3392 = vsel %vm3360, %v3356, %v2687
        %v3394 = vsel %vm3360, %v3359, %v2689
        %vm3395 = vcmask 785408
        %v3397 = vsel %vm3395, %v3362, %v2774
        %v3399 = vsel %vm3395, %v3364, %v2776
        %v3401 = vsel %vm3395, %v3366, %v2778
        %v3403 = vsel %vm3395, %v3368, %v2780
        %v3405 = vsel %vm3395, %v3370, %v2782
        %v3407 = vsel %vm3395, %v3372, %v2784
        %v3409 = vsel %vm3395, %v3374, %v2786
        %v3411 = vsel %vm3395, %v3376, %v2788
        %v3413 = vsel %vm3395, %v3378, %v2790
        %v3415 = vsel %vm3395, %v3380, %v2792
        %v3417 = vsel %vm3395, %v3382, %v2794
        %v3419 = vsel %vm3395, %v3384, %v2796
        %v3421 = vsel %vm3395, %v3386, %v2798
        %v3423 = vsel %vm3395, %v3388, %v2800
        %v3425 = vsel %vm3395, %v3390, %v2802
        %v3427 = vsel %vm3395, %v3392, %v2804
        %v3429 = vsel %vm3395, %v3394, %v2806
        %v3432 = vsel %vm3308, %v2485, %v2966
        %v3435 = vsel %vm3308, %v2488, %v2968
        %v3438 = vsel %vm3308, %v2490, %v2970
        %v3441 = vsel %vm3308, %v2492, %v2972
        %v3444 = vsel %vm3308, %v2494, %v2974
        %v3447 = vsel %vm3308, %v2496, %v2976
        %v3450 = vsel %vm3308, %v2498, %v2978
        %v3453 = vsel %vm3308, %v2500, %v2980
        %v3456 = vsel %vm3308, %v2502, %v2982
        %v3459 = vsel %vm3308, %v2504, %v2984
        %v3462 = vsel %vm3308, %v2838, %v2986
        %v3465 = vsel %vm3308, %v2840, %v2988
        %v3468 = vsel %vm3308, %v2842, %v2990
        %v3471 = vsel %vm3308, %v2844, %v2992
        %v3474 = vsel %vm3308, %v2846, %v2994
        %v3477 = vsel %vm3308, %v2848, %v2996
        %v3480 = vsel %vm3308, %v2847, %v2998
        %v3482 = vsel %vm3360, %v3432, %v3083
        %v3484 = vsel %vm3360, %v3435, %v3085
        %v3486 = vsel %vm3360, %v3438, %v3087
        %v3488 = vsel %vm3360, %v3441, %v3089
        %v3490 = vsel %vm3360, %v3444, %v3091
        %v3492 = vsel %vm3360, %v3447, %v3093
        %v3494 = vsel %vm3360, %v3450, %v3095
        %v3496 = vsel %vm3360, %v3453, %v3097
        %v3498 = vsel %vm3360, %v3456, %v3099
        %v3500 = vsel %vm3360, %v3459, %v3101
        %v3502 = vsel %vm3360, %v3462, %v3103
        %v3504 = vsel %vm3360, %v3465, %v3105
        %v3506 = vsel %vm3360, %v3468, %v3107
        %v3508 = vsel %vm3360, %v3471, %v3109
        %v3510 = vsel %vm3360, %v3474, %v3111
        %v3512 = vsel %vm3360, %v3477, %v3113
        %v3514 = vsel %vm3360, %v3480, %v3115
        %v3516 = vsel %vm3395, %v3482, %v3159
        %v3518 = vsel %vm3395, %v3484, %v3161
        %v3520 = vsel %vm3395, %v3486, %v3163
        %v3522 = vsel %vm3395, %v3488, %v3165
        %v3524 = vsel %vm3395, %v3490, %v3167
        %v3526 = vsel %vm3395, %v3492, %v3169
        %v3528 = vsel %vm3395, %v3494, %v3171
        %v3530 = vsel %vm3395, %v3496, %v3173
        %v3532 = vsel %vm3395, %v3498, %v3175
        %v3534 = vsel %vm3395, %v3500, %v3177
        %v3536 = vsel %vm3395, %v3502, %v3179
        %v3538 = vsel %vm3395, %v3504, %v3181
        %v3540 = vsel %vm3395, %v3506, %v3183
        %v3542 = vsel %vm3395, %v3508, %v3185
        %v3544 = vsel %vm3395, %v3510, %v3187
        %v3546 = vsel %vm3395, %v3512, %v3189
        %v3548 = vsel %vm3395, %v3514, %v3191
        %v3549 = vld [vmem:[#allocation3] sm:$0xf]
        %v3550 = vld [vmem:[#allocation3 + $0x4] sm:$0xf]
        %v3551 = vld [vmem:[#allocation3 + $0x8] sm:$0xf]
        %v3552 = vld [vmem:[#allocation3 + $0xc] sm:$0xf]
        %v3553 = vld [vmem:[#allocation3 + $0x10] sm:$0xf]
        %v3554 = vld [vmem:[#allocation3 + $0x14] sm:$0xf]
        %v3555 = vld [vmem:[#allocation3 + $0x18] sm:$0xf]
        %v3556 = vld [vmem:[#allocation3 + $0x1c] sm:$0xf]
        %v3557 = vld [vmem:[#allocation3 + $0x20] sm:$0xf]
        %v3558 = vld [vmem:[#allocation3 + $0x24] sm:$0xf]
        %v3559 = vld [vmem:[#allocation3 + $0x28] sm:$0xf]
        %v3560 = vld [vmem:[#allocation3 + $0x2c] sm:$0xf]
        %v3561 = vld [vmem:[#allocation3 + $0x30] sm:$0xf]
        %v3562 = vld [vmem:[#allocation3 + $0x34] sm:$0xf]
        %v3563 = vld [vmem:[#allocation3 + $0x38] sm:$0xf]
        %v3564 = vld [vmem:[#allocation3 + $0x3c] sm:$0xf]
        %v3565 = vld [vmem:[#allocation3 + $0x40] sm:$0xf]
        %v3566 = vld [vmem:[#allocation3 + $0x44] sm:$0xf]
        %v3567 = vld [vmem:[#allocation3 + $0x48] sm:$0xf]
        %v3568 = vld [vmem:[#allocation3 + $0x4c] sm:$0xf]
        %v3569 = vld [vmem:[#allocation3 + $0x50] sm:$0xf]
        %v3570 = vld [vmem:[#allocation3 + $0x54] sm:$0xf]
        %v3571 = vld [vmem:[#allocation3 + $0x58] sm:$0xf]
        %v3572 = vld [vmem:[#allocation3 + $0x5c] sm:$0xf]
        %v3573 = vld [vmem:[#allocation3 + $0x60] sm:$0xf]
        %v3574 = vld [vmem:[#allocation3 + $0x64] sm:$0xf]
        %v3575 = vld [vmem:[#allocation3 + $0x68] sm:$0xf]
        %v3576 = vld [vmem:[#allocation3 + $0x6c] sm:$0xf]
        %v3577 = vld [vmem:[#allocation3 + $0x70] sm:$0xf]
        %v3578 = vld [vmem:[#allocation3 + $0x74] sm:$0xf]
        %v3579 = vld [vmem:[#allocation3 + $0x78] sm:$0xf]
        %v3580 = vld [vmem:[#allocation3 + $0x7c] sm:$0xf]
        %v3581 = vld [vmem:[#allocation3 + $0x80] sm:$0xf]
        %v3582 = vld [vmem:[#allocation3 + $0x84] sm:$0xf]
        %v3583 = vld [vmem:[#allocation3 + $0x88] sm:$0xf]
        %v3584 = vld [vmem:[#allocation3 + $0x8c] sm:$0xf]
        %v3585 = vld [vmem:[%s4] sm:$0x1]
        %v3587 = vlaneseq
        %v3588 = vshrl.u32 %v3587, 7
        %v3589 = vsub.s32 0, %v3588
        %v3590 = vrot.slane %v3585, %v3589
        %vm3626 = vcmask 1046528
        %v3627 = vrot.slane %v3397, 1
        %v3628 = vrot.slane %v3399, 1
        %v3629 = vsel %vm3626, %v3627, %v3628
        %v3630 = vrot.slane %v3516, 1
        %v3631 = vrot.slane %v3518, 1
        %v3632 = vsel %vm3626, %v3630, %v3631
        %v3633 = vrot.slane %v3277, 1
        %v3634 = vrot.slane %v3279, 1
        %v3635 = vsel %vm3626, %v3633, %v3634
        %v3636 = vrot.slane %v3401, 1
        %v3637 = vsel %vm3626, %v3628, %v3636
        %v3638 = vrot.slane %v3520, 1
        %v3639 = vsel %vm3626, %v3631, %v3638
        %v3640 = vrot.slane %v3281, 1
        %v3641 = vsel %vm3626, %v3634, %v3640
        %v3642 = vrot.slane %v3403, 1
        %v3643 = vsel %vm3626, %v3636, %v3642
        %v3644 = vrot.slane %v3522, 1
        %v3645 = vsel %vm3626, %v3638, %v3644
        %v3646 = vrot.slane %v3283, 1
        %v3647 = vsel %vm3626, %v3640, %v3646
        %v3648 = vrot.slane %v3405, 1
        %v3649 = vsel %vm3626, %v3642, %v3648
        %v3650 = vrot.slane %v3524, 1
        %v3651 = vsel %vm3626, %v3644, %v3650
        %v3652 = vrot.slane %v3285, 1
        %v3653 = vsel %vm3626, %v3646, %v3652
        %v3654 = vrot.slane %v3407, 1
        %v3655 = vsel %vm3626, %v3648, %v3654
        %v3656 = vrot.slane %v3526, 1
        %v3657 = vsel %vm3626, %v3650, %v3656
        %v3658 = vrot.slane %v3287, 1
        %v3659 = vsel %vm3626, %v3652, %v3658
        %v3660 = vrot.slane %v3409, 1
        %v3661 = vsel %vm3626, %v3654, %v3660
        %v3662 = vrot.slane %v3528, 1
        %v3663 = vsel %vm3626, %v3656, %v3662
        %v3664 = vrot.slane %v3289, 1
        %v3665 = vsel %vm3626, %v3658, %v3664
        %v3666 = vrot.slane %v3411, 1
        %v3667 = vsel %vm3626, %v3660, %v3666
        %v3668 = vrot.slane %v3530, 1
        %v3669 = vsel %vm3626, %v3662, %v3668
        %v3670 = vrot.slane %v3291, 1
        %v3671 = vsel %vm3626, %v3664, %v3670
        %v3672 = vrot.slane %v3413, 1
        %v3673 = vsel %vm3626, %v3666, %v3672
        %v3674 = vrot.slane %v3532, 1
        %v3675 = vsel %vm3626, %v3668, %v3674
        %v3676 = vrot.slane %v3293, 1
        %v3677 = vsel %vm3626, %v3670, %v3676
        %v3678 = vrot.slane %v3415, 1
        %v3679 = vsel %vm3626, %v3672, %v3678
        %v3680 = vrot.slane %v3534, 1
        %v3681 = vsel %vm3626, %v3674, %v3680
        %v3682 = vrot.slane %v3295, 1
        %v3683 = vsel %vm3626, %v3676, %v3682
        %v3684 = vrot.slane %v3417, 1
        %v3685 = vsel %vm3626, %v3678, %v3684
        %v3686 = vrot.slane %v3536, 1
        %v3687 = vsel %vm3626, %v3680, %v3686
        %v3688 = vrot.slane %v3297, 1
        %v3689 = vsel %vm3626, %v3682, %v3688
        %v3690 = vrot.slane %v3419, 1
        %v3691 = vsel %vm3626, %v3684, %v3690
        %v3692 = vrot.slane %v3538, 1
        %v3693 = vsel %vm3626, %v3686, %v3692
        %v3694 = vrot.slane %v3299, 1
        %v3695 = vsel %vm3626, %v3688, %v3694
        %v3696 = vrot.slane %v3421, 1
        %v3697 = vsel %vm3626, %v3690, %v3696
        %v3698 = vrot.slane %v3540, 1
        %v3699 = vsel %vm3626, %v3692, %v3698
        %v3700 = vrot.slane %v3301, 1
        %v3701 = vsel %vm3626, %v3694, %v3700
        %v3702 = vrot.slane %v3423, 1
        %v3703 = vsel %vm3626, %v3696, %v3702
        %v3704 = vrot.slane %v3542, 1
        %v3705 = vsel %vm3626, %v3698, %v3704
        %v3706 = vrot.slane %v3303, 1
        %v3707 = vsel %vm3626, %v3700, %v3706
        %v3708 = vrot.slane %v3425, 1
        %v3709 = vsel %vm3626, %v3702, %v3708
        %v3710 = vrot.slane %v3544, 1
        %v3711 = vsel %vm3626, %v3704, %v3710
        %v3712 = vrot.slane %v3305, 1
        %v3713 = vsel %vm3626, %v3706, %v3712
        %v3714 = vrot.slane %v3427, 1
        %v3715 = vsel %vm3626, %v3708, %v3714
        %v3716 = vrot.slane %v3546, 1
        %v3717 = vsel %vm3626, %v3710, %v3716
        %v3718 = vrot.slane %v3307, 1
        %v3719 = vsel %vm3626, %v3712, %v3718
        %v3720 = vrot.slane %v3429, 1
        %v3721 = vsel %vm3626, %v3714, %v3720
        %v3722 = vrot.slane %v3548, 1
        %v3723 = vsel %vm3626, %v3716, %v3722
        %v3724 = vrot.slane %v3306, 1
        %v3725 = vsel %vm3626, %v3718, %v3724
        %v3794 = vunpack.c.l.b16 %v3549
        %v3795 = vunpack.c.l.b16 %v3550
        %v3796 = vunpack.c.l.b16 %v3551
        %v3797 = vunpack.c.l.b16 %v3552
        %v3798 = vunpack.c.l.b16 %v3553
        %v3799 = vunpack.c.l.b16 %v3554
        %v3800 = vunpack.c.l.b16 %v3555
        %v3801 = vunpack.c.l.b16 %v3556
        %v3802 = vunpack.c.l.b16 %v3557
        %v3803 = vunpack.c.l.b16 %v3558
        %v3804 = vunpack.c.l.b16 %v3559
        %v3805 = vunpack.c.l.b16 %v3560
        %v3806 = vunpack.c.l.b16 %v3561
        %v3807 = vunpack.c.l.b16 %v3562
        %v3808 = vunpack.c.l.b16 %v3563
        %v3809 = vunpack.c.l.b16 %v3564
        %v3810 = vunpack.c.l.b16 %v3565
        %v3811 = vunpack.c.l.b16 %v3566
        %v3812 = vunpack.c.l.b16 %v3567
        %v3813 = vunpack.c.l.b16 %v3568
        %v3814 = vunpack.c.l.b16 %v3569
        %v3815 = vunpack.c.l.b16 %v3570
        %v3816 = vunpack.c.l.b16 %v3571
        %v3817 = vunpack.c.l.b16 %v3572
        %v3818 = vunpack.c.l.b16 %v3573
        %v3819 = vunpack.c.l.b16 %v3574
        %v3820 = vunpack.c.l.b16 %v3575
        %v3821 = vunpack.c.l.b16 %v3576
        %v3822 = vunpack.c.l.b16 %v3577
        %v3823 = vunpack.c.l.b16 %v3578
        %v3824 = vunpack.c.l.b16 %v3579
        %v3825 = vunpack.c.l.b16 %v3580
        %v3826 = vunpack.c.l.b16 %v3581
        %v3827 = vunpack.c.l.b16 %v3582
        %v3828 = vunpack.c.l.b16 %v3583
        %v3829 = vunpack.c.l.b16 %v3584
        %v3830 = vpack.c.b16 %v3795, %v3794
        %v3831 = vpack.c.b16 %v3797, %v3796
        %v3832 = vpack.c.b16 %v3799, %v3798
        %v3833 = vpack.c.b16 %v3801, %v3800
        %v3834 = vpack.c.b16 %v3803, %v3802
        %v3835 = vpack.c.b16 %v3805, %v3804
        %v3836 = vpack.c.b16 %v3807, %v3806
        %v3837 = vpack.c.b16 %v3809, %v3808
        %v3838 = vpack.c.b16 %v3811, %v3810
        %v3839 = vpack.c.b16 %v3813, %v3812
        %v3840 = vpack.c.b16 %v3815, %v3814
        %v3841 = vpack.c.b16 %v3817, %v3816
        %v3842 = vpack.c.b16 %v3819, %v3818
        %v3843 = vpack.c.b16 %v3821, %v3820
        %v3844 = vpack.c.b16 %v3823, %v3822
        %v3845 = vpack.c.b16 %v3825, %v3824
        %v3846 = vpack.c.b16 %v3827, %v3826
        %v3847 = vpack.c.b16 %v3829, %v3828
        %v3867 = vsel %vm3308, %v3635, 0
        %v3870 = vsel %vm3308, %v3641, 0
        %v3873 = vsel %vm3308, %v3647, 0
        %v3876 = vsel %vm3308, %v3653, 0
        %v3879 = vsel %vm3308, %v3659, 0
        %v3882 = vsel %vm3308, %v3665, 0
        %v3885 = vsel %vm3308, %v3671, 0
        %v3888 = vsel %vm3308, %v3677, 0
        %v3891 = vsel %vm3308, %v3683, 0
        %v3894 = vsel %vm3308, %v3689, 0
        %v3897 = vsel %vm3308, %v3695, 0
        %v3900 = vsel %vm3308, %v3701, 0
        %v3903 = vsel %vm3308, %v3707, 0
        %v3906 = vsel %vm3308, %v3713, 0
        %v3909 = vsel %vm3308, %v3719, 0
        %v3912 = vsel %vm3308, %v3725, 0
        %3914 = vmatprep.subr.bf16.mxu0 0
        %3915 = vmatpush1.bf16.msra.mxu0 %v3837
        %3916 = vmatprep.subr.bf16.mxu0 0
        %3917 = vmatpush1.bf16.msra.mxu0 %v3836
        %3918 = vmatprep.subr.bf16.mxu0 0
        %3919 = vmatpush1.bf16.msra.mxu0 %v3835
        %3920 = vmatprep.subr.bf16.mxu0 0
        %3921 = vmatpush1.bf16.msra.mxu0 %v3834
        %3922 = vmatprep.subr.bf16.mxu0 0
        %3923 = vmatpush1.bf16.msra.mxu0 %v3833
        %3924 = vmatprep.subr.bf16.mxu0 0
        %3925 = vmatpush1.bf16.msra.mxu0 %v3832
        %3926 = vmatprep.subr.bf16.mxu0 0
        %3927 = vmatpush1.bf16.msra.mxu0 %v3831
        %3928 = vmatprep.subr.bf16.mxu0 0
        %3929 = vmatpush1.bf16.msra.mxu0 %v3830
        %3930 = vmatprep.subr.bf16.mxu0 0
        %3931 = vmatpush2.bf16.msra.mxu0 %v3845
        %3932 = vmatprep.subr.bf16.mxu0 0
        %3933 = vmatpush2.bf16.msra.mxu0 %v3844
        %3934 = vmatprep.subr.bf16.mxu0 0
        %3935 = vmatpush2.bf16.msra.mxu0 %v3843
        %3936 = vmatprep.subr.bf16.mxu0 0
        %3937 = vmatpush2.bf16.msra.mxu0 %v3842
        %3938 = vmatprep.subr.bf16.mxu0 0
        %3939 = vmatpush2.bf16.msra.mxu0 %v3841
        %3940 = vmatprep.subr.bf16.mxu0 0
        %3941 = vmatpush2.bf16.msra.mxu0 %v3840
        %3942 = vmatprep.subr.bf16.mxu0 0
        %3943 = vmatpush2.bf16.msra.mxu0 %v3839
        %3944 = vmatprep.subr.bf16.mxu0 0
        %3945 = vmatpush2.bf16.msra.mxu0 %v3838
        %3946 = vmatprep.mubr.bf16.mxu0 %v3632
        %3947 = vmatmul.mubr.bf16.gmra.mxu0 %v3629
        %v3948 = vpop.f32.mrf.mxu0
        %v3949 = vadd.f32 %v3590, %v3948
        %v3950 = vpop.f32.mrf.mxu0
        %v3951 = vpop.f32.mrf.mxu0
        %v3952 = vadd.f32 %v3590, %v3951
        %v3953 = vpop.f32.mrf.mxu0
        %3954 = vmatprep.mubr.bf16.mxu0 %v3639
        %3955 = vmatmul.mubr.bf16.gmra.mxu0 %v3637
        %v3956 = vpop.f32.mrf.mxu0
        %v3957 = vadd.f32 %v3590, %v3956
        %v3958 = vpop.f32.mrf.mxu0
        %v3959 = vpop.f32.mrf.mxu0
        %v3960 = vadd.f32 %v3590, %v3959
        %v3961 = vpop.f32.mrf.mxu0
        %3962 = vmatprep.mubr.bf16.mxu0 %v3645
        %3963 = vmatmul.mubr.bf16.gmra.mxu0 %v3643
        %v3964 = vpop.f32.mrf.mxu0
        %v3965 = vadd.f32 %v3590, %v3964
        %v3966 = vpop.f32.mrf.mxu0
        %v3967 = vpop.f32.mrf.mxu0
        %v3968 = vadd.f32 %v3590, %v3967
        %v3969 = vpop.f32.mrf.mxu0
        %3970 = vmatprep.mubr.bf16.mxu0 %v3651
        %3971 = vmatmul.mubr.bf16.gmra.mxu0 %v3649
        %v3972 = vpop.f32.mrf.mxu0
        %v3973 = vadd.f32 %v3590, %v3972
        %v3974 = vpop.f32.mrf.mxu0
        %v3975 = vpop.f32.mrf.mxu0
        %v3976 = vadd.f32 %v3590, %v3975
        %v3977 = vpop.f32.mrf.mxu0
        %3978 = vmatprep.mubr.bf16.mxu0 %v3657
        %3979 = vmatmul.mubr.bf16.gmra.mxu0 %v3655
        %v3980 = vpop.f32.mrf.mxu0
        %v3981 = vadd.f32 %v3590, %v3980
        %v3982 = vpop.f32.mrf.mxu0
        %v3983 = vpop.f32.mrf.mxu0
        %v3984 = vadd.f32 %v3590, %v3983
        %v3985 = vpop.f32.mrf.mxu0
        %3986 = vmatprep.mubr.bf16.mxu0 %v3663
        %3987 = vmatmul.mubr.bf16.gmra.mxu0 %v3661
        %v3988 = vpop.f32.mrf.mxu0
        %v3989 = vadd.f32 %v3590, %v3988
        %v3990 = vpop.f32.mrf.mxu0
        %v3991 = vpop.f32.mrf.mxu0
        %v3992 = vadd.f32 %v3590, %v3991
        %v3993 = vpop.f32.mrf.mxu0
        %3994 = vmatprep.mubr.bf16.mxu0 %v3669
        %3995 = vmatmul.mubr.bf16.gmra.mxu0 %v3667
        %v3996 = vpop.f32.mrf.mxu0
        %v3997 = vadd.f32 %v3590, %v3996
        %v3998 = vpop.f32.mrf.mxu0
        %v3999 = vpop.f32.mrf.mxu0
        %v4000 = vadd.f32 %v3590, %v3999
        %v4001 = vpop.f32.mrf.mxu0
        %4002 = vmatprep.mubr.bf16.mxu0 %v3675
        %4003 = vmatmul.mubr.bf16.gmra.mxu0 %v3673
        %v4004 = vpop.f32.mrf.mxu0
        %v4005 = vadd.f32 %v3590, %v4004
        %v4006 = vpop.f32.mrf.mxu0
        %v4007 = vpop.f32.mrf.mxu0
        %v4008 = vadd.f32 %v3590, %v4007
        %v4009 = vpop.f32.mrf.mxu0
        %4010 = vmatprep.mubr.bf16.mxu0 %v3681
        %4011 = vmatmul.mubr.bf16.gmra.mxu0 %v3679
        %v4012 = vpop.f32.mrf.mxu0
        %v4013 = vadd.f32 %v3590, %v4012
        %v4014 = vpop.f32.mrf.mxu0
        %v4015 = vpop.f32.mrf.mxu0
        %v4016 = vadd.f32 %v3590, %v4015
        %v4017 = vpop.f32.mrf.mxu0
        %4018 = vmatprep.mubr.bf16.mxu0 %v3687
        %4019 = vmatmul.mubr.bf16.gmra.mxu0 %v3685
        %v4020 = vpop.f32.mrf.mxu0
        %v4021 = vadd.f32 %v3590, %v4020
        %v4022 = vpop.f32.mrf.mxu0
        %v4023 = vpop.f32.mrf.mxu0
        %v4024 = vadd.f32 %v3590, %v4023
        %v4025 = vpop.f32.mrf.mxu0
        %4026 = vmatprep.mubr.bf16.mxu0 %v3693
        %4027 = vmatmul.mubr.bf16.gmra.mxu0 %v3691
        %v4028 = vpop.f32.mrf.mxu0
        %v4029 = vadd.f32 %v3590, %v4028
        %v4030 = vpop.f32.mrf.mxu0
        %v4031 = vpop.f32.mrf.mxu0
        %v4032 = vadd.f32 %v3590, %v4031
        %v4033 = vpop.f32.mrf.mxu0
        %4034 = vmatprep.mubr.bf16.mxu0 %v3699
        %4035 = vmatmul.mubr.bf16.gmra.mxu0 %v3697
        %v4036 = vpop.f32.mrf.mxu0
        %v4037 = vadd.f32 %v3590, %v4036
        %v4038 = vpop.f32.mrf.mxu0
        %v4039 = vpop.f32.mrf.mxu0
        %v4040 = vadd.f32 %v3590, %v4039
        %v4041 = vpop.f32.mrf.mxu0
        %4042 = vmatprep.mubr.bf16.mxu0 %v3705
        %4043 = vmatmul.mubr.bf16.gmra.mxu0 %v3703
        %v4044 = vpop.f32.mrf.mxu0
        %v4045 = vadd.f32 %v3590, %v4044
        %v4046 = vpop.f32.mrf.mxu0
        %v4047 = vpop.f32.mrf.mxu0
        %v4048 = vadd.f32 %v3590, %v4047
        %v4049 = vpop.f32.mrf.mxu0
        %4050 = vmatprep.mubr.bf16.mxu0 %v3711
        %4051 = vmatmul.mubr.bf16.gmra.mxu0 %v3709
        %v4052 = vpop.f32.mrf.mxu0
        %v4053 = vadd.f32 %v3590, %v4052
        %v4054 = vpop.f32.mrf.mxu0
        %v4055 = vpop.f32.mrf.mxu0
        %v4056 = vadd.f32 %v3590, %v4055
        %v4057 = vpop.f32.mrf.mxu0
        %4058 = vmatprep.mubr.bf16.mxu0 %v3717
        %4059 = vmatmul.mubr.bf16.gmra.mxu0 %v3715
        %v4060 = vpop.f32.mrf.mxu0
        %v4061 = vadd.f32 %v3590, %v4060
        %v4062 = vpop.f32.mrf.mxu0
        %v4063 = vpop.f32.mrf.mxu0
        %v4064 = vadd.f32 %v3590, %v4063
        %v4065 = vpop.f32.mrf.mxu0
        %4066 = vmatprep.mubr.bf16.mxu0 %v3723
        %4067 = vmatmul.mubr.bf16.gmra.mxu0 %v3721
        %v4068 = vpop.f32.mrf.mxu0
        %v4069 = vadd.f32 %v3590, %v4068
        %v4070 = vpop.f32.mrf.mxu0
        %v4071 = vpop.f32.mrf.mxu0
        %v4072 = vadd.f32 %v3590, %v4071
        %v4073 = vpop.f32.mrf.mxu0
        %4074 = vdwg.mxu0
        %4075 = vmatprep.subr.bf16.mxu0 0
        %4076 = vmatpush1.bf16.msra.mxu0 0
        %4077 = vmatprep.subr.bf16.mxu0 0
        %4078 = vmatpush1.bf16.msra.mxu0 0
        %4079 = vmatprep.subr.bf16.mxu0 0
        %4080 = vmatpush1.bf16.msra.mxu0 0
        %4081 = vmatprep.subr.bf16.mxu0 0
        %4082 = vmatpush1.bf16.msra.mxu0 0
        %4083 = vmatprep.subr.bf16.mxu0 0
        %4084 = vmatpush1.bf16.msra.mxu0 0
        %4085 = vmatprep.subr.bf16.mxu0 0
        %4086 = vmatpush1.bf16.msra.mxu0 0
        %4087 = vmatprep.subr.bf16.mxu0 0
        %4088 = vmatpush1.bf16.msra.mxu0 %v3847
        %4089 = vmatprep.subr.bf16.mxu0 0
        %4090 = vmatpush1.bf16.msra.mxu0 %v3846
        %4091 = vmatprep.subr.bf16.mxu0 0
        %4092 = vmatpush2.bf16.msra.mxu0 0
        %4093 = vmatprep.subr.bf16.mxu0 0
        %4094 = vmatpush2.bf16.msra.mxu0 0
        %4095 = vmatprep.subr.bf16.mxu0 0
        %4096 = vmatpush2.bf16.msra.mxu0 0
        %4097 = vmatprep.subr.bf16.mxu0 0
        %4098 = vmatpush2.bf16.msra.mxu0 0
        %4099 = vmatprep.subr.bf16.mxu0 0
        %4100 = vmatpush2.bf16.msra.mxu0 0
        %4101 = vmatprep.subr.bf16.mxu0 0
        %4102 = vmatpush2.bf16.msra.mxu0 0
        %4103 = vmatprep.subr.bf16.mxu0 0
        %4104 = vmatpush2.bf16.msra.mxu0 0
        %4105 = vmatprep.subr.bf16.mxu0 0
        %4106 = vmatpush2.bf16.msra.mxu0 0
        %4107 = vmatprep.mubr.bf16.mxu0 0
        %4108 = vmatmul.mubr.bf16.gmra.mxu0 %v3867
        %v4109 = vpop.f32.mrf.mxu0
        %v4110 = vadd.f32 %v3949, %v4109
        %v4111 = vpop.f32.mrf.mxu0
        %v4112 = vpop.f32.mrf.mxu0
        %v4113 = vadd.f32 %v3952, %v4112
        %v4114 = vpop.f32.mrf.mxu0
        %4115 = vmatprep.mubr.bf16.mxu0 0
        %4116 = vmatmul.mubr.bf16.gmra.mxu0 %v3870
        %v4117 = vpop.f32.mrf.mxu0
        %v4118 = vadd.f32 %v3957, %v4117
        %v4119 = vpop.f32.mrf.mxu0
        %v4120 = vpop.f32.mrf.mxu0
        %v4121 = vadd.f32 %v3960, %v4120
        %v4122 = vpop.f32.mrf.mxu0
        %4123 = vmatprep.mubr.bf16.mxu0 0
        %4124 = vmatmul.mubr.bf16.gmra.mxu0 %v3873
        %v4125 = vpop.f32.mrf.mxu0
        %v4126 = vadd.f32 %v3965, %v4125
        %v4127 = vpop.f32.mrf.mxu0
        %v4128 = vpop.f32.mrf.mxu0
        %v4129 = vadd.f32 %v3968, %v4128
        %v4130 = vpop.f32.mrf.mxu0
        %4131 = vmatprep.mubr.bf16.mxu0 0
        %4132 = vmatmul.mubr.bf16.gmra.mxu0 %v3876
        %v4133 = vpop.f32.mrf.mxu0
        %v4134 = vadd.f32 %v3973, %v4133
        %v4135 = vpop.f32.mrf.mxu0
        %v4136 = vpop.f32.mrf.mxu0
        %v4137 = vadd.f32 %v3976, %v4136
        %v4138 = vpop.f32.mrf.mxu0
        %4139 = vmatprep.mubr.bf16.mxu0 0
        %4140 = vmatmul.mubr.bf16.gmra.mxu0 %v3879
        %v4141 = vpop.f32.mrf.mxu0
        %v4142 = vadd.f32 %v3981, %v4141
        %v4143 = vpop.f32.mrf.mxu0
        %v4144 = vpop.f32.mrf.mxu0
        %v4145 = vadd.f32 %v3984, %v4144
        %v4146 = vpop.f32.mrf.mxu0
        %4147 = vmatprep.mubr.bf16.mxu0 0
        %4148 = vmatmul.mubr.bf16.gmra.mxu0 %v3882
        %v4149 = vpop.f32.mrf.mxu0
        %v4150 = vadd.f32 %v3989, %v4149
        %v4151 = vpop.f32.mrf.mxu0
        %v4152 = vpop.f32.mrf.mxu0
        %v4153 = vadd.f32 %v3992, %v4152
        %v4154 = vpop.f32.mrf.mxu0
        %4155 = vmatprep.mubr.bf16.mxu0 0
        %4156 = vmatmul.mubr.bf16.gmra.mxu0 %v3885
        %v4157 = vpop.f32.mrf.mxu0
        %v4158 = vadd.f32 %v3997, %v4157
        %v4159 = vpop.f32.mrf.mxu0
        %v4160 = vpop.f32.mrf.mxu0
        %v4161 = vadd.f32 %v4000, %v4160
        %v4162 = vpop.f32.mrf.mxu0
        %4163 = vmatprep.mubr.bf16.mxu0 0
        %4164 = vmatmul.mubr.bf16.gmra.mxu0 %v3888
        %v4165 = vpop.f32.mrf.mxu0
        %v4166 = vadd.f32 %v4005, %v4165
        %v4167 = vpop.f32.mrf.mxu0
        %v4168 = vpop.f32.mrf.mxu0
        %v4169 = vadd.f32 %v4008, %v4168
        %v4170 = vpop.f32.mrf.mxu0
        %4171 = vmatprep.mubr.bf16.mxu0 0
        %4172 = vmatmul.mubr.bf16.gmra.mxu0 %v3891
        %v4173 = vpop.f32.mrf.mxu0
        %v4174 = vadd.f32 %v4013, %v4173
        %v4175 = vpop.f32.mrf.mxu0
        %v4176 = vpop.f32.mrf.mxu0
        %v4177 = vadd.f32 %v4016, %v4176
        %v4178 = vpop.f32.mrf.mxu0
        %4179 = vmatprep.mubr.bf16.mxu0 0
        %4180 = vmatmul.mubr.bf16.gmra.mxu0 %v3894
        %v4181 = vpop.f32.mrf.mxu0
        %v4182 = vadd.f32 %v4021, %v4181
        %v4183 = vpop.f32.mrf.mxu0
        %v4184 = vpop.f32.mrf.mxu0
        %v4185 = vadd.f32 %v4024, %v4184
        %v4186 = vpop.f32.mrf.mxu0
        %4187 = vmatprep.mubr.bf16.mxu0 0
        %4188 = vmatmul.mubr.bf16.gmra.mxu0 %v3897
        %v4189 = vpop.f32.mrf.mxu0
        %v4190 = vadd.f32 %v4029, %v4189
        %v4191 = vpop.f32.mrf.mxu0
        %v4192 = vpop.f32.mrf.mxu0
        %v4193 = vadd.f32 %v4032, %v4192
        %v4194 = vpop.f32.mrf.mxu0
        %4195 = vmatprep.mubr.bf16.mxu0 0
        %4196 = vmatmul.mubr.bf16.gmra.mxu0 %v3900
        %v4197 = vpop.f32.mrf.mxu0
        %v4198 = vadd.f32 %v4037, %v4197
        %v4199 = vpop.f32.mrf.mxu0
        %v4200 = vpop.f32.mrf.mxu0
        %v4201 = vadd.f32 %v4040, %v4200
        %v4202 = vpop.f32.mrf.mxu0
        %4203 = vmatprep.mubr.bf16.mxu0 0
        %4204 = vmatmul.mubr.bf16.gmra.mxu0 %v3903
        %v4205 = vpop.f32.mrf.mxu0
        %v4206 = vadd.f32 %v4045, %v4205
        %v4207 = vpop.f32.mrf.mxu0
        %v4208 = vpop.f32.mrf.mxu0
        %v4209 = vadd.f32 %v4048, %v4208
        %v4210 = vpop.f32.mrf.mxu0
        %4211 = vmatprep.mubr.bf16.mxu0 0
        %4212 = vmatmul.mubr.bf16.gmra.mxu0 %v3906
        %v4213 = vpop.f32.mrf.mxu0
        %v4214 = vadd.f32 %v4053, %v4213
        %v4215 = vpop.f32.mrf.mxu0
        %v4216 = vpop.f32.mrf.mxu0
        %v4217 = vadd.f32 %v4056, %v4216
        %v4218 = vpop.f32.mrf.mxu0
        %4219 = vmatprep.mubr.bf16.mxu0 0
        %4220 = vmatmul.mubr.bf16.gmra.mxu0 %v3909
        %v4221 = vpop.f32.mrf.mxu0
        %v4222 = vadd.f32 %v4061, %v4221
        %v4223 = vpop.f32.mrf.mxu0
        %v4224 = vpop.f32.mrf.mxu0
        %v4225 = vadd.f32 %v4064, %v4224
        %v4226 = vpop.f32.mrf.mxu0
        %4227 = vmatprep.mubr.bf16.mxu0 0
        %4228 = vmatmul.mubr.bf16.gmra.mxu0 %v3912
        %v4229 = vpop.f32.mrf.mxu0
        %v4230 = vadd.f32 %v4069, %v4229
        %v4231 = vpop.f32.mrf.mxu0
        %v4232 = vpop.f32.mrf.mxu0
        %v4233 = vadd.f32 %v4072, %v4232
        %v4234 = vpop.f32.mrf.mxu0
        %4235 = vdwg.mxu0
        %v4236 = vmax.f32 %v4110, 0.0
        %v4237 = vmax.f32 %v4113, 0.0
        %v4238 = vmax.f32 %v4118, 0.0
        %v4239 = vmax.f32 %v4121, 0.0
        %v4240 = vmax.f32 %v4126, 0.0
        %v4241 = vmax.f32 %v4129, 0.0
        %v4242 = vmax.f32 %v4134, 0.0
        %v4243 = vmax.f32 %v4137, 0.0
        %v4244 = vmax.f32 %v4142, 0.0
        %v4245 = vmax.f32 %v4145, 0.0
        %v4246 = vmax.f32 %v4150, 0.0
        %v4247 = vmax.f32 %v4153, 0.0
        %v4248 = vmax.f32 %v4158, 0.0
        %v4249 = vmax.f32 %v4161, 0.0
        %v4250 = vmax.f32 %v4166, 0.0
        %v4251 = vmax.f32 %v4169, 0.0
        %v4252 = vmax.f32 %v4174, 0.0
        %v4253 = vmax.f32 %v4177, 0.0
        %v4254 = vmax.f32 %v4182, 0.0
        %v4255 = vmax.f32 %v4185, 0.0
        %v4256 = vmax.f32 %v4190, 0.0
        %v4257 = vmax.f32 %v4193, 0.0
        %v4258 = vmax.f32 %v4198, 0.0
        %v4259 = vmax.f32 %v4201, 0.0
        %v4260 = vmax.f32 %v4206, 0.0
        %v4261 = vmax.f32 %v4209, 0.0
        %v4262 = vmax.f32 %v4214, 0.0
        %v4263 = vmax.f32 %v4217, 0.0
        %v4264 = vmax.f32 %v4222, 0.0
        %v4265 = vmax.f32 %v4225, 0.0
        %v4266 = vmax.f32 %v4230, 0.0
        %v4267 = vmax.f32 %v4233, 0.0
        %v4268 = vpack.c.bf16 %v4237, %v4236
        %v4269 = vpack.c.bf16 %v4239, %v4238
        %v4270 = vpack.c.bf16 %v4241, %v4240
        %v4271 = vpack.c.bf16 %v4243, %v4242
        %v4272 = vpack.c.bf16 %v4245, %v4244
        %v4273 = vpack.c.bf16 %v4247, %v4246
        %v4274 = vpack.c.bf16 %v4249, %v4248
        %v4275 = vpack.c.bf16 %v4251, %v4250
        %v4276 = vpack.c.bf16 %v4253, %v4252
        %v4277 = vpack.c.bf16 %v4255, %v4254
        %v4278 = vpack.c.bf16 %v4257, %v4256
        %v4279 = vpack.c.bf16 %v4259, %v4258
        %v4280 = vpack.c.bf16 %v4261, %v4260
        %v4281 = vpack.c.bf16 %v4263, %v4262
        %v4282 = vpack.c.bf16 %v4265, %v4264
        %v4283 = vpack.c.bf16 %v4267, %v4266
        %v4284 = vld [vmem:[%s5] sm:$0xf]
        %v4285 = vld [vmem:[%s5 + $0x4] sm:$0xf]
        %v4286 = vld [vmem:[%s5 + $0x8] sm:$0xf]
        %v4287 = vld [vmem:[%s5 + $0xc] sm:$0xf]
        %v4288 = vld [vmem:[%s5 + $0x10] sm:$0xf]
        %v4289 = vld [vmem:[%s5 + $0x14] sm:$0xf]
        %v4290 = vld [vmem:[%s5 + $0x18] sm:$0xf]
        %v4291 = vld [vmem:[%s5 + $0x1c] sm:$0xf]
        %v4292 = vld [vmem:[%s5 + $0x20] sm:$0xf]
        %v4293 = vld [vmem:[%s5 + $0x24] sm:$0xf]
        %v4294 = vld [vmem:[%s5 + $0x28] sm:$0xf]
        %v4295 = vld [vmem:[%s5 + $0x2c] sm:$0xf]
        %v4296 = vld [vmem:[%s5 + $0x30] sm:$0xf]
        %v4297 = vld [vmem:[%s5 + $0x34] sm:$0xf]
        %v4298 = vld [vmem:[%s5 + $0x38] sm:$0xf]
        %v4299 = vld [vmem:[%s5 + $0x3c] sm:$0xf]
        %v4300 = vld [vmem:[%s6] sm:$0x1]
        %v4302 = vlaneseq
        %v4303 = vshrl.u32 %v4302, 7
        %v4304 = vsub.s32 0, %v4303
        %v4305 = vrot.slane %v4300, %v4304
        %v4323 = vunpack.c.l.b16 %v4284
        %v4324 = vunpack.c.l.b16 %v4285
        %v4325 = vunpack.c.l.b16 %v4286
        %v4326 = vunpack.c.l.b16 %v4287
        %v4327 = vunpack.c.l.b16 %v4288
        %v4328 = vunpack.c.l.b16 %v4289
        %v4329 = vunpack.c.l.b16 %v4290
        %v4330 = vunpack.c.l.b16 %v4291
        %v4331 = vunpack.c.l.b16 %v4292
        %v4332 = vunpack.c.l.b16 %v4293
        %v4333 = vunpack.c.l.b16 %v4294
        %v4334 = vunpack.c.l.b16 %v4295
        %v4335 = vunpack.c.l.b16 %v4296
        %v4336 = vunpack.c.l.b16 %v4297
        %v4337 = vunpack.c.l.b16 %v4298
        %v4338 = vunpack.c.l.b16 %v4299
        %v4339 = vpack.c.b16 %v4324, %v4323
        %v4340 = vpack.c.b16 %v4326, %v4325
        %v4341 = vpack.c.b16 %v4328, %v4327
        %v4342 = vpack.c.b16 %v4330, %v4329
        %v4343 = vpack.c.b16 %v4332, %v4331
        %v4344 = vpack.c.b16 %v4334, %v4333
        %v4345 = vpack.c.b16 %v4336, %v4335
        %v4346 = vpack.c.b16 %v4338, %v4337
        %4355 = vmatprep.subr.bf16.mxu0 0
        %4356 = vmatpush1.bf16.msra.mxu0 %v4346
        %4357 = vmatprep.subr.bf16.mxu0 0
        %4358 = vmatpush1.bf16.msra.mxu0 %v4345
        %4359 = vmatprep.subr.bf16.mxu0 0
        %4360 = vmatpush1.bf16.msra.mxu0 %v4344
        %4361 = vmatprep.subr.bf16.mxu0 0
        %4362 = vmatpush1.bf16.msra.mxu0 %v4343
        %4363 = vmatprep.subr.bf16.mxu0 0
        %4364 = vmatpush1.bf16.msra.mxu0 %v4342
        %4365 = vmatprep.subr.bf16.mxu0 0
        %4366 = vmatpush1.bf16.msra.mxu0 %v4341
        %4367 = vmatprep.subr.bf16.mxu0 0
        %4368 = vmatpush1.bf16.msra.mxu0 %v4340
        %4369 = vmatprep.subr.bf16.mxu0 0
        %4370 = vmatpush1.bf16.msra.mxu0 %v4339
        %4371 = vmatprep.subr.bf16.mxu0 0
        %4372 = vmatpush2.bf16.msra.mxu0 0
        %4373 = vmatprep.subr.bf16.mxu0 0
        %4374 = vmatpush2.bf16.msra.mxu0 0
        %4375 = vmatprep.subr.bf16.mxu0 0
        %4376 = vmatpush2.bf16.msra.mxu0 0
        %4377 = vmatprep.subr.bf16.mxu0 0
        %4378 = vmatpush2.bf16.msra.mxu0 0
        %4379 = vmatprep.subr.bf16.mxu0 0
        %4380 = vmatpush2.bf16.msra.mxu0 0
        %4381 = vmatprep.subr.bf16.mxu0 0
        %4382 = vmatpush2.bf16.msra.mxu0 0
        %4383 = vmatprep.subr.bf16.mxu0 0
        %4384 = vmatpush2.bf16.msra.mxu0 0
        %4385 = vmatprep.subr.bf16.mxu0 0
        %4386 = vmatpush2.bf16.msra.mxu0 0
        %4387 = vmatprep.mubr.bf16.mxu0 0
        %4388 = vmatmul.mubr.bf16.gmra.mxu0 %v4268
        %v4389 = vpop.f32.mrf.mxu0
        %v4390 = vadd.f32 %v4305, %v4389
        %v4391 = vpop.f32.mrf.mxu0
        %v4392 = vpop.f32.mrf.mxu0
        %v4393 = vadd.f32 %v4305, %v4392
        %v4394 = vpop.f32.mrf.mxu0
        %4395 = vmatprep.mubr.bf16.mxu0 0
        %4396 = vmatmul.mubr.bf16.gmra.mxu0 %v4269
        %v4397 = vpop.f32.mrf.mxu0
        %v4398 = vadd.f32 %v4305, %v4397
        %v4399 = vpop.f32.mrf.mxu0
        %v4400 = vpop.f32.mrf.mxu0
        %v4401 = vadd.f32 %v4305, %v4400
        %v4402 = vpop.f32.mrf.mxu0
        %4403 = vmatprep.mubr.bf16.mxu0 0
        %4404 = vmatmul.mubr.bf16.gmra.mxu0 %v4270
        %v4405 = vpop.f32.mrf.mxu0
        %v4406 = vadd.f32 %v4305, %v4405
        %v4407 = vpop.f32.mrf.mxu0
        %v4408 = vpop.f32.mrf.mxu0
        %v4409 = vadd.f32 %v4305, %v4408
        %v4410 = vpop.f32.mrf.mxu0
        %4411 = vmatprep.mubr.bf16.mxu0 0
        %4412 = vmatmul.mubr.bf16.gmra.mxu0 %v4271
        %v4413 = vpop.f32.mrf.mxu0
        %v4414 = vadd.f32 %v4305, %v4413
        %v4415 = vpop.f32.mrf.mxu0
        %v4416 = vpop.f32.mrf.mxu0
        %v4417 = vadd.f32 %v4305, %v4416
        %v4418 = vpop.f32.mrf.mxu0
        %4419 = vmatprep.mubr.bf16.mxu0 0
        %4420 = vmatmul.mubr.bf16.gmra.mxu0 %v4272
        %v4421 = vpop.f32.mrf.mxu0
        %v4422 = vadd.f32 %v4305, %v4421
        %v4423 = vpop.f32.mrf.mxu0
        %v4424 = vpop.f32.mrf.mxu0
        %v4425 = vadd.f32 %v4305, %v4424
        %v4426 = vpop.f32.mrf.mxu0
        %4427 = vmatprep.mubr.bf16.mxu0 0
        %4428 = vmatmul.mubr.bf16.gmra.mxu0 %v4273
        %v4429 = vpop.f32.mrf.mxu0
        %v4430 = vadd.f32 %v4305, %v4429
        %v4431 = vpop.f32.mrf.mxu0
        %v4432 = vpop.f32.mrf.mxu0
        %v4433 = vadd.f32 %v4305, %v4432
        %v4434 = vpop.f32.mrf.mxu0
        %4435 = vmatprep.mubr.bf16.mxu0 0
        %4436 = vmatmul.mubr.bf16.gmra.mxu0 %v4274
        %v4437 = vpop.f32.mrf.mxu0
        %v4438 = vadd.f32 %v4305, %v4437
        %v4439 = vpop.f32.mrf.mxu0
        %v4440 = vpop.f32.mrf.mxu0
        %v4441 = vadd.f32 %v4305, %v4440
        %v4442 = vpop.f32.mrf.mxu0
        %4443 = vmatprep.mubr.bf16.mxu0 0
        %4444 = vmatmul.mubr.bf16.gmra.mxu0 %v4275
        %v4445 = vpop.f32.mrf.mxu0
        %v4446 = vadd.f32 %v4305, %v4445
        %v4447 = vpop.f32.mrf.mxu0
        %v4448 = vpop.f32.mrf.mxu0
        %v4449 = vadd.f32 %v4305, %v4448
        %v4450 = vpop.f32.mrf.mxu0
        %4451 = vmatprep.mubr.bf16.mxu0 0
        %4452 = vmatmul.mubr.bf16.gmra.mxu0 %v4276
        %v4453 = vpop.f32.mrf.mxu0
        %v4454 = vadd.f32 %v4305, %v4453
        %v4455 = vpop.f32.mrf.mxu0
        %v4456 = vpop.f32.mrf.mxu0
        %v4457 = vadd.f32 %v4305, %v4456
        %v4458 = vpop.f32.mrf.mxu0
        %4459 = vmatprep.mubr.bf16.mxu0 0
        %4460 = vmatmul.mubr.bf16.gmra.mxu0 %v4277
        %v4461 = vpop.f32.mrf.mxu0
        %v4462 = vadd.f32 %v4305, %v4461
        %v4463 = vpop.f32.mrf.mxu0
        %v4464 = vpop.f32.mrf.mxu0
        %v4465 = vadd.f32 %v4305, %v4464
        %v4466 = vpop.f32.mrf.mxu0
        %4467 = vmatprep.mubr.bf16.mxu0 0
        %4468 = vmatmul.mubr.bf16.gmra.mxu0 %v4278
        %v4469 = vpop.f32.mrf.mxu0
        %v4470 = vadd.f32 %v4305, %v4469
        %v4471 = vpop.f32.mrf.mxu0
        %v4472 = vpop.f32.mrf.mxu0
        %v4473 = vadd.f32 %v4305, %v4472
        %v4474 = vpop.f32.mrf.mxu0
        %4475 = vmatprep.mubr.bf16.mxu0 0
        %4476 = vmatmul.mubr.bf16.gmra.mxu0 %v4279
        %v4477 = vpop.f32.mrf.mxu0
        %v4478 = vadd.f32 %v4305, %v4477
        %v4479 = vpop.f32.mrf.mxu0
        %v4480 = vpop.f32.mrf.mxu0
        %v4481 = vadd.f32 %v4305, %v4480
        %v4482 = vpop.f32.mrf.mxu0
        %4483 = vmatprep.mubr.bf16.mxu0 0
        %4484 = vmatmul.mubr.bf16.gmra.mxu0 %v4280
        %v4485 = vpop.f32.mrf.mxu0
        %v4486 = vadd.f32 %v4305, %v4485
        %v4487 = vpop.f32.mrf.mxu0
        %v4488 = vpop.f32.mrf.mxu0
        %v4489 = vadd.f32 %v4305, %v4488
        %v4490 = vpop.f32.mrf.mxu0
        %4491 = vmatprep.mubr.bf16.mxu0 0
        %4492 = vmatmul.mubr.bf16.gmra.mxu0 %v4281
        %v4493 = vpop.f32.mrf.mxu0
        %v4494 = vadd.f32 %v4305, %v4493
        %v4495 = vpop.f32.mrf.mxu0
        %v4496 = vpop.f32.mrf.mxu0
        %v4497 = vadd.f32 %v4305, %v4496
        %v4498 = vpop.f32.mrf.mxu0
        %4499 = vmatprep.mubr.bf16.mxu0 0
        %4500 = vmatmul.mubr.bf16.gmra.mxu0 %v4282
        %v4501 = vpop.f32.mrf.mxu0
        %v4502 = vadd.f32 %v4305, %v4501
        %v4503 = vpop.f32.mrf.mxu0
        %v4504 = vpop.f32.mrf.mxu0
        %v4505 = vadd.f32 %v4305, %v4504
        %v4506 = vpop.f32.mrf.mxu0
        %4507 = vmatprep.mubr.bf16.mxu0 0
        %4508 = vmatmul.mubr.bf16.gmra.mxu0 %v4283
        %v4509 = vpop.f32.mrf.mxu0
        %v4510 = vadd.f32 %v4305, %v4509
        %v4511 = vpop.f32.mrf.mxu0
        %v4512 = vpop.f32.mrf.mxu0
        %v4513 = vadd.f32 %v4305, %v4512
        %v4514 = vpop.f32.mrf.mxu0
        %4515 = vdwg.mxu0
        %v4516 = vmax.f32 %v4390, 0.0
        %v4517 = vmax.f32 %v4393, 0.0
        %v4518 = vmax.f32 %v4398, 0.0
        %v4519 = vmax.f32 %v4401, 0.0
        %v4520 = vmax.f32 %v4406, 0.0
        %v4521 = vmax.f32 %v4409, 0.0
        %v4522 = vmax.f32 %v4414, 0.0
        %v4523 = vmax.f32 %v4417, 0.0
        %v4524 = vmax.f32 %v4422, 0.0
        %v4525 = vmax.f32 %v4425, 0.0
        %v4526 = vmax.f32 %v4430, 0.0
        %v4527 = vmax.f32 %v4433, 0.0
        %v4528 = vmax.f32 %v4438, 0.0
        %v4529 = vmax.f32 %v4441, 0.0
        %v4530 = vmax.f32 %v4446, 0.0
        %v4531 = vmax.f32 %v4449, 0.0
        %v4532 = vmax.f32 %v4454, 0.0
        %v4533 = vmax.f32 %v4457, 0.0
        %v4534 = vmax.f32 %v4462, 0.0
        %v4535 = vmax.f32 %v4465, 0.0
        %v4536 = vmax.f32 %v4470, 0.0
        %v4537 = vmax.f32 %v4473, 0.0
        %v4538 = vmax.f32 %v4478, 0.0
        %v4539 = vmax.f32 %v4481, 0.0
        %v4540 = vmax.f32 %v4486, 0.0
        %v4541 = vmax.f32 %v4489, 0.0
        %v4542 = vmax.f32 %v4494, 0.0
        %v4543 = vmax.f32 %v4497, 0.0
        %v4544 = vmax.f32 %v4502, 0.0
        %v4545 = vmax.f32 %v4505, 0.0
        %v4546 = vmax.f32 %v4510, 0.0
        %v4547 = vmax.f32 %v4513, 0.0
        %v4548 = vpack.c.bf16 %v4517, %v4516
        %v4549 = vpack.c.bf16 %v4519, %v4518
        %v4550 = vpack.c.bf16 %v4521, %v4520
        %v4551 = vpack.c.bf16 %v4523, %v4522
        %v4552 = vpack.c.bf16 %v4525, %v4524
        %v4553 = vpack.c.bf16 %v4527, %v4526
        %v4554 = vpack.c.bf16 %v4529, %v4528
        %v4555 = vpack.c.bf16 %v4531, %v4530
        %v4556 = vpack.c.bf16 %v4533, %v4532
        %v4557 = vpack.c.bf16 %v4535, %v4534
        %v4558 = vpack.c.bf16 %v4537, %v4536
        %v4559 = vpack.c.bf16 %v4539, %v4538
        %v4560 = vpack.c.bf16 %v4541, %v4540
        %v4561 = vpack.c.bf16 %v4543, %v4542
        %v4562 = vpack.c.bf16 %v4545, %v4544
        %v4563 = vpack.c.bf16 %v4547, %v4546
        %v4564 = vld [vmem:[#allocation2 + $0x68] sm:$0xc]
        %v4565 = vld [vmem:[#allocation2 + $0x6c] sm:$0xf]
        %v4566 = vld [vmem:[#allocation2 + $0x70] sm:$0xf]
        %v4567 = vld [vmem:[#allocation2 + $0x74] sm:$0xf]
        %v4568 = vld [vmem:[#allocation2 + $0x78] sm:$0xf]
        %v4569 = vld [vmem:[#allocation2 + $0x7c] sm:$0xf]
        %v4570 = vld [vmem:[#allocation2 + $0x80] sm:$0xf]
        %v4571 = vld [vmem:[#allocation2 + $0x84] sm:$0xf]
        %v4572 = vld [vmem:[#allocation2 + $0x88] sm:$0xf]
        %v4573 = vld [vmem:[#allocation2 + $0x8c] sm:$0xf]
        %v4574 = vld [vmem:[#allocation2 + $0x90] sm:$0xf]
        %v4575 = vld [vmem:[#allocation2 + $0x94] sm:$0xf]
        %v4576 = vld [vmem:[#allocation2 + $0x98] sm:$0xf]
        %v4577 = vld [vmem:[#allocation2 + $0x9c] sm:$0xf]
        %v4578 = vld [vmem:[#allocation2 + $0xa0] sm:$0xf]
        %v4579 = vld [vmem:[#allocation2 + $0xa4] sm:$0xf]
        %v4580 = vld [vmem:[#allocation2 + $0xa8] sm:$0xf]
        %v4581 = vld [vmem:[#allocation2 + $0xac] sm:$0xf]
        %v4582 = vld [vmem:[#allocation2 + $0xb0] sm:$0xf]
        %v4583 = vld [vmem:[#allocation2 + $0xb4] sm:$0xf]
        %v4584 = vld [vmem:[#allocation2 + $0xb8] sm:$0xf]
        %v4585 = vld [vmem:[#allocation2 + $0xbc] sm:$0xf]
        %v4586 = vld [vmem:[#allocation2 + $0xc0] sm:$0xf]
        %v4587 = vld [vmem:[#allocation2 + $0xc4] sm:$0xf]
        %v4588 = vld [vmem:[#allocation2 + $0xc8] sm:$0xf]
        %v4589 = vld [vmem:[#allocation2 + $0xcc] sm:$0xf]
        %v4590 = vld [vmem:[#allocation2 + $0xd0] sm:$0xf]
        %v4591 = vld [vmem:[#allocation2 + $0xd4] sm:$0xf]
        %v4592 = vld [vmem:[#allocation2 + $0xd8] sm:$0xf]
        %v4593 = vld [vmem:[#allocation2 + $0xdc] sm:$0xf]
        %v4594 = vld [vmem:[#allocation2 + $0xe0] sm:$0xf]
        %v4595 = vld [vmem:[#allocation2 + $0xe4] sm:$0xf]
        %v4596 = vld [vmem:[#allocation2 + $0xe8] sm:$0x3]
        %vm4597 = vcmp.ge.s32.totalorder %v749, 12
        %vm4598 = vcmp.ge.s32.totalorder %v750, 12
        %vm4599 = vcmp.ge.s32.totalorder %v751, 12
        %vm4600 = vcmp.ge.s32.totalorder %v752, 12
        %vm4601 = vcmp.ge.s32.totalorder %v753, 12
        %vm4602 = vcmp.ge.s32.totalorder %v754, 12
        %vm4603 = vcmp.ge.s32.totalorder %v755, 12
        %vm4604 = vcmp.ge.s32.totalorder %v756, 12
        %vm4605 = vcmp.ge.s32.totalorder %v757, 12
        %vm4606 = vcmp.ge.s32.totalorder %v758, 12
        %vm4607 = vcmp.ge.s32.totalorder %v759, 12
        %vm4608 = vcmp.ge.s32.totalorder %v760, 12
        %vm4609 = vcmp.ge.s32.totalorder %v761, 12
        %vm4610 = vcmp.ge.s32.totalorder %v762, 12
        %vm4611 = vcmp.ge.s32.totalorder %v763, 12
        %vm4612 = vcmp.ge.s32.totalorder %v764, 12
        %vm4613 = vcmp.ge.s32.totalorder %v765, 12
        %vm4614 = vcmp.ge.s32.totalorder %v766, 12
        %vm4615 = vcmp.ge.s32.totalorder %v767, 12
        %vm4616 = vcmp.ge.s32.totalorder %v768, 12
        %vm4617 = vcmp.ge.s32.totalorder %v769, 12
        %vm4618 = vcmp.ge.s32.totalorder %v770, 12
        %vm4619 = vcmp.ge.s32.totalorder %v771, 12
        %vm4620 = vcmp.ge.s32.totalorder %v772, 12
        %vm4621 = vcmp.ge.s32.totalorder %v773, 12
        %vm4622 = vcmp.ge.s32.totalorder %v774, 12
        %vm4623 = vcmp.ge.s32.totalorder %v775, 12
        %vm4624 = vcmp.ge.s32.totalorder %v776, 12
        %vm4625 = vcmp.ge.s32.totalorder %v777, 12
        %vm4626 = vcmp.ge.s32.totalorder %v778, 12
        %vm4627 = vcmp.ge.s32.totalorder %v779, 12
        %vm4628 = vcmp.ge.s32.totalorder %v780, 12
        %v4629 = vsel %vm4597, 1, 0
        %v4630 = vsel %vm4598, 1, 0
        %v4631 = vsel %vm4599, 1, 0
        %v4632 = vsel %vm4600, 1, 0
        %v4633 = vsel %vm4601, 1, 0
        %v4634 = vsel %vm4602, 1, 0
        %v4635 = vsel %vm4603, 1, 0
        %v4636 = vsel %vm4604, 1, 0
        %v4637 = vsel %vm4605, 1, 0
        %v4638 = vsel %vm4606, 1, 0
        %v4639 = vsel %vm4607, 1, 0
        %v4640 = vsel %vm4608, 1, 0
        %v4641 = vsel %vm4609, 1, 0
        %v4642 = vsel %vm4610, 1, 0
        %v4643 = vsel %vm4611, 1, 0
        %v4644 = vsel %vm4612, 1, 0
        %v4645 = vsel %vm4613, 1, 0
        %v4646 = vsel %vm4614, 1, 0
        %v4647 = vsel %vm4615, 1, 0
        %v4648 = vsel %vm4616, 1, 0
        %v4649 = vsel %vm4617, 1, 0
        %v4650 = vsel %vm4618, 1, 0
        %v4651 = vsel %vm4619, 1, 0
        %v4652 = vsel %vm4620, 1, 0
        %v4653 = vsel %vm4621, 1, 0
        %v4654 = vsel %vm4622, 1, 0
        %v4655 = vsel %vm4623, 1, 0
        %v4656 = vsel %vm4624, 1, 0
        %v4657 = vsel %vm4625, 1, 0
        %v4658 = vsel %vm4626, 1, 0
        %v4659 = vsel %vm4627, 1, 0
        %v4660 = vsel %vm4628, 1, 0
        %vm4661 = vcmp.eq.s32.totalorder %v4629, 1
        %vm4662 = vcmp.eq.s32.totalorder %v4630, 1
        %vm4663 = vcmp.eq.s32.totalorder %v4631, 1
        %vm4664 = vcmp.eq.s32.totalorder %v4632, 1
        %vm4665 = vcmp.eq.s32.totalorder %v4633, 1
        %vm4666 = vcmp.eq.s32.totalorder %v4634, 1
        %vm4667 = vcmp.eq.s32.totalorder %v4635, 1
        %vm4668 = vcmp.eq.s32.totalorder %v4636, 1
        %vm4669 = vcmp.eq.s32.totalorder %v4637, 1
        %vm4670 = vcmp.eq.s32.totalorder %v4638, 1
        %vm4671 = vcmp.eq.s32.totalorder %v4639, 1
        %vm4672 = vcmp.eq.s32.totalorder %v4640, 1
        %vm4673 = vcmp.eq.s32.totalorder %v4641, 1
        %vm4674 = vcmp.eq.s32.totalorder %v4642, 1
        %vm4675 = vcmp.eq.s32.totalorder %v4643, 1
        %vm4676 = vcmp.eq.s32.totalorder %v4644, 1
        %vm4677 = vcmp.eq.s32.totalorder %v4645, 1
        %vm4678 = vcmp.eq.s32.totalorder %v4646, 1
        %vm4679 = vcmp.eq.s32.totalorder %v4647, 1
        %vm4680 = vcmp.eq.s32.totalorder %v4648, 1
        %vm4681 = vcmp.eq.s32.totalorder %v4649, 1
        %vm4682 = vcmp.eq.s32.totalorder %v4650, 1
        %vm4683 = vcmp.eq.s32.totalorder %v4651, 1
        %vm4684 = vcmp.eq.s32.totalorder %v4652, 1
        %vm4685 = vcmp.eq.s32.totalorder %v4653, 1
        %vm4686 = vcmp.eq.s32.totalorder %v4654, 1
        %vm4687 = vcmp.eq.s32.totalorder %v4655, 1
        %vm4688 = vcmp.eq.s32.totalorder %v4656, 1
        %vm4689 = vcmp.eq.s32.totalorder %v4657, 1
        %vm4690 = vcmp.eq.s32.totalorder %v4658, 1
        %vm4691 = vcmp.eq.s32.totalorder %v4659, 1
        %vm4692 = vcmp.eq.s32.totalorder %v4660, 1
        %vm4693 = vmpackc.low %vm4661, %vm4661
        %vm4694 = vmpackc.low %vm4662, %vm4662
        %vm4695 = vmpackc.low %vm4663, %vm4663
        %vm4696 = vmpackc.low %vm4664, %vm4664
        %vm4697 = vmpackc.low %vm4665, %vm4665
        %vm4698 = vmpackc.low %vm4666, %vm4666
        %vm4699 = vmpackc.low %vm4667, %vm4667
        %vm4700 = vmpackc.low %vm4668, %vm4668
        %vm4701 = vmpackc.low %vm4669, %vm4669
        %vm4702 = vmpackc.low %vm4670, %vm4670
        %vm4703 = vmpackc.low %vm4671, %vm4671
        %vm4704 = vmpackc.low %vm4672, %vm4672
        %vm4705 = vmpackc.low %vm4673, %vm4673
        %vm4706 = vmpackc.low %vm4674, %vm4674
        %vm4707 = vmpackc.low %vm4675, %vm4675
        %vm4708 = vmpackc.low %vm4676, %vm4676
        %vm4709 = vmpackc.low %vm4677, %vm4677
        %vm4710 = vmpackc.low %vm4678, %vm4678
        %vm4711 = vmpackc.low %vm4679, %vm4679
        %vm4712 = vmpackc.low %vm4680, %vm4680
        %vm4713 = vmpackc.low %vm4681, %vm4681
        %vm4714 = vmpackc.low %vm4682, %vm4682
        %vm4715 = vmpackc.low %vm4683, %vm4683
        %vm4716 = vmpackc.low %vm4684, %vm4684
        %vm4717 = vmpackc.low %vm4685, %vm4685
        %vm4718 = vmpackc.low %vm4686, %vm4686
        %vm4719 = vmpackc.low %vm4687, %vm4687
        %vm4720 = vmpackc.low %vm4688, %vm4688
        %vm4721 = vmpackc.low %vm4689, %vm4689
        %vm4722 = vmpackc.low %vm4690, %vm4690
        %vm4723 = vmpackc.low %vm4691, %vm4691
        %vm4724 = vmpackc.low %vm4692, %vm4692
        %v4725 = vsel %vm4693, 65537, 0
        %v4726 = vsel %vm4694, 65537, 0
        %v4727 = vsel %vm4695, 65537, 0
        %v4728 = vsel %vm4696, 65537, 0
        %v4729 = vsel %vm4697, 65537, 0
        %v4730 = vsel %vm4698, 65537, 0
        %v4731 = vsel %vm4699, 65537, 0
        %v4732 = vsel %vm4700, 65537, 0
        %v4733 = vsel %vm4701, 65537, 0
        %v4734 = vsel %vm4702, 65537, 0
        %v4735 = vsel %vm4703, 65537, 0
        %v4736 = vsel %vm4704, 65537, 0
        %v4737 = vsel %vm4705, 65537, 0
        %v4738 = vsel %vm4706, 65537, 0
        %v4739 = vsel %vm4707, 65537, 0
        %v4740 = vsel %vm4708, 65537, 0
        %v4741 = vsel %vm4709, 65537, 0
        %v4742 = vsel %vm4710, 65537, 0
        %v4743 = vsel %vm4711, 65537, 0
        %v4744 = vsel %vm4712, 65537, 0
        %v4745 = vsel %vm4713, 65537, 0
        %v4746 = vsel %vm4714, 65537, 0
        %v4747 = vsel %vm4715, 65537, 0
        %v4748 = vsel %vm4716, 65537, 0
        %v4749 = vsel %vm4717, 65537, 0
        %v4750 = vsel %vm4718, 65537, 0
        %v4751 = vsel %vm4719, 65537, 0
        %v4752 = vsel %vm4720, 65537, 0
        %v4753 = vsel %vm4721, 65537, 0
        %v4754 = vsel %vm4722, 65537, 0
        %v4755 = vsel %vm4723, 65537, 0
        %v4756 = vsel %vm4724, 65537, 0
        %vm4757 = vcmask 1041408
        %vm4758 = vcmask 1045508
        %vm4759 = vmor %vm4757, %vm4758
        %v4760 = vrot.slane %v4725, 6
        %v4761 = vrot.slane %v4760, 4
        %v4762 = vrot.slane %v4726, 6
        %v4763 = vsel %vm4759, %v4761, %v4762
        %v4764 = vrot.slane %v4762, 4
        %v4765 = vrot.slane %v4727, 6
        %v4766 = vsel %vm4759, %v4764, %v4765
        %v4767 = vrot.slane %v4765, 4
        %v4768 = vrot.slane %v4728, 6
        %v4769 = vsel %vm4759, %v4767, %v4768
        %v4770 = vrot.slane %v4768, 4
        %v4771 = vrot.slane %v4729, 6
        %v4772 = vsel %vm4759, %v4770, %v4771
        %v4773 = vrot.slane %v4771, 4
        %v4774 = vrot.slane %v4730, 6
        %v4775 = vsel %vm4759, %v4773, %v4774
        %v4776 = vrot.slane %v4774, 4
        %v4777 = vrot.slane %v4731, 6
        %v4778 = vsel %vm4759, %v4776, %v4777
        %v4779 = vrot.slane %v4777, 4
        %v4780 = vrot.slane %v4732, 6
        %v4781 = vsel %vm4759, %v4779, %v4780
        %v4782 = vrot.slane %v4780, 4
        %v4783 = vrot.slane %v4733, 6
        %v4784 = vsel %vm4759, %v4782, %v4783
        %v4785 = vrot.slane %v4783, 4
        %v4786 = vrot.slane %v4734, 6
        %v4787 = vsel %vm4759, %v4785, %v4786
        %v4788 = vrot.slane %v4786, 4
        %v4789 = vrot.slane %v4735, 6
        %v4790 = vsel %vm4759, %v4788, %v4789
        %v4791 = vrot.slane %v4789, 4
        %v4792 = vrot.slane %v4736, 6
        %v4793 = vsel %vm4759, %v4791, %v4792
        %v4794 = vrot.slane %v4792, 4
        %v4795 = vrot.slane %v4737, 6
        %v4796 = vsel %vm4759, %v4794, %v4795
        %v4797 = vrot.slane %v4795, 4
        %v4798 = vrot.slane %v4738, 6
        %v4799 = vsel %vm4759, %v4797, %v4798
        %v4800 = vrot.slane %v4798, 4
        %v4801 = vrot.slane %v4739, 6
        %v4802 = vsel %vm4759, %v4800, %v4801
        %v4803 = vrot.slane %v4801, 4
        %v4804 = vrot.slane %v4740, 6
        %v4805 = vsel %vm4759, %v4803, %v4804
        %v4806 = vrot.slane %v4804, 4
        %v4807 = vrot.slane %v4741, 6
        %v4808 = vsel %vm4759, %v4806, %v4807
        %v4809 = vrot.slane %v4807, 4
        %v4810 = vrot.slane %v4742, 6
        %v4811 = vsel %vm4759, %v4809, %v4810
        %v4812 = vrot.slane %v4810, 4
        %v4813 = vrot.slane %v4743, 6
        %v4814 = vsel %vm4759, %v4812, %v4813
        %v4815 = vrot.slane %v4813, 4
        %v4816 = vrot.slane %v4744, 6
        %v4817 = vsel %vm4759, %v4815, %v4816
        %v4818 = vrot.slane %v4816, 4
        %v4819 = vrot.slane %v4745, 6
        %v4820 = vsel %vm4759, %v4818, %v4819
        %v4821 = vrot.slane %v4819, 4
        %v4822 = vrot.slane %v4746, 6
        %v4823 = vsel %vm4759, %v4821, %v4822
        %v4824 = vrot.slane %v4822, 4
        %v4825 = vrot.slane %v4747, 6
        %v4826 = vsel %vm4759, %v4824, %v4825
        %v4827 = vrot.slane %v4825, 4
        %v4828 = vrot.slane %v4748, 6
        %v4829 = vsel %vm4759, %v4827, %v4828
        %v4830 = vrot.slane %v4828, 4
        %v4831 = vrot.slane %v4749, 6
        %v4832 = vsel %vm4759, %v4830, %v4831
        %v4833 = vrot.slane %v4831, 4
        %v4834 = vrot.slane %v4750, 6
        %v4835 = vsel %vm4759, %v4833, %v4834
        %v4836 = vrot.slane %v4834, 4
        %v4837 = vrot.slane %v4751, 6
        %v4838 = vsel %vm4759, %v4836, %v4837
        %v4839 = vrot.slane %v4837, 4
        %v4840 = vrot.slane %v4752, 6
        %v4841 = vsel %vm4759, %v4839, %v4840
        %v4842 = vrot.slane %v4840, 4
        %v4843 = vrot.slane %v4753, 6
        %v4844 = vsel %vm4759, %v4842, %v4843
        %v4845 = vrot.slane %v4843, 4
        %v4846 = vrot.slane %v4754, 6
        %v4847 = vsel %vm4759, %v4845, %v4846
        %v4848 = vrot.slane %v4846, 4
        %v4849 = vrot.slane %v4755, 6
        %v4850 = vsel %vm4759, %v4848, %v4849
        %v4851 = vrot.slane %v4849, 4
        %v4852 = vrot.slane %v4756, 6
        %v4853 = vsel %vm4759, %v4851, %v4852
        %v4854 = vrot.slane %v4852, 4
        %vm4855 = vcmp.ne.s16.totalorder %v4760, 0
        %vm4856 = vcmp.ne.s16.totalorder %v4763, 0
        %vm4857 = vcmp.ne.s16.totalorder %v4766, 0
        %vm4858 = vcmp.ne.s16.totalorder %v4769, 0
        %vm4859 = vcmp.ne.s16.totalorder %v4772, 0
        %vm4860 = vcmp.ne.s16.totalorder %v4775, 0
        %vm4861 = vcmp.ne.s16.totalorder %v4778, 0
        %vm4862 = vcmp.ne.s16.totalorder %v4781, 0
        %vm4863 = vcmp.ne.s16.totalorder %v4784, 0
        %vm4864 = vcmp.ne.s16.totalorder %v4787, 0
        %vm4865 = vcmp.ne.s16.totalorder %v4790, 0
        %vm4866 = vcmp.ne.s16.totalorder %v4793, 0
        %vm4867 = vcmp.ne.s16.totalorder %v4796, 0
        %vm4868 = vcmp.ne.s16.totalorder %v4799, 0
        %vm4869 = vcmp.ne.s16.totalorder %v4802, 0
        %vm4870 = vcmp.ne.s16.totalorder %v4805, 0
        %vm4871 = vcmp.ne.s16.totalorder %v4808, 0
        %vm4872 = vcmp.ne.s16.totalorder %v4811, 0
        %vm4873 = vcmp.ne.s16.totalorder %v4814, 0
        %vm4874 = vcmp.ne.s16.totalorder %v4817, 0
        %vm4875 = vcmp.ne.s16.totalorder %v4820, 0
        %vm4876 = vcmp.ne.s16.totalorder %v4823, 0
        %vm4877 = vcmp.ne.s16.totalorder %v4826, 0
        %vm4878 = vcmp.ne.s16.totalorder %v4829, 0
        %vm4879 = vcmp.ne.s16.totalorder %v4832, 0
        %vm4880 = vcmp.ne.s16.totalorder %v4835, 0
        %vm4881 = vcmp.ne.s16.totalorder %v4838, 0
        %vm4882 = vcmp.ne.s16.totalorder %v4841, 0
        %vm4883 = vcmp.ne.s16.totalorder %v4844, 0
        %vm4884 = vcmp.ne.s16.totalorder %v4847, 0
        %vm4885 = vcmp.ne.s16.totalorder %v4850, 0
        %vm4886 = vcmp.ne.s16.totalorder %v4853, 0
        %vm4887 = vcmp.ne.s16.totalorder %v4854, 0
        %v4888 = vsel %vm4855, %v4564, 0
        %v4889 = vsel %vm4856, %v4565, 0
        %v4890 = vsel %vm4857, %v4566, 0
        %v4891 = vsel %vm4858, %v4567, 0
        %v4892 = vsel %vm4859, %v4568, 0
        %v4893 = vsel %vm4860, %v4569, 0
        %v4894 = vsel %vm4861, %v4570, 0
        %v4895 = vsel %vm4862, %v4571, 0
        %v4896 = vsel %vm4863, %v4572, 0
        %v4897 = vsel %vm4864, %v4573, 0
        %v4898 = vsel %vm4865, %v4574, 0
        %v4899 = vsel %vm4866, %v4575, 0
        %v4900 = vsel %vm4867, %v4576, 0
        %v4901 = vsel %vm4868, %v4577, 0
        %v4902 = vsel %vm4869, %v4578, 0
        %v4903 = vsel %vm4870, %v4579, 0
        %v4904 = vsel %vm4871, %v4580, 0
        %v4905 = vsel %vm4872, %v4581, 0
        %v4906 = vsel %vm4873, %v4582, 0
        %v4907 = vsel %vm4874, %v4583, 0
        %v4908 = vsel %vm4875, %v4584, 0
        %v4909 = vsel %vm4876, %v4585, 0
        %v4910 = vsel %vm4877, %v4586, 0
        %v4911 = vsel %vm4878, %v4587, 0
        %v4912 = vsel %vm4879, %v4588, 0
        %v4913 = vsel %vm4880, %v4589, 0
        %v4914 = vsel %vm4881, %v4590, 0
        %v4915 = vsel %vm4882, %v4591, 0
        %v4916 = vsel %vm4883, %v4592, 0
        %v4917 = vsel %vm4884, %v4593, 0
        %v4918 = vsel %vm4885, %v4594, 0
        %v4919 = vsel %vm4886, %v4595, 0
        %v4920 = vsel %vm4887, %v4596, 0
        %v4921 = vld [vmem:[#allocation2 + $0xe8] sm:$0xf]
        %v4922 = vld [vmem:[#allocation2 + $0xec] sm:$0xf]
        %v4923 = vld [vmem:[#allocation2 + $0x74] sm:$0xc]
        %v4924 = vld [vmem:[#allocation2 + $0xf0] sm:$0xf]
        %v4925 = vld [vmem:[#allocation2 + $0xf4] sm:$0x3]
        %vm4926 = vcmp.lt.s32.totalorder %v749, 4
        %vm4927 = vcmp.lt.s32.totalorder %v750, 4
        %vm4928 = vcmp.lt.s32.totalorder %v751, 4
        %vm4929 = vcmp.lt.s32.totalorder %v752, 4
        %vm4930 = vcmp.lt.s32.totalorder %v753, 4
        %vm4931 = vcmp.lt.s32.totalorder %v754, 4
        %vm4932 = vcmp.lt.s32.totalorder %v755, 4
        %vm4933 = vcmp.lt.s32.totalorder %v756, 4
        %vm4934 = vcmp.lt.s32.totalorder %v757, 4
        %vm4935 = vcmp.lt.s32.totalorder %v758, 4
        %vm4936 = vcmp.lt.s32.totalorder %v759, 4
        %vm4937 = vcmp.lt.s32.totalorder %v760, 4
        %vm4938 = vcmp.lt.s32.totalorder %v761, 4
        %vm4939 = vcmp.lt.s32.totalorder %v762, 4
        %vm4940 = vcmp.lt.s32.totalorder %v763, 4
        %vm4941 = vcmp.lt.s32.totalorder %v764, 4
        %vm4942 = vcmp.lt.s32.totalorder %v765, 4
        %vm4943 = vcmp.lt.s32.totalorder %v766, 4
        %vm4944 = vcmp.lt.s32.totalorder %v767, 4
        %vm4945 = vcmp.lt.s32.totalorder %v768, 4
        %vm4946 = vcmp.lt.s32.totalorder %v769, 4
        %vm4947 = vcmp.lt.s32.totalorder %v770, 4
        %vm4948 = vcmp.lt.s32.totalorder %v771, 4
        %vm4949 = vcmp.lt.s32.totalorder %v772, 4
        %vm4950 = vcmp.lt.s32.totalorder %v773, 4
        %vm4951 = vcmp.lt.s32.totalorder %v774, 4
        %vm4952 = vcmp.lt.s32.totalorder %v775, 4
        %vm4953 = vcmp.lt.s32.totalorder %v776, 4
        %vm4954 = vcmp.lt.s32.totalorder %v777, 4
        %vm4955 = vcmp.lt.s32.totalorder %v778, 4
        %vm4956 = vcmp.lt.s32.totalorder %v779, 4
        %vm4957 = vcmp.lt.s32.totalorder %v780, 4
        %v4958 = vsel %vm4926, 1, 0
        %v4959 = vsel %vm4927, 1, 0
        %v4960 = vsel %vm4928, 1, 0
        %v4961 = vsel %vm4929, 1, 0
        %v4962 = vsel %vm4930, 1, 0
        %v4963 = vsel %vm4931, 1, 0
        %v4964 = vsel %vm4932, 1, 0
        %v4965 = vsel %vm4933, 1, 0
        %v4966 = vsel %vm4934, 1, 0
        %v4967 = vsel %vm4935, 1, 0
        %v4968 = vsel %vm4936, 1, 0
        %v4969 = vsel %vm4937, 1, 0
        %v4970 = vsel %vm4938, 1, 0
        %v4971 = vsel %vm4939, 1, 0
        %v4972 = vsel %vm4940, 1, 0
        %v4973 = vsel %vm4941, 1, 0
        %v4974 = vsel %vm4942, 1, 0
        %v4975 = vsel %vm4943, 1, 0
        %v4976 = vsel %vm4944, 1, 0
        %v4977 = vsel %vm4945, 1, 0
        %v4978 = vsel %vm4946, 1, 0
        %v4979 = vsel %vm4947, 1, 0
        %v4980 = vsel %vm4948, 1, 0
        %v4981 = vsel %vm4949, 1, 0
        %v4982 = vsel %vm4950, 1, 0
        %v4983 = vsel %vm4951, 1, 0
        %v4984 = vsel %vm4952, 1, 0
        %v4985 = vsel %vm4953, 1, 0
        %v4986 = vsel %vm4954, 1, 0
        %v4987 = vsel %vm4955, 1, 0
        %v4988 = vsel %vm4956, 1, 0
        %v4989 = vsel %vm4957, 1, 0
        %vm4990 = vcmp.eq.s32.totalorder %v4958, 1
        %vm4991 = vcmp.eq.s32.totalorder %v4959, 1
        %vm4992 = vcmp.eq.s32.totalorder %v4960, 1
        %vm4993 = vcmp.eq.s32.totalorder %v4961, 1
        %vm4994 = vcmp.eq.s32.totalorder %v4962, 1
        %vm4995 = vcmp.eq.s32.totalorder %v4963, 1
        %vm4996 = vcmp.eq.s32.totalorder %v4964, 1
        %vm4997 = vcmp.eq.s32.totalorder %v4965, 1
        %vm4998 = vcmp.eq.s32.totalorder %v4966, 1
        %vm4999 = vcmp.eq.s32.totalorder %v4967, 1
        %vm5000 = vcmp.eq.s32.totalorder %v4968, 1
        %vm5001 = vcmp.eq.s32.totalorder %v4969, 1
        %vm5002 = vcmp.eq.s32.totalorder %v4970, 1
        %vm5003 = vcmp.eq.s32.totalorder %v4971, 1
        %vm5004 = vcmp.eq.s32.totalorder %v4972, 1
        %vm5005 = vcmp.eq.s32.totalorder %v4973, 1
        %vm5006 = vcmp.eq.s32.totalorder %v4974, 1
        %vm5007 = vcmp.eq.s32.totalorder %v4975, 1
        %vm5008 = vcmp.eq.s32.totalorder %v4976, 1
        %vm5009 = vcmp.eq.s32.totalorder %v4977, 1
        %vm5010 = vcmp.eq.s32.totalorder %v4978, 1
        %vm5011 = vcmp.eq.s32.totalorder %v4979, 1
        %vm5012 = vcmp.eq.s32.totalorder %v4980, 1
        %vm5013 = vcmp.eq.s32.totalorder %v4981, 1
        %vm5014 = vcmp.eq.s32.totalorder %v4982, 1
        %vm5015 = vcmp.eq.s32.totalorder %v4983, 1
        %vm5016 = vcmp.eq.s32.totalorder %v4984, 1
        %vm5017 = vcmp.eq.s32.totalorder %v4985, 1
        %vm5018 = vcmp.eq.s32.totalorder %v4986, 1
        %vm5019 = vcmp.eq.s32.totalorder %v4987, 1
        %vm5020 = vcmp.eq.s32.totalorder %v4988, 1
        %vm5021 = vcmp.eq.s32.totalorder %v4989, 1
        %vm5022 = vmpackc.low %vm4990, %vm4990
        %vm5023 = vmpackc.low %vm4991, %vm4991
        %vm5024 = vmpackc.low %vm4992, %vm4992
        %vm5025 = vmpackc.low %vm4993, %vm4993
        %vm5026 = vmpackc.low %vm4994, %vm4994
        %vm5027 = vmpackc.low %vm4995, %vm4995
        %vm5028 = vmpackc.low %vm4996, %vm4996
        %vm5029 = vmpackc.low %vm4997, %vm4997
        %vm5030 = vmpackc.low %vm4998, %vm4998
        %vm5031 = vmpackc.low %vm4999, %vm4999
        %vm5032 = vmpackc.low %vm5000, %vm5000
        %vm5033 = vmpackc.low %vm5001, %vm5001
        %vm5034 = vmpackc.low %vm5002, %vm5002
        %vm5035 = vmpackc.low %vm5003, %vm5003
        %vm5036 = vmpackc.low %vm5004, %vm5004
        %vm5037 = vmpackc.low %vm5005, %vm5005
        %vm5038 = vmpackc.low %vm5006, %vm5006
        %vm5039 = vmpackc.low %vm5007, %vm5007
        %vm5040 = vmpackc.low %vm5008, %vm5008
        %vm5041 = vmpackc.low %vm5009, %vm5009
        %vm5042 = vmpackc.low %vm5010, %vm5010
        %vm5043 = vmpackc.low %vm5011, %vm5011
        %vm5044 = vmpackc.low %vm5012, %vm5012
        %vm5045 = vmpackc.low %vm5013, %vm5013
        %vm5046 = vmpackc.low %vm5014, %vm5014
        %vm5047 = vmpackc.low %vm5015, %vm5015
        %vm5048 = vmpackc.low %vm5016, %vm5016
        %vm5049 = vmpackc.low %vm5017, %vm5017
        %vm5050 = vmpackc.low %vm5018, %vm5018
        %vm5051 = vmpackc.low %vm5019, %vm5019
        %vm5052 = vmpackc.low %vm5020, %vm5020
        %vm5053 = vmpackc.low %vm5021, %vm5021
        %v5054 = vsel %vm5022, 65537, 0
        %v5055 = vsel %vm5023, 65537, 0
        %v5056 = vsel %vm5024, 65537, 0
        %v5057 = vsel %vm5025, 65537, 0
        %v5058 = vsel %vm5026, 65537, 0
        %v5059 = vsel %vm5027, 65537, 0
        %v5060 = vsel %vm5028, 65537, 0
        %v5061 = vsel %vm5029, 65537, 0
        %v5062 = vsel %vm5030, 65537, 0
        %v5063 = vsel %vm5031, 65537, 0
        %v5064 = vsel %vm5032, 65537, 0
        %v5065 = vsel %vm5033, 65537, 0
        %v5066 = vsel %vm5034, 65537, 0
        %v5067 = vsel %vm5035, 65537, 0
        %v5068 = vsel %vm5036, 65537, 0
        %v5069 = vsel %vm5037, 65537, 0
        %v5070 = vsel %vm5038, 65537, 0
        %v5071 = vsel %vm5039, 65537, 0
        %v5072 = vsel %vm5040, 65537, 0
        %v5073 = vsel %vm5041, 65537, 0
        %v5074 = vsel %vm5042, 65537, 0
        %v5075 = vsel %vm5043, 65537, 0
        %v5076 = vsel %vm5044, 65537, 0
        %v5077 = vsel %vm5045, 65537, 0
        %v5078 = vsel %vm5046, 65537, 0
        %v5079 = vsel %vm5047, 65537, 0
        %v5080 = vsel %vm5048, 65537, 0
        %v5081 = vsel %vm5049, 65537, 0
        %v5082 = vsel %vm5050, 65537, 0
        %v5083 = vsel %vm5051, 65537, 0
        %v5084 = vsel %vm5052, 65537, 0
        %v5085 = vsel %vm5053, 65537, 0
        %v5086 = vrot.slane %v5054, 6
        %v5087 = vrot.slane %v5086, 4
        %v5088 = vrot.slane %v5055, 6
        %v5089 = vsel %vm4759, %v5087, %v5088
        %v5090 = vrot.slane %v5088, 4
        %v5091 = vrot.slane %v5056, 6
        %v5092 = vsel %vm4759, %v5090, %v5091
        %v5093 = vrot.slane %v5091, 4
        %v5094 = vrot.slane %v5057, 6
        %v5095 = vsel %vm4759, %v5093, %v5094
        %v5096 = vrot.slane %v5094, 4
        %v5097 = vrot.slane %v5058, 6
        %v5098 = vsel %vm4759, %v5096, %v5097
        %v5099 = vrot.slane %v5097, 4
        %v5100 = vrot.slane %v5059, 6
        %v5101 = vsel %vm4759, %v5099, %v5100
        %v5102 = vrot.slane %v5100, 4
        %v5103 = vrot.slane %v5060, 6
        %v5104 = vsel %vm4759, %v5102, %v5103
        %v5105 = vrot.slane %v5103, 4
        %v5106 = vrot.slane %v5061, 6
        %v5107 = vsel %vm4759, %v5105, %v5106
        %v5108 = vrot.slane %v5106, 4
        %v5109 = vrot.slane %v5062, 6
        %v5110 = vsel %vm4759, %v5108, %v5109
        %v5111 = vrot.slane %v5109, 4
        %v5112 = vrot.slane %v5063, 6
        %v5113 = vsel %vm4759, %v5111, %v5112
        %v5114 = vrot.slane %v5112, 4
        %v5115 = vrot.slane %v5064, 6
        %v5116 = vsel %vm4759, %v5114, %v5115
        %v5117 = vrot.slane %v5115, 4
        %v5118 = vrot.slane %v5065, 6
        %v5119 = vsel %vm4759, %v5117, %v5118
        %v5120 = vrot.slane %v5118, 4
        %v5121 = vrot.slane %v5066, 6
        %v5122 = vsel %vm4759, %v5120, %v5121
        %v5123 = vrot.slane %v5121, 4
        %v5124 = vrot.slane %v5067, 6
        %v5125 = vsel %vm4759, %v5123, %v5124
        %v5126 = vrot.slane %v5124, 4
        %v5127 = vrot.slane %v5068, 6
        %v5128 = vsel %vm4759, %v5126, %v5127
        %v5129 = vrot.slane %v5127, 4
        %v5130 = vrot.slane %v5069, 6
        %v5131 = vsel %vm4759, %v5129, %v5130
        %v5132 = vrot.slane %v5130, 4
        %v5133 = vrot.slane %v5070, 6
        %v5134 = vsel %vm4759, %v5132, %v5133
        %v5135 = vrot.slane %v5133, 4
        %v5136 = vrot.slane %v5071, 6
        %v5137 = vsel %vm4759, %v5135, %v5136
        %v5138 = vrot.slane %v5136, 4
        %v5139 = vrot.slane %v5072, 6
        %v5140 = vsel %vm4759, %v5138, %v5139
        %v5141 = vrot.slane %v5139, 4
        %v5142 = vrot.slane %v5073, 6
        %v5143 = vsel %vm4759, %v5141, %v5142
        %v5144 = vrot.slane %v5142, 4
        %v5145 = vrot.slane %v5074, 6
        %v5146 = vsel %vm4759, %v5144, %v5145
        %v5147 = vrot.slane %v5145, 4
        %v5148 = vrot.slane %v5075, 6
        %v5149 = vsel %vm4759, %v5147, %v5148
        %v5150 = vrot.slane %v5148, 4
        %v5151 = vrot.slane %v5076, 6
        %v5152 = vsel %vm4759, %v5150, %v5151
        %v5153 = vrot.slane %v5151, 4
        %v5154 = vrot.slane %v5077, 6
        %v5155 = vsel %vm4759, %v5153, %v5154
        %v5156 = vrot.slane %v5154, 4
        %v5157 = vrot.slane %v5078, 6
        %v5158 = vsel %vm4759, %v5156, %v5157
        %v5159 = vrot.slane %v5157, 4
        %v5160 = vrot.slane %v5079, 6
        %v5161 = vsel %vm4759, %v5159, %v5160
        %v5162 = vrot.slane %v5160, 4
        %v5163 = vrot.slane %v5080, 6
        %v5164 = vsel %vm4759, %v5162, %v5163
        %v5165 = vrot.slane %v5163, 4
        %v5166 = vrot.slane %v5081, 6
        %v5167 = vsel %vm4759, %v5165, %v5166
        %v5168 = vrot.slane %v5166, 4
        %v5169 = vrot.slane %v5082, 6
        %v5170 = vsel %vm4759, %v5168, %v5169
        %v5171 = vrot.slane %v5169, 4
        %v5172 = vrot.slane %v5083, 6
        %v5173 = vsel %vm4759, %v5171, %v5172
        %v5174 = vrot.slane %v5172, 4
        %v5175 = vrot.slane %v5084, 6
        %v5176 = vsel %vm4759, %v5174, %v5175
        %v5177 = vrot.slane %v5175, 4
        %v5178 = vrot.slane %v5085, 6
        %v5179 = vsel %vm4759, %v5177, %v5178
        %v5180 = vrot.slane %v5178, 4
        %vm5181 = vcmp.ne.s16.totalorder %v5086, 0
        %vm5182 = vcmp.ne.s16.totalorder %v5089, 0
        %vm5183 = vcmp.ne.s16.totalorder %v5092, 0
        %vm5184 = vcmp.ne.s16.totalorder %v5095, 0
        %vm5185 = vcmp.ne.s16.totalorder %v5098, 0
        %vm5186 = vcmp.ne.s16.totalorder %v5101, 0
        %vm5187 = vcmp.ne.s16.totalorder %v5104, 0
        %vm5188 = vcmp.ne.s16.totalorder %v5107, 0
        %vm5189 = vcmp.ne.s16.totalorder %v5110, 0
        %vm5190 = vcmp.ne.s16.totalorder %v5113, 0
        %vm5191 = vcmp.ne.s16.totalorder %v5116, 0
        %vm5192 = vcmp.ne.s16.totalorder %v5119, 0
        %vm5193 = vcmp.ne.s16.totalorder %v5122, 0
        %vm5194 = vcmp.ne.s16.totalorder %v5125, 0
        %vm5195 = vcmp.ne.s16.totalorder %v5128, 0
        %vm5196 = vcmp.ne.s16.totalorder %v5131, 0
        %vm5197 = vcmp.ne.s16.totalorder %v5134, 0
        %vm5198 = vcmp.ne.s16.totalorder %v5137, 0
        %vm5199 = vcmp.ne.s16.totalorder %v5140, 0
        %vm5200 = vcmp.ne.s16.totalorder %v5143, 0
        %vm5201 = vcmp.ne.s16.totalorder %v5146, 0
        %vm5202 = vcmp.ne.s16.totalorder %v5149, 0
        %vm5203 = vcmp.ne.s16.totalorder %v5152, 0
        %vm5204 = vcmp.ne.s16.totalorder %v5155, 0
        %vm5205 = vcmp.ne.s16.totalorder %v5158, 0
        %vm5206 = vcmp.ne.s16.totalorder %v5161, 0
        %vm5207 = vcmp.ne.s16.totalorder %v5164, 0
        %vm5208 = vcmp.ne.s16.totalorder %v5167, 0
        %vm5209 = vcmp.ne.s16.totalorder %v5170, 0
        %vm5210 = vcmp.ne.s16.totalorder %v5173, 0
        %vm5211 = vcmp.ne.s16.totalorder %v5176, 0
        %vm5212 = vcmp.ne.s16.totalorder %v5179, 0
        %vm5213 = vcmp.ne.s16.totalorder %v5180, 0
        %v5214 = vsel %vm5181, %v4923, 0
        %v5215 = vsel %vm5182, %v4568, 0
        %v5216 = vsel %vm5183, %v4569, 0
        %v5217 = vsel %vm5184, %v4570, 0
        %v5218 = vsel %vm5185, %v4571, 0
        %v5219 = vsel %vm5186, %v4572, 0
        %v5220 = vsel %vm5187, %v4573, 0
        %v5221 = vsel %vm5188, %v4574, 0
        %v5222 = vsel %vm5189, %v4575, 0
        %v5223 = vsel %vm5190, %v4576, 0
        %v5224 = vsel %vm5191, %v4577, 0
        %v5225 = vsel %vm5192, %v4578, 0
        %v5226 = vsel %vm5193, %v4579, 0
        %v5227 = vsel %vm5194, %v4580, 0
        %v5228 = vsel %vm5195, %v4581, 0
        %v5229 = vsel %vm5196, %v4582, 0
        %v5230 = vsel %vm5197, %v4583, 0
        %v5231 = vsel %vm5198, %v4584, 0
        %v5232 = vsel %vm5199, %v4585, 0
        %v5233 = vsel %vm5200, %v4586, 0
        %v5234 = vsel %vm5201, %v4587, 0
        %v5235 = vsel %vm5202, %v4588, 0
        %v5236 = vsel %vm5203, %v4589, 0
        %v5237 = vsel %vm5204, %v4590, 0
        %v5238 = vsel %vm5205, %v4591, 0
        %v5239 = vsel %vm5206, %v4592, 0
        %v5240 = vsel %vm5207, %v4593, 0
        %v5241 = vsel %vm5208, %v4594, 0
        %v5242 = vsel %vm5209, %v4595, 0
        %v5243 = vsel %vm5210, %v4921, 0
        %v5244 = vsel %vm5211, %v4922, 0
        %v5245 = vsel %vm5212, %v4924, 0
        %v5246 = vsel %vm5213, %v4925, 0
        %v5247 = vld [vmem:[#allocation2 + $0xc8] sm:$0xc]
        %v5248 = vld [vmem:[#allocation2 + $0xf4] sm:$0xf]
        %v5249 = vld [vmem:[#allocation2 + $0xf8] sm:$0xf]
        %v5250 = vld [vmem:[#allocation2 + $0xfc] sm:$0xf]
        %v5251 = vld [vmem:[#allocation2 + $0x100] sm:$0xf]
        %v5252 = vld [vmem:[#allocation2 + $0x104] sm:$0xf]
        %v5253 = vld [vmem:[#allocation2 + $0x108] sm:$0xf]
        %v5254 = vld [vmem:[#allocation2 + $0x10c] sm:$0xf]
        %v5255 = vld [vmem:[#allocation2 + $0x110] sm:$0xf]
        %v5256 = vld [vmem:[#allocation2 + $0x114] sm:$0xf]
        %v5257 = vld [vmem:[#allocation2 + $0x118] sm:$0xf]
        %v5258 = vld [vmem:[#allocation2 + $0x11c] sm:$0xf]
        %v5259 = vld [vmem:[#allocation2 + $0x120] sm:$0xf]
        %v5260 = vld [vmem:[#allocation2 + $0x124] sm:$0xf]
        %v5261 = vld [vmem:[#allocation2 + $0x128] sm:$0xf]
        %v5262 = vld [vmem:[#allocation2 + $0x12c] sm:$0xf]
        %v5263 = vld [vmem:[#allocation2 + $0x130] sm:$0xf]
        %v5264 = vld [vmem:[#allocation2 + $0x134] sm:$0xf]
        %v5265 = vld [vmem:[#allocation2 + $0x138] sm:$0xf]
        %v5266 = vld [vmem:[#allocation2 + $0x13c] sm:$0xf]
        %v5267 = vld [vmem:[#allocation2 + $0x140] sm:$0xf]
        %v5268 = vld [vmem:[#allocation2 + $0x144] sm:$0xf]
        %v5269 = vld [vmem:[#allocation2 + $0x148] sm:$0x3]
        %v5270 = vsel %vm4855, %v5247, 0
        %v5271 = vsel %vm4856, %v4589, 0
        %v5272 = vsel %vm4857, %v4590, 0
        %v5273 = vsel %vm4858, %v4591, 0
        %v5274 = vsel %vm4859, %v4592, 0
        %v5275 = vsel %vm4860, %v4593, 0
        %v5276 = vsel %vm4861, %v4594, 0
        %v5277 = vsel %vm4862, %v4595, 0
        %v5278 = vsel %vm4863, %v4921, 0
        %v5279 = vsel %vm4864, %v4922, 0
        %v5280 = vsel %vm4865, %v4924, 0
        %v5281 = vsel %vm4866, %v5248, 0
        %v5282 = vsel %vm4867, %v5249, 0
        %v5283 = vsel %vm4868, %v5250, 0
        %v5284 = vsel %vm4869, %v5251, 0
        %v5285 = vsel %vm4870, %v5252, 0
        %v5286 = vsel %vm4871, %v5253, 0
        %v5287 = vsel %vm4872, %v5254, 0
        %v5288 = vsel %vm4873, %v5255, 0
        %v5289 = vsel %vm4874, %v5256, 0
        %v5290 = vsel %vm4875, %v5257, 0
        %v5291 = vsel %vm4876, %v5258, 0
        %v5292 = vsel %vm4877, %v5259, 0
        %v5293 = vsel %vm4878, %v5260, 0
        %v5294 = vsel %vm4879, %v5261, 0
        %v5295 = vsel %vm4880, %v5262, 0
        %v5296 = vsel %vm4881, %v5263, 0
        %v5297 = vsel %vm4882, %v5264, 0
        %v5298 = vsel %vm4883, %v5265, 0
        %v5299 = vsel %vm4884, %v5266, 0
        %v5300 = vsel %vm4885, %v5267, 0
        %v5301 = vsel %vm4886, %v5268, 0
        %v5302 = vsel %vm4887, %v5269, 0
        %v5303 = vld [vmem:[#allocation2 + $0xd4] sm:$0xc]
        %v5304 = vld [vmem:[#allocation2 + $0x148] sm:$0xf]
        %v5305 = vld [vmem:[#allocation2 + $0x14c] sm:$0xf]
        %v5306 = vld [vmem:[#allocation2 + $0x150] sm:$0xf]
        %v5307 = vld [vmem:[#allocation2 + $0x154] sm:$0x3]
        %v5308 = vsel %vm5181, %v5303, 0
        %v5309 = vsel %vm5182, %v4592, 0
        %v5310 = vsel %vm5183, %v4593, 0
        %v5311 = vsel %vm5184, %v4594, 0
        %v5312 = vsel %vm5185, %v4595, 0
        %v5313 = vsel %vm5186, %v4921, 0
        %v5314 = vsel %vm5187, %v4922, 0
        %v5315 = vsel %vm5188, %v4924, 0
        %v5316 = vsel %vm5189, %v5248, 0
        %v5317 = vsel %vm5190, %v5249, 0
        %v5318 = vsel %vm5191, %v5250, 0
        %v5319 = vsel %vm5192, %v5251, 0
        %v5320 = vsel %vm5193, %v5252, 0
        %v5321 = vsel %vm5194, %v5253, 0
        %v5322 = vsel %vm5195, %v5254, 0
        %v5323 = vsel %vm5196, %v5255, 0
        %v5324 = vsel %vm5197, %v5256, 0
        %v5325 = vsel %vm5198, %v5257, 0
        %v5326 = vsel %vm5199, %v5258, 0
        %v5327 = vsel %vm5200, %v5259, 0
        %v5328 = vsel %vm5201, %v5260, 0
        %v5329 = vsel %vm5202, %v5261, 0
        %v5330 = vsel %vm5203, %v5262, 0
        %v5331 = vsel %vm5204, %v5263, 0
        %v5332 = vsel %vm5205, %v5264, 0
        %v5333 = vsel %vm5206, %v5265, 0
        %v5334 = vsel %vm5207, %v5266, 0
        %v5335 = vsel %vm5208, %v5267, 0
        %v5336 = vsel %vm5209, %v5268, 0
        %v5337 = vsel %vm5210, %v5304, 0
        %v5338 = vsel %vm5211, %v5305, 0
        %v5339 = vsel %vm5212, %v5306, 0
        %v5340 = vsel %vm5213, %v5307, 0
        %v5341 = vld [vmem:[#allocation2 + $0x128] sm:$0xc]
        %v5342 = vld [vmem:[#allocation2 + $0x154] sm:$0xf]
        %v5343 = vld [vmem:[#allocation2 + $0x158] sm:$0xf]
        %v5344 = vld [vmem:[#allocation2 + $0x15c] sm:$0xf]
        %v5345 = vld [vmem:[#allocation2 + $0x160] sm:$0xf]
        %v5346 = vld [vmem:[#allocation2 + $0x164] sm:$0xf]
        %v5347 = vld [vmem:[#allocation2 + $0x168] sm:$0xf]
        %v5348 = vld [vmem:[#allocation2 + $0x16c] sm:$0xf]
        %v5349 = vld [vmem:[#allocation2 + $0x170] sm:$0xf]
        %v5350 = vld [vmem:[#allocation2 + $0x174] sm:$0xf]
        %v5351 = vld [vmem:[#allocation2 + $0x178] sm:$0xf]
        %v5352 = vld [vmem:[#allocation2 + $0x17c] sm:$0xf]
        %v5353 = vld [vmem:[#allocation2 + $0x180] sm:$0xf]
        %v5354 = vld [vmem:[#allocation2 + $0x184] sm:$0xf]
        %v5355 = vld [vmem:[#allocation2 + $0x188] sm:$0xf]
        %v5356 = vld [vmem:[#allocation2 + $0x18c] sm:$0xf]
        %v5357 = vld [vmem:[#allocation2 + $0x190] sm:$0xf]
        %v5358 = vld [vmem:[#allocation2 + $0x194] sm:$0xf]
        %v5359 = vld [vmem:[#allocation2 + $0x198] sm:$0xf]
        %v5360 = vld [vmem:[#allocation2 + $0x19c] sm:$0xf]
        %v5361 = vld [vmem:[#allocation2 + $0x1a0] sm:$0xf]
        %v5362 = vld [vmem:[#allocation2 + $0x1a4] sm:$0xf]
        %v5363 = vld [vmem:[#allocation2 + $0x1a8] sm:$0x3]
        %v5364 = vsel %vm4855, %v5341, 0
        %v5365 = vsel %vm4856, %v5262, 0
        %v5366 = vsel %vm4857, %v5263, 0
        %v5367 = vsel %vm4858, %v5264, 0
        %v5368 = vsel %vm4859, %v5265, 0
        %v5369 = vsel %vm4860, %v5266, 0
        %v5370 = vsel %vm4861, %v5267, 0
        %v5371 = vsel %vm4862, %v5268, 0
        %v5372 = vsel %vm4863, %v5304, 0
        %v5373 = vsel %vm4864, %v5305, 0
        %v5374 = vsel %vm4865, %v5306, 0
        %v5375 = vsel %vm4866, %v5342, 0
        %v5376 = vsel %vm4867, %v5343, 0
        %v5377 = vsel %vm4868, %v5344, 0
        %v5378 = vsel %vm4869, %v5345, 0
        %v5379 = vsel %vm4870, %v5346, 0
        %v5380 = vsel %vm4871, %v5347, 0
        %v5381 = vsel %vm4872, %v5348, 0
        %v5382 = vsel %vm4873, %v5349, 0
        %v5383 = vsel %vm4874, %v5350, 0
        %v5384 = vsel %vm4875, %v5351, 0
        %v5385 = vsel %vm4876, %v5352, 0
        %v5386 = vsel %vm4877, %v5353, 0
        %v5387 = vsel %vm4878, %v5354, 0
        %v5388 = vsel %vm4879, %v5355, 0
        %v5389 = vsel %vm4880, %v5356, 0
        %v5390 = vsel %vm4881, %v5357, 0
        %v5391 = vsel %vm4882, %v5358, 0
        %v5392 = vsel %vm4883, %v5359, 0
        %v5393 = vsel %vm4884, %v5360, 0
        %v5394 = vsel %vm4885, %v5361, 0
        %v5395 = vsel %vm4886, %v5362, 0
        %v5396 = vsel %vm4887, %v5363, 0
        %v5397 = vld [vmem:[#allocation2 + $0x1a8] sm:$0xf]
        %v5398 = vld [vmem:[#allocation2 + $0x1ac] sm:$0xf]
        %v5399 = vld [vmem:[#allocation2 + $0x134] sm:$0xc]
        %v5400 = vld [vmem:[#allocation2 + $0x1b0] sm:$0xf]
        %v5401 = vld [vmem:[#allocation2 + $0x1b4] sm:$0x3]
        %v5402 = vsel %vm5181, %v5399, 0
        %v5403 = vsel %vm5182, %v5265, 0
        %v5404 = vsel %vm5183, %v5266, 0
        %v5405 = vsel %vm5184, %v5267, 0
        %v5406 = vsel %vm5185, %v5268, 0
        %v5407 = vsel %vm5186, %v5304, 0
        %v5408 = vsel %vm5187, %v5305, 0
        %v5409 = vsel %vm5188, %v5306, 0
        %v5410 = vsel %vm5189, %v5342, 0
        %v5411 = vsel %vm5190, %v5343, 0
        %v5412 = vsel %vm5191, %v5344, 0
        %v5413 = vsel %vm5192, %v5345, 0
        %v5414 = vsel %vm5193, %v5346, 0
        %v5415 = vsel %vm5194, %v5347, 0
        %v5416 = vsel %vm5195, %v5348, 0
        %v5417 = vsel %vm5196, %v5349, 0
        %v5418 = vsel %vm5197, %v5350, 0
        %v5419 = vsel %vm5198, %v5351, 0
        %v5420 = vsel %vm5199, %v5352, 0
        %v5421 = vsel %vm5200, %v5353, 0
        %v5422 = vsel %vm5201, %v5354, 0
        %v5423 = vsel %vm5202, %v5355, 0
        %v5424 = vsel %vm5203, %v5356, 0
        %v5425 = vsel %vm5204, %v5357, 0
        %v5426 = vsel %vm5205, %v5358, 0
        %v5427 = vsel %vm5206, %v5359, 0
        %v5428 = vsel %vm5207, %v5360, 0
        %v5429 = vsel %vm5208, %v5361, 0
        %v5430 = vsel %vm5209, %v5362, 0
        %v5431 = vsel %vm5210, %v5397, 0
        %v5432 = vsel %vm5211, %v5398, 0
        %v5433 = vsel %vm5212, %v5400, 0
        %v5434 = vsel %vm5213, %v5401, 0
        %v5468 = vunpack.c.l.b16 %v4888
        %v5469 = vunpack.c.l.b16 %v4889
        %v5470 = vunpack.c.l.b16 %v4890
        %v5471 = vunpack.c.l.b16 %v4891
        %v5472 = vunpack.c.l.b16 %v4892
        %v5473 = vunpack.c.l.b16 %v4893
        %v5474 = vunpack.c.l.b16 %v4894
        %v5475 = vunpack.c.l.b16 %v4895
        %v5476 = vunpack.c.l.b16 %v4896
        %v5477 = vunpack.c.l.b16 %v4897
        %v5478 = vunpack.c.l.b16 %v4898
        %v5479 = vunpack.c.l.b16 %v4899
        %v5480 = vunpack.c.l.b16 %v4900
        %v5481 = vunpack.c.l.b16 %v4901
        %v5482 = vunpack.c.l.b16 %v4902
        %v5483 = vunpack.c.l.b16 %v4903
        %v5484 = vunpack.c.l.b16 %v4904
        %v5485 = vunpack.c.l.b16 %v4905
        %v5486 = vunpack.c.l.b16 %v4906
        %v5487 = vunpack.c.l.b16 %v4907
        %v5488 = vunpack.c.l.b16 %v4908
        %v5489 = vunpack.c.l.b16 %v4909
        %v5490 = vunpack.c.l.b16 %v4910
        %v5491 = vunpack.c.l.b16 %v4911
        %v5492 = vunpack.c.l.b16 %v4912
        %v5493 = vunpack.c.l.b16 %v4913
        %v5494 = vunpack.c.l.b16 %v4914
        %v5495 = vunpack.c.l.b16 %v4915
        %v5496 = vunpack.c.l.b16 %v4916
        %v5497 = vunpack.c.l.b16 %v4917
        %v5498 = vunpack.c.l.b16 %v4918
        %v5499 = vunpack.c.l.b16 %v4919
        %v5500 = vunpack.c.l.b16 %v4920
        %v5501 = vpack.c.b16 %v5469, %v5468
        %v5502 = vpack.c.b16 %v5471, %v5470
        %v5503 = vpack.c.b16 %v5473, %v5472
        %v5504 = vpack.c.b16 %v5475, %v5474
        %v5505 = vpack.c.b16 %v5477, %v5476
        %v5506 = vpack.c.b16 %v5479, %v5478
        %v5507 = vpack.c.b16 %v5481, %v5480
        %v5508 = vpack.c.b16 %v5483, %v5482
        %v5509 = vpack.c.b16 %v5485, %v5484
        %v5510 = vpack.c.b16 %v5487, %v5486
        %v5511 = vpack.c.b16 %v5489, %v5488
        %v5512 = vpack.c.b16 %v5491, %v5490
        %v5513 = vpack.c.b16 %v5493, %v5492
        %v5514 = vpack.c.b16 %v5495, %v5494
        %v5515 = vpack.c.b16 %v5497, %v5496
        %v5516 = vpack.c.b16 %v5499, %v5498
        %v5517 = vpack.c.b16 %v5500, %v5500
        %v5550 = vunpack.c.l.b16 %v4566
        %v5551 = vunpack.c.l.b16 %v4567
        %v5552 = vunpack.c.l.b16 %v4568
        %v5553 = vunpack.c.l.b16 %v4569
        %v5554 = vunpack.c.l.b16 %v4570
        %v5555 = vunpack.c.l.b16 %v4571
        %v5556 = vunpack.c.l.b16 %v4572
        %v5557 = vunpack.c.l.b16 %v4573
        %v5558 = vunpack.c.l.b16 %v4574
        %v5559 = vunpack.c.l.b16 %v4575
        %v5560 = vunpack.c.l.b16 %v4576
        %v5561 = vunpack.c.l.b16 %v4577
        %v5562 = vunpack.c.l.b16 %v4578
        %v5563 = vunpack.c.l.b16 %v4579
        %v5564 = vunpack.c.l.b16 %v4580
        %v5565 = vunpack.c.l.b16 %v4581
        %v5566 = vunpack.c.l.b16 %v4582
        %v5567 = vunpack.c.l.b16 %v4583
        %v5568 = vunpack.c.l.b16 %v4584
        %v5569 = vunpack.c.l.b16 %v4585
        %v5570 = vunpack.c.l.b16 %v4586
        %v5571 = vunpack.c.l.b16 %v4587
        %v5572 = vunpack.c.l.b16 %v4588
        %v5573 = vunpack.c.l.b16 %v4589
        %v5574 = vunpack.c.l.b16 %v4590
        %v5575 = vunpack.c.l.b16 %v4591
        %v5576 = vunpack.c.l.b16 %v4592
        %v5577 = vunpack.c.l.b16 %v4593
        %v5578 = vunpack.c.l.b16 %v4594
        %v5579 = vunpack.c.l.b16 %v4595
        %v5580 = vunpack.c.l.b16 %v4921
        %v5581 = vunpack.c.l.b16 %v4922
        %v5582 = vpack.c.b16 %v5551, %v5550
        %v5583 = vpack.c.b16 %v5553, %v5552
        %v5584 = vpack.c.b16 %v5555, %v5554
        %v5585 = vpack.c.b16 %v5557, %v5556
        %v5586 = vpack.c.b16 %v5559, %v5558
        %v5587 = vpack.c.b16 %v5561, %v5560
        %v5588 = vpack.c.b16 %v5563, %v5562
        %v5589 = vpack.c.b16 %v5565, %v5564
        %v5590 = vpack.c.b16 %v5567, %v5566
        %v5591 = vpack.c.b16 %v5569, %v5568
        %v5592 = vpack.c.b16 %v5571, %v5570
        %v5593 = vpack.c.b16 %v5573, %v5572
        %v5594 = vpack.c.b16 %v5575, %v5574
        %v5595 = vpack.c.b16 %v5577, %v5576
        %v5596 = vpack.c.b16 %v5579, %v5578
        %v5597 = vpack.c.b16 %v5581, %v5580
        %v5598 = vrot.slane %v5582, 6
        %v5599 = vrot.slane %v5583, 6
        %v5600 = vsel %vm4757, %v5598, %v5599
        %v5601 = vrot.slane %v5584, 6
        %v5602 = vsel %vm4757, %v5599, %v5601
        %v5603 = vrot.slane %v5585, 6
        %v5604 = vsel %vm4757, %v5601, %v5603
        %v5605 = vrot.slane %v5586, 6
        %v5606 = vsel %vm4757, %v5603, %v5605
        %v5607 = vrot.slane %v5587, 6
        %v5608 = vsel %vm4757, %v5605, %v5607
        %v5609 = vrot.slane %v5588, 6
        %v5610 = vsel %vm4757, %v5607, %v5609
        %v5611 = vrot.slane %v5589, 6
        %v5612 = vsel %vm4757, %v5609, %v5611
        %v5613 = vrot.slane %v5590, 6
        %v5614 = vsel %vm4757, %v5611, %v5613
        %v5615 = vrot.slane %v5591, 6
        %v5616 = vsel %vm4757, %v5613, %v5615
        %v5617 = vrot.slane %v5592, 6
        %v5618 = vsel %vm4757, %v5615, %v5617
        %v5619 = vrot.slane %v5593, 6
        %v5620 = vsel %vm4757, %v5617, %v5619
        %v5621 = vrot.slane %v5594, 6
        %v5622 = vsel %vm4757, %v5619, %v5621
        %v5623 = vrot.slane %v5595, 6
        %v5624 = vsel %vm4757, %v5621, %v5623
        %v5625 = vrot.slane %v5596, 6
        %v5626 = vsel %vm4757, %v5623, %v5625
        %v5627 = vrot.slane %v5597, 6
        %v5628 = vsel %vm4757, %v5625, %v5627
        %5629 = vrot.lane.b32.xlu0 %v5598, 32
        %v5630 = vpop.permute.xlu0 %5629
        %5631 = vrot.lane.b32.xlu0 %v5600, 32
        %v5632 = vpop.permute.xlu0 %5631
        %5633 = vrot.lane.b32.xlu0 %v5602, 32
        %v5634 = vpop.permute.xlu0 %5633
        %5635 = vrot.lane.b32.xlu0 %v5604, 32
        %v5636 = vpop.permute.xlu0 %5635
        %5637 = vrot.lane.b32.xlu0 %v5606, 32
        %v5638 = vpop.permute.xlu0 %5637
        %5639 = vrot.lane.b32.xlu0 %v5608, 32
        %v5640 = vpop.permute.xlu0 %5639
        %5641 = vrot.lane.b32.xlu0 %v5610, 32
        %v5642 = vpop.permute.xlu0 %5641
        %5643 = vrot.lane.b32.xlu0 %v5612, 32
        %v5644 = vpop.permute.xlu0 %5643
        %5645 = vrot.lane.b32.xlu0 %v5614, 32
        %v5646 = vpop.permute.xlu0 %5645
        %5647 = vrot.lane.b32.xlu0 %v5616, 32
        %v5648 = vpop.permute.xlu0 %5647
        %5649 = vrot.lane.b32.xlu0 %v5618, 32
        %v5650 = vpop.permute.xlu0 %5649
        %5651 = vrot.lane.b32.xlu0 %v5620, 32
        %v5652 = vpop.permute.xlu0 %5651
        %5653 = vrot.lane.b32.xlu0 %v5622, 32
        %v5654 = vpop.permute.xlu0 %5653
        %5655 = vrot.lane.b32.xlu0 %v5624, 32
        %v5656 = vpop.permute.xlu0 %5655
        %5657 = vrot.lane.b32.xlu0 %v5626, 32
        %v5658 = vpop.permute.xlu0 %5657
        %5659 = vrot.lane.b32.xlu0 %v5628, 32
        %v5660 = vpop.permute.xlu0 %5659
        %5661 = vrot.lane.b32.xlu0 %v5627, 32
        %v5662 = vpop.permute.xlu0 %5661
        %v5696 = vunpack.c.l.b16 %v5214
        %v5697 = vunpack.c.l.b16 %v5215
        %v5698 = vunpack.c.l.b16 %v5216
        %v5699 = vunpack.c.l.b16 %v5217
        %v5700 = vunpack.c.l.b16 %v5218
        %v5701 = vunpack.c.l.b16 %v5219
        %v5702 = vunpack.c.l.b16 %v5220
        %v5703 = vunpack.c.l.b16 %v5221
        %v5704 = vunpack.c.l.b16 %v5222
        %v5705 = vunpack.c.l.b16 %v5223
        %v5706 = vunpack.c.l.b16 %v5224
        %v5707 = vunpack.c.l.b16 %v5225
        %v5708 = vunpack.c.l.b16 %v5226
        %v5709 = vunpack.c.l.b16 %v5227
        %v5710 = vunpack.c.l.b16 %v5228
        %v5711 = vunpack.c.l.b16 %v5229
        %v5712 = vunpack.c.l.b16 %v5230
        %v5713 = vunpack.c.l.b16 %v5231
        %v5714 = vunpack.c.l.b16 %v5232
        %v5715 = vunpack.c.l.b16 %v5233
        %v5716 = vunpack.c.l.b16 %v5234
        %v5717 = vunpack.c.l.b16 %v5235
        %v5718 = vunpack.c.l.b16 %v5236
        %v5719 = vunpack.c.l.b16 %v5237
        %v5720 = vunpack.c.l.b16 %v5238
        %v5721 = vunpack.c.l.b16 %v5239
        %v5722 = vunpack.c.l.b16 %v5240
        %v5723 = vunpack.c.l.b16 %v5241
        %v5724 = vunpack.c.l.b16 %v5242
        %v5725 = vunpack.c.l.b16 %v5243
        %v5726 = vunpack.c.l.b16 %v5244
        %v5727 = vunpack.c.l.b16 %v5245
        %v5728 = vunpack.c.l.b16 %v5246
        %v5729 = vpack.c.b16 %v5697, %v5696
        %v5730 = vpack.c.b16 %v5699, %v5698
        %v5731 = vpack.c.b16 %v5701, %v5700
        %v5732 = vpack.c.b16 %v5703, %v5702
        %v5733 = vpack.c.b16 %v5705, %v5704
        %v5734 = vpack.c.b16 %v5707, %v5706
        %v5735 = vpack.c.b16 %v5709, %v5708
        %v5736 = vpack.c.b16 %v5711, %v5710
        %v5737 = vpack.c.b16 %v5713, %v5712
        %v5738 = vpack.c.b16 %v5715, %v5714
        %v5739 = vpack.c.b16 %v5717, %v5716
        %v5740 = vpack.c.b16 %v5719, %v5718
        %v5741 = vpack.c.b16 %v5721, %v5720
        %v5742 = vpack.c.b16 %v5723, %v5722
        %v5743 = vpack.c.b16 %v5725, %v5724
        %v5744 = vpack.c.b16 %v5727, %v5726
        %v5745 = vpack.c.b16 %v5728, %v5728
        %5746 = vrot.lane.b32.xlu0 %v5729, 64
        %v5747 = vpop.permute.xlu0 %5746
        %5748 = vrot.lane.b32.xlu0 %v5730, 64
        %v5749 = vpop.permute.xlu0 %5748
        %5750 = vrot.lane.b32.xlu0 %v5731, 64
        %v5751 = vpop.permute.xlu0 %5750
        %5752 = vrot.lane.b32.xlu0 %v5732, 64
        %v5753 = vpop.permute.xlu0 %5752
        %5754 = vrot.lane.b32.xlu0 %v5733, 64
        %v5755 = vpop.permute.xlu0 %5754
        %5756 = vrot.lane.b32.xlu0 %v5734, 64
        %v5757 = vpop.permute.xlu0 %5756
        %5758 = vrot.lane.b32.xlu0 %v5735, 64
        %v5759 = vpop.permute.xlu0 %5758
        %5760 = vrot.lane.b32.xlu0 %v5736, 64
        %v5761 = vpop.permute.xlu0 %5760
        %5762 = vrot.lane.b32.xlu0 %v5737, 64
        %v5763 = vpop.permute.xlu0 %5762
        %5764 = vrot.lane.b32.xlu0 %v5738, 64
        %v5765 = vpop.permute.xlu0 %5764
        %5766 = vrot.lane.b32.xlu0 %v5739, 64
        %v5767 = vpop.permute.xlu0 %5766
        %5768 = vrot.lane.b32.xlu0 %v5740, 64
        %v5769 = vpop.permute.xlu0 %5768
        %5770 = vrot.lane.b32.xlu0 %v5741, 64
        %v5771 = vpop.permute.xlu0 %5770
        %5772 = vrot.lane.b32.xlu0 %v5742, 64
        %v5773 = vpop.permute.xlu0 %5772
        %5774 = vrot.lane.b32.xlu0 %v5743, 64
        %v5775 = vpop.permute.xlu0 %5774
        %5776 = vrot.lane.b32.xlu0 %v5744, 64
        %v5777 = vpop.permute.xlu0 %5776
        %5778 = vrot.lane.b32.xlu0 %v5745, 64
        %v5779 = vpop.permute.xlu0 %5778
        %v5813 = vunpack.c.l.b16 %v5270
        %v5814 = vunpack.c.l.b16 %v5271
        %v5815 = vunpack.c.l.b16 %v5272
        %v5816 = vunpack.c.l.b16 %v5273
        %v5817 = vunpack.c.l.b16 %v5274
        %v5818 = vunpack.c.l.b16 %v5275
        %v5819 = vunpack.c.l.b16 %v5276
        %v5820 = vunpack.c.l.b16 %v5277
        %v5821 = vunpack.c.l.b16 %v5278
        %v5822 = vunpack.c.l.b16 %v5279
        %v5823 = vunpack.c.l.b16 %v5280
        %v5824 = vunpack.c.l.b16 %v5281
        %v5825 = vunpack.c.l.b16 %v5282
        %v5826 = vunpack.c.l.b16 %v5283
        %v5827 = vunpack.c.l.b16 %v5284
        %v5828 = vunpack.c.l.b16 %v5285
        %v5829 = vunpack.c.l.b16 %v5286
        %v5830 = vunpack.c.l.b16 %v5287
        %v5831 = vunpack.c.l.b16 %v5288
        %v5832 = vunpack.c.l.b16 %v5289
        %v5833 = vunpack.c.l.b16 %v5290
        %v5834 = vunpack.c.l.b16 %v5291
        %v5835 = vunpack.c.l.b16 %v5292
        %v5836 = vunpack.c.l.b16 %v5293
        %v5837 = vunpack.c.l.b16 %v5294
        %v5838 = vunpack.c.l.b16 %v5295
        %v5839 = vunpack.c.l.b16 %v5296
        %v5840 = vunpack.c.l.b16 %v5297
        %v5841 = vunpack.c.l.b16 %v5298
        %v5842 = vunpack.c.l.b16 %v5299
        %v5843 = vunpack.c.l.b16 %v5300
        %v5844 = vunpack.c.l.b16 %v5301
        %v5845 = vunpack.c.l.b16 %v5302
        %v5846 = vpack.c.b16 %v5814, %v5813
        %v5847 = vpack.c.b16 %v5816, %v5815
        %v5848 = vpack.c.b16 %v5818, %v5817
        %v5849 = vpack.c.b16 %v5820, %v5819
        %v5850 = vpack.c.b16 %v5822, %v5821
        %v5851 = vpack.c.b16 %v5824, %v5823
        %v5852 = vpack.c.b16 %v5826, %v5825
        %v5853 = vpack.c.b16 %v5828, %v5827
        %v5854 = vpack.c.b16 %v5830, %v5829
        %v5855 = vpack.c.b16 %v5832, %v5831
        %v5856 = vpack.c.b16 %v5834, %v5833
        %v5857 = vpack.c.b16 %v5836, %v5835
        %v5858 = vpack.c.b16 %v5838, %v5837
        %v5859 = vpack.c.b16 %v5840, %v5839
        %v5860 = vpack.c.b16 %v5842, %v5841
        %v5861 = vpack.c.b16 %v5844, %v5843
        %v5862 = vpack.c.b16 %v5845, %v5845
        %5863 = vrot.lane.b32.xlu0 %v5846, 96
        %v5864 = vpop.permute.xlu0 %5863
        %5865 = vrot.lane.b32.xlu0 %v5847, 96
        %v5866 = vpop.permute.xlu0 %5865
        %5867 = vrot.lane.b32.xlu0 %v5848, 96
        %v5868 = vpop.permute.xlu0 %5867
        %5869 = vrot.lane.b32.xlu0 %v5849, 96
        %v5870 = vpop.permute.xlu0 %5869
        %5871 = vrot.lane.b32.xlu0 %v5850, 96
        %v5872 = vpop.permute.xlu0 %5871
        %5873 = vrot.lane.b32.xlu0 %v5851, 96
        %v5874 = vpop.permute.xlu0 %5873
        %5875 = vrot.lane.b32.xlu0 %v5852, 96
        %v5876 = vpop.permute.xlu0 %5875
        %5877 = vrot.lane.b32.xlu0 %v5853, 96
        %v5878 = vpop.permute.xlu0 %5877
        %5879 = vrot.lane.b32.xlu0 %v5854, 96
        %v5880 = vpop.permute.xlu0 %5879
        %5881 = vrot.lane.b32.xlu0 %v5855, 96
        %v5882 = vpop.permute.xlu0 %5881
        %5883 = vrot.lane.b32.xlu0 %v5856, 96
        %v5884 = vpop.permute.xlu0 %5883
        %5885 = vrot.lane.b32.xlu0 %v5857, 96
        %v5886 = vpop.permute.xlu0 %5885
        %5887 = vrot.lane.b32.xlu0 %v5858, 96
        %v5888 = vpop.permute.xlu0 %5887
        %5889 = vrot.lane.b32.xlu0 %v5859, 96
        %v5890 = vpop.permute.xlu0 %5889
        %5891 = vrot.lane.b32.xlu0 %v5860, 96
        %v5892 = vpop.permute.xlu0 %5891
        %5893 = vrot.lane.b32.xlu0 %v5861, 96
        %v5894 = vpop.permute.xlu0 %5893
        %5895 = vrot.lane.b32.xlu0 %v5862, 96
        %v5896 = vpop.permute.xlu0 %5895
        %v5897 = vrot.slane %v2464, 6
        %v5898 = vrot.slane %v2465, 6
        %v5899 = vsel %vm4757, %v5897, %v5898
        %v5900 = vrot.slane %v2466, 6
        %v5901 = vsel %vm4757, %v5898, %v5900
        %v5902 = vrot.slane %v2467, 6
        %v5903 = vsel %vm4757, %v5900, %v5902
        %v5904 = vrot.slane %v2468, 6
        %v5905 = vsel %vm4757, %v5902, %v5904
        %v5906 = vrot.slane %v2469, 6
        %v5907 = vsel %vm4757, %v5904, %v5906
        %v5908 = vrot.slane %v2470, 6
        %v5909 = vsel %vm4757, %v5906, %v5908
        %v5910 = vrot.slane %v2471, 6
        %v5911 = vsel %vm4757, %v5908, %v5910
        %v5912 = vrot.slane %v2472, 6
        %v5913 = vsel %vm4757, %v5910, %v5912
        %v5914 = vrot.slane %v2473, 6
        %v5915 = vsel %vm4757, %v5912, %v5914
        %v5916 = vrot.slane %v2831, 6
        %v5917 = vsel %vm4757, %v5914, %v5916
        %v5918 = vrot.slane %v2832, 6
        %v5919 = vsel %vm4757, %v5916, %v5918
        %v5920 = vrot.slane %v2833, 6
        %v5921 = vsel %vm4757, %v5918, %v5920
        %v5922 = vrot.slane %v2834, 6
        %v5923 = vsel %vm4757, %v5920, %v5922
        %v5924 = vrot.slane %v2835, 6
        %v5925 = vsel %vm4757, %v5922, %v5924
        %v5926 = vrot.slane %v2836, 6
        %v5927 = vsel %vm4757, %v5924, %v5926
        %v5961 = vunpack.c.l.b16 %v5308
        %v5962 = vunpack.c.l.b16 %v5309
        %v5963 = vunpack.c.l.b16 %v5310
        %v5964 = vunpack.c.l.b16 %v5311
        %v5965 = vunpack.c.l.b16 %v5312
        %v5966 = vunpack.c.l.b16 %v5313
        %v5967 = vunpack.c.l.b16 %v5314
        %v5968 = vunpack.c.l.b16 %v5315
        %v5969 = vunpack.c.l.b16 %v5316
        %v5970 = vunpack.c.l.b16 %v5317
        %v5971 = vunpack.c.l.b16 %v5318
        %v5972 = vunpack.c.l.b16 %v5319
        %v5973 = vunpack.c.l.b16 %v5320
        %v5974 = vunpack.c.l.b16 %v5321
        %v5975 = vunpack.c.l.b16 %v5322
        %v5976 = vunpack.c.l.b16 %v5323
        %v5977 = vunpack.c.l.b16 %v5324
        %v5978 = vunpack.c.l.b16 %v5325
        %v5979 = vunpack.c.l.b16 %v5326
        %v5980 = vunpack.c.l.b16 %v5327
        %v5981 = vunpack.c.l.b16 %v5328
        %v5982 = vunpack.c.l.b16 %v5329
        %v5983 = vunpack.c.l.b16 %v5330
        %v5984 = vunpack.c.l.b16 %v5331
        %v5985 = vunpack.c.l.b16 %v5332
        %v5986 = vunpack.c.l.b16 %v5333
        %v5987 = vunpack.c.l.b16 %v5334
        %v5988 = vunpack.c.l.b16 %v5335
        %v5989 = vunpack.c.l.b16 %v5336
        %v5990 = vunpack.c.l.b16 %v5337
        %v5991 = vunpack.c.l.b16 %v5338
        %v5992 = vunpack.c.l.b16 %v5339
        %v5993 = vunpack.c.l.b16 %v5340
        %v5994 = vpack.c.b16 %v5962, %v5961
        %v5995 = vpack.c.b16 %v5964, %v5963
        %v5996 = vpack.c.b16 %v5966, %v5965
        %v5997 = vpack.c.b16 %v5968, %v5967
        %v5998 = vpack.c.b16 %v5970, %v5969
        %v5999 = vpack.c.b16 %v5972, %v5971
        %v6000 = vpack.c.b16 %v5974, %v5973
        %v6001 = vpack.c.b16 %v5976, %v5975
        %v6002 = vpack.c.b16 %v5978, %v5977
        %v6003 = vpack.c.b16 %v5980, %v5979
        %v6004 = vpack.c.b16 %v5982, %v5981
        %v6005 = vpack.c.b16 %v5984, %v5983
        %v6006 = vpack.c.b16 %v5986, %v5985
        %v6007 = vpack.c.b16 %v5988, %v5987
        %v6008 = vpack.c.b16 %v5990, %v5989
        %v6009 = vpack.c.b16 %v5992, %v5991
        %v6010 = vpack.c.b16 %v5993, %v5993
        %6011 = vrot.lane.b32.xlu0 %v5994, 32
        %v6012 = vpop.permute.xlu0 %6011
        %6013 = vrot.lane.b32.xlu0 %v5995, 32
        %v6014 = vpop.permute.xlu0 %6013
        %6015 = vrot.lane.b32.xlu0 %v5996, 32
        %v6016 = vpop.permute.xlu0 %6015
        %6017 = vrot.lane.b32.xlu0 %v5997, 32
        %v6018 = vpop.permute.xlu0 %6017
        %6019 = vrot.lane.b32.xlu0 %v5998, 32
        %v6020 = vpop.permute.xlu0 %6019
        %6021 = vrot.lane.b32.xlu0 %v5999, 32
        %v6022 = vpop.permute.xlu0 %6021
        %6023 = vrot.lane.b32.xlu0 %v6000, 32
        %v6024 = vpop.permute.xlu0 %6023
        %6025 = vrot.lane.b32.xlu0 %v6001, 32
        %v6026 = vpop.permute.xlu0 %6025
        %6027 = vrot.lane.b32.xlu0 %v6002, 32
        %v6028 = vpop.permute.xlu0 %6027
        %6029 = vrot.lane.b32.xlu0 %v6003, 32
        %v6030 = vpop.permute.xlu0 %6029
        %6031 = vrot.lane.b32.xlu0 %v6004, 32
        %v6032 = vpop.permute.xlu0 %6031
        %6033 = vrot.lane.b32.xlu0 %v6005, 32
        %v6034 = vpop.permute.xlu0 %6033
        %6035 = vrot.lane.b32.xlu0 %v6006, 32
        %v6036 = vpop.permute.xlu0 %6035
        %6037 = vrot.lane.b32.xlu0 %v6007, 32
        %v6038 = vpop.permute.xlu0 %6037
        %6039 = vrot.lane.b32.xlu0 %v6008, 32
        %v6040 = vpop.permute.xlu0 %6039
        %6041 = vrot.lane.b32.xlu0 %v6009, 32
        %v6042 = vpop.permute.xlu0 %6041
        %6043 = vrot.lane.b32.xlu0 %v6010, 32
        %v6044 = vpop.permute.xlu0 %6043
        %v6078 = vunpack.c.l.b16 %v5364
        %v6079 = vunpack.c.l.b16 %v5365
        %v6080 = vunpack.c.l.b16 %v5366
        %v6081 = vunpack.c.l.b16 %v5367
        %v6082 = vunpack.c.l.b16 %v5368
        %v6083 = vunpack.c.l.b16 %v5369
        %v6084 = vunpack.c.l.b16 %v5370
        %v6085 = vunpack.c.l.b16 %v5371
        %v6086 = vunpack.c.l.b16 %v5372
        %v6087 = vunpack.c.l.b16 %v5373
        %v6088 = vunpack.c.l.b16 %v5374
        %v6089 = vunpack.c.l.b16 %v5375
        %v6090 = vunpack.c.l.b16 %v5376
        %v6091 = vunpack.c.l.b16 %v5377
        %v6092 = vunpack.c.l.b16 %v5378
        %v6093 = vunpack.c.l.b16 %v5379
        %v6094 = vunpack.c.l.b16 %v5380
        %v6095 = vunpack.c.l.b16 %v5381
        %v6096 = vunpack.c.l.b16 %v5382
        %v6097 = vunpack.c.l.b16 %v5383
        %v6098 = vunpack.c.l.b16 %v5384
        %v6099 = vunpack.c.l.b16 %v5385
        %v6100 = vunpack.c.l.b16 %v5386
        %v6101 = vunpack.c.l.b16 %v5387
        %v6102 = vunpack.c.l.b16 %v5388
        %v6103 = vunpack.c.l.b16 %v5389
        %v6104 = vunpack.c.l.b16 %v5390
        %v6105 = vunpack.c.l.b16 %v5391
        %v6106 = vunpack.c.l.b16 %v5392
        %v6107 = vunpack.c.l.b16 %v5393
        %v6108 = vunpack.c.l.b16 %v5394
        %v6109 = vunpack.c.l.b16 %v5395
        %v6110 = vunpack.c.l.b16 %v5396
        %v6111 = vpack.c.b16 %v6079, %v6078
        %v6112 = vpack.c.b16 %v6081, %v6080
        %v6113 = vpack.c.b16 %v6083, %v6082
        %v6114 = vpack.c.b16 %v6085, %v6084
        %v6115 = vpack.c.b16 %v6087, %v6086
        %v6116 = vpack.c.b16 %v6089, %v6088
        %v6117 = vpack.c.b16 %v6091, %v6090
        %v6118 = vpack.c.b16 %v6093, %v6092
        %v6119 = vpack.c.b16 %v6095, %v6094
        %v6120 = vpack.c.b16 %v6097, %v6096
        %v6121 = vpack.c.b16 %v6099, %v6098
        %v6122 = vpack.c.b16 %v6101, %v6100
        %v6123 = vpack.c.b16 %v6103, %v6102
        %v6124 = vpack.c.b16 %v6105, %v6104
        %v6125 = vpack.c.b16 %v6107, %v6106
        %v6126 = vpack.c.b16 %v6109, %v6108
        %v6127 = vpack.c.b16 %v6110, %v6110
        %6128 = vrot.lane.b32.xlu0 %v6111, 64
        %v6129 = vpop.permute.xlu0 %6128
        %6130 = vrot.lane.b32.xlu0 %v6112, 64
        %v6131 = vpop.permute.xlu0 %6130
        %6132 = vrot.lane.b32.xlu0 %v6113, 64
        %v6133 = vpop.permute.xlu0 %6132
        %6134 = vrot.lane.b32.xlu0 %v6114, 64
        %v6135 = vpop.permute.xlu0 %6134
        %6136 = vrot.lane.b32.xlu0 %v6115, 64
        %v6137 = vpop.permute.xlu0 %6136
        %6138 = vrot.lane.b32.xlu0 %v6116, 64
        %v6139 = vpop.permute.xlu0 %6138
        %6140 = vrot.lane.b32.xlu0 %v6117, 64
        %v6141 = vpop.permute.xlu0 %6140
        %6142 = vrot.lane.b32.xlu0 %v6118, 64
        %v6143 = vpop.permute.xlu0 %6142
        %6144 = vrot.lane.b32.xlu0 %v6119, 64
        %v6145 = vpop.permute.xlu0 %6144
        %6146 = vrot.lane.b32.xlu0 %v6120, 64
        %v6147 = vpop.permute.xlu0 %6146
        %6148 = vrot.lane.b32.xlu0 %v6121, 64
        %v6149 = vpop.permute.xlu0 %6148
        %6150 = vrot.lane.b32.xlu0 %v6122, 64
        %v6151 = vpop.permute.xlu0 %6150
        %6152 = vrot.lane.b32.xlu0 %v6123, 64
        %v6153 = vpop.permute.xlu0 %6152
        %6154 = vrot.lane.b32.xlu0 %v6124, 64
        %v6155 = vpop.permute.xlu0 %6154
        %6156 = vrot.lane.b32.xlu0 %v6125, 64
        %v6157 = vpop.permute.xlu0 %6156
        %6158 = vrot.lane.b32.xlu0 %v6126, 64
        %v6159 = vpop.permute.xlu0 %6158
        %6160 = vrot.lane.b32.xlu0 %v6127, 64
        %v6161 = vpop.permute.xlu0 %6160
        %v6194 = vunpack.c.l.b16 %v5263
        %v6195 = vunpack.c.l.b16 %v5264
        %v6196 = vunpack.c.l.b16 %v5265
        %v6197 = vunpack.c.l.b16 %v5266
        %v6198 = vunpack.c.l.b16 %v5267
        %v6199 = vunpack.c.l.b16 %v5268
        %v6200 = vunpack.c.l.b16 %v5304
        %v6201 = vunpack.c.l.b16 %v5305
        %v6202 = vunpack.c.l.b16 %v5306
        %v6203 = vunpack.c.l.b16 %v5342
        %v6204 = vunpack.c.l.b16 %v5343
        %v6205 = vunpack.c.l.b16 %v5344
        %v6206 = vunpack.c.l.b16 %v5345
        %v6207 = vunpack.c.l.b16 %v5346
        %v6208 = vunpack.c.l.b16 %v5347
        %v6209 = vunpack.c.l.b16 %v5348
        %v6210 = vunpack.c.l.b16 %v5349
        %v6211 = vunpack.c.l.b16 %v5350
        %v6212 = vunpack.c.l.b16 %v5351
        %v6213 = vunpack.c.l.b16 %v5352
        %v6214 = vunpack.c.l.b16 %v5353
        %v6215 = vunpack.c.l.b16 %v5354
        %v6216 = vunpack.c.l.b16 %v5355
        %v6217 = vunpack.c.l.b16 %v5356
        %v6218 = vunpack.c.l.b16 %v5357
        %v6219 = vunpack.c.l.b16 %v5358
        %v6220 = vunpack.c.l.b16 %v5359
        %v6221 = vunpack.c.l.b16 %v5360
        %v6222 = vunpack.c.l.b16 %v5361
        %v6223 = vunpack.c.l.b16 %v5362
        %v6224 = vunpack.c.l.b16 %v5397
        %v6225 = vunpack.c.l.b16 %v5398
        %v6226 = vpack.c.b16 %v6195, %v6194
        %v6227 = vpack.c.b16 %v6197, %v6196
        %v6228 = vpack.c.b16 %v6199, %v6198
        %v6229 = vpack.c.b16 %v6201, %v6200
        %v6230 = vpack.c.b16 %v6203, %v6202
        %v6231 = vpack.c.b16 %v6205, %v6204
        %v6232 = vpack.c.b16 %v6207, %v6206
        %v6233 = vpack.c.b16 %v6209, %v6208
        %v6234 = vpack.c.b16 %v6211, %v6210
        %v6235 = vpack.c.b16 %v6213, %v6212
        %v6236 = vpack.c.b16 %v6215, %v6214
        %v6237 = vpack.c.b16 %v6217, %v6216
        %v6238 = vpack.c.b16 %v6219, %v6218
        %v6239 = vpack.c.b16 %v6221, %v6220
        %v6240 = vpack.c.b16 %v6223, %v6222
        %v6241 = vpack.c.b16 %v6225, %v6224
        %v6242 = vrot.slane %v6226, 6
        %v6243 = vrot.slane %v6227, 6
        %v6244 = vsel %vm4757, %v6242, %v6243
        %v6245 = vrot.slane %v6228, 6
        %v6246 = vsel %vm4757, %v6243, %v6245
        %v6247 = vrot.slane %v6229, 6
        %v6248 = vsel %vm4757, %v6245, %v6247
        %v6249 = vrot.slane %v6230, 6
        %v6250 = vsel %vm4757, %v6247, %v6249
        %v6251 = vrot.slane %v6231, 6
        %v6252 = vsel %vm4757, %v6249, %v6251
        %v6253 = vrot.slane %v6232, 6
        %v6254 = vsel %vm4757, %v6251, %v6253
        %v6255 = vrot.slane %v6233, 6
        %v6256 = vsel %vm4757, %v6253, %v6255
        %v6257 = vrot.slane %v6234, 6
        %v6258 = vsel %vm4757, %v6255, %v6257
        %v6259 = vrot.slane %v6235, 6
        %v6260 = vsel %vm4757, %v6257, %v6259
        %v6261 = vrot.slane %v6236, 6
        %v6262 = vsel %vm4757, %v6259, %v6261
        %v6263 = vrot.slane %v6237, 6
        %v6264 = vsel %vm4757, %v6261, %v6263
        %v6265 = vrot.slane %v6238, 6
        %v6266 = vsel %vm4757, %v6263, %v6265
        %v6267 = vrot.slane %v6239, 6
        %v6268 = vsel %vm4757, %v6265, %v6267
        %v6269 = vrot.slane %v6240, 6
        %v6270 = vsel %vm4757, %v6267, %v6269
        %v6271 = vrot.slane %v6241, 6
        %v6272 = vsel %vm4757, %v6269, %v6271
        %6273 = vrot.lane.b32.xlu0 %v6242, 96
        %v6274 = vpop.permute.xlu0 %6273
        %6275 = vrot.lane.b32.xlu0 %v6244, 96
        %v6276 = vpop.permute.xlu0 %6275
        %6277 = vrot.lane.b32.xlu0 %v6246, 96
        %v6278 = vpop.permute.xlu0 %6277
        %6279 = vrot.lane.b32.xlu0 %v6248, 96
        %v6280 = vpop.permute.xlu0 %6279
        %6281 = vrot.lane.b32.xlu0 %v6250, 96
        %v6282 = vpop.permute.xlu0 %6281
        %6283 = vrot.lane.b32.xlu0 %v6252, 96
        %v6284 = vpop.permute.xlu0 %6283
        %6285 = vrot.lane.b32.xlu0 %v6254, 96
        %v6286 = vpop.permute.xlu0 %6285
        %6287 = vrot.lane.b32.xlu0 %v6256, 96
        %v6288 = vpop.permute.xlu0 %6287
        %6289 = vrot.lane.b32.xlu0 %v6258, 96
        %v6290 = vpop.permute.xlu0 %6289
        %6291 = vrot.lane.b32.xlu0 %v6260, 96
        %v6292 = vpop.permute.xlu0 %6291
        %6293 = vrot.lane.b32.xlu0 %v6262, 96
        %v6294 = vpop.permute.xlu0 %6293
        %6295 = vrot.lane.b32.xlu0 %v6264, 96
        %v6296 = vpop.permute.xlu0 %6295
        %6297 = vrot.lane.b32.xlu0 %v6266, 96
        %v6298 = vpop.permute.xlu0 %6297
        %6299 = vrot.lane.b32.xlu0 %v6268, 96
        %v6300 = vpop.permute.xlu0 %6299
        %6301 = vrot.lane.b32.xlu0 %v6270, 96
        %v6302 = vpop.permute.xlu0 %6301
        %6303 = vrot.lane.b32.xlu0 %v6272, 96
        %v6304 = vpop.permute.xlu0 %6303
        %6305 = vrot.lane.b32.xlu0 %v6271, 96
        %v6306 = vpop.permute.xlu0 %6305
        %v6340 = vunpack.c.l.b16 %v5402
        %v6341 = vunpack.c.l.b16 %v5403
        %v6342 = vunpack.c.l.b16 %v5404
        %v6343 = vunpack.c.l.b16 %v5405
        %v6344 = vunpack.c.l.b16 %v5406
        %v6345 = vunpack.c.l.b16 %v5407
        %v6346 = vunpack.c.l.b16 %v5408
        %v6347 = vunpack.c.l.b16 %v5409
        %v6348 = vunpack.c.l.b16 %v5410
        %v6349 = vunpack.c.l.b16 %v5411
        %v6350 = vunpack.c.l.b16 %v5412
        %v6351 = vunpack.c.l.b16 %v5413
        %v6352 = vunpack.c.l.b16 %v5414
        %v6353 = vunpack.c.l.b16 %v5415
        %v6354 = vunpack.c.l.b16 %v5416
        %v6355 = vunpack.c.l.b16 %v5417
        %v6356 = vunpack.c.l.b16 %v5418
        %v6357 = vunpack.c.l.b16 %v5419
        %v6358 = vunpack.c.l.b16 %v5420
        %v6359 = vunpack.c.l.b16 %v5421
        %v6360 = vunpack.c.l.b16 %v5422
        %v6361 = vunpack.c.l.b16 %v5423
        %v6362 = vunpack.c.l.b16 %v5424
        %v6363 = vunpack.c.l.b16 %v5425
        %v6364 = vunpack.c.l.b16 %v5426
        %v6365 = vunpack.c.l.b16 %v5427
        %v6366 = vunpack.c.l.b16 %v5428
        %v6367 = vunpack.c.l.b16 %v5429
        %v6368 = vunpack.c.l.b16 %v5430
        %v6369 = vunpack.c.l.b16 %v5431
        %v6370 = vunpack.c.l.b16 %v5432
        %v6371 = vunpack.c.l.b16 %v5433
        %v6372 = vunpack.c.l.b16 %v5434
        %v6373 = vpack.c.b16 %v6341, %v6340
        %v6374 = vpack.c.b16 %v6343, %v6342
        %v6375 = vpack.c.b16 %v6345, %v6344
        %v6376 = vpack.c.b16 %v6347, %v6346
        %v6377 = vpack.c.b16 %v6349, %v6348
        %v6378 = vpack.c.b16 %v6351, %v6350
        %v6379 = vpack.c.b16 %v6353, %v6352
        %v6380 = vpack.c.b16 %v6355, %v6354
        %v6381 = vpack.c.b16 %v6357, %v6356
        %v6382 = vpack.c.b16 %v6359, %v6358
        %v6383 = vpack.c.b16 %v6361, %v6360
        %v6384 = vpack.c.b16 %v6363, %v6362
        %v6385 = vpack.c.b16 %v6365, %v6364
        %v6386 = vpack.c.b16 %v6367, %v6366
        %v6387 = vpack.c.b16 %v6369, %v6368
        %v6388 = vpack.c.b16 %v6371, %v6370
        %v6389 = vpack.c.b16 %v6372, %v6372
        %v6392 = vsel %vm3308, %v5501, %v5630
        %v6395 = vsel %vm3308, %v5502, %v5632
        %v6398 = vsel %vm3308, %v5503, %v5634
        %v6401 = vsel %vm3308, %v5504, %v5636
        %v6404 = vsel %vm3308, %v5505, %v5638
        %v6407 = vsel %vm3308, %v5506, %v5640
        %v6410 = vsel %vm3308, %v5507, %v5642
        %v6413 = vsel %vm3308, %v5508, %v5644
        %v6416 = vsel %vm3308, %v5509, %v5646
        %v6419 = vsel %vm3308, %v5510, %v5648
        %v6422 = vsel %vm3308, %v5511, %v5650
        %v6425 = vsel %vm3308, %v5512, %v5652
        %v6428 = vsel %vm3308, %v5513, %v5654
        %v6431 = vsel %vm3308, %v5514, %v5656
        %v6434 = vsel %vm3308, %v5515, %v5658
        %v6437 = vsel %vm3308, %v5516, %v5660
        %v6440 = vsel %vm3308, %v5517, %v5662
        %v6442 = vsel %vm3360, %v6392, %v5747
        %v6444 = vsel %vm3360, %v6395, %v5749
        %v6446 = vsel %vm3360, %v6398, %v5751
        %v6448 = vsel %vm3360, %v6401, %v5753
        %v6450 = vsel %vm3360, %v6404, %v5755
        %v6452 = vsel %vm3360, %v6407, %v5757
        %v6454 = vsel %vm3360, %v6410, %v5759
        %v6456 = vsel %vm3360, %v6413, %v5761
        %v6458 = vsel %vm3360, %v6416, %v5763
        %v6460 = vsel %vm3360, %v6419, %v5765
        %v6462 = vsel %vm3360, %v6422, %v5767
        %v6464 = vsel %vm3360, %v6425, %v5769
        %v6466 = vsel %vm3360, %v6428, %v5771
        %v6468 = vsel %vm3360, %v6431, %v5773
        %v6470 = vsel %vm3360, %v6434, %v5775
        %v6472 = vsel %vm3360, %v6437, %v5777
        %v6474 = vsel %vm3360, %v6440, %v5779
        %v6476 = vsel %vm3395, %v6442, %v5864
        %v6478 = vsel %vm3395, %v6444, %v5866
        %v6480 = vsel %vm3395, %v6446, %v5868
        %v6482 = vsel %vm3395, %v6448, %v5870
        %v6484 = vsel %vm3395, %v6450, %v5872
        %v6486 = vsel %vm3395, %v6452, %v5874
        %v6488 = vsel %vm3395, %v6454, %v5876
        %v6490 = vsel %vm3395, %v6456, %v5878
        %v6492 = vsel %vm3395, %v6458, %v5880
        %v6494 = vsel %vm3395, %v6460, %v5882
        %v6496 = vsel %vm3395, %v6462, %v5884
        %v6498 = vsel %vm3395, %v6464, %v5886
        %v6500 = vsel %vm3395, %v6466, %v5888
        %v6502 = vsel %vm3395, %v6468, %v5890
        %v6504 = vsel %vm3395, %v6470, %v5892
        %v6506 = vsel %vm3395, %v6472, %v5894
        %v6508 = vsel %vm3395, %v6474, %v5896
        %v6511 = vsel %vm3308, %v5897, %v6012
        %v6514 = vsel %vm3308, %v5899, %v6014
        %v6517 = vsel %vm3308, %v5901, %v6016
        %v6520 = vsel %vm3308, %v5903, %v6018
        %v6523 = vsel %vm3308, %v5905, %v6020
        %v6526 = vsel %vm3308, %v5907, %v6022
        %v6529 = vsel %vm3308, %v5909, %v6024
        %v6532 = vsel %vm3308, %v5911, %v6026
        %v6535 = vsel %vm3308, %v5913, %v6028
        %v6538 = vsel %vm3308, %v5915, %v6030
        %v6541 = vsel %vm3308, %v5917, %v6032
        %v6544 = vsel %vm3308, %v5919, %v6034
        %v6547 = vsel %vm3308, %v5921, %v6036
        %v6550 = vsel %vm3308, %v5923, %v6038
        %v6553 = vsel %vm3308, %v5925, %v6040
        %v6556 = vsel %vm3308, %v5927, %v6042
        %v6559 = vsel %vm3308, %v5926, %v6044
        %v6561 = vsel %vm3360, %v6511, %v6129
        %v6563 = vsel %vm3360, %v6514, %v6131
        %v6565 = vsel %vm3360, %v6517, %v6133
        %v6567 = vsel %vm3360, %v6520, %v6135
        %v6569 = vsel %vm3360, %v6523, %v6137
        %v6571 = vsel %vm3360, %v6526, %v6139
        %v6573 = vsel %vm3360, %v6529, %v6141
        %v6575 = vsel %vm3360, %v6532, %v6143
        %v6577 = vsel %vm3360, %v6535, %v6145
        %v6579 = vsel %vm3360, %v6538, %v6147
        %v6581 = vsel %vm3360, %v6541, %v6149
        %v6583 = vsel %vm3360, %v6544, %v6151
        %v6585 = vsel %vm3360, %v6547, %v6153
        %v6587 = vsel %vm3360, %v6550, %v6155
        %v6589 = vsel %vm3360, %v6553, %v6157
        %v6591 = vsel %vm3360, %v6556, %v6159
        %v6593 = vsel %vm3360, %v6559, %v6161
        %v6595 = vsel %vm3395, %v6561, %v6274
        %v6597 = vsel %vm3395, %v6563, %v6276
        %v6599 = vsel %vm3395, %v6565, %v6278
        %v6601 = vsel %vm3395, %v6567, %v6280
        %v6603 = vsel %vm3395, %v6569, %v6282
        %v6605 = vsel %vm3395, %v6571, %v6284
        %v6607 = vsel %vm3395, %v6573, %v6286
        %v6609 = vsel %vm3395, %v6575, %v6288
        %v6611 = vsel %vm3395, %v6577, %v6290
        %v6613 = vsel %vm3395, %v6579, %v6292
        %v6615 = vsel %vm3395, %v6581, %v6294
        %v6617 = vsel %vm3395, %v6583, %v6296
        %v6619 = vsel %vm3395, %v6585, %v6298
        %v6621 = vsel %vm3395, %v6587, %v6300
        %v6623 = vsel %vm3395, %v6589, %v6302
        %v6625 = vsel %vm3395, %v6591, %v6304
        %v6627 = vsel %vm3395, %v6593, %v6306
        %s6628 = scalar_lea.vmem [#allocation3], 144
        %v6629 = vld [vmem:[%s6628] sm:$0xf]
        %v6630 = vld [vmem:[%s6628 + $0x4] sm:$0xf]
        %v6631 = vld [vmem:[%s6628 + $0x8] sm:$0xf]
        %v6632 = vld [vmem:[%s6628 + $0xc] sm:$0xf]
        %v6633 = vld [vmem:[%s6628 + $0x10] sm:$0xf]
        %v6634 = vld [vmem:[%s6628 + $0x14] sm:$0xf]
        %v6635 = vld [vmem:[%s6628 + $0x18] sm:$0xf]
        %v6636 = vld [vmem:[%s6628 + $0x1c] sm:$0xf]
        %v6637 = vld [vmem:[%s6628 + $0x20] sm:$0xf]
        %v6638 = vld [vmem:[%s6628 + $0x24] sm:$0xf]
        %v6639 = vld [vmem:[%s6628 + $0x28] sm:$0xf]
        %v6640 = vld [vmem:[%s6628 + $0x2c] sm:$0xf]
        %v6641 = vld [vmem:[%s6628 + $0x30] sm:$0xf]
        %v6642 = vld [vmem:[%s6628 + $0x34] sm:$0xf]
        %v6643 = vld [vmem:[%s6628 + $0x38] sm:$0xf]
        %v6644 = vld [vmem:[%s6628 + $0x3c] sm:$0xf]
        %v6645 = vld [vmem:[%s6628 + $0x40] sm:$0xf]
        %v6646 = vld [vmem:[%s6628 + $0x44] sm:$0xf]
        %v6647 = vld [vmem:[%s6628 + $0x48] sm:$0xf]
        %v6648 = vld [vmem:[%s6628 + $0x4c] sm:$0xf]
        %v6649 = vld [vmem:[%s6628 + $0x50] sm:$0xf]
        %v6650 = vld [vmem:[%s6628 + $0x54] sm:$0xf]
        %v6651 = vld [vmem:[%s6628 + $0x58] sm:$0xf]
        %v6652 = vld [vmem:[%s6628 + $0x5c] sm:$0xf]
        %v6653 = vld [vmem:[%s6628 + $0x60] sm:$0xf]
        %v6654 = vld [vmem:[%s6628 + $0x64] sm:$0xf]
        %v6655 = vld [vmem:[%s6628 + $0x68] sm:$0xf]
        %v6656 = vld [vmem:[%s6628 + $0x6c] sm:$0xf]
        %v6657 = vld [vmem:[%s6628 + $0x70] sm:$0xf]
        %v6658 = vld [vmem:[%s6628 + $0x74] sm:$0xf]
        %v6659 = vld [vmem:[%s6628 + $0x78] sm:$0xf]
        %v6660 = vld [vmem:[%s6628 + $0x7c] sm:$0xf]
        %v6661 = vld [vmem:[%s6628 + $0x80] sm:$0xf]
        %v6662 = vld [vmem:[%s6628 + $0x84] sm:$0xf]
        %v6663 = vld [vmem:[%s6628 + $0x88] sm:$0xf]
        %v6664 = vld [vmem:[%s6628 + $0x8c] sm:$0xf]
        %s6665 = scalar_lea.vmem %s4, 1
        %v6666 = vld [vmem:[%s6665] sm:$0x1]
        %v6668 = vlaneseq
        %v6669 = vshrl.u32 %v6668, 7
        %v6670 = vsub.s32 0, %v6669
        %v6671 = vrot.slane %v6666, %v6670
        %v6707 = vrot.slane %v6476, 2
        %v6708 = vrot.slane %v6478, 2
        %v6709 = vsel %vm2622, %v6707, %v6708
        %v6710 = vrot.slane %v6595, 2
        %v6711 = vrot.slane %v6597, 2
        %v6712 = vsel %vm2622, %v6710, %v6711
        %v6713 = vrot.slane %v6373, 2
        %v6714 = vrot.slane %v6374, 2
        %v6715 = vsel %vm2622, %v6713, %v6714
        %v6716 = vrot.slane %v6480, 2
        %v6717 = vsel %vm2622, %v6708, %v6716
        %v6718 = vrot.slane %v6599, 2
        %v6719 = vsel %vm2622, %v6711, %v6718
        %v6720 = vrot.slane %v6375, 2
        %v6721 = vsel %vm2622, %v6714, %v6720
        %v6722 = vrot.slane %v6482, 2
        %v6723 = vsel %vm2622, %v6716, %v6722
        %v6724 = vrot.slane %v6601, 2
        %v6725 = vsel %vm2622, %v6718, %v6724
        %v6726 = vrot.slane %v6376, 2
        %v6727 = vsel %vm2622, %v6720, %v6726
        %v6728 = vrot.slane %v6484, 2
        %v6729 = vsel %vm2622, %v6722, %v6728
        %v6730 = vrot.slane %v6603, 2
        %v6731 = vsel %vm2622, %v6724, %v6730
        %v6732 = vrot.slane %v6377, 2
        %v6733 = vsel %vm2622, %v6726, %v6732
        %v6734 = vrot.slane %v6486, 2
        %v6735 = vsel %vm2622, %v6728, %v6734
        %v6736 = vrot.slane %v6605, 2
        %v6737 = vsel %vm2622, %v6730, %v6736
        %v6738 = vrot.slane %v6378, 2
        %v6739 = vsel %vm2622, %v6732, %v6738
        %v6740 = vrot.slane %v6488, 2
        %v6741 = vsel %vm2622, %v6734, %v6740
        %v6742 = vrot.slane %v6607, 2
        %v6743 = vsel %vm2622, %v6736, %v6742
        %v6744 = vrot.slane %v6379, 2
        %v6745 = vsel %vm2622, %v6738, %v6744
        %v6746 = vrot.slane %v6490, 2
        %v6747 = vsel %vm2622, %v6740, %v6746
        %v6748 = vrot.slane %v6609, 2
        %v6749 = vsel %vm2622, %v6742, %v6748
        %v6750 = vrot.slane %v6380, 2
        %v6751 = vsel %vm2622, %v6744, %v6750
        %v6752 = vrot.slane %v6492, 2
        %v6753 = vsel %vm2622, %v6746, %v6752
        %v6754 = vrot.slane %v6611, 2
        %v6755 = vsel %vm2622, %v6748, %v6754
        %v6756 = vrot.slane %v6381, 2
        %v6757 = vsel %vm2622, %v6750, %v6756
        %v6758 = vrot.slane %v6494, 2
        %v6759 = vsel %vm2622, %v6752, %v6758
        %v6760 = vrot.slane %v6613, 2
        %v6761 = vsel %vm2622, %v6754, %v6760
        %v6762 = vrot.slane %v6382, 2
        %v6763 = vsel %vm2622, %v6756, %v6762
        %v6764 = vrot.slane %v6496, 2
        %v6765 = vsel %vm2622, %v6758, %v6764
        %v6766 = vrot.slane %v6615, 2
        %v6767 = vsel %vm2622, %v6760, %v6766
        %v6768 = vrot.slane %v6383, 2
        %v6769 = vsel %vm2622, %v6762, %v6768
        %v6770 = vrot.slane %v6498, 2
        %v6771 = vsel %vm2622, %v6764, %v6770
        %v6772 = vrot.slane %v6617, 2
        %v6773 = vsel %vm2622, %v6766, %v6772
        %v6774 = vrot.slane %v6384, 2
        %v6775 = vsel %vm2622, %v6768, %v6774
        %v6776 = vrot.slane %v6500, 2
        %v6777 = vsel %vm2622, %v6770, %v6776
        %v6778 = vrot.slane %v6619, 2
        %v6779 = vsel %vm2622, %v6772, %v6778
        %v6780 = vrot.slane %v6385, 2
        %v6781 = vsel %vm2622, %v6774, %v6780
        %v6782 = vrot.slane %v6502, 2
        %v6783 = vsel %vm2622, %v6776, %v6782
        %v6784 = vrot.slane %v6621, 2
        %v6785 = vsel %vm2622, %v6778, %v6784
        %v6786 = vrot.slane %v6386, 2
        %v6787 = vsel %vm2622, %v6780, %v6786
        %v6788 = vrot.slane %v6504, 2
        %v6789 = vsel %vm2622, %v6782, %v6788
        %v6790 = vrot.slane %v6623, 2
        %v6791 = vsel %vm2622, %v6784, %v6790
        %v6792 = vrot.slane %v6387, 2
        %v6793 = vsel %vm2622, %v6786, %v6792
        %v6794 = vrot.slane %v6506, 2
        %v6795 = vsel %vm2622, %v6788, %v6794
        %v6796 = vrot.slane %v6625, 2
        %v6797 = vsel %vm2622, %v6790, %v6796
        %v6798 = vrot.slane %v6388, 2
        %v6799 = vsel %vm2622, %v6792, %v6798
        %v6800 = vrot.slane %v6508, 2
        %v6801 = vsel %vm2622, %v6794, %v6800
        %v6802 = vrot.slane %v6627, 2
        %v6803 = vsel %vm2622, %v6796, %v6802
        %v6804 = vrot.slane %v6389, 2
        %v6805 = vsel %vm2622, %v6798, %v6804
        %v6874 = vunpack.c.l.b16 %v6629
        %v6875 = vunpack.c.l.b16 %v6630
        %v6876 = vunpack.c.l.b16 %v6631
        %v6877 = vunpack.c.l.b16 %v6632
        %v6878 = vunpack.c.l.b16 %v6633
        %v6879 = vunpack.c.l.b16 %v6634
        %v6880 = vunpack.c.l.b16 %v6635
        %v6881 = vunpack.c.l.b16 %v6636
        %v6882 = vunpack.c.l.b16 %v6637
        %v6883 = vunpack.c.l.b16 %v6638
        %v6884 = vunpack.c.l.b16 %v6639
        %v6885 = vunpack.c.l.b16 %v6640
        %v6886 = vunpack.c.l.b16 %v6641
        %v6887 = vunpack.c.l.b16 %v6642
        %v6888 = vunpack.c.l.b16 %v6643
        %v6889 = vunpack.c.l.b16 %v6644
        %v6890 = vunpack.c.l.b16 %v6645
        %v6891 = vunpack.c.l.b16 %v6646
        %v6892 = vunpack.c.l.b16 %v6647
        %v6893 = vunpack.c.l.b16 %v6648
        %v6894 = vunpack.c.l.b16 %v6649
        %v6895 = vunpack.c.l.b16 %v6650
        %v6896 = vunpack.c.l.b16 %v6651
        %v6897 = vunpack.c.l.b16 %v6652
        %v6898 = vunpack.c.l.b16 %v6653
        %v6899 = vunpack.c.l.b16 %v6654
        %v6900 = vunpack.c.l.b16 %v6655
        %v6901 = vunpack.c.l.b16 %v6656
        %v6902 = vunpack.c.l.b16 %v6657
        %v6903 = vunpack.c.l.b16 %v6658
        %v6904 = vunpack.c.l.b16 %v6659
        %v6905 = vunpack.c.l.b16 %v6660
        %v6906 = vunpack.c.l.b16 %v6661
        %v6907 = vunpack.c.l.b16 %v6662
        %v6908 = vunpack.c.l.b16 %v6663
        %v6909 = vunpack.c.l.b16 %v6664
        %v6910 = vpack.c.b16 %v6875, %v6874
        %v6911 = vpack.c.b16 %v6877, %v6876
        %v6912 = vpack.c.b16 %v6879, %v6878
        %v6913 = vpack.c.b16 %v6881, %v6880
        %v6914 = vpack.c.b16 %v6883, %v6882
        %v6915 = vpack.c.b16 %v6885, %v6884
        %v6916 = vpack.c.b16 %v6887, %v6886
        %v6917 = vpack.c.b16 %v6889, %v6888
        %v6918 = vpack.c.b16 %v6891, %v6890
        %v6919 = vpack.c.b16 %v6893, %v6892
        %v6920 = vpack.c.b16 %v6895, %v6894
        %v6921 = vpack.c.b16 %v6897, %v6896
        %v6922 = vpack.c.b16 %v6899, %v6898
        %v6923 = vpack.c.b16 %v6901, %v6900
        %v6924 = vpack.c.b16 %v6903, %v6902
        %v6925 = vpack.c.b16 %v6905, %v6904
        %v6926 = vpack.c.b16 %v6907, %v6906
        %v6927 = vpack.c.b16 %v6909, %v6908
        %v6947 = vsel %vm3308, %v6715, 0
        %v6950 = vsel %vm3308, %v6721, 0
        %v6953 = vsel %vm3308, %v6727, 0
        %v6956 = vsel %vm3308, %v6733, 0
        %v6959 = vsel %vm3308, %v6739, 0
        %v6962 = vsel %vm3308, %v6745, 0
        %v6965 = vsel %vm3308, %v6751, 0
        %v6968 = vsel %vm3308, %v6757, 0
        %v6971 = vsel %vm3308, %v6763, 0
        %v6974 = vsel %vm3308, %v6769, 0
        %v6977 = vsel %vm3308, %v6775, 0
        %v6980 = vsel %vm3308, %v6781, 0
        %v6983 = vsel %vm3308, %v6787, 0
        %v6986 = vsel %vm3308, %v6793, 0
        %v6989 = vsel %vm3308, %v6799, 0
        %v6992 = vsel %vm3308, %v6805, 0
        %6994 = vmatprep.subr.bf16.mxu0 0
        %6995 = vmatpush1.bf16.msra.mxu0 %v6917
        %6996 = vmatprep.subr.bf16.mxu0 0
        %6997 = vmatpush1.bf16.msra.mxu0 %v6916
        %6998 = vmatprep.subr.bf16.mxu0 0
        %6999 = vmatpush1.bf16.msra.mxu0 %v6915
        %7000 = vmatprep.subr.bf16.mxu0 0
        %7001 = vmatpush1.bf16.msra.mxu0 %v6914
        %7002 = vmatprep.subr.bf16.mxu0 0
        %7003 = vmatpush1.bf16.msra.mxu0 %v6913
        %7004 = vmatprep.subr.bf16.mxu0 0
        %7005 = vmatpush1.bf16.msra.mxu0 %v6912
        %7006 = vmatprep.subr.bf16.mxu0 0
        %7007 = vmatpush1.bf16.msra.mxu0 %v6911
        %7008 = vmatprep.subr.bf16.mxu0 0
        %7009 = vmatpush1.bf16.msra.mxu0 %v6910
        %7010 = vmatprep.subr.bf16.mxu0 0
        %7011 = vmatpush2.bf16.msra.mxu0 %v6925
        %7012 = vmatprep.subr.bf16.mxu0 0
        %7013 = vmatpush2.bf16.msra.mxu0 %v6924
        %7014 = vmatprep.subr.bf16.mxu0 0
        %7015 = vmatpush2.bf16.msra.mxu0 %v6923
        %7016 = vmatprep.subr.bf16.mxu0 0
        %7017 = vmatpush2.bf16.msra.mxu0 %v6922
        %7018 = vmatprep.subr.bf16.mxu0 0
        %7019 = vmatpush2.bf16.msra.mxu0 %v6921
        %7020 = vmatprep.subr.bf16.mxu0 0
        %7021 = vmatpush2.bf16.msra.mxu0 %v6920
        %7022 = vmatprep.subr.bf16.mxu0 0
        %7023 = vmatpush2.bf16.msra.mxu0 %v6919
        %7024 = vmatprep.subr.bf16.mxu0 0
        %7025 = vmatpush2.bf16.msra.mxu0 %v6918
        %7026 = vmatprep.mubr.bf16.mxu0 %v6712
        %7027 = vmatmul.mubr.bf16.gmra.mxu0 %v6709
        %v7028 = vpop.f32.mrf.mxu0
        %v7029 = vadd.f32 %v6671, %v7028
        %v7030 = vpop.f32.mrf.mxu0
        %v7031 = vpop.f32.mrf.mxu0
        %v7032 = vadd.f32 %v6671, %v7031
        %v7033 = vpop.f32.mrf.mxu0
        %7034 = vmatprep.mubr.bf16.mxu0 %v6719
        %7035 = vmatmul.mubr.bf16.gmra.mxu0 %v6717
        %v7036 = vpop.f32.mrf.mxu0
        %v7037 = vadd.f32 %v6671, %v7036
        %v7038 = vpop.f32.mrf.mxu0
        %v7039 = vpop.f32.mrf.mxu0
        %v7040 = vadd.f32 %v6671, %v7039
        %v7041 = vpop.f32.mrf.mxu0
        %7042 = vmatprep.mubr.bf16.mxu0 %v6725
        %7043 = vmatmul.mubr.bf16.gmra.mxu0 %v6723
        %v7044 = vpop.f32.mrf.mxu0
        %v7045 = vadd.f32 %v6671, %v7044
        %v7046 = vpop.f32.mrf.mxu0
        %v7047 = vpop.f32.mrf.mxu0
        %v7048 = vadd.f32 %v6671, %v7047
        %v7049 = vpop.f32.mrf.mxu0
        %7050 = vmatprep.mubr.bf16.mxu0 %v6731
        %7051 = vmatmul.mubr.bf16.gmra.mxu0 %v6729
        %v7052 = vpop.f32.mrf.mxu0
        %v7053 = vadd.f32 %v6671, %v7052
        %v7054 = vpop.f32.mrf.mxu0
        %v7055 = vpop.f32.mrf.mxu0
        %v7056 = vadd.f32 %v6671, %v7055
        %v7057 = vpop.f32.mrf.mxu0
        %7058 = vmatprep.mubr.bf16.mxu0 %v6737
        %7059 = vmatmul.mubr.bf16.gmra.mxu0 %v6735
        %v7060 = vpop.f32.mrf.mxu0
        %v7061 = vadd.f32 %v6671, %v7060
        %v7062 = vpop.f32.mrf.mxu0
        %v7063 = vpop.f32.mrf.mxu0
        %v7064 = vadd.f32 %v6671, %v7063
        %v7065 = vpop.f32.mrf.mxu0
        %7066 = vmatprep.mubr.bf16.mxu0 %v6743
        %7067 = vmatmul.mubr.bf16.gmra.mxu0 %v6741
        %v7068 = vpop.f32.mrf.mxu0
        %v7069 = vadd.f32 %v6671, %v7068
        %v7070 = vpop.f32.mrf.mxu0
        %v7071 = vpop.f32.mrf.mxu0
        %v7072 = vadd.f32 %v6671, %v7071
        %v7073 = vpop.f32.mrf.mxu0
        %7074 = vmatprep.mubr.bf16.mxu0 %v6749
        %7075 = vmatmul.mubr.bf16.gmra.mxu0 %v6747
        %v7076 = vpop.f32.mrf.mxu0
        %v7077 = vadd.f32 %v6671, %v7076
        %v7078 = vpop.f32.mrf.mxu0
        %v7079 = vpop.f32.mrf.mxu0
        %v7080 = vadd.f32 %v6671, %v7079
        %v7081 = vpop.f32.mrf.mxu0
        %7082 = vmatprep.mubr.bf16.mxu0 %v6755
        %7083 = vmatmul.mubr.bf16.gmra.mxu0 %v6753
        %v7084 = vpop.f32.mrf.mxu0
        %v7085 = vadd.f32 %v6671, %v7084
        %v7086 = vpop.f32.mrf.mxu0
        %v7087 = vpop.f32.mrf.mxu0
        %v7088 = vadd.f32 %v6671, %v7087
        %v7089 = vpop.f32.mrf.mxu0
        %7090 = vmatprep.mubr.bf16.mxu0 %v6761
        %7091 = vmatmul.mubr.bf16.gmra.mxu0 %v6759
        %v7092 = vpop.f32.mrf.mxu0
        %v7093 = vadd.f32 %v6671, %v7092
        %v7094 = vpop.f32.mrf.mxu0
        %v7095 = vpop.f32.mrf.mxu0
        %v7096 = vadd.f32 %v6671, %v7095
        %v7097 = vpop.f32.mrf.mxu0
        %7098 = vmatprep.mubr.bf16.mxu0 %v6767
        %7099 = vmatmul.mubr.bf16.gmra.mxu0 %v6765
        %v7100 = vpop.f32.mrf.mxu0
        %v7101 = vadd.f32 %v6671, %v7100
        %v7102 = vpop.f32.mrf.mxu0
        %v7103 = vpop.f32.mrf.mxu0
        %v7104 = vadd.f32 %v6671, %v7103
        %v7105 = vpop.f32.mrf.mxu0
        %7106 = vmatprep.mubr.bf16.mxu0 %v6773
        %7107 = vmatmul.mubr.bf16.gmra.mxu0 %v6771
        %v7108 = vpop.f32.mrf.mxu0
        %v7109 = vadd.f32 %v6671, %v7108
        %v7110 = vpop.f32.mrf.mxu0
        %v7111 = vpop.f32.mrf.mxu0
        %v7112 = vadd.f32 %v6671, %v7111
        %v7113 = vpop.f32.mrf.mxu0
        %7114 = vmatprep.mubr.bf16.mxu0 %v6779
        %7115 = vmatmul.mubr.bf16.gmra.mxu0 %v6777
        %v7116 = vpop.f32.mrf.mxu0
        %v7117 = vadd.f32 %v6671, %v7116
        %v7118 = vpop.f32.mrf.mxu0
        %v7119 = vpop.f32.mrf.mxu0
        %v7120 = vadd.f32 %v6671, %v7119
        %v7121 = vpop.f32.mrf.mxu0
        %7122 = vmatprep.mubr.bf16.mxu0 %v6785
        %7123 = vmatmul.mubr.bf16.gmra.mxu0 %v6783
        %v7124 = vpop.f32.mrf.mxu0
        %v7125 = vadd.f32 %v6671, %v7124
        %v7126 = vpop.f32.mrf.mxu0
        %v7127 = vpop.f32.mrf.mxu0
        %v7128 = vadd.f32 %v6671, %v7127
        %v7129 = vpop.f32.mrf.mxu0
        %7130 = vmatprep.mubr.bf16.mxu0 %v6791
        %7131 = vmatmul.mubr.bf16.gmra.mxu0 %v6789
        %v7132 = vpop.f32.mrf.mxu0
        %v7133 = vadd.f32 %v6671, %v7132
        %v7134 = vpop.f32.mrf.mxu0
        %v7135 = vpop.f32.mrf.mxu0
        %v7136 = vadd.f32 %v6671, %v7135
        %v7137 = vpop.f32.mrf.mxu0
        %7138 = vmatprep.mubr.bf16.mxu0 %v6797
        %7139 = vmatmul.mubr.bf16.gmra.mxu0 %v6795
        %v7140 = vpop.f32.mrf.mxu0
        %v7141 = vadd.f32 %v6671, %v7140
        %v7142 = vpop.f32.mrf.mxu0
        %v7143 = vpop.f32.mrf.mxu0
        %v7144 = vadd.f32 %v6671, %v7143
        %v7145 = vpop.f32.mrf.mxu0
        %7146 = vmatprep.mubr.bf16.mxu0 %v6803
        %7147 = vmatmul.mubr.bf16.gmra.mxu0 %v6801
        %v7148 = vpop.f32.mrf.mxu0
        %v7149 = vadd.f32 %v6671, %v7148
        %v7150 = vpop.f32.mrf.mxu0
        %v7151 = vpop.f32.mrf.mxu0
        %v7152 = vadd.f32 %v6671, %v7151
        %v7153 = vpop.f32.mrf.mxu0
        %7154 = vdwg.mxu0
        %7155 = vmatprep.subr.bf16.mxu0 0
        %7156 = vmatpush1.bf16.msra.mxu0 0
        %7157 = vmatprep.subr.bf16.mxu0 0
        %7158 = vmatpush1.bf16.msra.mxu0 0
        %7159 = vmatprep.subr.bf16.mxu0 0
        %7160 = vmatpush1.bf16.msra.mxu0 0
        %7161 = vmatprep.subr.bf16.mxu0 0
        %7162 = vmatpush1.bf16.msra.mxu0 0
        %7163 = vmatprep.subr.bf16.mxu0 0
        %7164 = vmatpush1.bf16.msra.mxu0 0
        %7165 = vmatprep.subr.bf16.mxu0 0
        %7166 = vmatpush1.bf16.msra.mxu0 0
        %7167 = vmatprep.subr.bf16.mxu0 0
        %7168 = vmatpush1.bf16.msra.mxu0 %v6927
        %7169 = vmatprep.subr.bf16.mxu0 0
        %7170 = vmatpush1.bf16.msra.mxu0 %v6926
        %7171 = vmatprep.subr.bf16.mxu0 0
        %7172 = vmatpush2.bf16.msra.mxu0 0
        %7173 = vmatprep.subr.bf16.mxu0 0
        %7174 = vmatpush2.bf16.msra.mxu0 0
        %7175 = vmatprep.subr.bf16.mxu0 0
        %7176 = vmatpush2.bf16.msra.mxu0 0
        %7177 = vmatprep.subr.bf16.mxu0 0
        %7178 = vmatpush2.bf16.msra.mxu0 0
        %7179 = vmatprep.subr.bf16.mxu0 0
        %7180 = vmatpush2.bf16.msra.mxu0 0
        %7181 = vmatprep.subr.bf16.mxu0 0
        %7182 = vmatpush2.bf16.msra.mxu0 0
        %7183 = vmatprep.subr.bf16.mxu0 0
        %7184 = vmatpush2.bf16.msra.mxu0 0
        %7185 = vmatprep.subr.bf16.mxu0 0
        %7186 = vmatpush2.bf16.msra.mxu0 0
        %7187 = vmatprep.mubr.bf16.mxu0 0
        %7188 = vmatmul.mubr.bf16.gmra.mxu0 %v6947
        %v7189 = vpop.f32.mrf.mxu0
        %v7190 = vadd.f32 %v7029, %v7189
        %v7191 = vpop.f32.mrf.mxu0
        %v7192 = vpop.f32.mrf.mxu0
        %v7193 = vadd.f32 %v7032, %v7192
        %v7194 = vpop.f32.mrf.mxu0
        %7195 = vmatprep.mubr.bf16.mxu0 0
        %7196 = vmatmul.mubr.bf16.gmra.mxu0 %v6950
        %v7197 = vpop.f32.mrf.mxu0
        %v7198 = vadd.f32 %v7037, %v7197
        %v7199 = vpop.f32.mrf.mxu0
        %v7200 = vpop.f32.mrf.mxu0
        %v7201 = vadd.f32 %v7040, %v7200
        %v7202 = vpop.f32.mrf.mxu0
        %7203 = vmatprep.mubr.bf16.mxu0 0
        %7204 = vmatmul.mubr.bf16.gmra.mxu0 %v6953
        %v7205 = vpop.f32.mrf.mxu0
        %v7206 = vadd.f32 %v7045, %v7205
        %v7207 = vpop.f32.mrf.mxu0
        %v7208 = vpop.f32.mrf.mxu0
        %v7209 = vadd.f32 %v7048, %v7208
        %v7210 = vpop.f32.mrf.mxu0
        %7211 = vmatprep.mubr.bf16.mxu0 0
        %7212 = vmatmul.mubr.bf16.gmra.mxu0 %v6956
        %v7213 = vpop.f32.mrf.mxu0
        %v7214 = vadd.f32 %v7053, %v7213
        %v7215 = vpop.f32.mrf.mxu0
        %v7216 = vpop.f32.mrf.mxu0
        %v7217 = vadd.f32 %v7056, %v7216
        %v7218 = vpop.f32.mrf.mxu0
        %7219 = vmatprep.mubr.bf16.mxu0 0
        %7220 = vmatmul.mubr.bf16.gmra.mxu0 %v6959
        %v7221 = vpop.f32.mrf.mxu0
        %v7222 = vadd.f32 %v7061, %v7221
        %v7223 = vpop.f32.mrf.mxu0
        %v7224 = vpop.f32.mrf.mxu0
        %v7225 = vadd.f32 %v7064, %v7224
        %v7226 = vpop.f32.mrf.mxu0
        %7227 = vmatprep.mubr.bf16.mxu0 0
        %7228 = vmatmul.mubr.bf16.gmra.mxu0 %v6962
        %v7229 = vpop.f32.mrf.mxu0
        %v7230 = vadd.f32 %v7069, %v7229
        %v7231 = vpop.f32.mrf.mxu0
        %v7232 = vpop.f32.mrf.mxu0
        %v7233 = vadd.f32 %v7072, %v7232
        %v7234 = vpop.f32.mrf.mxu0
        %7235 = vmatprep.mubr.bf16.mxu0 0
        %7236 = vmatmul.mubr.bf16.gmra.mxu0 %v6965
        %v7237 = vpop.f32.mrf.mxu0
        %v7238 = vadd.f32 %v7077, %v7237
        %v7239 = vpop.f32.mrf.mxu0
        %v7240 = vpop.f32.mrf.mxu0
        %v7241 = vadd.f32 %v7080, %v7240
        %v7242 = vpop.f32.mrf.mxu0
        %7243 = vmatprep.mubr.bf16.mxu0 0
        %7244 = vmatmul.mubr.bf16.gmra.mxu0 %v6968
        %v7245 = vpop.f32.mrf.mxu0
        %v7246 = vadd.f32 %v7085, %v7245
        %v7247 = vpop.f32.mrf.mxu0
        %v7248 = vpop.f32.mrf.mxu0
        %v7249 = vadd.f32 %v7088, %v7248
        %v7250 = vpop.f32.mrf.mxu0
        %7251 = vmatprep.mubr.bf16.mxu0 0
        %7252 = vmatmul.mubr.bf16.gmra.mxu0 %v6971
        %v7253 = vpop.f32.mrf.mxu0
        %v7254 = vadd.f32 %v7093, %v7253
        %v7255 = vpop.f32.mrf.mxu0
        %v7256 = vpop.f32.mrf.mxu0
        %v7257 = vadd.f32 %v7096, %v7256
        %v7258 = vpop.f32.mrf.mxu0
        %7259 = vmatprep.mubr.bf16.mxu0 0
        %7260 = vmatmul.mubr.bf16.gmra.mxu0 %v6974
        %v7261 = vpop.f32.mrf.mxu0
        %v7262 = vadd.f32 %v7101, %v7261
        %v7263 = vpop.f32.mrf.mxu0
        %v7264 = vpop.f32.mrf.mxu0
        %v7265 = vadd.f32 %v7104, %v7264
        %v7266 = vpop.f32.mrf.mxu0
        %7267 = vmatprep.mubr.bf16.mxu0 0
        %7268 = vmatmul.mubr.bf16.gmra.mxu0 %v6977
        %v7269 = vpop.f32.mrf.mxu0
        %v7270 = vadd.f32 %v7109, %v7269
        %v7271 = vpop.f32.mrf.mxu0
        %v7272 = vpop.f32.mrf.mxu0
        %v7273 = vadd.f32 %v7112, %v7272
        %v7274 = vpop.f32.mrf.mxu0
        %7275 = vmatprep.mubr.bf16.mxu0 0
        %7276 = vmatmul.mubr.bf16.gmra.mxu0 %v6980
        %v7277 = vpop.f32.mrf.mxu0
        %v7278 = vadd.f32 %v7117, %v7277
        %v7279 = vpop.f32.mrf.mxu0
        %v7280 = vpop.f32.mrf.mxu0
        %v7281 = vadd.f32 %v7120, %v7280
        %v7282 = vpop.f32.mrf.mxu0
        %7283 = vmatprep.mubr.bf16.mxu0 0
        %7284 = vmatmul.mubr.bf16.gmra.mxu0 %v6983
        %v7285 = vpop.f32.mrf.mxu0
        %v7286 = vadd.f32 %v7125, %v7285
        %v7287 = vpop.f32.mrf.mxu0
        %v7288 = vpop.f32.mrf.mxu0
        %v7289 = vadd.f32 %v7128, %v7288
        %v7290 = vpop.f32.mrf.mxu0
        %7291 = vmatprep.mubr.bf16.mxu0 0
        %7292 = vmatmul.mubr.bf16.gmra.mxu0 %v6986
        %v7293 = vpop.f32.mrf.mxu0
        %v7294 = vadd.f32 %v7133, %v7293
        %v7295 = vpop.f32.mrf.mxu0
        %v7296 = vpop.f32.mrf.mxu0
        %v7297 = vadd.f32 %v7136, %v7296
        %v7298 = vpop.f32.mrf.mxu0
        %7299 = vmatprep.mubr.bf16.mxu0 0
        %7300 = vmatmul.mubr.bf16.gmra.mxu0 %v6989
        %v7301 = vpop.f32.mrf.mxu0
        %v7302 = vadd.f32 %v7141, %v7301
        %v7303 = vpop.f32.mrf.mxu0
        %v7304 = vpop.f32.mrf.mxu0
        %v7305 = vadd.f32 %v7144, %v7304
        %v7306 = vpop.f32.mrf.mxu0
        %7307 = vmatprep.mubr.bf16.mxu0 0
        %7308 = vmatmul.mubr.bf16.gmra.mxu0 %v6992
        %v7309 = vpop.f32.mrf.mxu0
        %v7310 = vadd.f32 %v7149, %v7309
        %v7311 = vpop.f32.mrf.mxu0
        %v7312 = vpop.f32.mrf.mxu0
        %v7313 = vadd.f32 %v7152, %v7312
        %v7314 = vpop.f32.mrf.mxu0
        %7315 = vdwg.mxu0
        %v7316 = vmax.f32 %v7190, 0.0
        %v7317 = vmax.f32 %v7193, 0.0
        %v7318 = vmax.f32 %v7198, 0.0
        %v7319 = vmax.f32 %v7201, 0.0
        %v7320 = vmax.f32 %v7206, 0.0
        %v7321 = vmax.f32 %v7209, 0.0
        %v7322 = vmax.f32 %v7214, 0.0
        %v7323 = vmax.f32 %v7217, 0.0
        %v7324 = vmax.f32 %v7222, 0.0
        %v7325 = vmax.f32 %v7225, 0.0
        %v7326 = vmax.f32 %v7230, 0.0
        %v7327 = vmax.f32 %v7233, 0.0
        %v7328 = vmax.f32 %v7238, 0.0
        %v7329 = vmax.f32 %v7241, 0.0
        %v7330 = vmax.f32 %v7246, 0.0
        %v7331 = vmax.f32 %v7249, 0.0
        %v7332 = vmax.f32 %v7254, 0.0
        %v7333 = vmax.f32 %v7257, 0.0
        %v7334 = vmax.f32 %v7262, 0.0
        %v7335 = vmax.f32 %v7265, 0.0
        %v7336 = vmax.f32 %v7270, 0.0
        %v7337 = vmax.f32 %v7273, 0.0
        %v7338 = vmax.f32 %v7278, 0.0
        %v7339 = vmax.f32 %v7281, 0.0
        %v7340 = vmax.f32 %v7286, 0.0
        %v7341 = vmax.f32 %v7289, 0.0
        %v7342 = vmax.f32 %v7294, 0.0
        %v7343 = vmax.f32 %v7297, 0.0
        %v7344 = vmax.f32 %v7302, 0.0
        %v7345 = vmax.f32 %v7305, 0.0
        %v7346 = vmax.f32 %v7310, 0.0
        %v7347 = vmax.f32 %v7313, 0.0
        %v7348 = vpack.c.bf16 %v7317, %v7316
        %v7349 = vpack.c.bf16 %v7319, %v7318
        %v7350 = vpack.c.bf16 %v7321, %v7320
        %v7351 = vpack.c.bf16 %v7323, %v7322
        %v7352 = vpack.c.bf16 %v7325, %v7324
        %v7353 = vpack.c.bf16 %v7327, %v7326
        %v7354 = vpack.c.bf16 %v7329, %v7328
        %v7355 = vpack.c.bf16 %v7331, %v7330
        %v7356 = vpack.c.bf16 %v7333, %v7332
        %v7357 = vpack.c.bf16 %v7335, %v7334
        %v7358 = vpack.c.bf16 %v7337, %v7336
        %v7359 = vpack.c.bf16 %v7339, %v7338
        %v7360 = vpack.c.bf16 %v7341, %v7340
        %v7361 = vpack.c.bf16 %v7343, %v7342
        %v7362 = vpack.c.bf16 %v7345, %v7344
        %v7363 = vpack.c.bf16 %v7347, %v7346
        %s7364 = scalar_lea.vmem %s5, 64
        %v7365 = vld [vmem:[%s7364] sm:$0xf]
        %v7366 = vld [vmem:[%s7364 + $0x4] sm:$0xf]
        %v7367 = vld [vmem:[%s7364 + $0x8] sm:$0xf]
        %v7368 = vld [vmem:[%s7364 + $0xc] sm:$0xf]
        %v7369 = vld [vmem:[%s7364 + $0x10] sm:$0xf]
        %v7370 = vld [vmem:[%s7364 + $0x14] sm:$0xf]
        %v7371 = vld [vmem:[%s7364 + $0x18] sm:$0xf]
        %v7372 = vld [vmem:[%s7364 + $0x1c] sm:$0xf]
        %v7373 = vld [vmem:[%s7364 + $0x20] sm:$0xf]
        %v7374 = vld [vmem:[%s7364 + $0x24] sm:$0xf]
        %v7375 = vld [vmem:[%s7364 + $0x28] sm:$0xf]
        %v7376 = vld [vmem:[%s7364 + $0x2c] sm:$0xf]
        %v7377 = vld [vmem:[%s7364 + $0x30] sm:$0xf]
        %v7378 = vld [vmem:[%s7364 + $0x34] sm:$0xf]
        %v7379 = vld [vmem:[%s7364 + $0x38] sm:$0xf]
        %v7380 = vld [vmem:[%s7364 + $0x3c] sm:$0xf]
        %s7381 = scalar_lea.vmem %s6, 1
        %v7382 = vld [vmem:[%s7381] sm:$0x1]
        %v7384 = vlaneseq
        %v7385 = vshrl.u32 %v7384, 7
        %v7386 = vsub.s32 0, %v7385
        %v7387 = vrot.slane %v7382, %v7386
        %v7405 = vunpack.c.l.b16 %v7365
        %v7406 = vunpack.c.l.b16 %v7366
        %v7407 = vunpack.c.l.b16 %v7367
        %v7408 = vunpack.c.l.b16 %v7368
        %v7409 = vunpack.c.l.b16 %v7369
        %v7410 = vunpack.c.l.b16 %v7370
        %v7411 = vunpack.c.l.b16 %v7371
        %v7412 = vunpack.c.l.b16 %v7372
        %v7413 = vunpack.c.l.b16 %v7373
        %v7414 = vunpack.c.l.b16 %v7374
        %v7415 = vunpack.c.l.b16 %v7375
        %v7416 = vunpack.c.l.b16 %v7376
        %v7417 = vunpack.c.l.b16 %v7377
        %v7418 = vunpack.c.l.b16 %v7378
        %v7419 = vunpack.c.l.b16 %v7379
        %v7420 = vunpack.c.l.b16 %v7380
        %v7421 = vpack.c.b16 %v7406, %v7405
        %v7422 = vpack.c.b16 %v7408, %v7407
        %v7423 = vpack.c.b16 %v7410, %v7409
        %v7424 = vpack.c.b16 %v7412, %v7411
        %v7425 = vpack.c.b16 %v7414, %v7413
        %v7426 = vpack.c.b16 %v7416, %v7415
        %v7427 = vpack.c.b16 %v7418, %v7417
        %v7428 = vpack.c.b16 %v7420, %v7419
        %7437 = vmatprep.subr.bf16.mxu0 0
        %7438 = vmatpush1.bf16.msra.mxu0 %v7428
        %7439 = vmatprep.subr.bf16.mxu0 0
        %7440 = vmatpush1.bf16.msra.mxu0 %v7427
        %7441 = vmatprep.subr.bf16.mxu0 0
        %7442 = vmatpush1.bf16.msra.mxu0 %v7426
        %7443 = vmatprep.subr.bf16.mxu0 0
        %7444 = vmatpush1.bf16.msra.mxu0 %v7425
        %7445 = vmatprep.subr.bf16.mxu0 0
        %7446 = vmatpush1.bf16.msra.mxu0 %v7424
        %7447 = vmatprep.subr.bf16.mxu0 0
        %7448 = vmatpush1.bf16.msra.mxu0 %v7423
        %7449 = vmatprep.subr.bf16.mxu0 0
        %7450 = vmatpush1.bf16.msra.mxu0 %v7422
        %7451 = vmatprep.subr.bf16.mxu0 0
        %7452 = vmatpush1.bf16.msra.mxu0 %v7421
        %7453 = vmatprep.subr.bf16.mxu0 0
        %7454 = vmatpush2.bf16.msra.mxu0 0
        %7455 = vmatprep.subr.bf16.mxu0 0
        %7456 = vmatpush2.bf16.msra.mxu0 0
        %7457 = vmatprep.subr.bf16.mxu0 0
        %7458 = vmatpush2.bf16.msra.mxu0 0
        %7459 = vmatprep.subr.bf16.mxu0 0
        %7460 = vmatpush2.bf16.msra.mxu0 0
        %7461 = vmatprep.subr.bf16.mxu0 0
        %7462 = vmatpush2.bf16.msra.mxu0 0
        %7463 = vmatprep.subr.bf16.mxu0 0
        %7464 = vmatpush2.bf16.msra.mxu0 0
        %7465 = vmatprep.subr.bf16.mxu0 0
        %7466 = vmatpush2.bf16.msra.mxu0 0
        %7467 = vmatprep.subr.bf16.mxu0 0
        %7468 = vmatpush2.bf16.msra.mxu0 0
        %7469 = vmatprep.mubr.bf16.mxu0 0
        %7470 = vmatmul.mubr.bf16.gmra.mxu0 %v7348
        %v7471 = vpop.f32.mrf.mxu0
        %v7472 = vadd.f32 %v7387, %v7471
        %v7473 = vpop.f32.mrf.mxu0
        %v7474 = vpop.f32.mrf.mxu0
        %v7475 = vadd.f32 %v7387, %v7474
        %v7476 = vpop.f32.mrf.mxu0
        %7477 = vmatprep.mubr.bf16.mxu0 0
        %7478 = vmatmul.mubr.bf16.gmra.mxu0 %v7349
        %v7479 = vpop.f32.mrf.mxu0
        %v7480 = vadd.f32 %v7387, %v7479
        %v7481 = vpop.f32.mrf.mxu0
        %v7482 = vpop.f32.mrf.mxu0
        %v7483 = vadd.f32 %v7387, %v7482
        %v7484 = vpop.f32.mrf.mxu0
        %7485 = vmatprep.mubr.bf16.mxu0 0
        %7486 = vmatmul.mubr.bf16.gmra.mxu0 %v7350
        %v7487 = vpop.f32.mrf.mxu0
        %v7488 = vadd.f32 %v7387, %v7487
        %v7489 = vpop.f32.mrf.mxu0
        %v7490 = vpop.f32.mrf.mxu0
        %v7491 = vadd.f32 %v7387, %v7490
        %v7492 = vpop.f32.mrf.mxu0
        %7493 = vmatprep.mubr.bf16.mxu0 0
        %7494 = vmatmul.mubr.bf16.gmra.mxu0 %v7351
        %v7495 = vpop.f32.mrf.mxu0
        %v7496 = vadd.f32 %v7387, %v7495
        %v7497 = vpop.f32.mrf.mxu0
        %v7498 = vpop.f32.mrf.mxu0
        %v7499 = vadd.f32 %v7387, %v7498
        %v7500 = vpop.f32.mrf.mxu0
        %7501 = vmatprep.mubr.bf16.mxu0 0
        %7502 = vmatmul.mubr.bf16.gmra.mxu0 %v7352
        %v7503 = vpop.f32.mrf.mxu0
        %v7504 = vadd.f32 %v7387, %v7503
        %v7505 = vpop.f32.mrf.mxu0
        %v7506 = vpop.f32.mrf.mxu0
        %v7507 = vadd.f32 %v7387, %v7506
        %v7508 = vpop.f32.mrf.mxu0
        %7509 = vmatprep.mubr.bf16.mxu0 0
        %7510 = vmatmul.mubr.bf16.gmra.mxu0 %v7353
        %v7511 = vpop.f32.mrf.mxu0
        %v7512 = vadd.f32 %v7387, %v7511
        %v7513 = vpop.f32.mrf.mxu0
        %v7514 = vpop.f32.mrf.mxu0
        %v7515 = vadd.f32 %v7387, %v7514
        %v7516 = vpop.f32.mrf.mxu0
        %7517 = vmatprep.mubr.bf16.mxu0 0
        %7518 = vmatmul.mubr.bf16.gmra.mxu0 %v7354
        %v7519 = vpop.f32.mrf.mxu0
        %v7520 = vadd.f32 %v7387, %v7519
        %v7521 = vpop.f32.mrf.mxu0
        %v7522 = vpop.f32.mrf.mxu0
        %v7523 = vadd.f32 %v7387, %v7522
        %v7524 = vpop.f32.mrf.mxu0
        %7525 = vmatprep.mubr.bf16.mxu0 0
        %7526 = vmatmul.mubr.bf16.gmra.mxu0 %v7355
        %v7527 = vpop.f32.mrf.mxu0
        %v7528 = vadd.f32 %v7387, %v7527
        %v7529 = vpop.f32.mrf.mxu0
        %v7530 = vpop.f32.mrf.mxu0
        %v7531 = vadd.f32 %v7387, %v7530
        %v7532 = vpop.f32.mrf.mxu0
        %7533 = vmatprep.mubr.bf16.mxu0 0
        %7534 = vmatmul.mubr.bf16.gmra.mxu0 %v7356
        %v7535 = vpop.f32.mrf.mxu0
        %v7536 = vadd.f32 %v7387, %v7535
        %v7537 = vpop.f32.mrf.mxu0
        %v7538 = vpop.f32.mrf.mxu0
        %v7539 = vadd.f32 %v7387, %v7538
        %v7540 = vpop.f32.mrf.mxu0
        %7541 = vmatprep.mubr.bf16.mxu0 0
        %7542 = vmatmul.mubr.bf16.gmra.mxu0 %v7357
        %v7543 = vpop.f32.mrf.mxu0
        %v7544 = vadd.f32 %v7387, %v7543
        %v7545 = vpop.f32.mrf.mxu0
        %v7546 = vpop.f32.mrf.mxu0
        %v7547 = vadd.f32 %v7387, %v7546
        %v7548 = vpop.f32.mrf.mxu0
        %7549 = vmatprep.mubr.bf16.mxu0 0
        %7550 = vmatmul.mubr.bf16.gmra.mxu0 %v7358
        %v7551 = vpop.f32.mrf.mxu0
        %v7552 = vadd.f32 %v7387, %v7551
        %v7553 = vpop.f32.mrf.mxu0
        %v7554 = vpop.f32.mrf.mxu0
        %v7555 = vadd.f32 %v7387, %v7554
        %v7556 = vpop.f32.mrf.mxu0
        %7557 = vmatprep.mubr.bf16.mxu0 0
        %7558 = vmatmul.mubr.bf16.gmra.mxu0 %v7359
        %v7559 = vpop.f32.mrf.mxu0
        %v7560 = vadd.f32 %v7387, %v7559
        %v7561 = vpop.f32.mrf.mxu0
        %v7562 = vpop.f32.mrf.mxu0
        %v7563 = vadd.f32 %v7387, %v7562
        %v7564 = vpop.f32.mrf.mxu0
        %7565 = vmatprep.mubr.bf16.mxu0 0
        %7566 = vmatmul.mubr.bf16.gmra.mxu0 %v7360
        %v7567 = vpop.f32.mrf.mxu0
        %v7568 = vadd.f32 %v7387, %v7567
        %v7569 = vpop.f32.mrf.mxu0
        %v7570 = vpop.f32.mrf.mxu0
        %v7571 = vadd.f32 %v7387, %v7570
        %v7572 = vpop.f32.mrf.mxu0
        %7573 = vmatprep.mubr.bf16.mxu0 0
        %7574 = vmatmul.mubr.bf16.gmra.mxu0 %v7361
        %v7575 = vpop.f32.mrf.mxu0
        %v7576 = vadd.f32 %v7387, %v7575
        %v7577 = vpop.f32.mrf.mxu0
        %v7578 = vpop.f32.mrf.mxu0
        %v7579 = vadd.f32 %v7387, %v7578
        %v7580 = vpop.f32.mrf.mxu0
        %7581 = vmatprep.mubr.bf16.mxu0 0
        %7582 = vmatmul.mubr.bf16.gmra.mxu0 %v7362
        %v7583 = vpop.f32.mrf.mxu0
        %v7584 = vadd.f32 %v7387, %v7583
        %v7585 = vpop.f32.mrf.mxu0
        %v7586 = vpop.f32.mrf.mxu0
        %v7587 = vadd.f32 %v7387, %v7586
        %v7588 = vpop.f32.mrf.mxu0
        %7589 = vmatprep.mubr.bf16.mxu0 0
        %7590 = vmatmul.mubr.bf16.gmra.mxu0 %v7363
        %v7591 = vpop.f32.mrf.mxu0
        %v7592 = vadd.f32 %v7387, %v7591
        %v7593 = vpop.f32.mrf.mxu0
        %v7594 = vpop.f32.mrf.mxu0
        %v7595 = vadd.f32 %v7387, %v7594
        %v7596 = vpop.f32.mrf.mxu0
        %7597 = vdwg.mxu0
        %v7598 = vmax.f32 %v7472, 0.0
        %v7599 = vmax.f32 %v7475, 0.0
        %v7600 = vmax.f32 %v7480, 0.0
        %v7601 = vmax.f32 %v7483, 0.0
        %v7602 = vmax.f32 %v7488, 0.0
        %v7603 = vmax.f32 %v7491, 0.0
        %v7604 = vmax.f32 %v7496, 0.0
        %v7605 = vmax.f32 %v7499, 0.0
        %v7606 = vmax.f32 %v7504, 0.0
        %v7607 = vmax.f32 %v7507, 0.0
        %v7608 = vmax.f32 %v7512, 0.0
        %v7609 = vmax.f32 %v7515, 0.0
        %v7610 = vmax.f32 %v7520, 0.0
        %v7611 = vmax.f32 %v7523, 0.0
        %v7612 = vmax.f32 %v7528, 0.0
        %v7613 = vmax.f32 %v7531, 0.0
        %v7614 = vmax.f32 %v7536, 0.0
        %v7615 = vmax.f32 %v7539, 0.0
        %v7616 = vmax.f32 %v7544, 0.0
        %v7617 = vmax.f32 %v7547, 0.0
        %v7618 = vmax.f32 %v7552, 0.0
        %v7619 = vmax.f32 %v7555, 0.0
        %v7620 = vmax.f32 %v7560, 0.0
        %v7621 = vmax.f32 %v7563, 0.0
        %v7622 = vmax.f32 %v7568, 0.0
        %v7623 = vmax.f32 %v7571, 0.0
        %v7624 = vmax.f32 %v7576, 0.0
        %v7625 = vmax.f32 %v7579, 0.0
        %v7626 = vmax.f32 %v7584, 0.0
        %v7627 = vmax.f32 %v7587, 0.0
        %v7628 = vmax.f32 %v7592, 0.0
        %v7629 = vmax.f32 %v7595, 0.0
        %v7630 = vpack.c.bf16 %v7599, %v7598
        %v7631 = vpack.c.bf16 %v7601, %v7600
        %v7632 = vpack.c.bf16 %v7603, %v7602
        %v7633 = vpack.c.bf16 %v7605, %v7604
        %v7634 = vpack.c.bf16 %v7607, %v7606
        %v7635 = vpack.c.bf16 %v7609, %v7608
        %v7636 = vpack.c.bf16 %v7611, %v7610
        %v7637 = vpack.c.bf16 %v7613, %v7612
        %v7638 = vpack.c.bf16 %v7615, %v7614
        %v7639 = vpack.c.bf16 %v7617, %v7616
        %v7640 = vpack.c.bf16 %v7619, %v7618
        %v7641 = vpack.c.bf16 %v7621, %v7620
        %v7642 = vpack.c.bf16 %v7623, %v7622
        %v7643 = vpack.c.bf16 %v7625, %v7624
        %v7644 = vpack.c.bf16 %v7627, %v7626
        %v7645 = vpack.c.bf16 %v7629, %v7628
        %s7646 = scalar_lea.vmem [#allocation3], 288
        %v7647 = vld [vmem:[%s7646 + $0x40] sm:$0xf]
        %v7648 = vld [vmem:[%s7646 + $0x44] sm:$0xf]
        %v7649 = vld [vmem:[%s7646 + $0x48] sm:$0xf]
        %v7650 = vld [vmem:[%s7646 + $0x4c] sm:$0xf]
        %s7651 = scalar_lea.vmem %s4, 2
        %v7652 = vld [vmem:[%s7651] sm:$0x1]
        %v7654 = vlaneseq
        %v7655 = vshrl.u32 %v7654, 7
        %v7656 = vsub.s32 0, %v7655
        %v7657 = vrot.slane %v7652, %v7656
        %v7663 = vunpack.c.l.b16 %v7647
        %v7664 = vunpack.c.l.b16 %v7648
        %v7665 = vunpack.c.l.b16 %v7649
        %v7666 = vunpack.c.l.b16 %v7650
        %v7667 = vpack.c.b16 %v7664, %v7663
        %v7668 = vpack.c.b16 %v7666, %v7665
        %v7672 = vsel %vm3308, %v2464, 0
        %v7675 = vsel %vm3308, %v2465, 0
        %v7678 = vsel %vm3308, %v2466, 0
        %v7681 = vsel %vm3308, %v2467, 0
        %v7684 = vsel %vm3308, %v2468, 0
        %v7687 = vsel %vm3308, %v2469, 0
        %v7690 = vsel %vm3308, %v2470, 0
        %v7693 = vsel %vm3308, %v2471, 0
        %v7696 = vsel %vm3308, %v2472, 0
        %v7699 = vsel %vm3308, %v2473, 0
        %v7702 = vsel %vm3308, %v2831, 0
        %v7705 = vsel %vm3308, %v2832, 0
        %v7708 = vsel %vm3308, %v2833, 0
        %v7711 = vsel %vm3308, %v2834, 0
        %v7714 = vsel %vm3308, %v2835, 0
        %v7717 = vsel %vm3308, %v2836, 0
        %7719 = vmatprep.subr.bf16.mxu0 0
        %7720 = vmatpush1.bf16.msra.mxu0 0
        %7721 = vmatprep.subr.bf16.mxu0 0
        %7722 = vmatpush1.bf16.msra.mxu0 0
        %7723 = vmatprep.subr.bf16.mxu0 0
        %7724 = vmatpush1.bf16.msra.mxu0 0
        %7725 = vmatprep.subr.bf16.mxu0 0
        %7726 = vmatpush1.bf16.msra.mxu0 0
        %7727 = vmatprep.subr.bf16.mxu0 0
        %7728 = vmatpush1.bf16.msra.mxu0 0
        %7729 = vmatprep.subr.bf16.mxu0 0
        %7730 = vmatpush1.bf16.msra.mxu0 0
        %7731 = vmatprep.subr.bf16.mxu0 0
        %7732 = vmatpush1.bf16.msra.mxu0 %v7668
        %7733 = vmatprep.subr.bf16.mxu0 0
        %7734 = vmatpush1.bf16.msra.mxu0 %v7667
        %7735 = vmatprep.subr.bf16.mxu0 0
        %7736 = vmatpush2.bf16.msra.mxu0 0
        %7737 = vmatprep.subr.bf16.mxu0 0
        %7738 = vmatpush2.bf16.msra.mxu0 0
        %7739 = vmatprep.subr.bf16.mxu0 0
        %7740 = vmatpush2.bf16.msra.mxu0 0
        %7741 = vmatprep.subr.bf16.mxu0 0
        %7742 = vmatpush2.bf16.msra.mxu0 0
        %7743 = vmatprep.subr.bf16.mxu0 0
        %7744 = vmatpush2.bf16.msra.mxu0 0
        %7745 = vmatprep.subr.bf16.mxu0 0
        %7746 = vmatpush2.bf16.msra.mxu0 0
        %7747 = vmatprep.subr.bf16.mxu0 0
        %7748 = vmatpush2.bf16.msra.mxu0 0
        %7749 = vmatprep.subr.bf16.mxu0 0
        %7750 = vmatpush2.bf16.msra.mxu0 0
        %7751 = vmatprep.mubr.bf16.mxu0 0
        %7752 = vmatmul.mubr.bf16.gmra.mxu0 %v7672
        %v7753 = vpop.f32.mrf.mxu0
        %v7754 = vadd.f32 %v7657, %v7753
        %v7755 = vpop.f32.mrf.mxu0
        %v7756 = vpop.f32.mrf.mxu0
        %v7757 = vadd.f32 %v7657, %v7756
        %v7758 = vpop.f32.mrf.mxu0
        %7759 = vmatprep.mubr.bf16.mxu0 0
        %7760 = vmatmul.mubr.bf16.gmra.mxu0 %v7675
        %v7761 = vpop.f32.mrf.mxu0
        %v7762 = vadd.f32 %v7657, %v7761
        %v7763 = vpop.f32.mrf.mxu0
        %v7764 = vpop.f32.mrf.mxu0
        %v7765 = vadd.f32 %v7657, %v7764
        %v7766 = vpop.f32.mrf.mxu0
        %7767 = vmatprep.mubr.bf16.mxu0 0
        %7768 = vmatmul.mubr.bf16.gmra.mxu0 %v7678
        %v7769 = vpop.f32.mrf.mxu0
        %v7770 = vadd.f32 %v7657, %v7769
        %v7771 = vpop.f32.mrf.mxu0
        %v7772 = vpop.f32.mrf.mxu0
        %v7773 = vadd.f32 %v7657, %v7772
        %v7774 = vpop.f32.mrf.mxu0
        %7775 = vmatprep.mubr.bf16.mxu0 0
        %7776 = vmatmul.mubr.bf16.gmra.mxu0 %v7681
        %v7777 = vpop.f32.mrf.mxu0
        %v7778 = vadd.f32 %v7657, %v7777
        %v7779 = vpop.f32.mrf.mxu0
        %v7780 = vpop.f32.mrf.mxu0
        %v7781 = vadd.f32 %v7657, %v7780
        %v7782 = vpop.f32.mrf.mxu0
        %7783 = vmatprep.mubr.bf16.mxu0 0
        %7784 = vmatmul.mubr.bf16.gmra.mxu0 %v7684
        %v7785 = vpop.f32.mrf.mxu0
        %v7786 = vadd.f32 %v7657, %v7785
        %v7787 = vpop.f32.mrf.mxu0
        %v7788 = vpop.f32.mrf.mxu0
        %v7789 = vadd.f32 %v7657, %v7788
        %v7790 = vpop.f32.mrf.mxu0
        %7791 = vmatprep.mubr.bf16.mxu0 0
        %7792 = vmatmul.mubr.bf16.gmra.mxu0 %v7687
        %v7793 = vpop.f32.mrf.mxu0
        %v7794 = vadd.f32 %v7657, %v7793
        %v7795 = vpop.f32.mrf.mxu0
        %v7796 = vpop.f32.mrf.mxu0
        %v7797 = vadd.f32 %v7657, %v7796
        %v7798 = vpop.f32.mrf.mxu0
        %7799 = vmatprep.mubr.bf16.mxu0 0
        %7800 = vmatmul.mubr.bf16.gmra.mxu0 %v7690
        %v7801 = vpop.f32.mrf.mxu0
        %v7802 = vadd.f32 %v7657, %v7801
        %v7803 = vpop.f32.mrf.mxu0
        %v7804 = vpop.f32.mrf.mxu0
        %v7805 = vadd.f32 %v7657, %v7804
        %v7806 = vpop.f32.mrf.mxu0
        %7807 = vmatprep.mubr.bf16.mxu0 0
        %7808 = vmatmul.mubr.bf16.gmra.mxu0 %v7693
        %v7809 = vpop.f32.mrf.mxu0
        %v7810 = vadd.f32 %v7657, %v7809
        %v7811 = vpop.f32.mrf.mxu0
        %v7812 = vpop.f32.mrf.mxu0
        %v7813 = vadd.f32 %v7657, %v7812
        %v7814 = vpop.f32.mrf.mxu0
        %7815 = vmatprep.mubr.bf16.mxu0 0
        %7816 = vmatmul.mubr.bf16.gmra.mxu0 %v7696
        %v7817 = vpop.f32.mrf.mxu0
        %v7818 = vadd.f32 %v7657, %v7817
        %v7819 = vpop.f32.mrf.mxu0
        %v7820 = vpop.f32.mrf.mxu0
        %v7821 = vadd.f32 %v7657, %v7820
        %v7822 = vpop.f32.mrf.mxu0
        %7823 = vmatprep.mubr.bf16.mxu0 0
        %7824 = vmatmul.mubr.bf16.gmra.mxu0 %v7699
        %v7825 = vpop.f32.mrf.mxu0
        %v7826 = vadd.f32 %v7657, %v7825
        %v7827 = vpop.f32.mrf.mxu0
        %v7828 = vpop.f32.mrf.mxu0
        %v7829 = vadd.f32 %v7657, %v7828
        %v7830 = vpop.f32.mrf.mxu0
        %7831 = vmatprep.mubr.bf16.mxu0 0
        %7832 = vmatmul.mubr.bf16.gmra.mxu0 %v7702
        %v7833 = vpop.f32.mrf.mxu0
        %v7834 = vadd.f32 %v7657, %v7833
        %v7835 = vpop.f32.mrf.mxu0
        %v7836 = vpop.f32.mrf.mxu0
        %v7837 = vadd.f32 %v7657, %v7836
        %v7838 = vpop.f32.mrf.mxu0
        %7839 = vmatprep.mubr.bf16.mxu0 0
        %7840 = vmatmul.mubr.bf16.gmra.mxu0 %v7705
        %v7841 = vpop.f32.mrf.mxu0
        %v7842 = vadd.f32 %v7657, %v7841
        %v7843 = vpop.f32.mrf.mxu0
        %v7844 = vpop.f32.mrf.mxu0
        %v7845 = vadd.f32 %v7657, %v7844
        %v7846 = vpop.f32.mrf.mxu0
        %7847 = vmatprep.mubr.bf16.mxu0 0
        %7848 = vmatmul.mubr.bf16.gmra.mxu0 %v7708
        %v7849 = vpop.f32.mrf.mxu0
        %v7850 = vadd.f32 %v7657, %v7849
        %v7851 = vpop.f32.mrf.mxu0
        %v7852 = vpop.f32.mrf.mxu0
        %v7853 = vadd.f32 %v7657, %v7852
        %v7854 = vpop.f32.mrf.mxu0
        %7855 = vmatprep.mubr.bf16.mxu0 0
        %7856 = vmatmul.mubr.bf16.gmra.mxu0 %v7711
        %v7857 = vpop.f32.mrf.mxu0
        %v7858 = vadd.f32 %v7657, %v7857
        %v7859 = vpop.f32.mrf.mxu0
        %v7860 = vpop.f32.mrf.mxu0
        %v7861 = vadd.f32 %v7657, %v7860
        %v7862 = vpop.f32.mrf.mxu0
        %7863 = vmatprep.mubr.bf16.mxu0 0
        %7864 = vmatmul.mubr.bf16.gmra.mxu0 %v7714
        %v7865 = vpop.f32.mrf.mxu0
        %v7866 = vadd.f32 %v7657, %v7865
        %v7867 = vpop.f32.mrf.mxu0
        %v7868 = vpop.f32.mrf.mxu0
        %v7869 = vadd.f32 %v7657, %v7868
        %v7870 = vpop.f32.mrf.mxu0
        %7871 = vmatprep.mubr.bf16.mxu0 0
        %7872 = vmatmul.mubr.bf16.gmra.mxu0 %v7717
        %v7873 = vpop.f32.mrf.mxu0
        %v7874 = vadd.f32 %v7657, %v7873
        %v7875 = vpop.f32.mrf.mxu0
        %v7876 = vpop.f32.mrf.mxu0
        %v7877 = vadd.f32 %v7657, %v7876
        %v7878 = vpop.f32.mrf.mxu0
        %7879 = vdwg.mxu0
        %v7880 = vmax.f32 %v7754, 0.0
        %v7881 = vmax.f32 %v7757, 0.0
        %v7882 = vmax.f32 %v7762, 0.0
        %v7883 = vmax.f32 %v7765, 0.0
        %v7884 = vmax.f32 %v7770, 0.0
        %v7885 = vmax.f32 %v7773, 0.0
        %v7886 = vmax.f32 %v7778, 0.0
        %v7887 = vmax.f32 %v7781, 0.0
        %v7888 = vmax.f32 %v7786, 0.0
        %v7889 = vmax.f32 %v7789, 0.0
        %v7890 = vmax.f32 %v7794, 0.0
        %v7891 = vmax.f32 %v7797, 0.0
        %v7892 = vmax.f32 %v7802, 0.0
        %v7893 = vmax.f32 %v7805, 0.0
        %v7894 = vmax.f32 %v7810, 0.0
        %v7895 = vmax.f32 %v7813, 0.0
        %v7896 = vmax.f32 %v7818, 0.0
        %v7897 = vmax.f32 %v7821, 0.0
        %v7898 = vmax.f32 %v7826, 0.0
        %v7899 = vmax.f32 %v7829, 0.0
        %v7900 = vmax.f32 %v7834, 0.0
        %v7901 = vmax.f32 %v7837, 0.0
        %v7902 = vmax.f32 %v7842, 0.0
        %v7903 = vmax.f32 %v7845, 0.0
        %v7904 = vmax.f32 %v7850, 0.0
        %v7905 = vmax.f32 %v7853, 0.0
        %v7906 = vmax.f32 %v7858, 0.0
        %v7907 = vmax.f32 %v7861, 0.0
        %v7908 = vmax.f32 %v7866, 0.0
        %v7909 = vmax.f32 %v7869, 0.0
        %v7910 = vmax.f32 %v7874, 0.0
        %v7911 = vmax.f32 %v7877, 0.0
        %v7912 = vpack.c.bf16 %v7881, %v7880
        %v7913 = vpack.c.bf16 %v7883, %v7882
        %v7914 = vpack.c.bf16 %v7885, %v7884
        %v7915 = vpack.c.bf16 %v7887, %v7886
        %v7916 = vpack.c.bf16 %v7889, %v7888
        %v7917 = vpack.c.bf16 %v7891, %v7890
        %v7918 = vpack.c.bf16 %v7893, %v7892
        %v7919 = vpack.c.bf16 %v7895, %v7894
        %v7920 = vpack.c.bf16 %v7897, %v7896
        %v7921 = vpack.c.bf16 %v7899, %v7898
        %v7922 = vpack.c.bf16 %v7901, %v7900
        %v7923 = vpack.c.bf16 %v7903, %v7902
        %v7924 = vpack.c.bf16 %v7905, %v7904
        %v7925 = vpack.c.bf16 %v7907, %v7906
        %v7926 = vpack.c.bf16 %v7909, %v7908
        %v7927 = vpack.c.bf16 %v7911, %v7910
        %s7928 = scalar_lea.vmem %s5, 128
        %v7929 = vld [vmem:[%s7928] sm:$0xf]
        %v7930 = vld [vmem:[%s7928 + $0x4] sm:$0xf]
        %v7931 = vld [vmem:[%s7928 + $0x8] sm:$0xf]
        %v7932 = vld [vmem:[%s7928 + $0xc] sm:$0xf]
        %v7933 = vld [vmem:[%s7928 + $0x10] sm:$0xf]
        %v7934 = vld [vmem:[%s7928 + $0x14] sm:$0xf]
        %v7935 = vld [vmem:[%s7928 + $0x18] sm:$0xf]
        %v7936 = vld [vmem:[%s7928 + $0x1c] sm:$0xf]
        %v7937 = vld [vmem:[%s7928 + $0x20] sm:$0xf]
        %v7938 = vld [vmem:[%s7928 + $0x24] sm:$0xf]
        %v7939 = vld [vmem:[%s7928 + $0x28] sm:$0xf]
        %v7940 = vld [vmem:[%s7928 + $0x2c] sm:$0xf]
        %v7941 = vld [vmem:[%s7928 + $0x30] sm:$0xf]
        %v7942 = vld [vmem:[%s7928 + $0x34] sm:$0xf]
        %v7943 = vld [vmem:[%s7928 + $0x38] sm:$0xf]
        %v7944 = vld [vmem:[%s7928 + $0x3c] sm:$0xf]
        %s7945 = scalar_lea.vmem %s6, 2
        %v7946 = vld [vmem:[%s7945] sm:$0x1]
        %v7948 = vlaneseq
        %v7949 = vshrl.u32 %v7948, 7
        %v7950 = vsub.s32 0, %v7949
        %v7951 = vrot.slane %v7946, %v7950
        %v7969 = vunpack.c.l.b16 %v7929
        %v7970 = vunpack.c.l.b16 %v7930
        %v7971 = vunpack.c.l.b16 %v7931
        %v7972 = vunpack.c.l.b16 %v7932
        %v7973 = vunpack.c.l.b16 %v7933
        %v7974 = vunpack.c.l.b16 %v7934
        %v7975 = vunpack.c.l.b16 %v7935
        %v7976 = vunpack.c.l.b16 %v7936
        %v7977 = vunpack.c.l.b16 %v7937
        %v7978 = vunpack.c.l.b16 %v7938
        %v7979 = vunpack.c.l.b16 %v7939
        %v7980 = vunpack.c.l.b16 %v7940
        %v7981 = vunpack.c.l.b16 %v7941
        %v7982 = vunpack.c.l.b16 %v7942
        %v7983 = vunpack.c.l.b16 %v7943
        %v7984 = vunpack.c.l.b16 %v7944
        %v7985 = vpack.c.b16 %v7970, %v7969
        %v7986 = vpack.c.b16 %v7972, %v7971
        %v7987 = vpack.c.b16 %v7974, %v7973
        %v7988 = vpack.c.b16 %v7976, %v7975
        %v7989 = vpack.c.b16 %v7978, %v7977
        %v7990 = vpack.c.b16 %v7980, %v7979
        %v7991 = vpack.c.b16 %v7982, %v7981
        %v7992 = vpack.c.b16 %v7984, %v7983
        %8001 = vmatprep.subr.bf16.mxu0 0
        %8002 = vmatpush1.bf16.msra.mxu0 %v7992
        %8003 = vmatprep.subr.bf16.mxu0 0
        %8004 = vmatpush1.bf16.msra.mxu0 %v7991
        %8005 = vmatprep.subr.bf16.mxu0 0
        %8006 = vmatpush1.bf16.msra.mxu0 %v7990
        %8007 = vmatprep.subr.bf16.mxu0 0
        %8008 = vmatpush1.bf16.msra.mxu0 %v7989
        %8009 = vmatprep.subr.bf16.mxu0 0
        %8010 = vmatpush1.bf16.msra.mxu0 %v7988
        %8011 = vmatprep.subr.bf16.mxu0 0
        %8012 = vmatpush1.bf16.msra.mxu0 %v7987
        %8013 = vmatprep.subr.bf16.mxu0 0
        %8014 = vmatpush1.bf16.msra.mxu0 %v7986
        %8015 = vmatprep.subr.bf16.mxu0 0
        %8016 = vmatpush1.bf16.msra.mxu0 %v7985
        %8017 = vmatprep.subr.bf16.mxu0 0
        %8018 = vmatpush2.bf16.msra.mxu0 0
        %8019 = vmatprep.subr.bf16.mxu0 0
        %8020 = vmatpush2.bf16.msra.mxu0 0
        %8021 = vmatprep.subr.bf16.mxu0 0
        %8022 = vmatpush2.bf16.msra.mxu0 0
        %8023 = vmatprep.subr.bf16.mxu0 0
        %8024 = vmatpush2.bf16.msra.mxu0 0
        %8025 = vmatprep.subr.bf16.mxu0 0
        %8026 = vmatpush2.bf16.msra.mxu0 0
        %8027 = vmatprep.subr.bf16.mxu0 0
        %8028 = vmatpush2.bf16.msra.mxu0 0
        %8029 = vmatprep.subr.bf16.mxu0 0
        %8030 = vmatpush2.bf16.msra.mxu0 0
        %8031 = vmatprep.subr.bf16.mxu0 0
        %8032 = vmatpush2.bf16.msra.mxu0 0
        %8033 = vmatprep.mubr.bf16.mxu0 0
        %8034 = vmatmul.mubr.bf16.gmra.mxu0 %v7912
        %v8035 = vpop.f32.mrf.mxu0
        %v8036 = vadd.f32 %v7951, %v8035
        %v8037 = vpop.f32.mrf.mxu0
        %v8038 = vpop.f32.mrf.mxu0
        %v8039 = vadd.f32 %v7951, %v8038
        %v8040 = vpop.f32.mrf.mxu0
        %8041 = vmatprep.mubr.bf16.mxu0 0
        %8042 = vmatmul.mubr.bf16.gmra.mxu0 %v7913
        %v8043 = vpop.f32.mrf.mxu0
        %v8044 = vadd.f32 %v7951, %v8043
        %v8045 = vpop.f32.mrf.mxu0
        %v8046 = vpop.f32.mrf.mxu0
        %v8047 = vadd.f32 %v7951, %v8046
        %v8048 = vpop.f32.mrf.mxu0
        %8049 = vmatprep.mubr.bf16.mxu0 0
        %8050 = vmatmul.mubr.bf16.gmra.mxu0 %v7914
        %v8051 = vpop.f32.mrf.mxu0
        %v8052 = vadd.f32 %v7951, %v8051
        %v8053 = vpop.f32.mrf.mxu0
        %v8054 = vpop.f32.mrf.mxu0
        %v8055 = vadd.f32 %v7951, %v8054
        %v8056 = vpop.f32.mrf.mxu0
        %8057 = vmatprep.mubr.bf16.mxu0 0
        %8058 = vmatmul.mubr.bf16.gmra.mxu0 %v7915
        %v8059 = vpop.f32.mrf.mxu0
        %v8060 = vadd.f32 %v7951, %v8059
        %v8061 = vpop.f32.mrf.mxu0
        %v8062 = vpop.f32.mrf.mxu0
        %v8063 = vadd.f32 %v7951, %v8062
        %v8064 = vpop.f32.mrf.mxu0
        %8065 = vmatprep.mubr.bf16.mxu0 0
        %8066 = vmatmul.mubr.bf16.gmra.mxu0 %v7916
        %v8067 = vpop.f32.mrf.mxu0
        %v8068 = vadd.f32 %v7951, %v8067
        %v8069 = vpop.f32.mrf.mxu0
        %v8070 = vpop.f32.mrf.mxu0
        %v8071 = vadd.f32 %v7951, %v8070
        %v8072 = vpop.f32.mrf.mxu0
        %8073 = vmatprep.mubr.bf16.mxu0 0
        %8074 = vmatmul.mubr.bf16.gmra.mxu0 %v7917
        %v8075 = vpop.f32.mrf.mxu0
        %v8076 = vadd.f32 %v7951, %v8075
        %v8077 = vpop.f32.mrf.mxu0
        %v8078 = vpop.f32.mrf.mxu0
        %v8079 = vadd.f32 %v7951, %v8078
        %v8080 = vpop.f32.mrf.mxu0
        %8081 = vmatprep.mubr.bf16.mxu0 0
        %8082 = vmatmul.mubr.bf16.gmra.mxu0 %v7918
        %v8083 = vpop.f32.mrf.mxu0
        %v8084 = vadd.f32 %v7951, %v8083
        %v8085 = vpop.f32.mrf.mxu0
        %v8086 = vpop.f32.mrf.mxu0
        %v8087 = vadd.f32 %v7951, %v8086
        %v8088 = vpop.f32.mrf.mxu0
        %8089 = vmatprep.mubr.bf16.mxu0 0
        %8090 = vmatmul.mubr.bf16.gmra.mxu0 %v7919
        %v8091 = vpop.f32.mrf.mxu0
        %v8092 = vadd.f32 %v7951, %v8091
        %v8093 = vpop.f32.mrf.mxu0
        %v8094 = vpop.f32.mrf.mxu0
        %v8095 = vadd.f32 %v7951, %v8094
        %v8096 = vpop.f32.mrf.mxu0
        %8097 = vmatprep.mubr.bf16.mxu0 0
        %8098 = vmatmul.mubr.bf16.gmra.mxu0 %v7920
        %v8099 = vpop.f32.mrf.mxu0
        %v8100 = vadd.f32 %v7951, %v8099
        %v8101 = vpop.f32.mrf.mxu0
        %v8102 = vpop.f32.mrf.mxu0
        %v8103 = vadd.f32 %v7951, %v8102
        %v8104 = vpop.f32.mrf.mxu0
        %8105 = vmatprep.mubr.bf16.mxu0 0
        %8106 = vmatmul.mubr.bf16.gmra.mxu0 %v7921
        %v8107 = vpop.f32.mrf.mxu0
        %v8108 = vadd.f32 %v7951, %v8107
        %v8109 = vpop.f32.mrf.mxu0
        %v8110 = vpop.f32.mrf.mxu0
        %v8111 = vadd.f32 %v7951, %v8110
        %v8112 = vpop.f32.mrf.mxu0
        %8113 = vmatprep.mubr.bf16.mxu0 0
        %8114 = vmatmul.mubr.bf16.gmra.mxu0 %v7922
        %v8115 = vpop.f32.mrf.mxu0
        %v8116 = vadd.f32 %v7951, %v8115
        %v8117 = vpop.f32.mrf.mxu0
        %v8118 = vpop.f32.mrf.mxu0
        %v8119 = vadd.f32 %v7951, %v8118
        %v8120 = vpop.f32.mrf.mxu0
        %8121 = vmatprep.mubr.bf16.mxu0 0
        %8122 = vmatmul.mubr.bf16.gmra.mxu0 %v7923
        %v8123 = vpop.f32.mrf.mxu0
        %v8124 = vadd.f32 %v7951, %v8123
        %v8125 = vpop.f32.mrf.mxu0
        %v8126 = vpop.f32.mrf.mxu0
        %v8127 = vadd.f32 %v7951, %v8126
        %v8128 = vpop.f32.mrf.mxu0
        %8129 = vmatprep.mubr.bf16.mxu0 0
        %8130 = vmatmul.mubr.bf16.gmra.mxu0 %v7924
        %v8131 = vpop.f32.mrf.mxu0
        %v8132 = vadd.f32 %v7951, %v8131
        %v8133 = vpop.f32.mrf.mxu0
        %v8134 = vpop.f32.mrf.mxu0
        %v8135 = vadd.f32 %v7951, %v8134
        %v8136 = vpop.f32.mrf.mxu0
        %8137 = vmatprep.mubr.bf16.mxu0 0
        %8138 = vmatmul.mubr.bf16.gmra.mxu0 %v7925
        %v8139 = vpop.f32.mrf.mxu0
        %v8140 = vadd.f32 %v7951, %v8139
        %v8141 = vpop.f32.mrf.mxu0
        %v8142 = vpop.f32.mrf.mxu0
        %v8143 = vadd.f32 %v7951, %v8142
        %v8144 = vpop.f32.mrf.mxu0
        %8145 = vmatprep.mubr.bf16.mxu0 0
        %8146 = vmatmul.mubr.bf16.gmra.mxu0 %v7926
        %v8147 = vpop.f32.mrf.mxu0
        %v8148 = vadd.f32 %v7951, %v8147
        %v8149 = vpop.f32.mrf.mxu0
        %v8150 = vpop.f32.mrf.mxu0
        %v8151 = vadd.f32 %v7951, %v8150
        %v8152 = vpop.f32.mrf.mxu0
        %8153 = vmatprep.mubr.bf16.mxu0 0
        %8154 = vmatmul.mubr.bf16.gmra.mxu0 %v7927
        %v8155 = vpop.f32.mrf.mxu0
        %v8156 = vadd.f32 %v7951, %v8155
        %v8157 = vpop.f32.mrf.mxu0
        %v8158 = vpop.f32.mrf.mxu0
        %v8159 = vadd.f32 %v7951, %v8158
        %v8160 = vpop.f32.mrf.mxu0
        %8161 = vdwg.mxu0
        %v8162 = vmax.f32 %v8036, 0.0
        %v8163 = vmax.f32 %v8039, 0.0
        %v8164 = vmax.f32 %v8044, 0.0
        %v8165 = vmax.f32 %v8047, 0.0
        %v8166 = vmax.f32 %v8052, 0.0
        %v8167 = vmax.f32 %v8055, 0.0
        %v8168 = vmax.f32 %v8060, 0.0
        %v8169 = vmax.f32 %v8063, 0.0
        %v8170 = vmax.f32 %v8068, 0.0
        %v8171 = vmax.f32 %v8071, 0.0
        %v8172 = vmax.f32 %v8076, 0.0
        %v8173 = vmax.f32 %v8079, 0.0
        %v8174 = vmax.f32 %v8084, 0.0
        %v8175 = vmax.f32 %v8087, 0.0
        %v8176 = vmax.f32 %v8092, 0.0
        %v8177 = vmax.f32 %v8095, 0.0
        %v8178 = vmax.f32 %v8100, 0.0
        %v8179 = vmax.f32 %v8103, 0.0
        %v8180 = vmax.f32 %v8108, 0.0
        %v8181 = vmax.f32 %v8111, 0.0
        %v8182 = vmax.f32 %v8116, 0.0
        %v8183 = vmax.f32 %v8119, 0.0
        %v8184 = vmax.f32 %v8124, 0.0
        %v8185 = vmax.f32 %v8127, 0.0
        %v8186 = vmax.f32 %v8132, 0.0
        %v8187 = vmax.f32 %v8135, 0.0
        %v8188 = vmax.f32 %v8140, 0.0
        %v8189 = vmax.f32 %v8143, 0.0
        %v8190 = vmax.f32 %v8148, 0.0
        %v8191 = vmax.f32 %v8151, 0.0
        %v8192 = vmax.f32 %v8156, 0.0
        %v8193 = vmax.f32 %v8159, 0.0
        %v8194 = vpack.c.bf16 %v8163, %v8162
        %v8195 = vpack.c.bf16 %v8165, %v8164
        %v8196 = vpack.c.bf16 %v8167, %v8166
        %v8197 = vpack.c.bf16 %v8169, %v8168
        %v8198 = vpack.c.bf16 %v8171, %v8170
        %v8199 = vpack.c.bf16 %v8173, %v8172
        %v8200 = vpack.c.bf16 %v8175, %v8174
        %v8201 = vpack.c.bf16 %v8177, %v8176
        %v8202 = vpack.c.bf16 %v8179, %v8178
        %v8203 = vpack.c.bf16 %v8181, %v8180
        %v8204 = vpack.c.bf16 %v8183, %v8182
        %v8205 = vpack.c.bf16 %v8185, %v8184
        %v8206 = vpack.c.bf16 %v8187, %v8186
        %v8207 = vpack.c.bf16 %v8189, %v8188
        %v8208 = vpack.c.bf16 %v8191, %v8190
        %v8209 = vpack.c.bf16 %v8193, %v8192
        %s8210 = scalar_lea.vmem [#allocation3], 432
        %v8211 = vld [vmem:[%s8210 + $0x40] sm:$0xf]
        %v8212 = vld [vmem:[%s8210 + $0x44] sm:$0xf]
        %v8213 = vld [vmem:[%s8210 + $0x48] sm:$0xf]
        %v8214 = vld [vmem:[%s8210 + $0x4c] sm:$0xf]
        %s8215 = scalar_lea.vmem %s4, 3
        %v8216 = vld [vmem:[%s8215] sm:$0x1]
        %v8218 = vlaneseq
        %v8219 = vshrl.u32 %v8218, 7
        %v8220 = vsub.s32 0, %v8219
        %v8221 = vrot.slane %v8216, %v8220
        %v8227 = vunpack.c.l.b16 %v8211
        %v8228 = vunpack.c.l.b16 %v8212
        %v8229 = vunpack.c.l.b16 %v8213
        %v8230 = vunpack.c.l.b16 %v8214
        %v8231 = vpack.c.b16 %v8228, %v8227
        %v8232 = vpack.c.b16 %v8230, %v8229
        %8235 = vmatprep.subr.bf16.mxu0 0
        %8236 = vmatpush1.bf16.msra.mxu0 0
        %8237 = vmatprep.subr.bf16.mxu0 0
        %8238 = vmatpush1.bf16.msra.mxu0 0
        %8239 = vmatprep.subr.bf16.mxu0 0
        %8240 = vmatpush1.bf16.msra.mxu0 0
        %8241 = vmatprep.subr.bf16.mxu0 0
        %8242 = vmatpush1.bf16.msra.mxu0 0
        %8243 = vmatprep.subr.bf16.mxu0 0
        %8244 = vmatpush1.bf16.msra.mxu0 0
        %8245 = vmatprep.subr.bf16.mxu0 0
        %8246 = vmatpush1.bf16.msra.mxu0 0
        %8247 = vmatprep.subr.bf16.mxu0 0
        %8248 = vmatpush1.bf16.msra.mxu0 %v8232
        %8249 = vmatprep.subr.bf16.mxu0 0
        %8250 = vmatpush1.bf16.msra.mxu0 %v8231
        %8251 = vmatprep.subr.bf16.mxu0 0
        %8252 = vmatpush2.bf16.msra.mxu0 0
        %8253 = vmatprep.subr.bf16.mxu0 0
        %8254 = vmatpush2.bf16.msra.mxu0 0
        %8255 = vmatprep.subr.bf16.mxu0 0
        %8256 = vmatpush2.bf16.msra.mxu0 0
        %8257 = vmatprep.subr.bf16.mxu0 0
        %8258 = vmatpush2.bf16.msra.mxu0 0
        %8259 = vmatprep.subr.bf16.mxu0 0
        %8260 = vmatpush2.bf16.msra.mxu0 0
        %8261 = vmatprep.subr.bf16.mxu0 0
        %8262 = vmatpush2.bf16.msra.mxu0 0
        %8263 = vmatprep.subr.bf16.mxu0 0
        %8264 = vmatpush2.bf16.msra.mxu0 0
        %8265 = vmatprep.subr.bf16.mxu0 0
        %8266 = vmatpush2.bf16.msra.mxu0 0
        %8267 = vmatprep.mubr.bf16.mxu0 0
        %8268 = vmatmul.mubr.bf16.gmra.mxu0 %v7672
        %v8269 = vpop.f32.mrf.mxu0
        %v8270 = vadd.f32 %v8221, %v8269
        %v8271 = vpop.f32.mrf.mxu0
        %v8272 = vpop.f32.mrf.mxu0
        %v8273 = vadd.f32 %v8221, %v8272
        %v8274 = vpop.f32.mrf.mxu0
        %8275 = vmatprep.mubr.bf16.mxu0 0
        %8276 = vmatmul.mubr.bf16.gmra.mxu0 %v7675
        %v8277 = vpop.f32.mrf.mxu0
        %v8278 = vadd.f32 %v8221, %v8277
        %v8279 = vpop.f32.mrf.mxu0
        %v8280 = vpop.f32.mrf.mxu0
        %v8281 = vadd.f32 %v8221, %v8280
        %v8282 = vpop.f32.mrf.mxu0
        %8283 = vmatprep.mubr.bf16.mxu0 0
        %8284 = vmatmul.mubr.bf16.gmra.mxu0 %v7678
        %v8285 = vpop.f32.mrf.mxu0
        %v8286 = vadd.f32 %v8221, %v8285
        %v8287 = vpop.f32.mrf.mxu0
        %v8288 = vpop.f32.mrf.mxu0
        %v8289 = vadd.f32 %v8221, %v8288
        %v8290 = vpop.f32.mrf.mxu0
        %8291 = vmatprep.mubr.bf16.mxu0 0
        %8292 = vmatmul.mubr.bf16.gmra.mxu0 %v7681
        %v8293 = vpop.f32.mrf.mxu0
        %v8294 = vadd.f32 %v8221, %v8293
        %v8295 = vpop.f32.mrf.mxu0
        %v8296 = vpop.f32.mrf.mxu0
        %v8297 = vadd.f32 %v8221, %v8296
        %v8298 = vpop.f32.mrf.mxu0
        %8299 = vmatprep.mubr.bf16.mxu0 0
        %8300 = vmatmul.mubr.bf16.gmra.mxu0 %v7684
        %v8301 = vpop.f32.mrf.mxu0
        %v8302 = vadd.f32 %v8221, %v8301
        %v8303 = vpop.f32.mrf.mxu0
        %v8304 = vpop.f32.mrf.mxu0
        %v8305 = vadd.f32 %v8221, %v8304
        %v8306 = vpop.f32.mrf.mxu0
        %8307 = vmatprep.mubr.bf16.mxu0 0
        %8308 = vmatmul.mubr.bf16.gmra.mxu0 %v7687
        %v8309 = vpop.f32.mrf.mxu0
        %v8310 = vadd.f32 %v8221, %v8309
        %v8311 = vpop.f32.mrf.mxu0
        %v8312 = vpop.f32.mrf.mxu0
        %v8313 = vadd.f32 %v8221, %v8312
        %v8314 = vpop.f32.mrf.mxu0
        %8315 = vmatprep.mubr.bf16.mxu0 0
        %8316 = vmatmul.mubr.bf16.gmra.mxu0 %v7690
        %v8317 = vpop.f32.mrf.mxu0
        %v8318 = vadd.f32 %v8221, %v8317
        %v8319 = vpop.f32.mrf.mxu0
        %v8320 = vpop.f32.mrf.mxu0
        %v8321 = vadd.f32 %v8221, %v8320
        %v8322 = vpop.f32.mrf.mxu0
        %8323 = vmatprep.mubr.bf16.mxu0 0
        %8324 = vmatmul.mubr.bf16.gmra.mxu0 %v7693
        %v8325 = vpop.f32.mrf.mxu0
        %v8326 = vadd.f32 %v8221, %v8325
        %v8327 = vpop.f32.mrf.mxu0
        %v8328 = vpop.f32.mrf.mxu0
        %v8329 = vadd.f32 %v8221, %v8328
        %v8330 = vpop.f32.mrf.mxu0
        %8331 = vmatprep.mubr.bf16.mxu0 0
        %8332 = vmatmul.mubr.bf16.gmra.mxu0 %v7696
        %v8333 = vpop.f32.mrf.mxu0
        %v8334 = vadd.f32 %v8221, %v8333
        %v8335 = vpop.f32.mrf.mxu0
        %v8336 = vpop.f32.mrf.mxu0
        %v8337 = vadd.f32 %v8221, %v8336
        %v8338 = vpop.f32.mrf.mxu0
        %8339 = vmatprep.mubr.bf16.mxu0 0
        %8340 = vmatmul.mubr.bf16.gmra.mxu0 %v7699
        %v8341 = vpop.f32.mrf.mxu0
        %v8342 = vadd.f32 %v8221, %v8341
        %v8343 = vpop.f32.mrf.mxu0
        %v8344 = vpop.f32.mrf.mxu0
        %v8345 = vadd.f32 %v8221, %v8344
        %v8346 = vpop.f32.mrf.mxu0
        %8347 = vmatprep.mubr.bf16.mxu0 0
        %8348 = vmatmul.mubr.bf16.gmra.mxu0 %v7702
        %v8349 = vpop.f32.mrf.mxu0
        %v8350 = vadd.f32 %v8221, %v8349
        %v8351 = vpop.f32.mrf.mxu0
        %v8352 = vpop.f32.mrf.mxu0
        %v8353 = vadd.f32 %v8221, %v8352
        %v8354 = vpop.f32.mrf.mxu0
        %8355 = vmatprep.mubr.bf16.mxu0 0
        %8356 = vmatmul.mubr.bf16.gmra.mxu0 %v7705
        %v8357 = vpop.f32.mrf.mxu0
        %v8358 = vadd.f32 %v8221, %v8357
        %v8359 = vpop.f32.mrf.mxu0
        %v8360 = vpop.f32.mrf.mxu0
        %v8361 = vadd.f32 %v8221, %v8360
        %v8362 = vpop.f32.mrf.mxu0
        %8363 = vmatprep.mubr.bf16.mxu0 0
        %8364 = vmatmul.mubr.bf16.gmra.mxu0 %v7708
        %v8365 = vpop.f32.mrf.mxu0
        %v8366 = vadd.f32 %v8221, %v8365
        %v8367 = vpop.f32.mrf.mxu0
        %v8368 = vpop.f32.mrf.mxu0
        %v8369 = vadd.f32 %v8221, %v8368
        %v8370 = vpop.f32.mrf.mxu0
        %8371 = vmatprep.mubr.bf16.mxu0 0
        %8372 = vmatmul.mubr.bf16.gmra.mxu0 %v7711
        %v8373 = vpop.f32.mrf.mxu0
        %v8374 = vadd.f32 %v8221, %v8373
        %v8375 = vpop.f32.mrf.mxu0
        %v8376 = vpop.f32.mrf.mxu0
        %v8377 = vadd.f32 %v8221, %v8376
        %v8378 = vpop.f32.mrf.mxu0
        %8379 = vmatprep.mubr.bf16.mxu0 0
        %8380 = vmatmul.mubr.bf16.gmra.mxu0 %v7714
        %v8381 = vpop.f32.mrf.mxu0
        %v8382 = vadd.f32 %v8221, %v8381
        %v8383 = vpop.f32.mrf.mxu0
        %v8384 = vpop.f32.mrf.mxu0
        %v8385 = vadd.f32 %v8221, %v8384
        %v8386 = vpop.f32.mrf.mxu0
        %8387 = vmatprep.mubr.bf16.mxu0 0
        %8388 = vmatmul.mubr.bf16.gmra.mxu0 %v7717
        %v8389 = vpop.f32.mrf.mxu0
        %v8390 = vadd.f32 %v8221, %v8389
        %v8391 = vpop.f32.mrf.mxu0
        %v8392 = vpop.f32.mrf.mxu0
        %v8393 = vadd.f32 %v8221, %v8392
        %v8394 = vpop.f32.mrf.mxu0
        %8395 = vdwg.mxu0
        %v8396 = vmax.f32 %v8270, 0.0
        %v8397 = vmax.f32 %v8273, 0.0
        %v8398 = vmax.f32 %v8278, 0.0
        %v8399 = vmax.f32 %v8281, 0.0
        %v8400 = vmax.f32 %v8286, 0.0
        %v8401 = vmax.f32 %v8289, 0.0
        %v8402 = vmax.f32 %v8294, 0.0
        %v8403 = vmax.f32 %v8297, 0.0
        %v8404 = vmax.f32 %v8302, 0.0
        %v8405 = vmax.f32 %v8305, 0.0
        %v8406 = vmax.f32 %v8310, 0.0
        %v8407 = vmax.f32 %v8313, 0.0
        %v8408 = vmax.f32 %v8318, 0.0
        %v8409 = vmax.f32 %v8321, 0.0
        %v8410 = vmax.f32 %v8326, 0.0
        %v8411 = vmax.f32 %v8329, 0.0
        %v8412 = vmax.f32 %v8334, 0.0
        %v8413 = vmax.f32 %v8337, 0.0
        %v8414 = vmax.f32 %v8342, 0.0
        %v8415 = vmax.f32 %v8345, 0.0
        %v8416 = vmax.f32 %v8350, 0.0
        %v8417 = vmax.f32 %v8353, 0.0
        %v8418 = vmax.f32 %v8358, 0.0
        %v8419 = vmax.f32 %v8361, 0.0
        %v8420 = vmax.f32 %v8366, 0.0
        %v8421 = vmax.f32 %v8369, 0.0
        %v8422 = vmax.f32 %v8374, 0.0
        %v8423 = vmax.f32 %v8377, 0.0
        %v8424 = vmax.f32 %v8382, 0.0
        %v8425 = vmax.f32 %v8385, 0.0
        %v8426 = vmax.f32 %v8390, 0.0
        %v8427 = vmax.f32 %v8393, 0.0
        %v8428 = vpack.c.bf16 %v8397, %v8396
        %v8429 = vpack.c.bf16 %v8399, %v8398
        %v8430 = vpack.c.bf16 %v8401, %v8400
        %v8431 = vpack.c.bf16 %v8403, %v8402
        %v8432 = vpack.c.bf16 %v8405, %v8404
        %v8433 = vpack.c.bf16 %v8407, %v8406
        %v8434 = vpack.c.bf16 %v8409, %v8408
        %v8435 = vpack.c.bf16 %v8411, %v8410
        %v8436 = vpack.c.bf16 %v8413, %v8412
        %v8437 = vpack.c.bf16 %v8415, %v8414
        %v8438 = vpack.c.bf16 %v8417, %v8416
        %v8439 = vpack.c.bf16 %v8419, %v8418
        %v8440 = vpack.c.bf16 %v8421, %v8420
        %v8441 = vpack.c.bf16 %v8423, %v8422
        %v8442 = vpack.c.bf16 %v8425, %v8424
        %v8443 = vpack.c.bf16 %v8427, %v8426
        %s8444 = scalar_lea.vmem %s5, 192
        %v8445 = vld [vmem:[%s8444] sm:$0xf]
        %v8446 = vld [vmem:[%s8444 + $0x4] sm:$0xf]
        %v8447 = vld [vmem:[%s8444 + $0x8] sm:$0xf]
        %v8448 = vld [vmem:[%s8444 + $0xc] sm:$0xf]
        %v8449 = vld [vmem:[%s8444 + $0x10] sm:$0xf]
        %v8450 = vld [vmem:[%s8444 + $0x14] sm:$0xf]
        %v8451 = vld [vmem:[%s8444 + $0x18] sm:$0xf]
        %v8452 = vld [vmem:[%s8444 + $0x1c] sm:$0xf]
        %v8453 = vld [vmem:[%s8444 + $0x20] sm:$0xf]
        %v8454 = vld [vmem:[%s8444 + $0x24] sm:$0xf]
        %v8455 = vld [vmem:[%s8444 + $0x28] sm:$0xf]
        %v8456 = vld [vmem:[%s8444 + $0x2c] sm:$0xf]
        %v8457 = vld [vmem:[%s8444 + $0x30] sm:$0xf]
        %v8458 = vld [vmem:[%s8444 + $0x34] sm:$0xf]
        %v8459 = vld [vmem:[%s8444 + $0x38] sm:$0xf]
        %v8460 = vld [vmem:[%s8444 + $0x3c] sm:$0xf]
        %s8461 = scalar_lea.vmem %s6, 3
        %v8462 = vld [vmem:[%s8461] sm:$0x1]
        %v8464 = vlaneseq
        %v8465 = vshrl.u32 %v8464, 7
        %v8466 = vsub.s32 0, %v8465
        %v8467 = vrot.slane %v8462, %v8466
        %v8485 = vunpack.c.l.b16 %v8445
        %v8486 = vunpack.c.l.b16 %v8446
        %v8487 = vunpack.c.l.b16 %v8447
        %v8488 = vunpack.c.l.b16 %v8448
        %v8489 = vunpack.c.l.b16 %v8449
        %v8490 = vunpack.c.l.b16 %v8450
        %v8491 = vunpack.c.l.b16 %v8451
        %v8492 = vunpack.c.l.b16 %v8452
        %v8493 = vunpack.c.l.b16 %v8453
        %v8494 = vunpack.c.l.b16 %v8454
        %v8495 = vunpack.c.l.b16 %v8455
        %v8496 = vunpack.c.l.b16 %v8456
        %v8497 = vunpack.c.l.b16 %v8457
        %v8498 = vunpack.c.l.b16 %v8458
        %v8499 = vunpack.c.l.b16 %v8459
        %v8500 = vunpack.c.l.b16 %v8460
        %v8501 = vpack.c.b16 %v8486, %v8485
        %v8502 = vpack.c.b16 %v8488, %v8487
        %v8503 = vpack.c.b16 %v8490, %v8489
        %v8504 = vpack.c.b16 %v8492, %v8491
        %v8505 = vpack.c.b16 %v8494, %v8493
        %v8506 = vpack.c.b16 %v8496, %v8495
        %v8507 = vpack.c.b16 %v8498, %v8497
        %v8508 = vpack.c.b16 %v8500, %v8499
        %8517 = vmatprep.subr.bf16.mxu0 0
        %8518 = vmatpush1.bf16.msra.mxu0 %v8508
        %8519 = vmatprep.subr.bf16.mxu0 0
        %8520 = vmatpush1.bf16.msra.mxu0 %v8507
        %8521 = vmatprep.subr.bf16.mxu0 0
        %8522 = vmatpush1.bf16.msra.mxu0 %v8506
        %8523 = vmatprep.subr.bf16.mxu0 0
        %8524 = vmatpush1.bf16.msra.mxu0 %v8505
        %8525 = vmatprep.subr.bf16.mxu0 0
        %8526 = vmatpush1.bf16.msra.mxu0 %v8504
        %8527 = vmatprep.subr.bf16.mxu0 0
        %8528 = vmatpush1.bf16.msra.mxu0 %v8503
        %8529 = vmatprep.subr.bf16.mxu0 0
        %8530 = vmatpush1.bf16.msra.mxu0 %v8502
        %8531 = vmatprep.subr.bf16.mxu0 0
        %8532 = vmatpush1.bf16.msra.mxu0 %v8501
        %8533 = vmatprep.subr.bf16.mxu0 0
        %8534 = vmatpush2.bf16.msra.mxu0 0
        %8535 = vmatprep.subr.bf16.mxu0 0
        %8536 = vmatpush2.bf16.msra.mxu0 0
        %8537 = vmatprep.subr.bf16.mxu0 0
        %8538 = vmatpush2.bf16.msra.mxu0 0
        %8539 = vmatprep.subr.bf16.mxu0 0
        %8540 = vmatpush2.bf16.msra.mxu0 0
        %8541 = vmatprep.subr.bf16.mxu0 0
        %8542 = vmatpush2.bf16.msra.mxu0 0
        %8543 = vmatprep.subr.bf16.mxu0 0
        %8544 = vmatpush2.bf16.msra.mxu0 0
        %8545 = vmatprep.subr.bf16.mxu0 0
        %8546 = vmatpush2.bf16.msra.mxu0 0
        %8547 = vmatprep.subr.bf16.mxu0 0
        %8548 = vmatpush2.bf16.msra.mxu0 0
        %8549 = vmatprep.mubr.bf16.mxu0 0
        %8550 = vmatmul.mubr.bf16.gmra.mxu0 %v8428
        %v8551 = vpop.f32.mrf.mxu0
        %v8552 = vadd.f32 %v8467, %v8551
        %v8553 = vpop.f32.mrf.mxu0
        %v8554 = vpop.f32.mrf.mxu0
        %v8555 = vadd.f32 %v8467, %v8554
        %v8556 = vpop.f32.mrf.mxu0
        %8557 = vmatprep.mubr.bf16.mxu0 0
        %8558 = vmatmul.mubr.bf16.gmra.mxu0 %v8429
        %v8559 = vpop.f32.mrf.mxu0
        %v8560 = vadd.f32 %v8467, %v8559
        %v8561 = vpop.f32.mrf.mxu0
        %v8562 = vpop.f32.mrf.mxu0
        %v8563 = vadd.f32 %v8467, %v8562
        %v8564 = vpop.f32.mrf.mxu0
        %8565 = vmatprep.mubr.bf16.mxu0 0
        %8566 = vmatmul.mubr.bf16.gmra.mxu0 %v8430
        %v8567 = vpop.f32.mrf.mxu0
        %v8568 = vadd.f32 %v8467, %v8567
        %v8569 = vpop.f32.mrf.mxu0
        %v8570 = vpop.f32.mrf.mxu0
        %v8571 = vadd.f32 %v8467, %v8570
        %v8572 = vpop.f32.mrf.mxu0
        %8573 = vmatprep.mubr.bf16.mxu0 0
        %8574 = vmatmul.mubr.bf16.gmra.mxu0 %v8431
        %v8575 = vpop.f32.mrf.mxu0
        %v8576 = vadd.f32 %v8467, %v8575
        %v8577 = vpop.f32.mrf.mxu0
        %v8578 = vpop.f32.mrf.mxu0
        %v8579 = vadd.f32 %v8467, %v8578
        %v8580 = vpop.f32.mrf.mxu0
        %8581 = vmatprep.mubr.bf16.mxu0 0
        %8582 = vmatmul.mubr.bf16.gmra.mxu0 %v8432
        %v8583 = vpop.f32.mrf.mxu0
        %v8584 = vadd.f32 %v8467, %v8583
        %v8585 = vpop.f32.mrf.mxu0
        %v8586 = vpop.f32.mrf.mxu0
        %v8587 = vadd.f32 %v8467, %v8586
        %v8588 = vpop.f32.mrf.mxu0
        %8589 = vmatprep.mubr.bf16.mxu0 0
        %8590 = vmatmul.mubr.bf16.gmra.mxu0 %v8433
        %v8591 = vpop.f32.mrf.mxu0
        %v8592 = vadd.f32 %v8467, %v8591
        %v8593 = vpop.f32.mrf.mxu0
        %v8594 = vpop.f32.mrf.mxu0
        %v8595 = vadd.f32 %v8467, %v8594
        %v8596 = vpop.f32.mrf.mxu0
        %8597 = vmatprep.mubr.bf16.mxu0 0
        %8598 = vmatmul.mubr.bf16.gmra.mxu0 %v8434
        %v8599 = vpop.f32.mrf.mxu0
        %v8600 = vadd.f32 %v8467, %v8599
        %v8601 = vpop.f32.mrf.mxu0
        %v8602 = vpop.f32.mrf.mxu0
        %v8603 = vadd.f32 %v8467, %v8602
        %v8604 = vpop.f32.mrf.mxu0
        %8605 = vmatprep.mubr.bf16.mxu0 0
        %8606 = vmatmul.mubr.bf16.gmra.mxu0 %v8435
        %v8607 = vpop.f32.mrf.mxu0
        %v8608 = vadd.f32 %v8467, %v8607
        %v8609 = vpop.f32.mrf.mxu0
        %v8610 = vpop.f32.mrf.mxu0
        %v8611 = vadd.f32 %v8467, %v8610
        %v8612 = vpop.f32.mrf.mxu0
        %8613 = vmatprep.mubr.bf16.mxu0 0
        %8614 = vmatmul.mubr.bf16.gmra.mxu0 %v8436
        %v8615 = vpop.f32.mrf.mxu0
        %v8616 = vadd.f32 %v8467, %v8615
        %v8617 = vpop.f32.mrf.mxu0
        %v8618 = vpop.f32.mrf.mxu0
        %v8619 = vadd.f32 %v8467, %v8618
        %v8620 = vpop.f32.mrf.mxu0
        %8621 = vmatprep.mubr.bf16.mxu0 0
        %8622 = vmatmul.mubr.bf16.gmra.mxu0 %v8437
        %v8623 = vpop.f32.mrf.mxu0
        %v8624 = vadd.f32 %v8467, %v8623
        %v8625 = vpop.f32.mrf.mxu0
        %v8626 = vpop.f32.mrf.mxu0
        %v8627 = vadd.f32 %v8467, %v8626
        %v8628 = vpop.f32.mrf.mxu0
        %8629 = vmatprep.mubr.bf16.mxu0 0
        %8630 = vmatmul.mubr.bf16.gmra.mxu0 %v8438
        %v8631 = vpop.f32.mrf.mxu0
        %v8632 = vadd.f32 %v8467, %v8631
        %v8633 = vpop.f32.mrf.mxu0
        %v8634 = vpop.f32.mrf.mxu0
        %v8635 = vadd.f32 %v8467, %v8634
        %v8636 = vpop.f32.mrf.mxu0
        %8637 = vmatprep.mubr.bf16.mxu0 0
        %8638 = vmatmul.mubr.bf16.gmra.mxu0 %v8439
        %v8639 = vpop.f32.mrf.mxu0
        %v8640 = vadd.f32 %v8467, %v8639
        %v8641 = vpop.f32.mrf.mxu0
        %v8642 = vpop.f32.mrf.mxu0
        %v8643 = vadd.f32 %v8467, %v8642
        %v8644 = vpop.f32.mrf.mxu0
        %8645 = vmatprep.mubr.bf16.mxu0 0
        %8646 = vmatmul.mubr.bf16.gmra.mxu0 %v8440
        %v8647 = vpop.f32.mrf.mxu0
        %v8648 = vadd.f32 %v8467, %v8647
        %v8649 = vpop.f32.mrf.mxu0
        %v8650 = vpop.f32.mrf.mxu0
        %v8651 = vadd.f32 %v8467, %v8650
        %v8652 = vpop.f32.mrf.mxu0
        %8653 = vmatprep.mubr.bf16.mxu0 0
        %8654 = vmatmul.mubr.bf16.gmra.mxu0 %v8441
        %v8655 = vpop.f32.mrf.mxu0
        %v8656 = vadd.f32 %v8467, %v8655
        %v8657 = vpop.f32.mrf.mxu0
        %v8658 = vpop.f32.mrf.mxu0
        %v8659 = vadd.f32 %v8467, %v8658
        %v8660 = vpop.f32.mrf.mxu0
        %8661 = vmatprep.mubr.bf16.mxu0 0
        %8662 = vmatmul.mubr.bf16.gmra.mxu0 %v8442
        %v8663 = vpop.f32.mrf.mxu0
        %v8664 = vadd.f32 %v8467, %v8663
        %v8665 = vpop.f32.mrf.mxu0
        %v8666 = vpop.f32.mrf.mxu0
        %v8667 = vadd.f32 %v8467, %v8666
        %v8668 = vpop.f32.mrf.mxu0
        %8669 = vmatprep.mubr.bf16.mxu0 0
        %8670 = vmatmul.mubr.bf16.gmra.mxu0 %v8443
        %v8671 = vpop.f32.mrf.mxu0
        %v8672 = vadd.f32 %v8467, %v8671
        %v8673 = vpop.f32.mrf.mxu0
        %v8674 = vpop.f32.mrf.mxu0
        %v8675 = vadd.f32 %v8467, %v8674
        %v8676 = vpop.f32.mrf.mxu0
        %8677 = vdwg.mxu0
        %v8678 = vmax.f32 %v8552, 0.0
        %v8679 = vmax.f32 %v8555, 0.0
        %v8680 = vmax.f32 %v8560, 0.0
        %v8681 = vmax.f32 %v8563, 0.0
        %v8682 = vmax.f32 %v8568, 0.0
        %v8683 = vmax.f32 %v8571, 0.0
        %v8684 = vmax.f32 %v8576, 0.0
        %v8685 = vmax.f32 %v8579, 0.0
        %v8686 = vmax.f32 %v8584, 0.0
        %v8687 = vmax.f32 %v8587, 0.0
        %v8688 = vmax.f32 %v8592, 0.0
        %v8689 = vmax.f32 %v8595, 0.0
        %v8690 = vmax.f32 %v8600, 0.0
        %v8691 = vmax.f32 %v8603, 0.0
        %v8692 = vmax.f32 %v8608, 0.0
        %v8693 = vmax.f32 %v8611, 0.0
        %v8694 = vmax.f32 %v8616, 0.0
        %v8695 = vmax.f32 %v8619, 0.0
        %v8696 = vmax.f32 %v8624, 0.0
        %v8697 = vmax.f32 %v8627, 0.0
        %v8698 = vmax.f32 %v8632, 0.0
        %v8699 = vmax.f32 %v8635, 0.0
        %v8700 = vmax.f32 %v8640, 0.0
        %v8701 = vmax.f32 %v8643, 0.0
        %v8702 = vmax.f32 %v8648, 0.0
        %v8703 = vmax.f32 %v8651, 0.0
        %v8704 = vmax.f32 %v8656, 0.0
        %v8705 = vmax.f32 %v8659, 0.0
        %v8706 = vmax.f32 %v8664, 0.0
        %v8707 = vmax.f32 %v8667, 0.0
        %v8708 = vmax.f32 %v8672, 0.0
        %v8709 = vmax.f32 %v8675, 0.0
        %v8710 = vpack.c.bf16 %v8679, %v8678
        %v8711 = vpack.c.bf16 %v8681, %v8680
        %v8712 = vpack.c.bf16 %v8683, %v8682
        %v8713 = vpack.c.bf16 %v8685, %v8684
        %v8714 = vpack.c.bf16 %v8687, %v8686
        %v8715 = vpack.c.bf16 %v8689, %v8688
        %v8716 = vpack.c.bf16 %v8691, %v8690
        %v8717 = vpack.c.bf16 %v8693, %v8692
        %v8718 = vpack.c.bf16 %v8695, %v8694
        %v8719 = vpack.c.bf16 %v8697, %v8696
        %v8720 = vpack.c.bf16 %v8699, %v8698
        %v8721 = vpack.c.bf16 %v8701, %v8700
        %v8722 = vpack.c.bf16 %v8703, %v8702
        %v8723 = vpack.c.bf16 %v8705, %v8704
        %v8724 = vpack.c.bf16 %v8707, %v8706
        %v8725 = vpack.c.bf16 %v8709, %v8708
        %v8726 = vld [vmem:[#allocation6] sm:$0xf]
        %v8727 = vld [vmem:[#allocation6 + $0x4] sm:$0xf]
        %v8728 = vld [vmem:[#allocation6 + $0x8] sm:$0xf]
        %v8729 = vld [vmem:[#allocation6 + $0xc] sm:$0xf]
        %v8730 = vld [vmem:[#allocation6 + $0x10] sm:$0xf]
        %v8731 = vld [vmem:[#allocation6 + $0x14] sm:$0xf]
        %v8732 = vld [vmem:[#allocation6 + $0x18] sm:$0xf]
        %v8733 = vld [vmem:[#allocation6 + $0x1c] sm:$0xf]
        %v8734 = vld [vmem:[#allocation6 + $0x20] sm:$0xf]
        %v8735 = vld [vmem:[#allocation6 + $0x24] sm:$0xf]
        %v8736 = vld [vmem:[#allocation6 + $0x28] sm:$0xf]
        %v8737 = vld [vmem:[#allocation6 + $0x2c] sm:$0xf]
        %v8738 = vld [vmem:[#allocation6 + $0x30] sm:$0xf]
        %v8739 = vld [vmem:[#allocation6 + $0x34] sm:$0xf]
        %v8740 = vld [vmem:[#allocation6 + $0x38] sm:$0xf]
        %v8741 = vld [vmem:[#allocation6 + $0x3c] sm:$0xf]
        %v8742 = vld [vmem:[#allocation6 + $0x40] sm:$0xf]
        %v8743 = vld [vmem:[#allocation6 + $0x44] sm:$0xf]
        %v8744 = vld [vmem:[#allocation6 + $0x48] sm:$0xf]
        %v8745 = vld [vmem:[#allocation6 + $0x4c] sm:$0xf]
        %v8746 = vld [vmem:[#allocation6 + $0x50] sm:$0xf]
        %v8747 = vld [vmem:[#allocation6 + $0x54] sm:$0xf]
        %v8748 = vld [vmem:[#allocation6 + $0x58] sm:$0xf]
        %v8749 = vld [vmem:[#allocation6 + $0x5c] sm:$0xf]
        %v8750 = vld [vmem:[#allocation6 + $0x60] sm:$0xf]
        %v8751 = vld [vmem:[#allocation6 + $0x64] sm:$0xf]
        %v8752 = vld [vmem:[#allocation6 + $0x68] sm:$0xf]
        %v8753 = vld [vmem:[#allocation6 + $0x6c] sm:$0xf]
        %v8754 = vld [vmem:[#allocation6 + $0x70] sm:$0xf]
        %v8755 = vld [vmem:[#allocation6 + $0x74] sm:$0xf]
        %v8756 = vld [vmem:[#allocation6 + $0x78] sm:$0xf]
        %v8757 = vld [vmem:[#allocation6 + $0x7c] sm:$0xf]
        %v8758 = vld [vmem:[#allocation6 + $0x80] sm:$0xf]
        %v8759 = vld [vmem:[#allocation6 + $0x84] sm:$0xf]
        %v8760 = vld [vmem:[#allocation6 + $0x88] sm:$0xf]
        %v8761 = vld [vmem:[#allocation6 + $0x8c] sm:$0xf]
        %v8762 = vld [vmem:[#allocation6 + $0x90] sm:$0xf]
        %v8763 = vld [vmem:[#allocation6 + $0x94] sm:$0xf]
        %v8764 = vld [vmem:[#allocation6 + $0x98] sm:$0xf]
        %v8765 = vld [vmem:[#allocation6 + $0x9c] sm:$0xf]
        %v8766 = vld [vmem:[#allocation6 + $0xa0] sm:$0xf]
        %v8767 = vld [vmem:[#allocation6 + $0xa4] sm:$0xf]
        %v8768 = vld [vmem:[#allocation6 + $0xa8] sm:$0xf]
        %v8769 = vld [vmem:[#allocation6 + $0xac] sm:$0xf]
        %v8770 = vld [vmem:[#allocation6 + $0xb0] sm:$0xf]
        %v8771 = vld [vmem:[#allocation6 + $0xb4] sm:$0xf]
        %v8772 = vld [vmem:[#allocation6 + $0xb8] sm:$0xf]
        %v8773 = vld [vmem:[#allocation6 + $0xbc] sm:$0xf]
        %v8774 = vld [vmem:[#allocation6 + $0xc0] sm:$0xf]
        %v8775 = vld [vmem:[#allocation6 + $0xc4] sm:$0xf]
        %v8776 = vld [vmem:[#allocation6 + $0xc8] sm:$0xf]
        %v8777 = vld [vmem:[#allocation6 + $0xcc] sm:$0xf]
        %v8778 = vld [vmem:[#allocation6 + $0xd0] sm:$0xf]
        %v8779 = vld [vmem:[#allocation6 + $0xd4] sm:$0xf]
        %v8780 = vld [vmem:[#allocation6 + $0xd8] sm:$0xf]
        %v8781 = vld [vmem:[#allocation6 + $0xdc] sm:$0xf]
        %v8782 = vld [vmem:[#allocation6 + $0xe0] sm:$0xf]
        %v8783 = vld [vmem:[#allocation6 + $0xe4] sm:$0xf]
        %v8784 = vld [vmem:[#allocation6 + $0xe8] sm:$0xf]
        %v8785 = vld [vmem:[#allocation6 + $0xec] sm:$0xf]
        %v8786 = vld [vmem:[#allocation6 + $0xf0] sm:$0xf]
        %v8787 = vld [vmem:[#allocation6 + $0xf4] sm:$0xf]
        %v8788 = vld [vmem:[#allocation6 + $0xf8] sm:$0xf]
        %v8789 = vld [vmem:[#allocation6 + $0xfc] sm:$0xf]
        %v8790 = vld [vmem:[%s8] sm:$0x1]
        %v8792 = vlaneseq
        %v8793 = vshrl.u32 %v8792, 7
        %v8794 = vsub.s32 0, %v8793
        %v8795 = vrot.slane %v8790, %v8794
        %v8861 = vunpack.c.l.b16 %v8726
        %v8862 = vunpack.c.l.b16 %v8727
        %v8863 = vunpack.c.l.b16 %v8728
        %v8864 = vunpack.c.l.b16 %v8729
        %v8865 = vunpack.c.l.b16 %v8730
        %v8866 = vunpack.c.l.b16 %v8731
        %v8867 = vunpack.c.l.b16 %v8732
        %v8868 = vunpack.c.l.b16 %v8733
        %v8869 = vunpack.c.l.b16 %v8734
        %v8870 = vunpack.c.l.b16 %v8735
        %v8871 = vunpack.c.l.b16 %v8736
        %v8872 = vunpack.c.l.b16 %v8737
        %v8873 = vunpack.c.l.b16 %v8738
        %v8874 = vunpack.c.l.b16 %v8739
        %v8875 = vunpack.c.l.b16 %v8740
        %v8876 = vunpack.c.l.b16 %v8741
        %v8877 = vunpack.c.l.b16 %v8742
        %v8878 = vunpack.c.l.b16 %v8743
        %v8879 = vunpack.c.l.b16 %v8744
        %v8880 = vunpack.c.l.b16 %v8745
        %v8881 = vunpack.c.l.b16 %v8746
        %v8882 = vunpack.c.l.b16 %v8747
        %v8883 = vunpack.c.l.b16 %v8748
        %v8884 = vunpack.c.l.b16 %v8749
        %v8885 = vunpack.c.l.b16 %v8750
        %v8886 = vunpack.c.l.b16 %v8751
        %v8887 = vunpack.c.l.b16 %v8752
        %v8888 = vunpack.c.l.b16 %v8753
        %v8889 = vunpack.c.l.b16 %v8754
        %v8890 = vunpack.c.l.b16 %v8755
        %v8891 = vunpack.c.l.b16 %v8756
        %v8892 = vunpack.c.l.b16 %v8757
        %v8893 = vunpack.c.l.b16 %v8758
        %v8894 = vunpack.c.l.b16 %v8759
        %v8895 = vunpack.c.l.b16 %v8760
        %v8896 = vunpack.c.l.b16 %v8761
        %v8897 = vunpack.c.l.b16 %v8762
        %v8898 = vunpack.c.l.b16 %v8763
        %v8899 = vunpack.c.l.b16 %v8764
        %v8900 = vunpack.c.l.b16 %v8765
        %v8901 = vunpack.c.l.b16 %v8766
        %v8902 = vunpack.c.l.b16 %v8767
        %v8903 = vunpack.c.l.b16 %v8768
        %v8904 = vunpack.c.l.b16 %v8769
        %v8905 = vunpack.c.l.b16 %v8770
        %v8906 = vunpack.c.l.b16 %v8771
        %v8907 = vunpack.c.l.b16 %v8772
        %v8908 = vunpack.c.l.b16 %v8773
        %v8909 = vunpack.c.l.b16 %v8774
        %v8910 = vunpack.c.l.b16 %v8775
        %v8911 = vunpack.c.l.b16 %v8776
        %v8912 = vunpack.c.l.b16 %v8777
        %v8913 = vunpack.c.l.b16 %v8778
        %v8914 = vunpack.c.l.b16 %v8779
        %v8915 = vunpack.c.l.b16 %v8780
        %v8916 = vunpack.c.l.b16 %v8781
        %v8917 = vunpack.c.l.b16 %v8782
        %v8918 = vunpack.c.l.b16 %v8783
        %v8919 = vunpack.c.l.b16 %v8784
        %v8920 = vunpack.c.l.b16 %v8785
        %v8921 = vunpack.c.l.b16 %v8786
        %v8922 = vunpack.c.l.b16 %v8787
        %v8923 = vunpack.c.l.b16 %v8788
        %v8924 = vunpack.c.l.b16 %v8789
        %v8925 = vpack.c.b16 %v8862, %v8861
        %v8926 = vpack.c.b16 %v8864, %v8863
        %v8927 = vpack.c.b16 %v8866, %v8865
        %v8928 = vpack.c.b16 %v8868, %v8867
        %v8929 = vpack.c.b16 %v8870, %v8869
        %v8930 = vpack.c.b16 %v8872, %v8871
        %v8931 = vpack.c.b16 %v8874, %v8873
        %v8932 = vpack.c.b16 %v8876, %v8875
        %v8933 = vpack.c.b16 %v8878, %v8877
        %v8934 = vpack.c.b16 %v8880, %v8879
        %v8935 = vpack.c.b16 %v8882, %v8881
        %v8936 = vpack.c.b16 %v8884, %v8883
        %v8937 = vpack.c.b16 %v8886, %v8885
        %v8938 = vpack.c.b16 %v8888, %v8887
        %v8939 = vpack.c.b16 %v8890, %v8889
        %v8940 = vpack.c.b16 %v8892, %v8891
        %v8941 = vpack.c.b16 %v8894, %v8893
        %v8942 = vpack.c.b16 %v8896, %v8895
        %v8943 = vpack.c.b16 %v8898, %v8897
        %v8944 = vpack.c.b16 %v8900, %v8899
        %v8945 = vpack.c.b16 %v8902, %v8901
        %v8946 = vpack.c.b16 %v8904, %v8903
        %v8947 = vpack.c.b16 %v8906, %v8905
        %v8948 = vpack.c.b16 %v8908, %v8907
        %v8949 = vpack.c.b16 %v8910, %v8909
        %v8950 = vpack.c.b16 %v8912, %v8911
        %v8951 = vpack.c.b16 %v8914, %v8913
        %v8952 = vpack.c.b16 %v8916, %v8915
        %v8953 = vpack.c.b16 %v8918, %v8917
        %v8954 = vpack.c.b16 %v8920, %v8919
        %v8955 = vpack.c.b16 %v8922, %v8921
        %v8956 = vpack.c.b16 %v8924, %v8923
        %8989 = vmatprep.subr.bf16.mxu0 0
        %8990 = vmatpush1.bf16.msra.mxu0 %v8932
        %8991 = vmatprep.subr.bf16.mxu0 0
        %8992 = vmatpush1.bf16.msra.mxu0 %v8931
        %8993 = vmatprep.subr.bf16.mxu0 0
        %8994 = vmatpush1.bf16.msra.mxu0 %v8930
        %8995 = vmatprep.subr.bf16.mxu0 0
        %8996 = vmatpush1.bf16.msra.mxu0 %v8929
        %8997 = vmatprep.subr.bf16.mxu0 0
        %8998 = vmatpush1.bf16.msra.mxu0 %v8928
        %8999 = vmatprep.subr.bf16.mxu0 0
        %9000 = vmatpush1.bf16.msra.mxu0 %v8927
        %9001 = vmatprep.subr.bf16.mxu0 0
        %9002 = vmatpush1.bf16.msra.mxu0 %v8926
        %9003 = vmatprep.subr.bf16.mxu0 0
        %9004 = vmatpush1.bf16.msra.mxu0 %v8925
        %9005 = vmatprep.subr.bf16.mxu0 0
        %9006 = vmatpush2.bf16.msra.mxu0 %v8940
        %9007 = vmatprep.subr.bf16.mxu0 0
        %9008 = vmatpush2.bf16.msra.mxu0 %v8939
        %9009 = vmatprep.subr.bf16.mxu0 0
        %9010 = vmatpush2.bf16.msra.mxu0 %v8938
        %9011 = vmatprep.subr.bf16.mxu0 0
        %9012 = vmatpush2.bf16.msra.mxu0 %v8937
        %9013 = vmatprep.subr.bf16.mxu0 0
        %9014 = vmatpush2.bf16.msra.mxu0 %v8936
        %9015 = vmatprep.subr.bf16.mxu0 0
        %9016 = vmatpush2.bf16.msra.mxu0 %v8935
        %9017 = vmatprep.subr.bf16.mxu0 0
        %9018 = vmatpush2.bf16.msra.mxu0 %v8934
        %9019 = vmatprep.subr.bf16.mxu0 0
        %9020 = vmatpush2.bf16.msra.mxu0 %v8933
        %9021 = vmatprep.mubr.bf16.mxu0 %v7630
        %9022 = vmatmul.mubr.bf16.gmra.mxu0 %v4548
        %v9023 = vpop.f32.mrf.mxu0
        %v9024 = vadd.f32 %v8795, %v9023
        %v9025 = vpop.f32.mrf.mxu0
        %v9026 = vpop.f32.mrf.mxu0
        %v9027 = vadd.f32 %v8795, %v9026
        %v9028 = vpop.f32.mrf.mxu0
        %9029 = vmatprep.mubr.bf16.mxu0 %v7631
        %9030 = vmatmul.mubr.bf16.gmra.mxu0 %v4549
        %v9031 = vpop.f32.mrf.mxu0
        %v9032 = vadd.f32 %v8795, %v9031
        %v9033 = vpop.f32.mrf.mxu0
        %v9034 = vpop.f32.mrf.mxu0
        %v9035 = vadd.f32 %v8795, %v9034
        %v9036 = vpop.f32.mrf.mxu0
        %9037 = vmatprep.mubr.bf16.mxu0 %v7632
        %9038 = vmatmul.mubr.bf16.gmra.mxu0 %v4550
        %v9039 = vpop.f32.mrf.mxu0
        %v9040 = vadd.f32 %v8795, %v9039
        %v9041 = vpop.f32.mrf.mxu0
        %v9042 = vpop.f32.mrf.mxu0
        %v9043 = vadd.f32 %v8795, %v9042
        %v9044 = vpop.f32.mrf.mxu0
        %9045 = vmatprep.mubr.bf16.mxu0 %v7633
        %9046 = vmatmul.mubr.bf16.gmra.mxu0 %v4551
        %v9047 = vpop.f32.mrf.mxu0
        %v9048 = vadd.f32 %v8795, %v9047
        %v9049 = vpop.f32.mrf.mxu0
        %v9050 = vpop.f32.mrf.mxu0
        %v9051 = vadd.f32 %v8795, %v9050
        %v9052 = vpop.f32.mrf.mxu0
        %9053 = vmatprep.mubr.bf16.mxu0 %v7634
        %9054 = vmatmul.mubr.bf16.gmra.mxu0 %v4552
        %v9055 = vpop.f32.mrf.mxu0
        %v9056 = vadd.f32 %v8795, %v9055
        %v9057 = vpop.f32.mrf.mxu0
        %v9058 = vpop.f32.mrf.mxu0
        %v9059 = vadd.f32 %v8795, %v9058
        %v9060 = vpop.f32.mrf.mxu0
        %9061 = vmatprep.mubr.bf16.mxu0 %v7635
        %9062 = vmatmul.mubr.bf16.gmra.mxu0 %v4553
        %v9063 = vpop.f32.mrf.mxu0
        %v9064 = vadd.f32 %v8795, %v9063
        %v9065 = vpop.f32.mrf.mxu0
        %v9066 = vpop.f32.mrf.mxu0
        %v9067 = vadd.f32 %v8795, %v9066
        %v9068 = vpop.f32.mrf.mxu0
        %9069 = vmatprep.mubr.bf16.mxu0 %v7636
        %9070 = vmatmul.mubr.bf16.gmra.mxu0 %v4554
        %v9071 = vpop.f32.mrf.mxu0
        %v9072 = vadd.f32 %v8795, %v9071
        %v9073 = vpop.f32.mrf.mxu0
        %v9074 = vpop.f32.mrf.mxu0
        %v9075 = vadd.f32 %v8795, %v9074
        %v9076 = vpop.f32.mrf.mxu0
        %9077 = vmatprep.mubr.bf16.mxu0 %v7637
        %9078 = vmatmul.mubr.bf16.gmra.mxu0 %v4555
        %v9079 = vpop.f32.mrf.mxu0
        %v9080 = vadd.f32 %v8795, %v9079
        %v9081 = vpop.f32.mrf.mxu0
        %v9082 = vpop.f32.mrf.mxu0
        %v9083 = vadd.f32 %v8795, %v9082
        %v9084 = vpop.f32.mrf.mxu0
        %9085 = vmatprep.mubr.bf16.mxu0 %v7638
        %9086 = vmatmul.mubr.bf16.gmra.mxu0 %v4556
        %v9087 = vpop.f32.mrf.mxu0
        %v9088 = vadd.f32 %v8795, %v9087
        %v9089 = vpop.f32.mrf.mxu0
        %v9090 = vpop.f32.mrf.mxu0
        %v9091 = vadd.f32 %v8795, %v9090
        %v9092 = vpop.f32.mrf.mxu0
        %9093 = vmatprep.mubr.bf16.mxu0 %v7639
        %9094 = vmatmul.mubr.bf16.gmra.mxu0 %v4557
        %v9095 = vpop.f32.mrf.mxu0
        %v9096 = vadd.f32 %v8795, %v9095
        %v9097 = vpop.f32.mrf.mxu0
        %v9098 = vpop.f32.mrf.mxu0
        %v9099 = vadd.f32 %v8795, %v9098
        %v9100 = vpop.f32.mrf.mxu0
        %9101 = vmatprep.mubr.bf16.mxu0 %v7640
        %9102 = vmatmul.mubr.bf16.gmra.mxu0 %v4558
        %v9103 = vpop.f32.mrf.mxu0
        %v9104 = vadd.f32 %v8795, %v9103
        %v9105 = vpop.f32.mrf.mxu0
        %v9106 = vpop.f32.mrf.mxu0
        %v9107 = vadd.f32 %v8795, %v9106
        %v9108 = vpop.f32.mrf.mxu0
        %9109 = vmatprep.mubr.bf16.mxu0 %v7641
        %9110 = vmatmul.mubr.bf16.gmra.mxu0 %v4559
        %v9111 = vpop.f32.mrf.mxu0
        %v9112 = vadd.f32 %v8795, %v9111
        %v9113 = vpop.f32.mrf.mxu0
        %v9114 = vpop.f32.mrf.mxu0
        %v9115 = vadd.f32 %v8795, %v9114
        %v9116 = vpop.f32.mrf.mxu0
        %9117 = vmatprep.mubr.bf16.mxu0 %v7642
        %9118 = vmatmul.mubr.bf16.gmra.mxu0 %v4560
        %v9119 = vpop.f32.mrf.mxu0
        %v9120 = vadd.f32 %v8795, %v9119
        %v9121 = vpop.f32.mrf.mxu0
        %v9122 = vpop.f32.mrf.mxu0
        %v9123 = vadd.f32 %v8795, %v9122
        %v9124 = vpop.f32.mrf.mxu0
        %9125 = vmatprep.mubr.bf16.mxu0 %v7643
        %9126 = vmatmul.mubr.bf16.gmra.mxu0 %v4561
        %v9127 = vpop.f32.mrf.mxu0
        %v9128 = vadd.f32 %v8795, %v9127
        %v9129 = vpop.f32.mrf.mxu0
        %v9130 = vpop.f32.mrf.mxu0
        %v9131 = vadd.f32 %v8795, %v9130
        %v9132 = vpop.f32.mrf.mxu0
        %9133 = vmatprep.mubr.bf16.mxu0 %v7644
        %9134 = vmatmul.mubr.bf16.gmra.mxu0 %v4562
        %v9135 = vpop.f32.mrf.mxu0
        %v9136 = vadd.f32 %v8795, %v9135
        %v9137 = vpop.f32.mrf.mxu0
        %v9138 = vpop.f32.mrf.mxu0
        %v9139 = vadd.f32 %v8795, %v9138
        %v9140 = vpop.f32.mrf.mxu0
        %9141 = vmatprep.mubr.bf16.mxu0 %v7645
        %9142 = vmatmul.mubr.bf16.gmra.mxu0 %v4563
        %v9143 = vpop.f32.mrf.mxu0
        %v9144 = vadd.f32 %v8795, %v9143
        %v9145 = vpop.f32.mrf.mxu0
        %v9146 = vpop.f32.mrf.mxu0
        %v9147 = vadd.f32 %v8795, %v9146
        %v9148 = vpop.f32.mrf.mxu0
        %9149 = vdwg.mxu0
        %9150 = vmatprep.subr.bf16.mxu0 0
        %9151 = vmatpush1.bf16.msra.mxu0 %v8948
        %9152 = vmatprep.subr.bf16.mxu0 0
        %9153 = vmatpush1.bf16.msra.mxu0 %v8947
        %9154 = vmatprep.subr.bf16.mxu0 0
        %9155 = vmatpush1.bf16.msra.mxu0 %v8946
        %9156 = vmatprep.subr.bf16.mxu0 0
        %9157 = vmatpush1.bf16.msra.mxu0 %v8945
        %9158 = vmatprep.subr.bf16.mxu0 0
        %9159 = vmatpush1.bf16.msra.mxu0 %v8944
        %9160 = vmatprep.subr.bf16.mxu0 0
        %9161 = vmatpush1.bf16.msra.mxu0 %v8943
        %9162 = vmatprep.subr.bf16.mxu0 0
        %9163 = vmatpush1.bf16.msra.mxu0 %v8942
        %9164 = vmatprep.subr.bf16.mxu0 0
        %9165 = vmatpush1.bf16.msra.mxu0 %v8941
        %9166 = vmatprep.subr.bf16.mxu0 0
        %9167 = vmatpush2.bf16.msra.mxu0 %v8956
        %9168 = vmatprep.subr.bf16.mxu0 0
        %9169 = vmatpush2.bf16.msra.mxu0 %v8955
        %9170 = vmatprep.subr.bf16.mxu0 0
        %9171 = vmatpush2.bf16.msra.mxu0 %v8954
        %9172 = vmatprep.subr.bf16.mxu0 0
        %9173 = vmatpush2.bf16.msra.mxu0 %v8953
        %9174 = vmatprep.subr.bf16.mxu0 0
        %9175 = vmatpush2.bf16.msra.mxu0 %v8952
        %9176 = vmatprep.subr.bf16.mxu0 0
        %9177 = vmatpush2.bf16.msra.mxu0 %v8951
        %9178 = vmatprep.subr.bf16.mxu0 0
        %9179 = vmatpush2.bf16.msra.mxu0 %v8950
        %9180 = vmatprep.subr.bf16.mxu0 0
        %9181 = vmatpush2.bf16.msra.mxu0 %v8949
        %9182 = vmatprep.mubr.bf16.mxu0 %v8710
        %9183 = vmatmul.mubr.bf16.gmra.mxu0 %v8194
        %v9184 = vpop.f32.mrf.mxu0
        %v9185 = vadd.f32 %v9024, %v9184
        %v9186 = vpop.f32.mrf.mxu0
        %v9187 = vpop.f32.mrf.mxu0
        %v9188 = vadd.f32 %v9027, %v9187
        %v9189 = vpop.f32.mrf.mxu0
        %9190 = vmatprep.mubr.bf16.mxu0 %v8711
        %9191 = vmatmul.mubr.bf16.gmra.mxu0 %v8195
        %v9192 = vpop.f32.mrf.mxu0
        %v9193 = vadd.f32 %v9032, %v9192
        %v9194 = vpop.f32.mrf.mxu0
        %v9195 = vpop.f32.mrf.mxu0
        %v9196 = vadd.f32 %v9035, %v9195
        %v9197 = vpop.f32.mrf.mxu0
        %9198 = vmatprep.mubr.bf16.mxu0 %v8712
        %9199 = vmatmul.mubr.bf16.gmra.mxu0 %v8196
        %v9200 = vpop.f32.mrf.mxu0
        %v9201 = vadd.f32 %v9040, %v9200
        %v9202 = vpop.f32.mrf.mxu0
        %v9203 = vpop.f32.mrf.mxu0
        %v9204 = vadd.f32 %v9043, %v9203
        %v9205 = vpop.f32.mrf.mxu0
        %9206 = vmatprep.mubr.bf16.mxu0 %v8713
        %9207 = vmatmul.mubr.bf16.gmra.mxu0 %v8197
        %v9208 = vpop.f32.mrf.mxu0
        %v9209 = vadd.f32 %v9048, %v9208
        %v9210 = vpop.f32.mrf.mxu0
        %v9211 = vpop.f32.mrf.mxu0
        %v9212 = vadd.f32 %v9051, %v9211
        %v9213 = vpop.f32.mrf.mxu0
        %9214 = vmatprep.mubr.bf16.mxu0 %v8714
        %9215 = vmatmul.mubr.bf16.gmra.mxu0 %v8198
        %v9216 = vpop.f32.mrf.mxu0
        %v9217 = vadd.f32 %v9056, %v9216
        %v9218 = vpop.f32.mrf.mxu0
        %v9219 = vpop.f32.mrf.mxu0
        %v9220 = vadd.f32 %v9059, %v9219
        %v9221 = vpop.f32.mrf.mxu0
        %9222 = vmatprep.mubr.bf16.mxu0 %v8715
        %9223 = vmatmul.mubr.bf16.gmra.mxu0 %v8199
        %v9224 = vpop.f32.mrf.mxu0
        %v9225 = vadd.f32 %v9064, %v9224
        %v9226 = vpop.f32.mrf.mxu0
        %v9227 = vpop.f32.mrf.mxu0
        %v9228 = vadd.f32 %v9067, %v9227
        %v9229 = vpop.f32.mrf.mxu0
        %9230 = vmatprep.mubr.bf16.mxu0 %v8716
        %9231 = vmatmul.mubr.bf16.gmra.mxu0 %v8200
        %v9232 = vpop.f32.mrf.mxu0
        %v9233 = vadd.f32 %v9072, %v9232
        %v9234 = vpop.f32.mrf.mxu0
        %v9235 = vpop.f32.mrf.mxu0
        %v9236 = vadd.f32 %v9075, %v9235
        %v9237 = vpop.f32.mrf.mxu0
        %9238 = vmatprep.mubr.bf16.mxu0 %v8717
        %9239 = vmatmul.mubr.bf16.gmra.mxu0 %v8201
        %v9240 = vpop.f32.mrf.mxu0
        %v9241 = vadd.f32 %v9080, %v9240
        %v9242 = vpop.f32.mrf.mxu0
        %v9243 = vpop.f32.mrf.mxu0
        %v9244 = vadd.f32 %v9083, %v9243
        %v9245 = vpop.f32.mrf.mxu0
        %9246 = vmatprep.mubr.bf16.mxu0 %v8718
        %9247 = vmatmul.mubr.bf16.gmra.mxu0 %v8202
        %v9248 = vpop.f32.mrf.mxu0
        %v9249 = vadd.f32 %v9088, %v9248
        %v9250 = vpop.f32.mrf.mxu0
        %v9251 = vpop.f32.mrf.mxu0
        %v9252 = vadd.f32 %v9091, %v9251
        %v9253 = vpop.f32.mrf.mxu0
        %9254 = vmatprep.mubr.bf16.mxu0 %v8719
        %9255 = vmatmul.mubr.bf16.gmra.mxu0 %v8203
        %v9256 = vpop.f32.mrf.mxu0
        %v9257 = vadd.f32 %v9096, %v9256
        %v9258 = vpop.f32.mrf.mxu0
        %v9259 = vpop.f32.mrf.mxu0
        %v9260 = vadd.f32 %v9099, %v9259
        %v9261 = vpop.f32.mrf.mxu0
        %9262 = vmatprep.mubr.bf16.mxu0 %v8720
        %9263 = vmatmul.mubr.bf16.gmra.mxu0 %v8204
        %v9264 = vpop.f32.mrf.mxu0
        %v9265 = vadd.f32 %v9104, %v9264
        %v9266 = vpop.f32.mrf.mxu0
        %v9267 = vpop.f32.mrf.mxu0
        %v9268 = vadd.f32 %v9107, %v9267
        %v9269 = vpop.f32.mrf.mxu0
        %9270 = vmatprep.mubr.bf16.mxu0 %v8721
        %9271 = vmatmul.mubr.bf16.gmra.mxu0 %v8205
        %v9272 = vpop.f32.mrf.mxu0
        %v9273 = vadd.f32 %v9112, %v9272
        %v9274 = vpop.f32.mrf.mxu0
        %v9275 = vpop.f32.mrf.mxu0
        %v9276 = vadd.f32 %v9115, %v9275
        %v9277 = vpop.f32.mrf.mxu0
        %9278 = vmatprep.mubr.bf16.mxu0 %v8722
        %9279 = vmatmul.mubr.bf16.gmra.mxu0 %v8206
        %v9280 = vpop.f32.mrf.mxu0
        %v9281 = vadd.f32 %v9120, %v9280
        %v9282 = vpop.f32.mrf.mxu0
        %v9283 = vpop.f32.mrf.mxu0
        %v9284 = vadd.f32 %v9123, %v9283
        %v9285 = vpop.f32.mrf.mxu0
        %9286 = vmatprep.mubr.bf16.mxu0 %v8723
        %9287 = vmatmul.mubr.bf16.gmra.mxu0 %v8207
        %v9288 = vpop.f32.mrf.mxu0
        %v9289 = vadd.f32 %v9128, %v9288
        %v9290 = vpop.f32.mrf.mxu0
        %v9291 = vpop.f32.mrf.mxu0
        %v9292 = vadd.f32 %v9131, %v9291
        %v9293 = vpop.f32.mrf.mxu0
        %9294 = vmatprep.mubr.bf16.mxu0 %v8724
        %9295 = vmatmul.mubr.bf16.gmra.mxu0 %v8208
        %v9296 = vpop.f32.mrf.mxu0
        %v9297 = vadd.f32 %v9136, %v9296
        %v9298 = vpop.f32.mrf.mxu0
        %v9299 = vpop.f32.mrf.mxu0
        %v9300 = vadd.f32 %v9139, %v9299
        %v9301 = vpop.f32.mrf.mxu0
        %9302 = vmatprep.mubr.bf16.mxu0 %v8725
        %9303 = vmatmul.mubr.bf16.gmra.mxu0 %v8209
        %v9304 = vpop.f32.mrf.mxu0
        %v9305 = vadd.f32 %v9144, %v9304
        %v9306 = vpop.f32.mrf.mxu0
        %v9307 = vpop.f32.mrf.mxu0
        %v9308 = vadd.f32 %v9147, %v9307
        %v9309 = vpop.f32.mrf.mxu0
        %9310 = vdwg.mxu0
        %9311 = vst [vmem:[%s355] sm:$0xff] %v9185
        %9312 = vst [vmem:[%s355 + $0x8] sm:$0xff] %v9188
        %9313 = vst [vmem:[%s355 + $0x10] sm:$0xff] %v9193
        %9314 = vst [vmem:[%s355 + $0x18] sm:$0xff] %v9196
        %9315 = vst [vmem:[%s355 + $0x20] sm:$0xff] %v9201
        %9316 = vst [vmem:[%s355 + $0x28] sm:$0xff] %v9204
        %9317 = vst [vmem:[%s355 + $0x30] sm:$0xff] %v9209
        %9318 = vst [vmem:[%s355 + $0x38] sm:$0xff] %v9212
        %9319 = vst [vmem:[%s355 + $0x40] sm:$0xff] %v9217
        %9320 = vst [vmem:[%s355 + $0x48] sm:$0xff] %v9220
        %9321 = vst [vmem:[%s355 + $0x50] sm:$0xff] %v9225
        %9322 = vst [vmem:[%s355 + $0x58] sm:$0xff] %v9228
        %9323 = vst [vmem:[%s355 + $0x60] sm:$0xff] %v9233
        %9324 = vst [vmem:[%s355 + $0x68] sm:$0xff] %v9236
        %9325 = vst [vmem:[%s355 + $0x70] sm:$0xff] %v9241
        %9326 = vst [vmem:[%s355 + $0x78] sm:$0xff] %v9244
        %9327 = vst [vmem:[%s355 + $0x80] sm:$0xff] %v9249
        %9328 = vst [vmem:[%s355 + $0x88] sm:$0xff] %v9252
        %9329 = vst [vmem:[%s355 + $0x90] sm:$0xff] %v9257
        %9330 = vst [vmem:[%s355 + $0x98] sm:$0xff] %v9260
        %9331 = vst [vmem:[%s355 + $0xa0] sm:$0xff] %v9265
        %9332 = vst [vmem:[%s355 + $0xa8] sm:$0xff] %v9268
        %9333 = vst [vmem:[%s355 + $0xb0] sm:$0xff] %v9273
        %9334 = vst [vmem:[%s355 + $0xb8] sm:$0xff] %v9276
        %9335 = vst [vmem:[%s355 + $0xc0] sm:$0xff] %v9281
        %9336 = vst [vmem:[%s355 + $0xc8] sm:$0xff] %v9284
        %9337 = vst [vmem:[%s355 + $0xd0] sm:$0xff] %v9289
        %9338 = vst [vmem:[%s355 + $0xd8] sm:$0xff] %v9292
        %9339 = vst [vmem:[%s355 + $0xe0] sm:$0xff] %v9297
        %9340 = vst [vmem:[%s355 + $0xe8] sm:$0xff] %v9300
        %9341 = vst [vmem:[%s355 + $0xf0] sm:$0xff] %v9305
        %9342 = vst [vmem:[%s355 + $0xf8] sm:$0xff] %v9308
        %s9343 = sand.u32 %s227, 1
        %s9344 = scalar_lea.sflag [#allocation5], %s9343
        %s9345 = sand.u32 %s227, 1
        %s9346 = smul.addr %s9345, 256
        %s9347 = scalar_lea.vmem [#allocation8], %s9346
        // Predicated region
        $region65: #{tpu_custom_call.1} parent=55 // pred_check
          %p9348 = pneg %p237
        $region66: #{tpu_custom_call.1} parent=55 // pred_check_branch
          %9350 = sbr.rel (%p9348) target = $region68
        $region67: #{tpu_custom_call.1} parent=55 // pred_region
          %s9352 = ssub.s32 4096, 4096
          %9353 = vsyncadd %s9344, %s9352
          %s9354 = smul.addr %s25, 32
          %s9355 = smul.addr %s9354, 128
          %s9356 = scalar_lea.hbm %s9, %s9355
          %s9357 = sshll.u32 %s9347, 4
          %s9358 = int_to_ptr.vmem [resolvable:$true] %s9357
          %9363 = dma.vmem_to_hbm [thread:$0]  %s9358, 4096, %s9356, %s9344, 128, 128, 8
        $region68: #{tpu_custom_call.1} parent=55 // pred_fallthru
          _
      $region56: #{tpu_custom_call.1} parent=5 // pred_fallthru
        _
      %p9364 = scmp.le.s32.totalorder 2, %s20
      // Predicated region
      $region69: #{tpu_custom_call.1} parent=5 // pred_check
        %p9365 = pneg %p9364
      $region70: #{tpu_custom_call.1} parent=5 // pred_check_branch
        %9367 = sbr.rel (%p9365) target = $region72
      $region71: #{tpu_custom_call.1} parent=5 // pred_region
        %s9368 = ssub.s32 %s20, 2
        // Predicated region
        $region73: #{tpu_custom_call.1} parent=71 // pred_check
          %p9369 = pneg %p243
        $region74: #{tpu_custom_call.1} parent=71 // pred_check_branch
          %9371 = sbr.rel (%p9369) target = $region76
        $region75: #{tpu_custom_call.1} parent=71 // pred_region
          %s9372 = sand.u32 %s228, 1
          %s9373 = scalar_lea.sflag [#allocation5], %s9372
          %s9374 = sand.u32 %s228, 1
          %s9375 = smul.addr %s9374, 256
          %s9376 = scalar_lea.vmem [#allocation8], %s9375
          %9377 = dma.done %s9373, 4096
        $region76: #{tpu_custom_call.1} parent=71 // pred_fallthru
          _
      $region72: #{tpu_custom_call.1} parent=5 // pred_fallthru
        _
    $region6: #{tpu_custom_call.1} parent=1 // loop_footer
      %s24 = sadd.s32 1, %s20
    $region7: #{tpu_custom_call.1} parent=1 // loop_footer_branch
      %19 = sbr.rel target = $region3
    $region8: #{tpu_custom_call.1} parent=1 // loop_exit
      _
    %9378 = vsyncpa [#allocation4], 1
    %s9379 = scalar_lea.sflag [#allocation4], 1
    %9380 = vsyncpa %s9379, 1
    %9381 = vsyncpa [#allocation7], 1
    %9382 = vsyncpa [#allocation5], 1
    %s9383 = scalar_lea.sflag [#allocation5], 1
    %9384 = vsyncpa %s9383, 1

</llo_original>
